<compile_context>
chip_gen: v7x
topology: tpu7x:2x2x1
jax: 0.10.0
libtpu: 0.0.40
codegen_flags: <defaults>
</compile_context>

<pallas_src>
import math
import functools

import jax
import jax.numpy as jnp
from jax import lax
from jax.experimental import pallas as pl
from jax.experimental.pallas import tpu as pltpu

MXU_IN_DTYPE = jnp.bfloat16   # MXU operand dtype; f32 accumulation is kept
ACT_DTYPE = jnp.bfloat16      # inter-layer activation dtype in HBM
LN_EPS = 1e-5                 # torch nn.Transformer layer_norm_eps default


# ----------------------------- in-kernel helpers -----------------------------

def _mm(a, b):
    """MXU matmul, bf16 operands, f32 accumulation."""
    return jnp.dot(a.astype(MXU_IN_DTYPE), b.astype(MXU_IN_DTYPE),
                   preferred_element_type=jnp.float32)


def _layer_norm(x, g, b, eps=LN_EPS):
    mu = jnp.mean(x, axis=-1, keepdims=True)
    xc = x - mu
    var = jnp.mean(xc * xc, axis=-1, keepdims=True)
    return xc * lax.rsqrt(var + eps) * g + b


def _mha(q, k, v, wo, mask, n_head):
    """All heads of one batch slab.  q:(Sq,D) k,v:(Sk,D) wo:(D,D) mask:(Sq,Sk)|None.
    Per-head softmax(q k^T / sqrt(dh) + mask) v, heads concatenated (free lane
    placement), then ONE full-depth output projection matmul with wo."""
    Sq, D = q.shape
    dh = D // n_head
    scale = 1.0 / math.sqrt(dh)
    ctx = []
    # TODO(synk): at large n_head/S switch to a batched head einsum or fori_loop
    # to bound live ranges of the (Sq,Sk) score buffers (toy n_head=4 is fine).
    for h in range(n_head):                       # static unroll (n_head small)
        c = h * dh
        qs = q[:, c:c + dh]
        ks = k[:, c:c + dh]
        vs = v[:, c:c + dh]
        # contract on the last dims -> no explicit ks.T (keeps the XLU free)
        s = lax.dot_general(qs.astype(MXU_IN_DTYPE), ks.astype(MXU_IN_DTYPE),
                            (((1,), (1,)), ((), ())),
                            preferred_element_type=jnp.float32) * scale
        if mask is not None:
            s = s + mask
        s = s - jnp.max(s, axis=-1, keepdims=True)
        p = jnp.exp(s)
        p = p * pl.reciprocal(jnp.sum(p, axis=-1, keepdims=True), approx=True)
        ctx.append(_mm(p, vs))                    # (Sq, dh) f32
    ctx = jnp.concatenate(ctx, axis=-1)           # head concat -> (Sq, D)
    return _mm(ctx, wo)                           # single K=D output projection


# ----------------------------- fused layer kernels -----------------------------

def _encoder_layer_kernel(*refs, n_head, has_mask, fuse_final):
    refs = list(refs)
    o_ref = refs.pop()                            # output ref follows all inputs
    it = iter(refs)
    x_ref = next(it)
    mask_ref = next(it) if has_mask else None
    wqkv = next(it); bqkv = next(it); wo = next(it); bo = next(it)
    n1g = next(it); n1b = next(it)
    w1 = next(it); b1 = next(it); w2 = next(it); b2 = next(it)
    n2g = next(it); n2b = next(it)
    if fuse_final:
        fg = next(it); fb = next(it)

    x = x_ref[...].astype(jnp.float32)            # (S, D) one batch
    D = x.shape[-1]
    qkv = _mm(x, wqkv[...]) + bqkv[...]           # merged QKV, (S, 3D)
    q, k, v = qkv[:, :D], qkv[:, D:2 * D], qkv[:, 2 * D:]
    m = mask_ref[...] if has_mask else None
    attn = _mha(q, k, v, wo[...], m, n_head) + bo[...]
    x = _layer_norm(x + attn, n1g[...], n1b[...])  # post-norm (torch default)
    h = jnp.maximum(_mm(x, w1[...]) + b1[...], 0.0)  # FFN, ReLU
    h = _mm(h, w2[...]) + b2[...]
    x = _layer_norm(x + h, n2g[...], n2b[...])
    if fuse_final:                                 # fused final encoder norm
        x = _layer_norm(x, fg[...], fb[...])
    o_ref[...] = x.astype(o_ref.dtype)


def _decoder_layer_kernel(x_ref, mem_ref, tmask_ref,
                          wqkv_ref, bqkv_ref, wo1_ref, bo1_ref,
                          n1g_ref, n1b_ref,
                          wqc_ref, bqc_ref, wkvc_ref, bkvc_ref, wo2_ref, bo2_ref,
                          n2g_ref, n2b_ref,
                          w1_ref, b1_ref, w2_ref, b2_ref,
                          n3g_ref, n3b_ref,
                          o_ref, *, n_head):
    x = x_ref[...].astype(jnp.float32)             # (S_tgt, D)
    mem = mem_ref[...].astype(jnp.float32)         # (S_src, D)
    D = x.shape[-1]

    # masked self-attention
    qkv = _mm(x, wqkv_ref[...]) + bqkv_ref[...]
    q, k, v = qkv[:, :D], qkv[:, D:2 * D], qkv[:, 2 * D:]
    sa = _mha(q, k, v, wo1_ref[...], tmask_ref[...], n_head) + bo1_ref[...]
    x = _layer_norm(x + sa, n1g_ref[...], n1b_ref[...])

    # cross-attention over encoder memory (memory_mask=None in nn.Transformer)
    qc = _mm(x, wqc_ref[...]) + bqc_ref[...]
    kvc = _mm(mem, wkvc_ref[...]) + bkvc_ref[...]
    kc, vc = kvc[:, :D], kvc[:, D:]
    ca = _mha(qc, kc, vc, wo2_ref[...], None, n_head) + bo2_ref[...]
    x = _layer_norm(x + ca, n2g_ref[...], n2b_ref[...])

    # feed-forward
    h = jnp.maximum(_mm(x, w1_ref[...]) + b1_ref[...], 0.0)
    h = _mm(h, w2_ref[...]) + b2_ref[...]
    x = _layer_norm(x + h, n3g_ref[...], n3b_ref[...])
    o_ref[...] = x.astype(o_ref.dtype)


def _norm_proj_kernel(x_ref, g_ref, b_ref, w_ref, wb_ref, o_ref):
    # final decoder LayerNorm fused with one lane-dense tile of the vocab proj
    x = _layer_norm(x_ref[...].astype(jnp.float32), g_ref[...], b_ref[...])
    o_ref[...] = (_mm(x, w_ref[...]) + wb_ref[...]).astype(o_ref.dtype)


# ----------------------------- pallas_call wrappers -----------------------------

def _const_spec(a):
    """Whole-array block, same index every grid step, single-buffered if possible."""
    nd = a.ndim

    def idx(*_args):
        return (0,) * nd

    try:
        return pl.BlockSpec(a.shape, idx, pipeline_mode=pl.Buffered(1))
    except Exception:   # older Pallas without pipeline_mode / Buffered
        return pl.BlockSpec(a.shape, idx)


def _vmem_limit_bytes(*arrays):
    """Explicit scoped-VMEM sizing from the real operand footprint."""
    fp = sum(int(a.size) * jnp.dtype(a.dtype).itemsize for a in arrays)
    # single-buffered weights + double-buffered activation blocks + f32 temporaries
    return int(min(max(4 * fp, 16 << 20), 48 << 20))


def encoder_layer(x, src_mask, p, n_head, final_norm=None):
    """x: (B, S, D) activations.  src_mask None -> no mask DMA / no mask add."""
    B, S, D = x.shape
    weights = [p["wqkv"], p["bqkv"], p["wo"], p["bo"],
               p["norm1_g"], p["norm1_b"],
               p["w1"], p["b1"], p["w2"], p["b2"],
               p["norm2_g"], p["norm2_b"]]
    has_mask = src_mask is not None
    fuse_final = final_norm is not None
    if fuse_final:
        weights = weights + list(final_norm)
    inputs = [x] + ([src_mask] if has_mask else []) + weights
    in_specs = [pl.BlockSpec((None, S, D), lambda b: (b, 0, 0))]
    if has_mask:
        in_specs.append(_const_spec(src_mask))
    in_specs += [_const_spec(w) for w in weights]
    return pl.pallas_call(
        functools.partial(_encoder_layer_kernel, n_head=n_head,
                          has_mask=has_mask, fuse_final=fuse_final),
        out_shape=jax.ShapeDtypeStruct((B, S, D), ACT_DTYPE),
        grid=(B,),
        in_specs=in_specs,
        out_specs=pl.BlockSpec((None, S, D), lambda b: (b, 0, 0)),
        compiler_params=pltpu.CompilerParams(
            dimension_semantics=("parallel",),
            vmem_limit_bytes=_vmem_limit_bytes(*inputs)),
    )(*inputs)


def decoder_layer(x, memory, tgt_mask, p, n_head):
    """x: (B, S_tgt, D), memory: (B, S_src, D) (bf16)."""
    B, S_t, D = x.shape
    S_s = memory.shape[1]
    weights = [p["wqkv"], p["bqkv"], p["wo1"], p["bo1"],
               p["norm1_g"], p["norm1_b"],
               p["wq_c"], p["bq_c"], p["wkv_c"], p["bkv_c"], p["wo2"], p["bo2"],
               p["norm2_g"], p["norm2_b"],
               p["w1"], p["b1"], p["w2"], p["b2"],
               p["norm3_g"], p["norm3_b"]]
    inputs = [x, memory, tgt_mask] + weights
    return pl.pallas_call(
        functools.partial(_decoder_layer_kernel, n_head=n_head),
        out_shape=jax.ShapeDtypeStruct((B, S_t, D), ACT_DTYPE),
        grid=(B,),
        in_specs=[pl.BlockSpec((None, S_t, D), lambda b: (b, 0, 0)),
                  pl.BlockSpec((None, S_s, D), lambda b: (b, 0, 0)),
                  _const_spec(tgt_mask)] + [_const_spec(w) for w in weights],
        out_specs=pl.BlockSpec((None, S_t, D), lambda b: (b, 0, 0)),
        compiler_params=pltpu.CompilerParams(
            dimension_semantics=("parallel",),
            vmem_limit_bytes=_vmem_limit_bytes(*inputs)),
    )(*inputs)


def final_norm_and_project(x, g, b, w, wb, tn=128):
    """Final decoder LayerNorm fused with the vocab projection.
    Tiled over vocab columns (tn = 128-lane-dense tiles); weights stream per tile."""
    B, S, D = x.shape
    M = B * S
    Np = w.shape[1]                      # vocab padded to a multiple of 128
    assert Np % tn == 0
    x2 = x.reshape(M, D)
    return pl.pallas_call(
        _norm_proj_kernel,
        out_shape=jax.ShapeDtypeStruct((M, Np), jnp.float32),
        grid=(Np // tn,),
        in_specs=[pl.BlockSpec((M, D), lambda j: (0, 0)),      # resident rows
                  _const_spec(g), _const_spec(b),
                  pl.BlockSpec((D, tn), lambda j: (0, j)),     # weight column tile
                  pl.BlockSpec((1, tn), lambda j: (0, j))],
        out_specs=pl.BlockSpec((M, tn), lambda j: (0, j)),     # lane-dense stores
        compiler_params=pltpu.CompilerParams(
            dimension_semantics=("parallel",),
            vmem_limit_bytes=_vmem_limit_bytes(x2, g, b, w, wb)),
    )(x2, g, b, w, wb)


# -------------------------- Transformer assembly --------------------------

def positional_encoding(max_len, d_model):
    position = jnp.arange(max_len, dtype=jnp.float32)[:, None]
    div_term = jnp.exp(jnp.arange(0, d_model, 2, dtype=jnp.float32)
                       * (-math.log(10000.0) / d_model))
    pe = jnp.zeros((max_len, 1, d_model), dtype=jnp.float32)
    pe = pe.at[:, 0, 0::2].set(jnp.sin(position * div_term))
    pe = pe.at[:, 0, 1::2].set(jnp.cos(position * div_term))
    return pe


def default_transformer_forward(params, src, tgt, src_mask, tgt_mask,
                                *, n_head, n_token):
    emb = params["embedding"]
    d_model = emb.shape[1]
    S_src, B = src.shape
    S_tgt = tgt.shape[0]
    assert d_model % n_head == 0

    # Embedding lookup (JAX gather glue).  The reference scales by sqrt(d_model)
    # twice (once at lookup, once via `src *= sqrt(d_model)`), so the net factor
    # is d_model — mirrored deliberately.
    scale = float(d_model)
    pe = params["pe"]
    src_e = jnp.take(emb, src, axis=0) * scale + pe[:S_src]    # (S_src, B, D)
    tgt_e = jnp.take(emb, tgt, axis=0) * scale + pe[:S_tgt]
    # TODO(synk): audio Conv1d branch + scatter_ not implemented (include_audio=False).
    # TODO(synk): PE add / embedding scale could be fused into the first layer kernel.

    # batch-major (B, S, D), bf16 inter-layer activations in HBM
    src_x = jnp.transpose(src_e, (1, 0, 2)).astype(ACT_DTYPE)
    tgt_x = jnp.transpose(tgt_e, (1, 0, 2)).astype(ACT_DTYPE)

    if tgt_mask is None:
        tgt_mask = jnp.zeros((S_tgt, S_tgt), jnp.float32)

    # encoder stack; final encoder LayerNorm fused into the last layer kernel
    memory = src_x
    n_enc = len(params["encoder_layers"])
    for i, lp in enumerate(params["encoder_layers"]):
        fused = (params["enc_norm_g"], params["enc_norm_b"]) if i == n_enc - 1 else None
        memory = encoder_layer(memory, src_mask, lp, n_head, final_norm=fused)
    if n_enc == 0:   # not exercised; keep semantics if the stack is empty
        memory = _layer_norm(memory.astype(jnp.float32),
                             params["enc_norm_g"], params["enc_norm_b"]).astype(ACT_DTYPE)

    # decoder stack + final decoder LayerNorm fused with the tiled vocab projection
    out = tgt_x
    for lp in params["decoder_layers"]:
        out = decoder_layer(out, memory, tgt_mask, lp, n_head)
    logits = final_norm_and_project(out, params["dec_norm_g"], params["dec_norm_b"],
                                    params["dec_w"], params["dec_b"])
    logits = logits[:, :n_token]                                  # drop vocab padding
    return logits.reshape(B, S_tgt, n_token).transpose(1, 0, 2)   # (S_tgt, B, n_token)


# ------------------------------- Init (synthetic) -------------------------------

def init_params(key, n_token, d_model, d_hid, n_enc, n_dec, max_len=64):
    keys = iter(jax.random.split(key, 512))
    W_DT = jnp.bfloat16   # matmul weights stored bf16 in HBM (half DMA / VMEM)

    def w(shape, scale=0.05):
        return (jax.random.normal(next(keys), shape, jnp.float32) * scale).astype(W_DT)

    def zeros2(n):
        return jnp.zeros((1, n), jnp.float32)

    def ones2(n):
        return jnp.ones((1, n), jnp.float32)

    def enc_layer():
        return dict(
            wqkv=w((d_model, 3 * d_model)), bqkv=zeros2(3 * d_model),
            wo=w((d_model, d_model)), bo=zeros2(d_model),
            norm1_g=ones2(d_model), norm1_b=zeros2(d_model),
            w1=w((d_model, d_hid)), b1=zeros2(d_hid),
            w2=w((d_hid, d_model)), b2=zeros2(d_model),
            norm2_g=ones2(d_model), norm2_b=zeros2(d_model))

    def dec_layer():
        return dict(
            wqkv=w((d_model, 3 * d_model)), bqkv=zeros2(3 * d_model),
            wo1=w((d_model, d_model)), bo1=zeros2(d_model),
            norm1_g=ones2(d_model), norm1_b=zeros2(d_model),
            wq_c=w((d_model, d_model)), bq_c=zeros2(d_model),
            wkv_c=w((d_model, 2 * d_model)), bkv_c=zeros2(2 * d_model),
            wo2=w((d_model, d_model)), bo2=zeros2(d_model),
            norm2_g=ones2(d_model), norm2_b=zeros2(d_model),
            w1=w((d_model, d_hid)), b1=zeros2(d_hid),
            w2=w((d_hid, d_model)), b2=zeros2(d_model),
            norm3_g=ones2(d_model), norm3_b=zeros2(d_model))

    initrange = 0.1  # matches init_weights()
    n_pad = ((n_token + 127) // 128) * 128      # lane-dense (128-multiple) vocab
    dec_w = jax.random.uniform(next(keys), (d_model, n_token), jnp.float32,
                               -initrange, initrange)
    dec_w = jnp.pad(dec_w, ((0, 0), (0, n_pad - n_token))).astype(W_DT)

    return dict(
        embedding=jax.random.uniform(next(keys), (n_token, d_model), jnp.float32,
                                     -initrange, initrange),
        pe=positional_encoding(max_len, d_model),
        encoder_layers=[enc_layer() for _ in range(n_enc)],
        decoder_layers=[dec_layer() for _ in range(n_dec)],
        enc_norm_g=ones2(d_model), enc_norm_b=zeros2(d_model),
        dec_norm_g=ones2(d_model), dec_norm_b=zeros2(d_model),
        dec_w=dec_w, dec_b=jnp.zeros((1, n_pad), jnp.float32))


# ------------------------------------ main ------------------------------------

if __name__ == "__main__":
    n_token, d_model, n_head, d_hid = 50, 32, 4, 64
    n_encoder_layers, n_decoder_layers = 2, 2
    S, B = 8, 2  # seq_len, batch

    key = jax.random.PRNGKey(0)
    pkey, skey, tkey = jax.random.split(key, 3)
    params = init_params(pkey, n_token, d_model, d_hid,
                         n_encoder_layers, n_decoder_layers)

    src = jax.random.randint(skey, (S, B), 0, n_token, dtype=jnp.int32)
    tgt = jax.random.randint(tkey, (S, B), 0, n_token, dtype=jnp.int32)
    src_mask = None  # nn.Transformer default: no encoder self-attn mask (fast path)
    tgt_mask = jnp.where(jnp.triu(jnp.ones((S, S), dtype=bool), 1),
                         -jnp.inf, 0.0).astype(jnp.float32)  # causal mask

    fwd = jax.jit(functools.partial(default_transformer_forward,
                                    n_head=n_head, n_token=n_token))
    out = fwd(params, src, tgt, src_mask, tgt_mask)
    jax.block_until_ready(out)

    assert out.shape == (S, B, n_token), out.shape
    assert bool(jnp.all(jnp.isfinite(out)))
    print("KERNEL_OK")
</pallas_src>

<mosaic_0001>
module attributes {stable_mosaic.version = 11 : i64} {
  func.func @_encoder_layer_kernel(%arg0: i32, %arg1: memref<1x8x32xbf16, #tpu.memory_space<vmem>>, %arg2: memref<32x96xbf16, #tpu.memory_space<vmem>>, %arg3: memref<1x96xf32, #tpu.memory_space<vmem>>, %arg4: memref<32x32xbf16, #tpu.memory_space<vmem>>, %arg5: memref<1x32xf32, #tpu.memory_space<vmem>>, %arg6: memref<1x32xf32, #tpu.memory_space<vmem>>, %arg7: memref<1x32xf32, #tpu.memory_space<vmem>>, %arg8: memref<32x64xbf16, #tpu.memory_space<vmem>>, %arg9: memref<1x64xf32, #tpu.memory_space<vmem>>, %arg10: memref<64x32xbf16, #tpu.memory_space<vmem>>, %arg11: memref<1x32xf32, #tpu.memory_space<vmem>>, %arg12: memref<1x32xf32, #tpu.memory_space<vmem>>, %arg13: memref<1x32xf32, #tpu.memory_space<vmem>>, %arg14: memref<1x8x32xbf16, #tpu.memory_space<vmem>>) attributes {dimension_semantics = [#tpu.dimension_semantics<parallel>], iteration_bounds = array<i64: 2>, scalar_prefetch = 0 : i64, scratch_operands = 0 : i64, tpu.core_type = #tpu.core_type<tc>, window_params = [{transform_indices = @transform_0, window_bounds = array<i64: 1, 8, 32>}, {pipeline_mode = #tpu.pipeline_mode<synchronous>, transform_indices = @transform_1, window_bounds = array<i64: 32, 96>}, {pipeline_mode = #tpu.pipeline_mode<synchronous>, transform_indices = @transform_2, window_bounds = array<i64: 1, 96>}, {pipeline_mode = #tpu.pipeline_mode<synchronous>, transform_indices = @transform_3, window_bounds = array<i64: 32, 32>}, {pipeline_mode = #tpu.pipeline_mode<synchronous>, transform_indices = @transform_4, window_bounds = array<i64: 1, 32>}, {pipeline_mode = #tpu.pipeline_mode<synchronous>, transform_indices = @transform_5, window_bounds = array<i64: 1, 32>}, {pipeline_mode = #tpu.pipeline_mode<synchronous>, transform_indices = @transform_6, window_bounds = array<i64: 1, 32>}, {pipeline_mode = #tpu.pipeline_mode<synchronous>, transform_indices = @transform_7, window_bounds = array<i64: 32, 64>}, {pipeline_mode = #tpu.pipeline_mode<synchronous>, transform_indices = @transform_8, window_bounds = array<i64: 1, 64>}, {pipeline_mode = #tpu.pipeline_mode<synchronous>, transform_indices = @transform_9, window_bounds = array<i64: 64, 32>}, {pipeline_mode = #tpu.pipeline_mode<synchronous>, transform_indices = @transform_10, window_bounds = array<i64: 1, 32>}, {pipeline_mode = #tpu.pipeline_mode<synchronous>, transform_indices = @transform_11, window_bounds = array<i64: 1, 32>}, {pipeline_mode = #tpu.pipeline_mode<synchronous>, transform_indices = @transform_12, window_bounds = array<i64: 1, 32>}, {transform_indices = @transform_13, window_bounds = array<i64: 1, 8, 32>}]} {
    %c0 = arith.constant 0 : index
    %c0_0 = arith.constant 0 : index
    %c0_1 = arith.constant 0 : index
    %0 = vector.load %arg1[%c0, %c0_0, %c0_1] : memref<1x8x32xbf16, #tpu.memory_space<vmem>>, vector<1x8x32xbf16>
    %1 = vector.shape_cast %0 : vector<1x8x32xbf16> to vector<8x32xbf16>
    %2 = arith.extf %1 : vector<8x32xbf16> to vector<8x32xf32>
    %c0_2 = arith.constant 0 : index
    %c0_3 = arith.constant 0 : index
    %3 = vector.load %arg2[%c0_2, %c0_3] : memref<32x96xbf16, #tpu.memory_space<vmem>>, vector<32x96xbf16>
    %4 = arith.truncf %2 : vector<8x32xf32> to vector<8x32xbf16>
    %cst = arith.constant dense<0.000000e+00> : vector<8x96xf32>
    %5 = tpu.matmul %4, %3, %cst {dimension_numbers = #tpu.dot_dimension_numbers<[1], [0], [0], [1], [0, 0, 1, 1], [], []>} : vector<8x32xbf16>, vector<32x96xbf16>, vector<8x96xf32> -> vector<8x96xf32>
    %c0_4 = arith.constant 0 : index
    %c0_5 = arith.constant 0 : index
    %6 = vector.load %arg3[%c0_4, %c0_5] : memref<1x96xf32, #tpu.memory_space<vmem>>, vector<1x96xf32>
    %7 = vector.broadcast %6 : vector<1x96xf32> to vector<8x96xf32>
    %8 = arith.addf %5, %7 : vector<8x96xf32>
    %9 = vector.extract_strided_slice %8 {offsets = [0, 0], sizes = [8, 32], strides = [1, 1]} : vector<8x96xf32> to vector<8x32xf32>
    %10 = vector.extract_strided_slice %8 {offsets = [0, 32], sizes = [8, 32], strides = [1, 1]} : vector<8x96xf32> to vector<8x32xf32>
    %11 = vector.extract_strided_slice %8 {offsets = [0, 64], sizes = [8, 32], strides = [1, 1]} : vector<8x96xf32> to vector<8x32xf32>
    %c0_6 = arith.constant 0 : index
    %c0_7 = arith.constant 0 : index
    %12 = vector.load %arg4[%c0_6, %c0_7] : memref<32x32xbf16, #tpu.memory_space<vmem>>, vector<32x32xbf16>
    %13 = vector.extract_strided_slice %9 {offsets = [0, 0], sizes = [8, 8], strides = [1, 1]} : vector<8x32xf32> to vector<8x8xf32>
    %14 = vector.extract_strided_slice %10 {offsets = [0, 0], sizes = [8, 8], strides = [1, 1]} : vector<8x32xf32> to vector<8x8xf32>
    %15 = vector.extract_strided_slice %11 {offsets = [0, 0], sizes = [8, 8], strides = [1, 1]} : vector<8x32xf32> to vector<8x8xf32>
    %16 = arith.truncf %13 : vector<8x8xf32> to vector<8x8xbf16>
    %17 = arith.truncf %14 : vector<8x8xf32> to vector<8x8xbf16>
    %cst_8 = arith.constant dense<0.000000e+00> : vector<8x8xf32>
    %18 = tpu.matmul %16, %17, %cst_8 {dimension_numbers = #tpu.dot_dimension_numbers<[1], [1], [0], [0], [0, 0, 1, 0], [], []>} : vector<8x8xbf16>, vector<8x8xbf16>, vector<8x8xf32> -> vector<8x8xf32>
    %cst_9 = arith.constant 0.353553385 : f32
    %19 = vector.broadcast %cst_9 : f32 to vector<8x8xf32>
    %20 = arith.mulf %18, %19 : vector<8x8xf32>
    %cst_10 = arith.constant dense<0xFF800000> : vector<8xf32>
    %21 = vector.multi_reduction <maximumf>, %20, %cst_10 [1] : vector<8x8xf32> to vector<8xf32>
    %22 = vector.shape_cast %21 : vector<8xf32> to vector<8x1xf32>
    %23 = vector.broadcast %22 : vector<8x1xf32> to vector<8x8xf32>
    %24 = arith.subf %20, %23 : vector<8x8xf32>
    %25 = math.exp %24 : vector<8x8xf32>
    %cst_11 = arith.constant dense<0.000000e+00> : vector<8xf32>
    %26 = vector.multi_reduction <add>, %25, %cst_11 [1] : vector<8x8xf32> to vector<8xf32>
    %27 = vector.shape_cast %26 : vector<8xf32> to vector<8x1xf32>
    %28 = tpu.reciprocal %27 {approx = true} : vector<8x1xf32> -> vector<8x1xf32>
    %29 = vector.broadcast %28 : vector<8x1xf32> to vector<8x8xf32>
    %30 = arith.mulf %25, %29 : vector<8x8xf32>
    %31 = arith.truncf %30 : vector<8x8xf32> to vector<8x8xbf16>
    %32 = arith.truncf %15 : vector<8x8xf32> to vector<8x8xbf16>
    %cst_12 = arith.constant dense<0.000000e+00> : vector<8x8xf32>
    %33 = tpu.matmul %31, %32, %cst_12 {dimension_numbers = #tpu.dot_dimension_numbers<[1], [0], [0], [1], [0, 0, 1, 1], [], []>} : vector<8x8xbf16>, vector<8x8xbf16>, vector<8x8xf32> -> vector<8x8xf32>
    %34 = vector.extract_strided_slice %9 {offsets = [0, 8], sizes = [8, 8], strides = [1, 1]} : vector<8x32xf32> to vector<8x8xf32>
    %35 = vector.extract_strided_slice %10 {offsets = [0, 8], sizes = [8, 8], strides = [1, 1]} : vector<8x32xf32> to vector<8x8xf32>
    %36 = vector.extract_strided_slice %11 {offsets = [0, 8], sizes = [8, 8], strides = [1, 1]} : vector<8x32xf32> to vector<8x8xf32>
    %37 = arith.truncf %34 : vector<8x8xf32> to vector<8x8xbf16>
    %38 = arith.truncf %35 : vector<8x8xf32> to vector<8x8xbf16>
    %cst_13 = arith.constant dense<0.000000e+00> : vector<8x8xf32>
    %39 = tpu.matmul %37, %38, %cst_13 {dimension_numbers = #tpu.dot_dimension_numbers<[1], [1], [0], [0], [0, 0, 1, 0], [], []>} : vector<8x8xbf16>, vector<8x8xbf16>, vector<8x8xf32> -> vector<8x8xf32>
    %cst_14 = arith.constant 0.353553385 : f32
    %40 = vector.broadcast %cst_14 : f32 to vector<8x8xf32>
    %41 = arith.mulf %39, %40 : vector<8x8xf32>
    %cst_15 = arith.constant dense<0xFF800000> : vector<8xf32>
    %42 = vector.multi_reduction <maximumf>, %41, %cst_15 [1] : vector<8x8xf32> to vector<8xf32>
    %43 = vector.shape_cast %42 : vector<8xf32> to vector<8x1xf32>
    %44 = vector.broadcast %43 : vector<8x1xf32> to vector<8x8xf32>
    %45 = arith.subf %41, %44 : vector<8x8xf32>
    %46 = math.exp %45 : vector<8x8xf32>
    %cst_16 = arith.constant dense<0.000000e+00> : vector<8xf32>
    %47 = vector.multi_reduction <add>, %46, %cst_16 [1] : vector<8x8xf32> to vector<8xf32>
    %48 = vector.shape_cast %47 : vector<8xf32> to vector<8x1xf32>
    %49 = tpu.reciprocal %48 {approx = true} : vector<8x1xf32> -> vector<8x1xf32>
    %50 = vector.broadcast %49 : vector<8x1xf32> to vector<8x8xf32>
    %51 = arith.mulf %46, %50 : vector<8x8xf32>
    %52 = arith.truncf %51 : vector<8x8xf32> to vector<8x8xbf16>
    %53 = arith.truncf %36 : vector<8x8xf32> to vector<8x8xbf16>
    %cst_17 = arith.constant dense<0.000000e+00> : vector<8x8xf32>
    %54 = tpu.matmul %52, %53, %cst_17 {dimension_numbers = #tpu.dot_dimension_numbers<[1], [0], [0], [1], [0, 0, 1, 1], [], []>} : vector<8x8xbf16>, vector<8x8xbf16>, vector<8x8xf32> -> vector<8x8xf32>
    %55 = vector.extract_strided_slice %9 {offsets = [0, 16], sizes = [8, 8], strides = [1, 1]} : vector<8x32xf32> to vector<8x8xf32>
    %56 = vector.extract_strided_slice %10 {offsets = [0, 16], sizes = [8, 8], strides = [1, 1]} : vector<8x32xf32> to vector<8x8xf32>
    %57 = vector.extract_strided_slice %11 {offsets = [0, 16], sizes = [8, 8], strides = [1, 1]} : vector<8x32xf32> to vector<8x8xf32>
    %58 = arith.truncf %55 : vector<8x8xf32> to vector<8x8xbf16>
    %59 = arith.truncf %56 : vector<8x8xf32> to vector<8x8xbf16>
    %cst_18 = arith.constant dense<0.000000e+00> : vector<8x8xf32>
    %60 = tpu.matmul %58, %59, %cst_18 {dimension_numbers = #tpu.dot_dimension_numbers<[1], [1], [0], [0], [0, 0, 1, 0], [], []>} : vector<8x8xbf16>, vector<8x8xbf16>, vector<8x8xf32> -> vector<8x8xf32>
    %cst_19 = arith.constant 0.353553385 : f32
    %61 = vector.broadcast %cst_19 : f32 to vector<8x8xf32>
    %62 = arith.mulf %60, %61 : vector<8x8xf32>
    %cst_20 = arith.constant dense<0xFF800000> : vector<8xf32>
    %63 = vector.multi_reduction <maximumf>, %62, %cst_20 [1] : vector<8x8xf32> to vector<8xf32>
    %64 = vector.shape_cast %63 : vector<8xf32> to vector<8x1xf32>
    %65 = vector.broadcast %64 : vector<8x1xf32> to vector<8x8xf32>
    %66 = arith.subf %62, %65 : vector<8x8xf32>
    %67 = math.exp %66 : vector<8x8xf32>
    %cst_21 = arith.constant dense<0.000000e+00> : vector<8xf32>
    %68 = vector.multi_reduction <add>, %67, %cst_21 [1] : vector<8x8xf32> to vector<8xf32>
    %69 = vector.shape_cast %68 : vector<8xf32> to vector<8x1xf32>
    %70 = tpu.reciprocal %69 {approx = true} : vector<8x1xf32> -> vector<8x1xf32>
    %71 = vector.broadcast %70 : vector<8x1xf32> to vector<8x8xf32>
    %72 = arith.mulf %67, %71 : vector<8x8xf32>
    %73 = arith.truncf %72 : vector<8x8xf32> to vector<8x8xbf16>
    %74 = arith.truncf %57 : vector<8x8xf32> to vector<8x8xbf16>
    %cst_22 = arith.constant dense<0.000000e+00> : vector<8x8xf32>
    %75 = tpu.matmul %73, %74, %cst_22 {dimension_numbers = #tpu.dot_dimension_numbers<[1], [0], [0], [1], [0, 0, 1, 1], [], []>} : vector<8x8xbf16>, vector<8x8xbf16>, vector<8x8xf32> -> vector<8x8xf32>
    %76 = vector.extract_strided_slice %9 {offsets = [0, 24], sizes = [8, 8], strides = [1, 1]} : vector<8x32xf32> to vector<8x8xf32>
    %77 = vector.extract_strided_slice %10 {offsets = [0, 24], sizes = [8, 8], strides = [1, 1]} : vector<8x32xf32> to vector<8x8xf32>
    %78 = vector.extract_strided_slice %11 {offsets = [0, 24], sizes = [8, 8], strides = [1, 1]} : vector<8x32xf32> to vector<8x8xf32>
    %79 = arith.truncf %76 : vector<8x8xf32> to vector<8x8xbf16>
    %80 = arith.truncf %77 : vector<8x8xf32> to vector<8x8xbf16>
    %cst_23 = arith.constant dense<0.000000e+00> : vector<8x8xf32>
    %81 = tpu.matmul %79, %80, %cst_23 {dimension_numbers = #tpu.dot_dimension_numbers<[1], [1], [0], [0], [0, 0, 1, 0], [], []>} : vector<8x8xbf16>, vector<8x8xbf16>, vector<8x8xf32> -> vector<8x8xf32>
    %cst_24 = arith.constant 0.353553385 : f32
    %82 = vector.broadcast %cst_24 : f32 to vector<8x8xf32>
    %83 = arith.mulf %81, %82 : vector<8x8xf32>
    %cst_25 = arith.constant dense<0xFF800000> : vector<8xf32>
    %84 = vector.multi_reduction <maximumf>, %83, %cst_25 [1] : vector<8x8xf32> to vector<8xf32>
    %85 = vector.shape_cast %84 : vector<8xf32> to vector<8x1xf32>
    %86 = vector.broadcast %85 : vector<8x1xf32> to vector<8x8xf32>
    %87 = arith.subf %83, %86 : vector<8x8xf32>
    %88 = math.exp %87 : vector<8x8xf32>
    %cst_26 = arith.constant dense<0.000000e+00> : vector<8xf32>
    %89 = vector.multi_reduction <add>, %88, %cst_26 [1] : vector<8x8xf32> to vector<8xf32>
    %90 = vector.shape_cast %89 : vector<8xf32> to vector<8x1xf32>
    %91 = tpu.reciprocal %90 {approx = true} : vector<8x1xf32> -> vector<8x1xf32>
    %92 = vector.broadcast %91 : vector<8x1xf32> to vector<8x8xf32>
    %93 = arith.mulf %88, %92 : vector<8x8xf32>
    %94 = arith.truncf %93 : vector<8x8xf32> to vector<8x8xbf16>
    %95 = arith.truncf %78 : vector<8x8xf32> to vector<8x8xbf16>
    %cst_27 = arith.constant dense<0.000000e+00> : vector<8x8xf32>
    %96 = tpu.matmul %94, %95, %cst_27 {dimension_numbers = #tpu.dot_dimension_numbers<[1], [0], [0], [1], [0, 0, 1, 1], [], []>} : vector<8x8xbf16>, vector<8x8xbf16>, vector<8x8xf32> -> vector<8x8xf32>
    %97 = tpu.concatenate %33, %54, %75, %96 in 1 : vector<8x8xf32>, vector<8x8xf32>, vector<8x8xf32>, vector<8x8xf32> -> vector<8x32xf32>
    %98 = arith.truncf %97 : vector<8x32xf32> to vector<8x32xbf16>
    %cst_28 = arith.constant dense<0.000000e+00> : vector<8x32xf32>
    %99 = tpu.matmul %98, %12, %cst_28 {dimension_numbers = #tpu.dot_dimension_numbers<[1], [0], [0], [1], [0, 0, 1, 1], [], []>} : vector<8x32xbf16>, vector<32x32xbf16>, vector<8x32xf32> -> vector<8x32xf32>
    %c0_29 = arith.constant 0 : index
    %c0_30 = arith.constant 0 : index
    %100 = vector.load %arg5[%c0_29, %c0_30] : memref<1x32xf32, #tpu.memory_space<vmem>>, vector<1x32xf32>
    %101 = vector.broadcast %100 : vector<1x32xf32> to vector<8x32xf32>
    %102 = arith.addf %99, %101 : vector<8x32xf32>
    %103 = arith.addf %2, %102 : vector<8x32xf32>
    %c0_31 = arith.constant 0 : index
    %c0_32 = arith.constant 0 : index
    %104 = vector.load %arg6[%c0_31, %c0_32] : memref<1x32xf32, #tpu.memory_space<vmem>>, vector<1x32xf32>
    %c0_33 = arith.constant 0 : index
    %c0_34 = arith.constant 0 : index
    %105 = vector.load %arg7[%c0_33, %c0_34] : memref<1x32xf32, #tpu.memory_space<vmem>>, vector<1x32xf32>
    %cst_35 = arith.constant dense<0.000000e+00> : vector<8xf32>
    %106 = vector.multi_reduction <add>, %103, %cst_35 [1] : vector<8x32xf32> to vector<8xf32>
    %107 = vector.shape_cast %106 : vector<8xf32> to vector<8x1xf32>
    %cst_36 = arith.constant 3.200000e+01 : f32
    %108 = vector.broadcast %cst_36 : f32 to vector<8x1xf32>
    %109 = arith.divf %107, %108 : vector<8x1xf32>
    %110 = vector.broadcast %109 : vector<8x1xf32> to vector<8x32xf32>
    %111 = arith.subf %103, %110 : vector<8x32xf32>
    %112 = arith.mulf %111, %111 : vector<8x32xf32>
    %cst_37 = arith.constant dense<0.000000e+00> : vector<8xf32>
    %113 = vector.multi_reduction <add>, %112, %cst_37 [1] : vector<8x32xf32> to vector<8xf32>
    %114 = vector.shape_cast %113 : vector<8xf32> to vector<8x1xf32>
    %cst_38 = arith.constant 3.200000e+01 : f32
    %115 = vector.broadcast %cst_38 : f32 to vector<8x1xf32>
    %116 = arith.divf %114, %115 : vector<8x1xf32>
    %cst_39 = arith.constant 9.99999974E-6 : f32
    %117 = vector.broadcast %cst_39 : f32 to vector<8x1xf32>
    %118 = arith.addf %116, %117 : vector<8x1xf32>
    %119 = math.rsqrt %118 : vector<8x1xf32>
    %120 = vector.broadcast %119 : vector<8x1xf32> to vector<8x32xf32>
    %121 = arith.mulf %111, %120 : vector<8x32xf32>
    %122 = vector.broadcast %104 : vector<1x32xf32> to vector<8x32xf32>
    %123 = arith.mulf %121, %122 : vector<8x32xf32>
    %124 = vector.broadcast %105 : vector<1x32xf32> to vector<8x32xf32>
    %125 = arith.addf %123, %124 : vector<8x32xf32>
    %c0_40 = arith.constant 0 : index
    %c0_41 = arith.constant 0 : index
    %126 = vector.load %arg8[%c0_40, %c0_41] : memref<32x64xbf16, #tpu.memory_space<vmem>>, vector<32x64xbf16>
    %127 = arith.truncf %125 : vector<8x32xf32> to vector<8x32xbf16>
    %cst_42 = arith.constant dense<0.000000e+00> : vector<8x64xf32>
    %128 = tpu.matmul %127, %126, %cst_42 {dimension_numbers = #tpu.dot_dimension_numbers<[1], [0], [0], [1], [0, 0, 1, 1], [], []>} : vector<8x32xbf16>, vector<32x64xbf16>, vector<8x64xf32> -> vector<8x64xf32>
    %c0_43 = arith.constant 0 : index
    %c0_44 = arith.constant 0 : index
    %129 = vector.load %arg9[%c0_43, %c0_44] : memref<1x64xf32, #tpu.memory_space<vmem>>, vector<1x64xf32>
    %130 = vector.broadcast %129 : vector<1x64xf32> to vector<8x64xf32>
    %131 = arith.addf %128, %130 : vector<8x64xf32>
    %cst_45 = arith.constant 0.000000e+00 : f32
    %132 = vector.broadcast %cst_45 : f32 to vector<8x64xf32>
    %133 = arith.maximumf %131, %132 : vector<8x64xf32>
    %c0_46 = arith.constant 0 : index
    %c0_47 = arith.constant 0 : index
    %134 = vector.load %arg10[%c0_46, %c0_47] : memref<64x32xbf16, #tpu.memory_space<vmem>>, vector<64x32xbf16>
    %135 = arith.truncf %133 : vector<8x64xf32> to vector<8x64xbf16>
    %cst_48 = arith.constant dense<0.000000e+00> : vector<8x32xf32>
    %136 = tpu.matmul %135, %134, %cst_48 {dimension_numbers = #tpu.dot_dimension_numbers<[1], [0], [0], [1], [0, 0, 1, 1], [], []>} : vector<8x64xbf16>, vector<64x32xbf16>, vector<8x32xf32> -> vector<8x32xf32>
    %c0_49 = arith.constant 0 : index
    %c0_50 = arith.constant 0 : index
    %137 = vector.load %arg11[%c0_49, %c0_50] : memref<1x32xf32, #tpu.memory_space<vmem>>, vector<1x32xf32>
    %138 = vector.broadcast %137 : vector<1x32xf32> to vector<8x32xf32>
    %139 = arith.addf %136, %138 : vector<8x32xf32>
    %140 = arith.addf %125, %139 : vector<8x32xf32>
    %c0_51 = arith.constant 0 : index
    %c0_52 = arith.constant 0 : index
    %141 = vector.load %arg12[%c0_51, %c0_52] : memref<1x32xf32, #tpu.memory_space<vmem>>, vector<1x32xf32>
    %c0_53 = arith.constant 0 : index
    %c0_54 = arith.constant 0 : index
    %142 = vector.load %arg13[%c0_53, %c0_54] : memref<1x32xf32, #tpu.memory_space<vmem>>, vector<1x32xf32>
    %cst_55 = arith.constant dense<0.000000e+00> : vector<8xf32>
    %143 = vector.multi_reduction <add>, %140, %cst_55 [1] : vector<8x32xf32> to vector<8xf32>
    %144 = vector.shape_cast %143 : vector<8xf32> to vector<8x1xf32>
    %cst_56 = arith.constant 3.200000e+01 : f32
    %145 = vector.broadcast %cst_56 : f32 to vector<8x1xf32>
    %146 = arith.divf %144, %145 : vector<8x1xf32>
    %147 = vector.broadcast %146 : vector<8x1xf32> to vector<8x32xf32>
    %148 = arith.subf %140, %147 : vector<8x32xf32>
    %149 = arith.mulf %148, %148 : vector<8x32xf32>
    %cst_57 = arith.constant dense<0.000000e+00> : vector<8xf32>
    %150 = vector.multi_reduction <add>, %149, %cst_57 [1] : vector<8x32xf32> to vector<8xf32>
    %151 = vector.shape_cast %150 : vector<8xf32> to vector<8x1xf32>
    %cst_58 = arith.constant 3.200000e+01 : f32
    %152 = vector.broadcast %cst_58 : f32 to vector<8x1xf32>
    %153 = arith.divf %151, %152 : vector<8x1xf32>
    %cst_59 = arith.constant 9.99999974E-6 : f32
    %154 = vector.broadcast %cst_59 : f32 to vector<8x1xf32>
    %155 = arith.addf %153, %154 : vector<8x1xf32>
    %156 = math.rsqrt %155 : vector<8x1xf32>
    %157 = vector.broadcast %156 : vector<8x1xf32> to vector<8x32xf32>
    %158 = arith.mulf %148, %157 : vector<8x32xf32>
    %159 = vector.broadcast %141 : vector<1x32xf32> to vector<8x32xf32>
    %160 = arith.mulf %158, %159 : vector<8x32xf32>
    %161 = vector.broadcast %142 : vector<1x32xf32> to vector<8x32xf32>
    %162 = arith.addf %160, %161 : vector<8x32xf32>
    %163 = arith.truncf %162 : vector<8x32xf32> to vector<8x32xbf16>
    %c0_60 = arith.constant 0 : index
    %c0_61 = arith.constant 0 : index
    %c0_62 = arith.constant 0 : index
    %164 = vector.load %arg14[%c0_60, %c0_61, %c0_62] : memref<1x8x32xbf16, #tpu.memory_space<vmem>>, vector<1x8x32xbf16>
    %165 = vector.shape_cast %164 : vector<1x8x32xbf16> to vector<8x32xbf16>
    %166 = vector.shape_cast %163 : vector<8x32xbf16> to vector<1x8x32xbf16>
    tpu.vector_store %arg14[%c0_60, %c0_61, %c0_62], %166 {strides = array<i32>} : memref<1x8x32xbf16, #tpu.memory_space<vmem>>, vector<1x8x32xbf16>,
    return
  }
  func.func @transform_0(%arg0: i32) -> (i32, i32, i32) {
    %c0_i32 = arith.constant 0 : i32
    %c0_i32_0 = arith.constant 0 : i32
    %c0_i32_1 = arith.constant 0 : i32
    return %arg0, %c0_i32, %c0_i32_0 : i32, i32, i32
  }
  func.func @transform_1(%arg0: i32) -> (i32, i32) {
    %c0_i32 = arith.constant 0 : i32
    %c0_i32_0 = arith.constant 0 : i32
    %c0_i32_1 = arith.constant 0 : i32
    return %c0_i32, %c0_i32_0 : i32, i32
  }
  func.func @transform_2(%arg0: i32) -> (i32, i32) {
    %c0_i32 = arith.constant 0 : i32
    %c0_i32_0 = arith.constant 0 : i32
    %c0_i32_1 = arith.constant 0 : i32
    return %c0_i32, %c0_i32_0 : i32, i32
  }
  func.func @transform_3(%arg0: i32) -> (i32, i32) {
    %c0_i32 = arith.constant 0 : i32
    %c0_i32_0 = arith.constant 0 : i32
    %c0_i32_1 = arith.constant 0 : i32
    return %c0_i32, %c0_i32_0 : i32, i32
  }
  func.func @transform_4(%arg0: i32) -> (i32, i32) {
    %c0_i32 = arith.constant 0 : i32
    %c0_i32_0 = arith.constant 0 : i32
    %c0_i32_1 = arith.constant 0 : i32
    return %c0_i32, %c0_i32_0 : i32, i32
  }
  func.func @transform_5(%arg0: i32) -> (i32, i32) {
    %c0_i32 = arith.constant 0 : i32
    %c0_i32_0 = arith.constant 0 : i32
    %c0_i32_1 = arith.constant 0 : i32
    return %c0_i32, %c0_i32_0 : i32, i32
  }
  func.func @transform_6(%arg0: i32) -> (i32, i32) {
    %c0_i32 = arith.constant 0 : i32
    %c0_i32_0 = arith.constant 0 : i32
    %c0_i32_1 = arith.constant 0 : i32
    return %c0_i32, %c0_i32_0 : i32, i32
  }
  func.func @transform_7(%arg0: i32) -> (i32, i32) {
    %c0_i32 = arith.constant 0 : i32
    %c0_i32_0 = arith.constant 0 : i32
    %c0_i32_1 = arith.constant 0 : i32
    return %c0_i32, %c0_i32_0 : i32, i32
  }
  func.func @transform_8(%arg0: i32) -> (i32, i32) {
    %c0_i32 = arith.constant 0 : i32
    %c0_i32_0 = arith.constant 0 : i32
    %c0_i32_1 = arith.constant 0 : i32
    return %c0_i32, %c0_i32_0 : i32, i32
  }
  func.func @transform_9(%arg0: i32) -> (i32, i32) {
    %c0_i32 = arith.constant 0 : i32
    %c0_i32_0 = arith.constant 0 : i32
    %c0_i32_1 = arith.constant 0 : i32
    return %c0_i32, %c0_i32_0 : i32, i32
  }
  func.func @transform_10(%arg0: i32) -> (i32, i32) {
    %c0_i32 = arith.constant 0 : i32
    %c0_i32_0 = arith.constant 0 : i32
    %c0_i32_1 = arith.constant 0 : i32
    return %c0_i32, %c0_i32_0 : i32, i32
  }
  func.func @transform_11(%arg0: i32) -> (i32, i32) {
    %c0_i32 = arith.constant 0 : i32
    %c0_i32_0 = arith.constant 0 : i32
    %c0_i32_1 = arith.constant 0 : i32
    return %c0_i32, %c0_i32_0 : i32, i32
  }
  func.func @transform_12(%arg0: i32) -> (i32, i32) {
    %c0_i32 = arith.constant 0 : i32
    %c0_i32_0 = arith.constant 0 : i32
    %c0_i32_1 = arith.constant 0 : i32
    return %c0_i32, %c0_i32_0 : i32, i32
  }
  func.func @transform_13(%arg0: i32) -> (i32, i32, i32) {
    %c0_i32 = arith.constant 0 : i32
    %c0_i32_0 = arith.constant 0 : i32
    %c0_i32_1 = arith.constant 0 : i32
    return %arg0, %c0_i32, %c0_i32_0 : i32, i32, i32
  }
}

module attributes {stable_mosaic.version = 11 : i64} {
  func.func @_encoder_layer_kernel(%arg0: i32, %arg1: memref<1x8x32xbf16, #tpu.memory_space<vmem>>, %arg2: memref<32x96xbf16, #tpu.memory_space<vmem>>, %arg3: memref<1x96xf32, #tpu.memory_space<vmem>>, %arg4: memref<32x32xbf16, #tpu.memory_space<vmem>>, %arg5: memref<1x32xf32, #tpu.memory_space<vmem>>, %arg6: memref<1x32xf32, #tpu.memory_space<vmem>>, %arg7: memref<1x32xf32, #tpu.memory_space<vmem>>, %arg8: memref<32x64xbf16, #tpu.memory_space<vmem>>, %arg9: memref<1x64xf32, #tpu.memory_space<vmem>>, %arg10: memref<64x32xbf16, #tpu.memory_space<vmem>>, %arg11: memref<1x32xf32, #tpu.memory_space<vmem>>, %arg12: memref<1x32xf32, #tpu.memory_space<vmem>>, %arg13: memref<1x32xf32, #tpu.memory_space<vmem>>, %arg14: memref<1x32xf32, #tpu.memory_space<vmem>>, %arg15: memref<1x32xf32, #tpu.memory_space<vmem>>, %arg16: memref<1x8x32xbf16, #tpu.memory_space<vmem>>) attributes {dimension_semantics = [#tpu.dimension_semantics<parallel>], iteration_bounds = array<i64: 2>, scalar_prefetch = 0 : i64, scratch_operands = 0 : i64, tpu.core_type = #tpu.core_type<tc>, window_params = [{transform_indices = @transform_0, window_bounds = array<i64: 1, 8, 32>}, {pipeline_mode = #tpu.pipeline_mode<synchronous>, transform_indices = @transform_1, window_bounds = array<i64: 32, 96>}, {pipeline_mode = #tpu.pipeline_mode<synchronous>, transform_indices = @transform_2, window_bounds = array<i64: 1, 96>}, {pipeline_mode = #tpu.pipeline_mode<synchronous>, transform_indices = @transform_3, window_bounds = array<i64: 32, 32>}, {pipeline_mode = #tpu.pipeline_mode<synchronous>, transform_indices = @transform_4, window_bounds = array<i64: 1, 32>}, {pipeline_mode = #tpu.pipeline_mode<synchronous>, transform_indices = @transform_5, window_bounds = array<i64: 1, 32>}, {pipeline_mode = #tpu.pipeline_mode<synchronous>, transform_indices = @transform_6, window_bounds = array<i64: 1, 32>}, {pipeline_mode = #tpu.pipeline_mode<synchronous>, transform_indices = @transform_7, window_bounds = array<i64: 32, 64>}, {pipeline_mode = #tpu.pipeline_mode<synchronous>, transform_indices = @transform_8, window_bounds = array<i64: 1, 64>}, {pipeline_mode = #tpu.pipeline_mode<synchronous>, transform_indices = @transform_9, window_bounds = array<i64: 64, 32>}, {pipeline_mode = #tpu.pipeline_mode<synchronous>, transform_indices = @transform_10, window_bounds = array<i64: 1, 32>}, {pipeline_mode = #tpu.pipeline_mode<synchronous>, transform_indices = @transform_11, window_bounds = array<i64: 1, 32>}, {pipeline_mode = #tpu.pipeline_mode<synchronous>, transform_indices = @transform_12, window_bounds = array<i64: 1, 32>}, {pipeline_mode = #tpu.pipeline_mode<synchronous>, transform_indices = @transform_13, window_bounds = array<i64: 1, 32>}, {pipeline_mode = #tpu.pipeline_mode<synchronous>, transform_indices = @transform_14, window_bounds = array<i64: 1, 32>}, {transform_indices = @transform_15, window_bounds = array<i64: 1, 8, 32>}]} {
    %c0 = arith.constant 0 : index
    %c0_0 = arith.constant 0 : index
    %c0_1 = arith.constant 0 : index
    %0 = vector.load %arg1[%c0, %c0_0, %c0_1] : memref<1x8x32xbf16, #tpu.memory_space<vmem>>, vector<1x8x32xbf16>
    %1 = vector.shape_cast %0 : vector<1x8x32xbf16> to vector<8x32xbf16>
    %2 = arith.extf %1 : vector<8x32xbf16> to vector<8x32xf32>
    %c0_2 = arith.constant 0 : index
    %c0_3 = arith.constant 0 : index
    %3 = vector.load %arg2[%c0_2, %c0_3] : memref<32x96xbf16, #tpu.memory_space<vmem>>, vector<32x96xbf16>
    %4 = arith.truncf %2 : vector<8x32xf32> to vector<8x32xbf16>
    %cst = arith.constant dense<0.000000e+00> : vector<8x96xf32>
    %5 = tpu.matmul %4, %3, %cst {dimension_numbers = #tpu.dot_dimension_numbers<[1], [0], [0], [1], [0, 0, 1, 1], [], []>} : vector<8x32xbf16>, vector<32x96xbf16>, vector<8x96xf32> -> vector<8x96xf32>
    %c0_4 = arith.constant 0 : index
    %c0_5 = arith.constant 0 : index
    %6 = vector.load %arg3[%c0_4, %c0_5] : memref<1x96xf32, #tpu.memory_space<vmem>>, vector<1x96xf32>
    %7 = vector.broadcast %6 : vector<1x96xf32> to vector<8x96xf32>
    %8 = arith.addf %5, %7 : vector<8x96xf32>
    %9 = vector.extract_strided_slice %8 {offsets = [0, 0], sizes = [8, 32], strides = [1, 1]} : vector<8x96xf32> to vector<8x32xf32>
    %10 = vector.extract_strided_slice %8 {offsets = [0, 32], sizes = [8, 32], strides = [1, 1]} : vector<8x96xf32> to vector<8x32xf32>
    %11 = vector.extract_strided_slice %8 {offsets = [0, 64], sizes = [8, 32], strides = [1, 1]} : vector<8x96xf32> to vector<8x32xf32>
    %c0_6 = arith.constant 0 : index
    %c0_7 = arith.constant 0 : index
    %12 = vector.load %arg4[%c0_6, %c0_7] : memref<32x32xbf16, #tpu.memory_space<vmem>>, vector<32x32xbf16>
    %13 = vector.extract_strided_slice %9 {offsets = [0, 0], sizes = [8, 8], strides = [1, 1]} : vector<8x32xf32> to vector<8x8xf32>
    %14 = vector.extract_strided_slice %10 {offsets = [0, 0], sizes = [8, 8], strides = [1, 1]} : vector<8x32xf32> to vector<8x8xf32>
    %15 = vector.extract_strided_slice %11 {offsets = [0, 0], sizes = [8, 8], strides = [1, 1]} : vector<8x32xf32> to vector<8x8xf32>
    %16 = arith.truncf %13 : vector<8x8xf32> to vector<8x8xbf16>
    %17 = arith.truncf %14 : vector<8x8xf32> to vector<8x8xbf16>
    %cst_8 = arith.constant dense<0.000000e+00> : vector<8x8xf32>
    %18 = tpu.matmul %16, %17, %cst_8 {dimension_numbers = #tpu.dot_dimension_numbers<[1], [1], [0], [0], [0, 0, 1, 0], [], []>} : vector<8x8xbf16>, vector<8x8xbf16>, vector<8x8xf32> -> vector<8x8xf32>
    %cst_9 = arith.constant 0.353553385 : f32
    %19 = vector.broadcast %cst_9 : f32 to vector<8x8xf32>
    %20 = arith.mulf %18, %19 : vector<8x8xf32>
    %cst_10 = arith.constant dense<0xFF800000> : vector<8xf32>
    %21 = vector.multi_reduction <maximumf>, %20, %cst_10 [1] : vector<8x8xf32> to vector<8xf32>
    %22 = vector.shape_cast %21 : vector<8xf32> to vector<8x1xf32>
    %23 = vector.broadcast %22 : vector<8x1xf32> to vector<8x8xf32>
    %24 = arith.subf %20, %23 : vector<8x8xf32>
    %25 = math.exp %24 : vector<8x8xf32>
    %cst_11 = arith.constant dense<0.000000e+00> : vector<8xf32>
    %26 = vector.multi_reduction <add>, %25, %cst_11 [1] : vector<8x8xf32> to vector<8xf32>
    %27 = vector.shape_cast %26 : vector<8xf32> to vector<8x1xf32>
    %28 = tpu.reciprocal %27 {approx = true} : vector<8x1xf32> -> vector<8x1xf32>
    %29 = vector.broadcast %28 : vector<8x1xf32> to vector<8x8xf32>
    %30 = arith.mulf %25, %29 : vector<8x8xf32>
    %31 = arith.truncf %30 : vector<8x8xf32> to vector<8x8xbf16>
    %32 = arith.truncf %15 : vector<8x8xf32> to vector<8x8xbf16>
    %cst_12 = arith.constant dense<0.000000e+00> : vector<8x8xf32>
    %33 = tpu.matmul %31, %32, %cst_12 {dimension_numbers = #tpu.dot_dimension_numbers<[1], [0], [0], [1], [0, 0, 1, 1], [], []>} : vector<8x8xbf16>, vector<8x8xbf16>, vector<8x8xf32> -> vector<8x8xf32>
    %34 = vector.extract_strided_slice %9 {offsets = [0, 8], sizes = [8, 8], strides = [1, 1]} : vector<8x32xf32> to vector<8x8xf32>
    %35 = vector.extract_strided_slice %10 {offsets = [0, 8], sizes = [8, 8], strides = [1, 1]} : vector<8x32xf32> to vector<8x8xf32>
    %36 = vector.extract_strided_slice %11 {offsets = [0, 8], sizes = [8, 8], strides = [1, 1]} : vector<8x32xf32> to vector<8x8xf32>
    %37 = arith.truncf %34 : vector<8x8xf32> to vector<8x8xbf16>
    %38 = arith.truncf %35 : vector<8x8xf32> to vector<8x8xbf16>
    %cst_13 = arith.constant dense<0.000000e+00> : vector<8x8xf32>
    %39 = tpu.matmul %37, %38, %cst_13 {dimension_numbers = #tpu.dot_dimension_numbers<[1], [1], [0], [0], [0, 0, 1, 0], [], []>} : vector<8x8xbf16>, vector<8x8xbf16>, vector<8x8xf32> -> vector<8x8xf32>
    %cst_14 = arith.constant 0.353553385 : f32
    %40 = vector.broadcast %cst_14 : f32 to vector<8x8xf32>
    %41 = arith.mulf %39, %40 : vector<8x8xf32>
    %cst_15 = arith.constant dense<0xFF800000> : vector<8xf32>
    %42 = vector.multi_reduction <maximumf>, %41, %cst_15 [1] : vector<8x8xf32> to vector<8xf32>
    %43 = vector.shape_cast %42 : vector<8xf32> to vector<8x1xf32>
    %44 = vector.broadcast %43 : vector<8x1xf32> to vector<8x8xf32>
    %45 = arith.subf %41, %44 : vector<8x8xf32>
    %46 = math.exp %45 : vector<8x8xf32>
    %cst_16 = arith.constant dense<0.000000e+00> : vector<8xf32>
    %47 = vector.multi_reduction <add>, %46, %cst_16 [1] : vector<8x8xf32> to vector<8xf32>
    %48 = vector.shape_cast %47 : vector<8xf32> to vector<8x1xf32>
    %49 = tpu.reciprocal %48 {approx = true} : vector<8x1xf32> -> vector<8x1xf32>
    %50 = vector.broadcast %49 : vector<8x1xf32> to vector<8x8xf32>
    %51 = arith.mulf %46, %50 : vector<8x8xf32>
    %52 = arith.truncf %51 : vector<8x8xf32> to vector<8x8xbf16>
    %53 = arith.truncf %36 : vector<8x8xf32> to vector<8x8xbf16>
    %cst_17 = arith.constant dense<0.000000e+00> : vector<8x8xf32>
    %54 = tpu.matmul %52, %53, %cst_17 {dimension_numbers = #tpu.dot_dimension_numbers<[1], [0], [0], [1], [0, 0, 1, 1], [], []>} : vector<8x8xbf16>, vector<8x8xbf16>, vector<8x8xf32> -> vector<8x8xf32>
    %55 = vector.extract_strided_slice %9 {offsets = [0, 16], sizes = [8, 8], strides = [1, 1]} : vector<8x32xf32> to vector<8x8xf32>
    %56 = vector.extract_strided_slice %10 {offsets = [0, 16], sizes = [8, 8], strides = [1, 1]} : vector<8x32xf32> to vector<8x8xf32>
    %57 = vector.extract_strided_slice %11 {offsets = [0, 16], sizes = [8, 8], strides = [1, 1]} : vector<8x32xf32> to vector<8x8xf32>
    %58 = arith.truncf %55 : vector<8x8xf32> to vector<8x8xbf16>
    %59 = arith.truncf %56 : vector<8x8xf32> to vector<8x8xbf16>
    %cst_18 = arith.constant dense<0.000000e+00> : vector<8x8xf32>
    %60 = tpu.matmul %58, %59, %cst_18 {dimension_numbers = #tpu.dot_dimension_numbers<[1], [1], [0], [0], [0, 0, 1, 0], [], []>} : vector<8x8xbf16>, vector<8x8xbf16>, vector<8x8xf32> -> vector<8x8xf32>
    %cst_19 = arith.constant 0.353553385 : f32
    %61 = vector.broadcast %cst_19 : f32 to vector<8x8xf32>
    %62 = arith.mulf %60, %61 : vector<8x8xf32>
    %cst_20 = arith.constant dense<0xFF800000> : vector<8xf32>
    %63 = vector.multi_reduction <maximumf>, %62, %cst_20 [1] : vector<8x8xf32> to vector<8xf32>
    %64 = vector.shape_cast %63 : vector<8xf32> to vector<8x1xf32>
    %65 = vector.broadcast %64 : vector<8x1xf32> to vector<8x8xf32>
    %66 = arith.subf %62, %65 : vector<8x8xf32>
    %67 = math.exp %66 : vector<8x8xf32>
    %cst_21 = arith.constant dense<0.000000e+00> : vector<8xf32>
    %68 = vector.multi_reduction <add>, %67, %cst_21 [1] : vector<8x8xf32> to vector<8xf32>
    %69 = vector.shape_cast %68 : vector<8xf32> to vector<8x1xf32>
    %70 = tpu.reciprocal %69 {approx = true} : vector<8x1xf32> -> vector<8x1xf32>
    %71 = vector.broadcast %70 : vector<8x1xf32> to vector<8x8xf32>
    %72 = arith.mulf %67, %71 : vector<8x8xf32>
    %73 = arith.truncf %72 : vector<8x8xf32> to vector<8x8xbf16>
    %74 = arith.truncf %57 : vector<8x8xf32> to vector<8x8xbf16>
    %cst_22 = arith.constant dense<0.000000e+00> : vector<8x8xf32>
    %75 = tpu.matmul %73, %74, %cst_22 {dimension_numbers = #tpu.dot_dimension_numbers<[1], [0], [0], [1], [0, 0, 1, 1], [], []>} : vector<8x8xbf16>, vector<8x8xbf16>, vector<8x8xf32> -> vector<8x8xf32>
    %76 = vector.extract_strided_slice %9 {offsets = [0, 24], sizes = [8, 8], strides = [1, 1]} : vector<8x32xf32> to vector<8x8xf32>
    %77 = vector.extract_strided_slice %10 {offsets = [0, 24], sizes = [8, 8], strides = [1, 1]} : vector<8x32xf32> to vector<8x8xf32>
    %78 = vector.extract_strided_slice %11 {offsets = [0, 24], sizes = [8, 8], strides = [1, 1]} : vector<8x32xf32> to vector<8x8xf32>
    %79 = arith.truncf %76 : vector<8x8xf32> to vector<8x8xbf16>
    %80 = arith.truncf %77 : vector<8x8xf32> to vector<8x8xbf16>
    %cst_23 = arith.constant dense<0.000000e+00> : vector<8x8xf32>
    %81 = tpu.matmul %79, %80, %cst_23 {dimension_numbers = #tpu.dot_dimension_numbers<[1], [1], [0], [0], [0, 0, 1, 0], [], []>} : vector<8x8xbf16>, vector<8x8xbf16>, vector<8x8xf32> -> vector<8x8xf32>
    %cst_24 = arith.constant 0.353553385 : f32
    %82 = vector.broadcast %cst_24 : f32 to vector<8x8xf32>
    %83 = arith.mulf %81, %82 : vector<8x8xf32>
    %cst_25 = arith.constant dense<0xFF800000> : vector<8xf32>
    %84 = vector.multi_reduction <maximumf>, %83, %cst_25 [1] : vector<8x8xf32> to vector<8xf32>
    %85 = vector.shape_cast %84 : vector<8xf32> to vector<8x1xf32>
    %86 = vector.broadcast %85 : vector<8x1xf32> to vector<8x8xf32>
    %87 = arith.subf %83, %86 : vector<8x8xf32>
    %88 = math.exp %87 : vector<8x8xf32>
    %cst_26 = arith.constant dense<0.000000e+00> : vector<8xf32>
    %89 = vector.multi_reduction <add>, %88, %cst_26 [1] : vector<8x8xf32> to vector<8xf32>
    %90 = vector.shape_cast %89 : vector<8xf32> to vector<8x1xf32>
    %91 = tpu.reciprocal %90 {approx = true} : vector<8x1xf32> -> vector<8x1xf32>
    %92 = vector.broadcast %91 : vector<8x1xf32> to vector<8x8xf32>
    %93 = arith.mulf %88, %92 : vector<8x8xf32>
    %94 = arith.truncf %93 : vector<8x8xf32> to vector<8x8xbf16>
    %95 = arith.truncf %78 : vector<8x8xf32> to vector<8x8xbf16>
    %cst_27 = arith.constant dense<0.000000e+00> : vector<8x8xf32>
    %96 = tpu.matmul %94, %95, %cst_27 {dimension_numbers = #tpu.dot_dimension_numbers<[1], [0], [0], [1], [0, 0, 1, 1], [], []>} : vector<8x8xbf16>, vector<8x8xbf16>, vector<8x8xf32> -> vector<8x8xf32>
    %97 = tpu.concatenate %33, %54, %75, %96 in 1 : vector<8x8xf32>, vector<8x8xf32>, vector<8x8xf32>, vector<8x8xf32> -> vector<8x32xf32>
    %98 = arith.truncf %97 : vector<8x32xf32> to vector<8x32xbf16>
    %cst_28 = arith.constant dense<0.000000e+00> : vector<8x32xf32>
    %99 = tpu.matmul %98, %12, %cst_28 {dimension_numbers = #tpu.dot_dimension_numbers<[1], [0], [0], [1], [0, 0, 1, 1], [], []>} : vector<8x32xbf16>, vector<32x32xbf16>, vector<8x32xf32> -> vector<8x32xf32>
    %c0_29 = arith.constant 0 : index
    %c0_30 = arith.constant 0 : index
    %100 = vector.load %arg5[%c0_29, %c0_30] : memref<1x32xf32, #tpu.memory_space<vmem>>, vector<1x32xf32>
    %101 = vector.broadcast %100 : vector<1x32xf32> to vector<8x32xf32>
    %102 = arith.addf %99, %101 : vector<8x32xf32>
    %103 = arith.addf %2, %102 : vector<8x32xf32>
    %c0_31 = arith.constant 0 : index
    %c0_32 = arith.constant 0 : index
    %104 = vector.load %arg6[%c0_31, %c0_32] : memref<1x32xf32, #tpu.memory_space<vmem>>, vector<1x32xf32>
    %c0_33 = arith.constant 0 : index
    %c0_34 = arith.constant 0 : index
    %105 = vector.load %arg7[%c0_33, %c0_34] : memref<1x32xf32, #tpu.memory_space<vmem>>, vector<1x32xf32>
    %cst_35 = arith.constant dense<0.000000e+00> : vector<8xf32>
    %106 = vector.multi_reduction <add>, %103, %cst_35 [1] : vector<8x32xf32> to vector<8xf32>
    %107 = vector.shape_cast %106 : vector<8xf32> to vector<8x1xf32>
    %cst_36 = arith.constant 3.200000e+01 : f32
    %108 = vector.broadcast %cst_36 : f32 to vector<8x1xf32>
    %109 = arith.divf %107, %108 : vector<8x1xf32>
    %110 = vector.broadcast %109 : vector<8x1xf32> to vector<8x32xf32>
    %111 = arith.subf %103, %110 : vector<8x32xf32>
    %112 = arith.mulf %111, %111 : vector<8x32xf32>
    %cst_37 = arith.constant dense<0.000000e+00> : vector<8xf32>
    %113 = vector.multi_reduction <add>, %112, %cst_37 [1] : vector<8x32xf32> to vector<8xf32>
    %114 = vector.shape_cast %113 : vector<8xf32> to vector<8x1xf32>
    %cst_38 = arith.constant 3.200000e+01 : f32
    %115 = vector.broadcast %cst_38 : f32 to vector<8x1xf32>
    %116 = arith.divf %114, %115 : vector<8x1xf32>
    %cst_39 = arith.constant 9.99999974E-6 : f32
    %117 = vector.broadcast %cst_39 : f32 to vector<8x1xf32>
    %118 = arith.addf %116, %117 : vector<8x1xf32>
    %119 = math.rsqrt %118 : vector<8x1xf32>
    %120 = vector.broadcast %119 : vector<8x1xf32> to vector<8x32xf32>
    %121 = arith.mulf %111, %120 : vector<8x32xf32>
    %122 = vector.broadcast %104 : vector<1x32xf32> to vector<8x32xf32>
    %123 = arith.mulf %121, %122 : vector<8x32xf32>
    %124 = vector.broadcast %105 : vector<1x32xf32> to vector<8x32xf32>
    %125 = arith.addf %123, %124 : vector<8x32xf32>
    %c0_40 = arith.constant 0 : index
    %c0_41 = arith.constant 0 : index
    %126 = vector.load %arg8[%c0_40, %c0_41] : memref<32x64xbf16, #tpu.memory_space<vmem>>, vector<32x64xbf16>
    %127 = arith.truncf %125 : vector<8x32xf32> to vector<8x32xbf16>
    %cst_42 = arith.constant dense<0.000000e+00> : vector<8x64xf32>
    %128 = tpu.matmul %127, %126, %cst_42 {dimension_numbers = #tpu.dot_dimension_numbers<[1], [0], [0], [1], [0, 0, 1, 1], [], []>} : vector<8x32xbf16>, vector<32x64xbf16>, vector<8x64xf32> -> vector<8x64xf32>
    %c0_43 = arith.constant 0 : index
    %c0_44 = arith.constant 0 : index
    %129 = vector.load %arg9[%c0_43, %c0_44] : memref<1x64xf32, #tpu.memory_space<vmem>>, vector<1x64xf32>
    %130 = vector.broadcast %129 : vector<1x64xf32> to vector<8x64xf32>
    %131 = arith.addf %128, %130 : vector<8x64xf32>
    %cst_45 = arith.constant 0.000000e+00 : f32
    %132 = vector.broadcast %cst_45 : f32 to vector<8x64xf32>
    %133 = arith.maximumf %131, %132 : vector<8x64xf32>
    %c0_46 = arith.constant 0 : index
    %c0_47 = arith.constant 0 : index
    %134 = vector.load %arg10[%c0_46, %c0_47] : memref<64x32xbf16, #tpu.memory_space<vmem>>, vector<64x32xbf16>
    %135 = arith.truncf %133 : vector<8x64xf32> to vector<8x64xbf16>
    %cst_48 = arith.constant dense<0.000000e+00> : vector<8x32xf32>
    %136 = tpu.matmul %135, %134, %cst_48 {dimension_numbers = #tpu.dot_dimension_numbers<[1], [0], [0], [1], [0, 0, 1, 1], [], []>} : vector<8x64xbf16>, vector<64x32xbf16>, vector<8x32xf32> -> vector<8x32xf32>
    %c0_49 = arith.constant 0 : index
    %c0_50 = arith.constant 0 : index
    %137 = vector.load %arg11[%c0_49, %c0_50] : memref<1x32xf32, #tpu.memory_space<vmem>>, vector<1x32xf32>
    %138 = vector.broadcast %137 : vector<1x32xf32> to vector<8x32xf32>
    %139 = arith.addf %136, %138 : vector<8x32xf32>
    %140 = arith.addf %125, %139 : vector<8x32xf32>
    %c0_51 = arith.constant 0 : index
    %c0_52 = arith.constant 0 : index
    %141 = vector.load %arg12[%c0_51, %c0_52] : memref<1x32xf32, #tpu.memory_space<vmem>>, vector<1x32xf32>
    %c0_53 = arith.constant 0 : index
    %c0_54 = arith.constant 0 : index
    %142 = vector.load %arg13[%c0_53, %c0_54] : memref<1x32xf32, #tpu.memory_space<vmem>>, vector<1x32xf32>
    %cst_55 = arith.constant dense<0.000000e+00> : vector<8xf32>
    %143 = vector.multi_reduction <add>, %140, %cst_55 [1] : vector<8x32xf32> to vector<8xf32>
    %144 = vector.shape_cast %143 : vector<8xf32> to vector<8x1xf32>
    %cst_56 = arith.constant 3.200000e+01 : f32
    %145 = vector.broadcast %cst_56 : f32 to vector<8x1xf32>
    %146 = arith.divf %144, %145 : vector<8x1xf32>
    %147 = vector.broadcast %146 : vector<8x1xf32> to vector<8x32xf32>
    %148 = arith.subf %140, %147 : vector<8x32xf32>
    %149 = arith.mulf %148, %148 : vector<8x32xf32>
    %cst_57 = arith.constant dense<0.000000e+00> : vector<8xf32>
    %150 = vector.multi_reduction <add>, %149, %cst_57 [1] : vector<8x32xf32> to vector<8xf32>
    %151 = vector.shape_cast %150 : vector<8xf32> to vector<8x1xf32>
    %cst_58 = arith.constant 3.200000e+01 : f32
    %152 = vector.broadcast %cst_58 : f32 to vector<8x1xf32>
    %153 = arith.divf %151, %152 : vector<8x1xf32>
    %cst_59 = arith.constant 9.99999974E-6 : f32
    %154 = vector.broadcast %cst_59 : f32 to vector<8x1xf32>
    %155 = arith.addf %153, %154 : vector<8x1xf32>
    %156 = math.rsqrt %155 : vector<8x1xf32>
    %157 = vector.broadcast %156 : vector<8x1xf32> to vector<8x32xf32>
    %158 = arith.mulf %148, %157 : vector<8x32xf32>
    %159 = vector.broadcast %141 : vector<1x32xf32> to vector<8x32xf32>
    %160 = arith.mulf %158, %159 : vector<8x32xf32>
    %161 = vector.broadcast %142 : vector<1x32xf32> to vector<8x32xf32>
    %162 = arith.addf %160, %161 : vector<8x32xf32>
    %c0_60 = arith.constant 0 : index
    %c0_61 = arith.constant 0 : index
    %163 = vector.load %arg14[%c0_60, %c0_61] : memref<1x32xf32, #tpu.memory_space<vmem>>, vector<1x32xf32>
    %c0_62 = arith.constant 0 : index
    %c0_63 = arith.constant 0 : index
    %164 = vector.load %arg15[%c0_62, %c0_63] : memref<1x32xf32, #tpu.memory_space<vmem>>, vector<1x32xf32>
    %cst_64 = arith.constant dense<0.000000e+00> : vector<8xf32>
    %165 = vector.multi_reduction <add>, %162, %cst_64 [1] : vector<8x32xf32> to vector<8xf32>
    %166 = vector.shape_cast %165 : vector<8xf32> to vector<8x1xf32>
    %cst_65 = arith.constant 3.200000e+01 : f32
    %167 = vector.broadcast %cst_65 : f32 to vector<8x1xf32>
    %168 = arith.divf %166, %167 : vector<8x1xf32>
    %169 = vector.broadcast %168 : vector<8x1xf32> to vector<8x32xf32>
    %170 = arith.subf %162, %169 : vector<8x32xf32>
    %171 = arith.mulf %170, %170 : vector<8x32xf32>
    %cst_66 = arith.constant dense<0.000000e+00> : vector<8xf32>
    %172 = vector.multi_reduction <add>, %171, %cst_66 [1] : vector<8x32xf32> to vector<8xf32>
    %173 = vector.shape_cast %172 : vector<8xf32> to vector<8x1xf32>
    %cst_67 = arith.constant 3.200000e+01 : f32
    %174 = vector.broadcast %cst_67 : f32 to vector<8x1xf32>
    %175 = arith.divf %173, %174 : vector<8x1xf32>
    %cst_68 = arith.constant 9.99999974E-6 : f32
    %176 = vector.broadcast %cst_68 : f32 to vector<8x1xf32>
    %177 = arith.addf %175, %176 : vector<8x1xf32>
    %178 = math.rsqrt %177 : vector<8x1xf32>
    %179 = vector.broadcast %178 : vector<8x1xf32> to vector<8x32xf32>
    %180 = arith.mulf %170, %179 : vector<8x32xf32>
    %181 = vector.broadcast %163 : vector<1x32xf32> to vector<8x32xf32>
    %182 = arith.mulf %180, %181 : vector<8x32xf32>
    %183 = vector.broadcast %164 : vector<1x32xf32> to vector<8x32xf32>
    %184 = arith.addf %182, %183 : vector<8x32xf32>
    %185 = arith.truncf %184 : vector<8x32xf32> to vector<8x32xbf16>
    %c0_69 = arith.constant 0 : index
    %c0_70 = arith.constant 0 : index
    %c0_71 = arith.constant 0 : index
    %186 = vector.load %arg16[%c0_69, %c0_70, %c0_71] : memref<1x8x32xbf16, #tpu.memory_space<vmem>>, vector<1x8x32xbf16>
    %187 = vector.shape_cast %186 : vector<1x8x32xbf16> to vector<8x32xbf16>
    %188 = vector.shape_cast %185 : vector<8x32xbf16> to vector<1x8x32xbf16>
    tpu.vector_store %arg16[%c0_69, %c0_70, %c0_71], %188 {strides = array<i32>} : memref<1x8x32xbf16, #tpu.memory_space<vmem>>, vector<1x8x32xbf16>,
    return
  }
  func.func @transform_0(%arg0: i32) -> (i32, i32, i32) {
    %c0_i32 = arith.constant 0 : i32
    %c0_i32_0 = arith.constant 0 : i32
    %c0_i32_1 = arith.constant 0 : i32
    return %arg0, %c0_i32, %c0_i32_0 : i32, i32, i32
  }
  func.func @transform_1(%arg0: i32) -> (i32, i32) {
    %c0_i32 = arith.constant 0 : i32
    %c0_i32_0 = arith.constant 0 : i32
    %c0_i32_1 = arith.constant 0 : i32
    return %c0_i32, %c0_i32_0 : i32, i32
  }
  func.func @transform_2(%arg0: i32) -> (i32, i32) {
    %c0_i32 = arith.constant 0 : i32
    %c0_i32_0 = arith.constant 0 : i32
    %c0_i32_1 = arith.constant 0 : i32
    return %c0_i32, %c0_i32_0 : i32, i32
  }
  func.func @transform_3(%arg0: i32) -> (i32, i32) {
    %c0_i32 = arith.constant 0 : i32
    %c0_i32_0 = arith.constant 0 : i32
    %c0_i32_1 = arith.constant 0 : i32
    return %c0_i32, %c0_i32_0 : i32, i32
  }
  func.func @transform_4(%arg0: i32) -> (i32, i32) {
    %c0_i32 = arith.constant 0 : i32
    %c0_i32_0 = arith.constant 0 : i32
    %c0_i32_1 = arith.constant 0 : i32
    return %c0_i32, %c0_i32_0 : i32, i32
  }
  func.func @transform_5(%arg0: i32) -> (i32, i32) {
    %c0_i32 = arith.constant 0 : i32
    %c0_i32_0 = arith.constant 0 : i32
    %c0_i32_1 = arith.constant 0 : i32
    return %c0_i32, %c0_i32_0 : i32, i32
  }
  func.func @transform_6(%arg0: i32) -> (i32, i32) {
    %c0_i32 = arith.constant 0 : i32
    %c0_i32_0 = arith.constant 0 : i32
    %c0_i32_1 = arith.constant 0 : i32
    return %c0_i32, %c0_i32_0 : i32, i32
  }
  func.func @transform_7(%arg0: i32) -> (i32, i32) {
    %c0_i32 = arith.constant 0 : i32
    %c0_i32_0 = arith.constant 0 : i32
    %c0_i32_1 = arith.constant 0 : i32
    return %c0_i32, %c0_i32_0 : i32, i32
  }
  func.func @transform_8(%arg0: i32) -> (i32, i32) {
    %c0_i32 = arith.constant 0 : i32
    %c0_i32_0 = arith.constant 0 : i32
    %c0_i32_1 = arith.constant 0 : i32
    return %c0_i32, %c0_i32_0 : i32, i32
  }
  func.func @transform_9(%arg0: i32) -> (i32, i32) {
    %c0_i32 = arith.constant 0 : i32
    %c0_i32_0 = arith.constant 0 : i32
    %c0_i32_1 = arith.constant 0 : i32
    return %c0_i32, %c0_i32_0 : i32, i32
  }
  func.func @transform_10(%arg0: i32) -> (i32, i32) {
    %c0_i32 = arith.constant 0 : i32
    %c0_i32_0 = arith.constant 0 : i32
    %c0_i32_1 = arith.constant 0 : i32
    return %c0_i32, %c0_i32_0 : i32, i32
  }
  func.func @transform_11(%arg0: i32) -> (i32, i32) {
    %c0_i32 = arith.constant 0 : i32
    %c0_i32_0 = arith.constant 0 : i32
    %c0_i32_1 = arith.constant 0 : i32
    return %c0_i32, %c0_i32_0 : i32, i32
  }
  func.func @transform_12(%arg0: i32) -> (i32, i32) {
    %c0_i32 = arith.constant 0 : i32
    %c0_i32_0 = arith.constant 0 : i32
    %c0_i32_1 = arith.constant 0 : i32
    return %c0_i32, %c0_i32_0 : i32, i32
  }
  func.func @transform_13(%arg0: i32) -> (i32, i32) {
    %c0_i32 = arith.constant 0 : i32
    %c0_i32_0 = arith.constant 0 : i32
    %c0_i32_1 = arith.constant 0 : i32
    return %c0_i32, %c0_i32_0 : i32, i32
  }
  func.func @transform_14(%arg0: i32) -> (i32, i32) {
    %c0_i32 = arith.constant 0 : i32
    %c0_i32_0 = arith.constant 0 : i32
    %c0_i32_1 = arith.constant 0 : i32
    return %c0_i32, %c0_i32_0 : i32, i32
  }
  func.func @transform_15(%arg0: i32) -> (i32, i32, i32) {
    %c0_i32 = arith.constant 0 : i32
    %c0_i32_0 = arith.constant 0 : i32
    %c0_i32_1 = arith.constant 0 : i32
    return %arg0, %c0_i32, %c0_i32_0 : i32, i32, i32
  }
}

module attributes {stable_mosaic.version = 11 : i64} {
  func.func @_decoder_layer_kernel(%arg0: i32, %arg1: memref<1x8x32xbf16, #tpu.memory_space<vmem>>, %arg2: memref<1x8x32xbf16, #tpu.memory_space<vmem>>, %arg3: memref<8x8xf32, #tpu.memory_space<vmem>>, %arg4: memref<32x96xbf16, #tpu.memory_space<vmem>>, %arg5: memref<1x96xf32, #tpu.memory_space<vmem>>, %arg6: memref<32x32xbf16, #tpu.memory_space<vmem>>, %arg7: memref<1x32xf32, #tpu.memory_space<vmem>>, %arg8: memref<1x32xf32, #tpu.memory_space<vmem>>, %arg9: memref<1x32xf32, #tpu.memory_space<vmem>>, %arg10: memref<32x32xbf16, #tpu.memory_space<vmem>>, %arg11: memref<1x32xf32, #tpu.memory_space<vmem>>, %arg12: memref<32x64xbf16, #tpu.memory_space<vmem>>, %arg13: memref<1x64xf32, #tpu.memory_space<vmem>>, %arg14: memref<32x32xbf16, #tpu.memory_space<vmem>>, %arg15: memref<1x32xf32, #tpu.memory_space<vmem>>, %arg16: memref<1x32xf32, #tpu.memory_space<vmem>>, %arg17: memref<1x32xf32, #tpu.memory_space<vmem>>, %arg18: memref<32x64xbf16, #tpu.memory_space<vmem>>, %arg19: memref<1x64xf32, #tpu.memory_space<vmem>>, %arg20: memref<64x32xbf16, #tpu.memory_space<vmem>>, %arg21: memref<1x32xf32, #tpu.memory_space<vmem>>, %arg22: memref<1x32xf32, #tpu.memory_space<vmem>>, %arg23: memref<1x32xf32, #tpu.memory_space<vmem>>, %arg24: memref<1x8x32xbf16, #tpu.memory_space<vmem>>) attributes {dimension_semantics = [#tpu.dimension_semantics<parallel>], iteration_bounds = array<i64: 2>, scalar_prefetch = 0 : i64, scratch_operands = 0 : i64, tpu.core_type = #tpu.core_type<tc>, window_params = [{transform_indices = @transform_0, window_bounds = array<i64: 1, 8, 32>}, {transform_indices = @transform_1, window_bounds = array<i64: 1, 8, 32>}, {pipeline_mode = #tpu.pipeline_mode<synchronous>, transform_indices = @transform_2, window_bounds = array<i64: 8, 8>}, {pipeline_mode = #tpu.pipeline_mode<synchronous>, transform_indices = @transform_3, window_bounds = array<i64: 32, 96>}, {pipeline_mode = #tpu.pipeline_mode<synchronous>, transform_indices = @transform_4, window_bounds = array<i64: 1, 96>}, {pipeline_mode = #tpu.pipeline_mode<synchronous>, transform_indices = @transform_5, window_bounds = array<i64: 32, 32>}, {pipeline_mode = #tpu.pipeline_mode<synchronous>, transform_indices = @transform_6, window_bounds = array<i64: 1, 32>}, {pipeline_mode = #tpu.pipeline_mode<synchronous>, transform_indices = @transform_7, window_bounds = array<i64: 1, 32>}, {pipeline_mode = #tpu.pipeline_mode<synchronous>, transform_indices = @transform_8, window_bounds = array<i64: 1, 32>}, {pipeline_mode = #tpu.pipeline_mode<synchronous>, transform_indices = @transform_9, window_bounds = array<i64: 32, 32>}, {pipeline_mode = #tpu.pipeline_mode<synchronous>, transform_indices = @transform_10, window_bounds = array<i64: 1, 32>}, {pipeline_mode = #tpu.pipeline_mode<synchronous>, transform_indices = @transform_11, window_bounds = array<i64: 32, 64>}, {pipeline_mode = #tpu.pipeline_mode<synchronous>, transform_indices = @transform_12, window_bounds = array<i64: 1, 64>}, {pipeline_mode = #tpu.pipeline_mode<synchronous>, transform_indices = @transform_13, window_bounds = array<i64: 32, 32>}, {pipeline_mode = #tpu.pipeline_mode<synchronous>, transform_indices = @transform_14, window_bounds = array<i64: 1, 32>}, {pipeline_mode = #tpu.pipeline_mode<synchronous>, transform_indices = @transform_15, window_bounds = array<i64: 1, 32>}, {pipeline_mode = #tpu.pipeline_mode<synchronous>, transform_indices = @transform_16, window_bounds = array<i64: 1, 32>}, {pipeline_mode = #tpu.pipeline_mode<synchronous>, transform_indices = @transform_17, window_bounds = array<i64: 32, 64>}, {pipeline_mode = #tpu.pipeline_mode<synchronous>, transform_indices = @transform_18, window_bounds = array<i64: 1, 64>}, {pipeline_mode = #tpu.pipeline_mode<synchronous>, transform_indices = @transform_19, window_bounds = array<i64: 64, 32>}, {pipeline_mode = #tpu.pipeline_mode<synchronous>, transform_indices = @transform_20, window_bounds = array<i64: 1, 32>}, {pipeline_mode = #tpu.pipeline_mode<synchronous>, transform_indices = @transform_21, window_bounds = array<i64: 1, 32>}, {pipeline_mode = #tpu.pipeline_mode<synchronous>, transform_indices = @transform_22, window_bounds = array<i64: 1, 32>}, {transform_indices = @transform_23, window_bounds = array<i64: 1, 8, 32>}]} {
    %c0 = arith.constant 0 : index
    %c0_0 = arith.constant 0 : index
    %c0_1 = arith.constant 0 : index
    %0 = vector.load %arg1[%c0, %c0_0, %c0_1] : memref<1x8x32xbf16, #tpu.memory_space<vmem>>, vector<1x8x32xbf16>
    %1 = vector.shape_cast %0 : vector<1x8x32xbf16> to vector<8x32xbf16>
    %2 = arith.extf %1 : vector<8x32xbf16> to vector<8x32xf32>
    %c0_2 = arith.constant 0 : index
    %c0_3 = arith.constant 0 : index
    %c0_4 = arith.constant 0 : index
    %3 = vector.load %arg2[%c0_2, %c0_3, %c0_4] : memref<1x8x32xbf16, #tpu.memory_space<vmem>>, vector<1x8x32xbf16>
    %4 = vector.shape_cast %3 : vector<1x8x32xbf16> to vector<8x32xbf16>
    %5 = arith.extf %4 : vector<8x32xbf16> to vector<8x32xf32>
    %c0_5 = arith.constant 0 : index
    %c0_6 = arith.constant 0 : index
    %6 = vector.load %arg4[%c0_5, %c0_6] : memref<32x96xbf16, #tpu.memory_space<vmem>>, vector<32x96xbf16>
    %7 = arith.truncf %2 : vector<8x32xf32> to vector<8x32xbf16>
    %cst = arith.constant dense<0.000000e+00> : vector<8x96xf32>
    %8 = tpu.matmul %7, %6, %cst {dimension_numbers = #tpu.dot_dimension_numbers<[1], [0], [0], [1], [0, 0, 1, 1], [], []>} : vector<8x32xbf16>, vector<32x96xbf16>, vector<8x96xf32> -> vector<8x96xf32>
    %c0_7 = arith.constant 0 : index
    %c0_8 = arith.constant 0 : index
    %9 = vector.load %arg5[%c0_7, %c0_8] : memref<1x96xf32, #tpu.memory_space<vmem>>, vector<1x96xf32>
    %10 = vector.broadcast %9 : vector<1x96xf32> to vector<8x96xf32>
    %11 = arith.addf %8, %10 : vector<8x96xf32>
    %12 = vector.extract_strided_slice %11 {offsets = [0, 0], sizes = [8, 32], strides = [1, 1]} : vector<8x96xf32> to vector<8x32xf32>
    %13 = vector.extract_strided_slice %11 {offsets = [0, 32], sizes = [8, 32], strides = [1, 1]} : vector<8x96xf32> to vector<8x32xf32>
    %14 = vector.extract_strided_slice %11 {offsets = [0, 64], sizes = [8, 32], strides = [1, 1]} : vector<8x96xf32> to vector<8x32xf32>
    %c0_9 = arith.constant 0 : index
    %c0_10 = arith.constant 0 : index
    %15 = vector.load %arg6[%c0_9, %c0_10] : memref<32x32xbf16, #tpu.memory_space<vmem>>, vector<32x32xbf16>
    %c0_11 = arith.constant 0 : index
    %c0_12 = arith.constant 0 : index
    %16 = vector.load %arg3[%c0_11, %c0_12] : memref<8x8xf32, #tpu.memory_space<vmem>>, vector<8x8xf32>
    %17 = vector.extract_strided_slice %12 {offsets = [0, 0], sizes = [8, 8], strides = [1, 1]} : vector<8x32xf32> to vector<8x8xf32>
    %18 = vector.extract_strided_slice %13 {offsets = [0, 0], sizes = [8, 8], strides = [1, 1]} : vector<8x32xf32> to vector<8x8xf32>
    %19 = vector.extract_strided_slice %14 {offsets = [0, 0], sizes = [8, 8], strides = [1, 1]} : vector<8x32xf32> to vector<8x8xf32>
    %20 = arith.truncf %17 : vector<8x8xf32> to vector<8x8xbf16>
    %21 = arith.truncf %18 : vector<8x8xf32> to vector<8x8xbf16>
    %cst_13 = arith.constant dense<0.000000e+00> : vector<8x8xf32>
    %22 = tpu.matmul %20, %21, %cst_13 {dimension_numbers = #tpu.dot_dimension_numbers<[1], [1], [0], [0], [0, 0, 1, 0], [], []>} : vector<8x8xbf16>, vector<8x8xbf16>, vector<8x8xf32> -> vector<8x8xf32>
    %cst_14 = arith.constant 0.353553385 : f32
    %23 = vector.broadcast %cst_14 : f32 to vector<8x8xf32>
    %24 = arith.mulf %22, %23 : vector<8x8xf32>
    %25 = arith.addf %24, %16 : vector<8x8xf32>
    %cst_15 = arith.constant dense<0xFF800000> : vector<8xf32>
    %26 = vector.multi_reduction <maximumf>, %25, %cst_15 [1] : vector<8x8xf32> to vector<8xf32>
    %27 = vector.shape_cast %26 : vector<8xf32> to vector<8x1xf32>
    %28 = vector.broadcast %27 : vector<8x1xf32> to vector<8x8xf32>
    %29 = arith.subf %25, %28 : vector<8x8xf32>
    %30 = math.exp %29 : vector<8x8xf32>
    %cst_16 = arith.constant dense<0.000000e+00> : vector<8xf32>
    %31 = vector.multi_reduction <add>, %30, %cst_16 [1] : vector<8x8xf32> to vector<8xf32>
    %32 = vector.shape_cast %31 : vector<8xf32> to vector<8x1xf32>
    %33 = tpu.reciprocal %32 {approx = true} : vector<8x1xf32> -> vector<8x1xf32>
    %34 = vector.broadcast %33 : vector<8x1xf32> to vector<8x8xf32>
    %35 = arith.mulf %30, %34 : vector<8x8xf32>
    %36 = arith.truncf %35 : vector<8x8xf32> to vector<8x8xbf16>
    %37 = arith.truncf %19 : vector<8x8xf32> to vector<8x8xbf16>
    %cst_17 = arith.constant dense<0.000000e+00> : vector<8x8xf32>
    %38 = tpu.matmul %36, %37, %cst_17 {dimension_numbers = #tpu.dot_dimension_numbers<[1], [0], [0], [1], [0, 0, 1, 1], [], []>} : vector<8x8xbf16>, vector<8x8xbf16>, vector<8x8xf32> -> vector<8x8xf32>
    %39 = vector.extract_strided_slice %12 {offsets = [0, 8], sizes = [8, 8], strides = [1, 1]} : vector<8x32xf32> to vector<8x8xf32>
    %40 = vector.extract_strided_slice %13 {offsets = [0, 8], sizes = [8, 8], strides = [1, 1]} : vector<8x32xf32> to vector<8x8xf32>
    %41 = vector.extract_strided_slice %14 {offsets = [0, 8], sizes = [8, 8], strides = [1, 1]} : vector<8x32xf32> to vector<8x8xf32>
    %42 = arith.truncf %39 : vector<8x8xf32> to vector<8x8xbf16>
    %43 = arith.truncf %40 : vector<8x8xf32> to vector<8x8xbf16>
    %cst_18 = arith.constant dense<0.000000e+00> : vector<8x8xf32>
    %44 = tpu.matmul %42, %43, %cst_18 {dimension_numbers = #tpu.dot_dimension_numbers<[1], [1], [0], [0], [0, 0, 1, 0], [], []>} : vector<8x8xbf16>, vector<8x8xbf16>, vector<8x8xf32> -> vector<8x8xf32>
    %cst_19 = arith.constant 0.353553385 : f32
    %45 = vector.broadcast %cst_19 : f32 to vector<8x8xf32>
    %46 = arith.mulf %44, %45 : vector<8x8xf32>
    %47 = arith.addf %46, %16 : vector<8x8xf32>
    %cst_20 = arith.constant dense<0xFF800000> : vector<8xf32>
    %48 = vector.multi_reduction <maximumf>, %47, %cst_20 [1] : vector<8x8xf32> to vector<8xf32>
    %49 = vector.shape_cast %48 : vector<8xf32> to vector<8x1xf32>
    %50 = vector.broadcast %49 : vector<8x1xf32> to vector<8x8xf32>
    %51 = arith.subf %47, %50 : vector<8x8xf32>
    %52 = math.exp %51 : vector<8x8xf32>
    %cst_21 = arith.constant dense<0.000000e+00> : vector<8xf32>
    %53 = vector.multi_reduction <add>, %52, %cst_21 [1] : vector<8x8xf32> to vector<8xf32>
    %54 = vector.shape_cast %53 : vector<8xf32> to vector<8x1xf32>
    %55 = tpu.reciprocal %54 {approx = true} : vector<8x1xf32> -> vector<8x1xf32>
    %56 = vector.broadcast %55 : vector<8x1xf32> to vector<8x8xf32>
    %57 = arith.mulf %52, %56 : vector<8x8xf32>
    %58 = arith.truncf %57 : vector<8x8xf32> to vector<8x8xbf16>
    %59 = arith.truncf %41 : vector<8x8xf32> to vector<8x8xbf16>
    %cst_22 = arith.constant dense<0.000000e+00> : vector<8x8xf32>
    %60 = tpu.matmul %58, %59, %cst_22 {dimension_numbers = #tpu.dot_dimension_numbers<[1], [0], [0], [1], [0, 0, 1, 1], [], []>} : vector<8x8xbf16>, vector<8x8xbf16>, vector<8x8xf32> -> vector<8x8xf32>
    %61 = vector.extract_strided_slice %12 {offsets = [0, 16], sizes = [8, 8], strides = [1, 1]} : vector<8x32xf32> to vector<8x8xf32>
    %62 = vector.extract_strided_slice %13 {offsets = [0, 16], sizes = [8, 8], strides = [1, 1]} : vector<8x32xf32> to vector<8x8xf32>
    %63 = vector.extract_strided_slice %14 {offsets = [0, 16], sizes = [8, 8], strides = [1, 1]} : vector<8x32xf32> to vector<8x8xf32>
    %64 = arith.truncf %61 : vector<8x8xf32> to vector<8x8xbf16>
    %65 = arith.truncf %62 : vector<8x8xf32> to vector<8x8xbf16>
    %cst_23 = arith.constant dense<0.000000e+00> : vector<8x8xf32>
    %66 = tpu.matmul %64, %65, %cst_23 {dimension_numbers = #tpu.dot_dimension_numbers<[1], [1], [0], [0], [0, 0, 1, 0], [], []>} : vector<8x8xbf16>, vector<8x8xbf16>, vector<8x8xf32> -> vector<8x8xf32>
    %cst_24 = arith.constant 0.353553385 : f32
    %67 = vector.broadcast %cst_24 : f32 to vector<8x8xf32>
    %68 = arith.mulf %66, %67 : vector<8x8xf32>
    %69 = arith.addf %68, %16 : vector<8x8xf32>
    %cst_25 = arith.constant dense<0xFF800000> : vector<8xf32>
    %70 = vector.multi_reduction <maximumf>, %69, %cst_25 [1] : vector<8x8xf32> to vector<8xf32>
    %71 = vector.shape_cast %70 : vector<8xf32> to vector<8x1xf32>
    %72 = vector.broadcast %71 : vector<8x1xf32> to vector<8x8xf32>
    %73 = arith.subf %69, %72 : vector<8x8xf32>
    %74 = math.exp %73 : vector<8x8xf32>
    %cst_26 = arith.constant dense<0.000000e+00> : vector<8xf32>
    %75 = vector.multi_reduction <add>, %74, %cst_26 [1] : vector<8x8xf32> to vector<8xf32>
    %76 = vector.shape_cast %75 : vector<8xf32> to vector<8x1xf32>
    %77 = tpu.reciprocal %76 {approx = true} : vector<8x1xf32> -> vector<8x1xf32>
    %78 = vector.broadcast %77 : vector<8x1xf32> to vector<8x8xf32>
    %79 = arith.mulf %74, %78 : vector<8x8xf32>
    %80 = arith.truncf %79 : vector<8x8xf32> to vector<8x8xbf16>
    %81 = arith.truncf %63 : vector<8x8xf32> to vector<8x8xbf16>
    %cst_27 = arith.constant dense<0.000000e+00> : vector<8x8xf32>
    %82 = tpu.matmul %80, %81, %cst_27 {dimension_numbers = #tpu.dot_dimension_numbers<[1], [0], [0], [1], [0, 0, 1, 1], [], []>} : vector<8x8xbf16>, vector<8x8xbf16>, vector<8x8xf32> -> vector<8x8xf32>
    %83 = vector.extract_strided_slice %12 {offsets = [0, 24], sizes = [8, 8], strides = [1, 1]} : vector<8x32xf32> to vector<8x8xf32>
    %84 = vector.extract_strided_slice %13 {offsets = [0, 24], sizes = [8, 8], strides = [1, 1]} : vector<8x32xf32> to vector<8x8xf32>
    %85 = vector.extract_strided_slice %14 {offsets = [0, 24], sizes = [8, 8], strides = [1, 1]} : vector<8x32xf32> to vector<8x8xf32>
    %86 = arith.truncf %83 : vector<8x8xf32> to vector<8x8xbf16>
    %87 = arith.truncf %84 : vector<8x8xf32> to vector<8x8xbf16>
    %cst_28 = arith.constant dense<0.000000e+00> : vector<8x8xf32>
    %88 = tpu.matmul %86, %87, %cst_28 {dimension_numbers = #tpu.dot_dimension_numbers<[1], [1], [0], [0], [0, 0, 1, 0], [], []>} : vector<8x8xbf16>, vector<8x8xbf16>, vector<8x8xf32> -> vector<8x8xf32>
    %cst_29 = arith.constant 0.353553385 : f32
    %89 = vector.broadcast %cst_29 : f32 to vector<8x8xf32>
    %90 = arith.mulf %88, %89 : vector<8x8xf32>
    %91 = arith.addf %90, %16 : vector<8x8xf32>
    %cst_30 = arith.constant dense<0xFF800000> : vector<8xf32>
    %92 = vector.multi_reduction <maximumf>, %91, %cst_30 [1] : vector<8x8xf32> to vector<8xf32>
    %93 = vector.shape_cast %92 : vector<8xf32> to vector<8x1xf32>
    %94 = vector.broadcast %93 : vector<8x1xf32> to vector<8x8xf32>
    %95 = arith.subf %91, %94 : vector<8x8xf32>
    %96 = math.exp %95 : vector<8x8xf32>
    %cst_31 = arith.constant dense<0.000000e+00> : vector<8xf32>
    %97 = vector.multi_reduction <add>, %96, %cst_31 [1] : vector<8x8xf32> to vector<8xf32>
    %98 = vector.shape_cast %97 : vector<8xf32> to vector<8x1xf32>
    %99 = tpu.reciprocal %98 {approx = true} : vector<8x1xf32> -> vector<8x1xf32>
    %100 = vector.broadcast %99 : vector<8x1xf32> to vector<8x8xf32>
    %101 = arith.mulf %96, %100 : vector<8x8xf32>
    %102 = arith.truncf %101 : vector<8x8xf32> to vector<8x8xbf16>
    %103 = arith.truncf %85 : vector<8x8xf32> to vector<8x8xbf16>
    %cst_32 = arith.constant dense<0.000000e+00> : vector<8x8xf32>
    %104 = tpu.matmul %102, %103, %cst_32 {dimension_numbers = #tpu.dot_dimension_numbers<[1], [0], [0], [1], [0, 0, 1, 1], [], []>} : vector<8x8xbf16>, vector<8x8xbf16>, vector<8x8xf32> -> vector<8x8xf32>
    %105 = tpu.concatenate %38, %60, %82, %104 in 1 : vector<8x8xf32>, vector<8x8xf32>, vector<8x8xf32>, vector<8x8xf32> -> vector<8x32xf32>
    %106 = arith.truncf %105 : vector<8x32xf32> to vector<8x32xbf16>
    %cst_33 = arith.constant dense<0.000000e+00> : vector<8x32xf32>
    %107 = tpu.matmul %106, %15, %cst_33 {dimension_numbers = #tpu.dot_dimension_numbers<[1], [0], [0], [1], [0, 0, 1, 1], [], []>} : vector<8x32xbf16>, vector<32x32xbf16>, vector<8x32xf32> -> vector<8x32xf32>
    %c0_34 = arith.constant 0 : index
    %c0_35 = arith.constant 0 : index
    %108 = vector.load %arg7[%c0_34, %c0_35] : memref<1x32xf32, #tpu.memory_space<vmem>>, vector<1x32xf32>
    %109 = vector.broadcast %108 : vector<1x32xf32> to vector<8x32xf32>
    %110 = arith.addf %107, %109 : vector<8x32xf32>
    %111 = arith.addf %2, %110 : vector<8x32xf32>
    %c0_36 = arith.constant 0 : index
    %c0_37 = arith.constant 0 : index
    %112 = vector.load %arg8[%c0_36, %c0_37] : memref<1x32xf32, #tpu.memory_space<vmem>>, vector<1x32xf32>
    %c0_38 = arith.constant 0 : index
    %c0_39 = arith.constant 0 : index
    %113 = vector.load %arg9[%c0_38, %c0_39] : memref<1x32xf32, #tpu.memory_space<vmem>>, vector<1x32xf32>
    %cst_40 = arith.constant dense<0.000000e+00> : vector<8xf32>
    %114 = vector.multi_reduction <add>, %111, %cst_40 [1] : vector<8x32xf32> to vector<8xf32>
    %115 = vector.shape_cast %114 : vector<8xf32> to vector<8x1xf32>
    %cst_41 = arith.constant 3.200000e+01 : f32
    %116 = vector.broadcast %cst_41 : f32 to vector<8x1xf32>
    %117 = arith.divf %115, %116 : vector<8x1xf32>
    %118 = vector.broadcast %117 : vector<8x1xf32> to vector<8x32xf32>
    %119 = arith.subf %111, %118 : vector<8x32xf32>
    %120 = arith.mulf %119, %119 : vector<8x32xf32>
    %cst_42 = arith.constant dense<0.000000e+00> : vector<8xf32>
    %121 = vector.multi_reduction <add>, %120, %cst_42 [1] : vector<8x32xf32> to vector<8xf32>
    %122 = vector.shape_cast %121 : vector<8xf32> to vector<8x1xf32>
    %cst_43 = arith.constant 3.200000e+01 : f32
    %123 = vector.broadcast %cst_43 : f32 to vector<8x1xf32>
    %124 = arith.divf %122, %123 : vector<8x1xf32>
    %cst_44 = arith.constant 9.99999974E-6 : f32
    %125 = vector.broadcast %cst_44 : f32 to vector<8x1xf32>
    %126 = arith.addf %124, %125 : vector<8x1xf32>
    %127 = math.rsqrt %126 : vector<8x1xf32>
    %128 = vector.broadcast %127 : vector<8x1xf32> to vector<8x32xf32>
    %129 = arith.mulf %119, %128 : vector<8x32xf32>
    %130 = vector.broadcast %112 : vector<1x32xf32> to vector<8x32xf32>
    %131 = arith.mulf %129, %130 : vector<8x32xf32>
    %132 = vector.broadcast %113 : vector<1x32xf32> to vector<8x32xf32>
    %133 = arith.addf %131, %132 : vector<8x32xf32>
    %c0_45 = arith.constant 0 : index
    %c0_46 = arith.constant 0 : index
    %134 = vector.load %arg10[%c0_45, %c0_46] : memref<32x32xbf16, #tpu.memory_space<vmem>>, vector<32x32xbf16>
    %135 = arith.truncf %133 : vector<8x32xf32> to vector<8x32xbf16>
    %cst_47 = arith.constant dense<0.000000e+00> : vector<8x32xf32>
    %136 = tpu.matmul %135, %134, %cst_47 {dimension_numbers = #tpu.dot_dimension_numbers<[1], [0], [0], [1], [0, 0, 1, 1], [], []>} : vector<8x32xbf16>, vector<32x32xbf16>, vector<8x32xf32> -> vector<8x32xf32>
    %c0_48 = arith.constant 0 : index
    %c0_49 = arith.constant 0 : index
    %137 = vector.load %arg11[%c0_48, %c0_49] : memref<1x32xf32, #tpu.memory_space<vmem>>, vector<1x32xf32>
    %138 = vector.broadcast %137 : vector<1x32xf32> to vector<8x32xf32>
    %139 = arith.addf %136, %138 : vector<8x32xf32>
    %c0_50 = arith.constant 0 : index
    %c0_51 = arith.constant 0 : index
    %140 = vector.load %arg12[%c0_50, %c0_51] : memref<32x64xbf16, #tpu.memory_space<vmem>>, vector<32x64xbf16>
    %141 = arith.truncf %5 : vector<8x32xf32> to vector<8x32xbf16>
    %cst_52 = arith.constant dense<0.000000e+00> : vector<8x64xf32>
    %142 = tpu.matmul %141, %140, %cst_52 {dimension_numbers = #tpu.dot_dimension_numbers<[1], [0], [0], [1], [0, 0, 1, 1], [], []>} : vector<8x32xbf16>, vector<32x64xbf16>, vector<8x64xf32> -> vector<8x64xf32>
    %c0_53 = arith.constant 0 : index
    %c0_54 = arith.constant 0 : index
    %143 = vector.load %arg13[%c0_53, %c0_54] : memref<1x64xf32, #tpu.memory_space<vmem>>, vector<1x64xf32>
    %144 = vector.broadcast %143 : vector<1x64xf32> to vector<8x64xf32>
    %145 = arith.addf %142, %144 : vector<8x64xf32>
    %146 = vector.extract_strided_slice %145 {offsets = [0, 0], sizes = [8, 32], strides = [1, 1]} : vector<8x64xf32> to vector<8x32xf32>
    %147 = vector.extract_strided_slice %145 {offsets = [0, 32], sizes = [8, 32], strides = [1, 1]} : vector<8x64xf32> to vector<8x32xf32>
    %c0_55 = arith.constant 0 : index
    %c0_56 = arith.constant 0 : index
    %148 = vector.load %arg14[%c0_55, %c0_56] : memref<32x32xbf16, #tpu.memory_space<vmem>>, vector<32x32xbf16>
    %149 = vector.extract_strided_slice %139 {offsets = [0, 0], sizes = [8, 8], strides = [1, 1]} : vector<8x32xf32> to vector<8x8xf32>
    %150 = vector.extract_strided_slice %146 {offsets = [0, 0], sizes = [8, 8], strides = [1, 1]} : vector<8x32xf32> to vector<8x8xf32>
    %151 = vector.extract_strided_slice %147 {offsets = [0, 0], sizes = [8, 8], strides = [1, 1]} : vector<8x32xf32> to vector<8x8xf32>
    %152 = arith.truncf %149 : vector<8x8xf32> to vector<8x8xbf16>
    %153 = arith.truncf %150 : vector<8x8xf32> to vector<8x8xbf16>
    %cst_57 = arith.constant dense<0.000000e+00> : vector<8x8xf32>
    %154 = tpu.matmul %152, %153, %cst_57 {dimension_numbers = #tpu.dot_dimension_numbers<[1], [1], [0], [0], [0, 0, 1, 0], [], []>} : vector<8x8xbf16>, vector<8x8xbf16>, vector<8x8xf32> -> vector<8x8xf32>
    %cst_58 = arith.constant 0.353553385 : f32
    %155 = vector.broadcast %cst_58 : f32 to vector<8x8xf32>
    %156 = arith.mulf %154, %155 : vector<8x8xf32>
    %cst_59 = arith.constant dense<0xFF800000> : vector<8xf32>
    %157 = vector.multi_reduction <maximumf>, %156, %cst_59 [1] : vector<8x8xf32> to vector<8xf32>
    %158 = vector.shape_cast %157 : vector<8xf32> to vector<8x1xf32>
    %159 = vector.broadcast %158 : vector<8x1xf32> to vector<8x8xf32>
    %160 = arith.subf %156, %159 : vector<8x8xf32>
    %161 = math.exp %160 : vector<8x8xf32>
    %cst_60 = arith.constant dense<0.000000e+00> : vector<8xf32>
    %162 = vector.multi_reduction <add>, %161, %cst_60 [1] : vector<8x8xf32> to vector<8xf32>
    %163 = vector.shape_cast %162 : vector<8xf32> to vector<8x1xf32>
    %164 = tpu.reciprocal %163 {approx = true} : vector<8x1xf32> -> vector<8x1xf32>
    %165 = vector.broadcast %164 : vector<8x1xf32> to vector<8x8xf32>
    %166 = arith.mulf %161, %165 : vector<8x8xf32>
    %167 = arith.truncf %166 : vector<8x8xf32> to vector<8x8xbf16>
    %168 = arith.truncf %151 : vector<8x8xf32> to vector<8x8xbf16>
    %cst_61 = arith.constant dense<0.000000e+00> : vector<8x8xf32>
    %169 = tpu.matmul %167, %168, %cst_61 {dimension_numbers = #tpu.dot_dimension_numbers<[1], [0], [0], [1], [0, 0, 1, 1], [], []>} : vector<8x8xbf16>, vector<8x8xbf16>, vector<8x8xf32> -> vector<8x8xf32>
    %170 = vector.extract_strided_slice %139 {offsets = [0, 8], sizes = [8, 8], strides = [1, 1]} : vector<8x32xf32> to vector<8x8xf32>
    %171 = vector.extract_strided_slice %146 {offsets = [0, 8], sizes = [8, 8], strides = [1, 1]} : vector<8x32xf32> to vector<8x8xf32>
    %172 = vector.extract_strided_slice %147 {offsets = [0, 8], sizes = [8, 8], strides = [1, 1]} : vector<8x32xf32> to vector<8x8xf32>
    %173 = arith.truncf %170 : vector<8x8xf32> to vector<8x8xbf16>
    %174 = arith.truncf %171 : vector<8x8xf32> to vector<8x8xbf16>
    %cst_62 = arith.constant dense<0.000000e+00> : vector<8x8xf32>
    %175 = tpu.matmul %173, %174, %cst_62 {dimension_numbers = #tpu.dot_dimension_numbers<[1], [1], [0], [0], [0, 0, 1, 0], [], []>} : vector<8x8xbf16>, vector<8x8xbf16>, vector<8x8xf32> -> vector<8x8xf32>
    %cst_63 = arith.constant 0.353553385 : f32
    %176 = vector.broadcast %cst_63 : f32 to vector<8x8xf32>
    %177 = arith.mulf %175, %176 : vector<8x8xf32>
    %cst_64 = arith.constant dense<0xFF800000> : vector<8xf32>
    %178 = vector.multi_reduction <maximumf>, %177, %cst_64 [1] : vector<8x8xf32> to vector<8xf32>
    %179 = vector.shape_cast %178 : vector<8xf32> to vector<8x1xf32>
    %180 = vector.broadcast %179 : vector<8x1xf32> to vector<8x8xf32>
    %181 = arith.subf %177, %180 : vector<8x8xf32>
    %182 = math.exp %181 : vector<8x8xf32>
    %cst_65 = arith.constant dense<0.000000e+00> : vector<8xf32>
    %183 = vector.multi_reduction <add>, %182, %cst_65 [1] : vector<8x8xf32> to vector<8xf32>
    %184 = vector.shape_cast %183 : vector<8xf32> to vector<8x1xf32>
    %185 = tpu.reciprocal %184 {approx = true} : vector<8x1xf32> -> vector<8x1xf32>
    %186 = vector.broadcast %185 : vector<8x1xf32> to vector<8x8xf32>
    %187 = arith.mulf %182, %186 : vector<8x8xf32>
    %188 = arith.truncf %187 : vector<8x8xf32> to vector<8x8xbf16>
    %189 = arith.truncf %172 : vector<8x8xf32> to vector<8x8xbf16>
    %cst_66 = arith.constant dense<0.000000e+00> : vector<8x8xf32>
    %190 = tpu.matmul %188, %189, %cst_66 {dimension_numbers = #tpu.dot_dimension_numbers<[1], [0], [0], [1], [0, 0, 1, 1], [], []>} : vector<8x8xbf16>, vector<8x8xbf16>, vector<8x8xf32> -> vector<8x8xf32>
    %191 = vector.extract_strided_slice %139 {offsets = [0, 16], sizes = [8, 8], strides = [1, 1]} : vector<8x32xf32> to vector<8x8xf32>
    %192 = vector.extract_strided_slice %146 {offsets = [0, 16], sizes = [8, 8], strides = [1, 1]} : vector<8x32xf32> to vector<8x8xf32>
    %193 = vector.extract_strided_slice %147 {offsets = [0, 16], sizes = [8, 8], strides = [1, 1]} : vector<8x32xf32> to vector<8x8xf32>
    %194 = arith.truncf %191 : vector<8x8xf32> to vector<8x8xbf16>
    %195 = arith.truncf %192 : vector<8x8xf32> to vector<8x8xbf16>
    %cst_67 = arith.constant dense<0.000000e+00> : vector<8x8xf32>
    %196 = tpu.matmul %194, %195, %cst_67 {dimension_numbers = #tpu.dot_dimension_numbers<[1], [1], [0], [0], [0, 0, 1, 0], [], []>} : vector<8x8xbf16>, vector<8x8xbf16>, vector<8x8xf32> -> vector<8x8xf32>
    %cst_68 = arith.constant 0.353553385 : f32
    %197 = vector.broadcast %cst_68 : f32 to vector<8x8xf32>
    %198 = arith.mulf %196, %197 : vector<8x8xf32>
    %cst_69 = arith.constant dense<0xFF800000> : vector<8xf32>
    %199 = vector.multi_reduction <maximumf>, %198, %cst_69 [1] : vector<8x8xf32> to vector<8xf32>
    %200 = vector.shape_cast %199 : vector<8xf32> to vector<8x1xf32>
    %201 = vector.broadcast %200 : vector<8x1xf32> to vector<8x8xf32>
    %202 = arith.subf %198, %201 : vector<8x8xf32>
    %203 = math.exp %202 : vector<8x8xf32>
    %cst_70 = arith.constant dense<0.000000e+00> : vector<8xf32>
    %204 = vector.multi_reduction <add>, %203, %cst_70 [1] : vector<8x8xf32> to vector<8xf32>
    %205 = vector.shape_cast %204 : vector<8xf32> to vector<8x1xf32>
    %206 = tpu.reciprocal %205 {approx = true} : vector<8x1xf32> -> vector<8x1xf32>
    %207 = vector.broadcast %206 : vector<8x1xf32> to vector<8x8xf32>
    %208 = arith.mulf %203, %207 : vector<8x8xf32>
    %209 = arith.truncf %208 : vector<8x8xf32> to vector<8x8xbf16>
    %210 = arith.truncf %193 : vector<8x8xf32> to vector<8x8xbf16>
    %cst_71 = arith.constant dense<0.000000e+00> : vector<8x8xf32>
    %211 = tpu.matmul %209, %210, %cst_71 {dimension_numbers = #tpu.dot_dimension_numbers<[1], [0], [0], [1], [0, 0, 1, 1], [], []>} : vector<8x8xbf16>, vector<8x8xbf16>, vector<8x8xf32> -> vector<8x8xf32>
    %212 = vector.extract_strided_slice %139 {offsets = [0, 24], sizes = [8, 8], strides = [1, 1]} : vector<8x32xf32> to vector<8x8xf32>
    %213 = vector.extract_strided_slice %146 {offsets = [0, 24], sizes = [8, 8], strides = [1, 1]} : vector<8x32xf32> to vector<8x8xf32>
    %214 = vector.extract_strided_slice %147 {offsets = [0, 24], sizes = [8, 8], strides = [1, 1]} : vector<8x32xf32> to vector<8x8xf32>
    %215 = arith.truncf %212 : vector<8x8xf32> to vector<8x8xbf16>
    %216 = arith.truncf %213 : vector<8x8xf32> to vector<8x8xbf16>
    %cst_72 = arith.constant dense<0.000000e+00> : vector<8x8xf32>
    %217 = tpu.matmul %215, %216, %cst_72 {dimension_numbers = #tpu.dot_dimension_numbers<[1], [1], [0], [0], [0, 0, 1, 0], [], []>} : vector<8x8xbf16>, vector<8x8xbf16>, vector<8x8xf32> -> vector<8x8xf32>
    %cst_73 = arith.constant 0.353553385 : f32
    %218 = vector.broadcast %cst_73 : f32 to vector<8x8xf32>
    %219 = arith.mulf %217, %218 : vector<8x8xf32>
    %cst_74 = arith.constant dense<0xFF800000> : vector<8xf32>
    %220 = vector.multi_reduction <maximumf>, %219, %cst_74 [1] : vector<8x8xf32> to vector<8xf32>
    %221 = vector.shape_cast %220 : vector<8xf32> to vector<8x1xf32>
    %222 = vector.broadcast %221 : vector<8x1xf32> to vector<8x8xf32>
    %223 = arith.subf %219, %222 : vector<8x8xf32>
    %224 = math.exp %223 : vector<8x8xf32>
    %cst_75 = arith.constant dense<0.000000e+00> : vector<8xf32>
    %225 = vector.multi_reduction <add>, %224, %cst_75 [1] : vector<8x8xf32> to vector<8xf32>
    %226 = vector.shape_cast %225 : vector<8xf32> to vector<8x1xf32>
    %227 = tpu.reciprocal %226 {approx = true} : vector<8x1xf32> -> vector<8x1xf32>
    %228 = vector.broadcast %227 : vector<8x1xf32> to vector<8x8xf32>
    %229 = arith.mulf %224, %228 : vector<8x8xf32>
    %230 = arith.truncf %229 : vector<8x8xf32> to vector<8x8xbf16>
    %231 = arith.truncf %214 : vector<8x8xf32> to vector<8x8xbf16>
    %cst_76 = arith.constant dense<0.000000e+00> : vector<8x8xf32>
    %232 = tpu.matmul %230, %231, %cst_76 {dimension_numbers = #tpu.dot_dimension_numbers<[1], [0], [0], [1], [0, 0, 1, 1], [], []>} : vector<8x8xbf16>, vector<8x8xbf16>, vector<8x8xf32> -> vector<8x8xf32>
    %233 = tpu.concatenate %169, %190, %211, %232 in 1 : vector<8x8xf32>, vector<8x8xf32>, vector<8x8xf32>, vector<8x8xf32> -> vector<8x32xf32>
    %234 = arith.truncf %233 : vector<8x32xf32> to vector<8x32xbf16>
    %cst_77 = arith.constant dense<0.000000e+00> : vector<8x32xf32>
    %235 = tpu.matmul %234, %148, %cst_77 {dimension_numbers = #tpu.dot_dimension_numbers<[1], [0], [0], [1], [0, 0, 1, 1], [], []>} : vector<8x32xbf16>, vector<32x32xbf16>, vector<8x32xf32> -> vector<8x32xf32>
    %c0_78 = arith.constant 0 : index
    %c0_79 = arith.constant 0 : index
    %236 = vector.load %arg15[%c0_78, %c0_79] : memref<1x32xf32, #tpu.memory_space<vmem>>, vector<1x32xf32>
    %237 = vector.broadcast %236 : vector<1x32xf32> to vector<8x32xf32>
    %238 = arith.addf %235, %237 : vector<8x32xf32>
    %239 = arith.addf %133, %238 : vector<8x32xf32>
    %c0_80 = arith.constant 0 : index
    %c0_81 = arith.constant 0 : index
    %240 = vector.load %arg16[%c0_80, %c0_81] : memref<1x32xf32, #tpu.memory_space<vmem>>, vector<1x32xf32>
    %c0_82 = arith.constant 0 : index
    %c0_83 = arith.constant 0 : index
    %241 = vector.load %arg17[%c0_82, %c0_83] : memref<1x32xf32, #tpu.memory_space<vmem>>, vector<1x32xf32>
    %cst_84 = arith.constant dense<0.000000e+00> : vector<8xf32>
    %242 = vector.multi_reduction <add>, %239, %cst_84 [1] : vector<8x32xf32> to vector<8xf32>
    %243 = vector.shape_cast %242 : vector<8xf32> to vector<8x1xf32>
    %cst_85 = arith.constant 3.200000e+01 : f32
    %244 = vector.broadcast %cst_85 : f32 to vector<8x1xf32>
    %245 = arith.divf %243, %244 : vector<8x1xf32>
    %246 = vector.broadcast %245 : vector<8x1xf32> to vector<8x32xf32>
    %247 = arith.subf %239, %246 : vector<8x32xf32>
    %248 = arith.mulf %247, %247 : vector<8x32xf32>
    %cst_86 = arith.constant dense<0.000000e+00> : vector<8xf32>
    %249 = vector.multi_reduction <add>, %248, %cst_86 [1] : vector<8x32xf32> to vector<8xf32>
    %250 = vector.shape_cast %249 : vector<8xf32> to vector<8x1xf32>
    %cst_87 = arith.constant 3.200000e+01 : f32
    %251 = vector.broadcast %cst_87 : f32 to vector<8x1xf32>
    %252 = arith.divf %250, %251 : vector<8x1xf32>
    %cst_88 = arith.constant 9.99999974E-6 : f32
    %253 = vector.broadcast %cst_88 : f32 to vector<8x1xf32>
    %254 = arith.addf %252, %253 : vector<8x1xf32>
    %255 = math.rsqrt %254 : vector<8x1xf32>
    %256 = vector.broadcast %255 : vector<8x1xf32> to vector<8x32xf32>
    %257 = arith.mulf %247, %256 : vector<8x32xf32>
    %258 = vector.broadcast %240 : vector<1x32xf32> to vector<8x32xf32>
    %259 = arith.mulf %257, %258 : vector<8x32xf32>
    %260 = vector.broadcast %241 : vector<1x32xf32> to vector<8x32xf32>
    %261 = arith.addf %259, %260 : vector<8x32xf32>
    %c0_89 = arith.constant 0 : index
    %c0_90 = arith.constant 0 : index
    %262 = vector.load %arg18[%c0_89, %c0_90] : memref<32x64xbf16, #tpu.memory_space<vmem>>, vector<32x64xbf16>
    %263 = arith.truncf %261 : vector<8x32xf32> to vector<8x32xbf16>
    %cst_91 = arith.constant dense<0.000000e+00> : vector<8x64xf32>
    %264 = tpu.matmul %263, %262, %cst_91 {dimension_numbers = #tpu.dot_dimension_numbers<[1], [0], [0], [1], [0, 0, 1, 1], [], []>} : vector<8x32xbf16>, vector<32x64xbf16>, vector<8x64xf32> -> vector<8x64xf32>
    %c0_92 = arith.constant 0 : index
    %c0_93 = arith.constant 0 : index
    %265 = vector.load %arg19[%c0_92, %c0_93] : memref<1x64xf32, #tpu.memory_space<vmem>>, vector<1x64xf32>
    %266 = vector.broadcast %265 : vector<1x64xf32> to vector<8x64xf32>
    %267 = arith.addf %264, %266 : vector<8x64xf32>
    %cst_94 = arith.constant 0.000000e+00 : f32
    %268 = vector.broadcast %cst_94 : f32 to vector<8x64xf32>
    %269 = arith.maximumf %267, %268 : vector<8x64xf32>
    %c0_95 = arith.constant 0 : index
    %c0_96 = arith.constant 0 : index
    %270 = vector.load %arg20[%c0_95, %c0_96] : memref<64x32xbf16, #tpu.memory_space<vmem>>, vector<64x32xbf16>
    %271 = arith.truncf %269 : vector<8x64xf32> to vector<8x64xbf16>
    %cst_97 = arith.constant dense<0.000000e+00> : vector<8x32xf32>
    %272 = tpu.matmul %271, %270, %cst_97 {dimension_numbers = #tpu.dot_dimension_numbers<[1], [0], [0], [1], [0, 0, 1, 1], [], []>} : vector<8x64xbf16>, vector<64x32xbf16>, vector<8x32xf32> -> vector<8x32xf32>
    %c0_98 = arith.constant 0 : index
    %c0_99 = arith.constant 0 : index
    %273 = vector.load %arg21[%c0_98, %c0_99] : memref<1x32xf32, #tpu.memory_space<vmem>>, vector<1x32xf32>
    %274 = vector.broadcast %273 : vector<1x32xf32> to vector<8x32xf32>
    %275 = arith.addf %272, %274 : vector<8x32xf32>
    %276 = arith.addf %261, %275 : vector<8x32xf32>
    %c0_100 = arith.constant 0 : index
    %c0_101 = arith.constant 0 : index
    %277 = vector.load %arg22[%c0_100, %c0_101] : memref<1x32xf32, #tpu.memory_space<vmem>>, vector<1x32xf32>
    %c0_102 = arith.constant 0 : index
    %c0_103 = arith.constant 0 : index
    %278 = vector.load %arg23[%c0_102, %c0_103] : memref<1x32xf32, #tpu.memory_space<vmem>>, vector<1x32xf32>
    %cst_104 = arith.constant dense<0.000000e+00> : vector<8xf32>
    %279 = vector.multi_reduction <add>, %276, %cst_104 [1] : vector<8x32xf32> to vector<8xf32>
    %280 = vector.shape_cast %279 : vector<8xf32> to vector<8x1xf32>
    %cst_105 = arith.constant 3.200000e+01 : f32
    %281 = vector.broadcast %cst_105 : f32 to vector<8x1xf32>
    %282 = arith.divf %280, %281 : vector<8x1xf32>
    %283 = vector.broadcast %282 : vector<8x1xf32> to vector<8x32xf32>
    %284 = arith.subf %276, %283 : vector<8x32xf32>
    %285 = arith.mulf %284, %284 : vector<8x32xf32>
    %cst_106 = arith.constant dense<0.000000e+00> : vector<8xf32>
    %286 = vector.multi_reduction <add>, %285, %cst_106 [1] : vector<8x32xf32> to vector<8xf32>
    %287 = vector.shape_cast %286 : vector<8xf32> to vector<8x1xf32>
    %cst_107 = arith.constant 3.200000e+01 : f32
    %288 = vector.broadcast %cst_107 : f32 to vector<8x1xf32>
    %289 = arith.divf %287, %288 : vector<8x1xf32>
    %cst_108 = arith.constant 9.99999974E-6 : f32
    %290 = vector.broadcast %cst_108 : f32 to vector<8x1xf32>
    %291 = arith.addf %289, %290 : vector<8x1xf32>
    %292 = math.rsqrt %291 : vector<8x1xf32>
    %293 = vector.broadcast %292 : vector<8x1xf32> to vector<8x32xf32>
    %294 = arith.mulf %284, %293 : vector<8x32xf32>
    %295 = vector.broadcast %277 : vector<1x32xf32> to vector<8x32xf32>
    %296 = arith.mulf %294, %295 : vector<8x32xf32>
    %297 = vector.broadcast %278 : vector<1x32xf32> to vector<8x32xf32>
    %298 = arith.addf %296, %297 : vector<8x32xf32>
    %299 = arith.truncf %298 : vector<8x32xf32> to vector<8x32xbf16>
    %c0_109 = arith.constant 0 : index
    %c0_110 = arith.constant 0 : index
    %c0_111 = arith.constant 0 : index
    %300 = vector.load %arg24[%c0_109, %c0_110, %c0_111] : memref<1x8x32xbf16, #tpu.memory_space<vmem>>, vector<1x8x32xbf16>
    %301 = vector.shape_cast %300 : vector<1x8x32xbf16> to vector<8x32xbf16>
    %302 = vector.shape_cast %299 : vector<8x32xbf16> to vector<1x8x32xbf16>
    tpu.vector_store %arg24[%c0_109, %c0_110, %c0_111], %302 {strides = array<i32>} : memref<1x8x32xbf16, #tpu.memory_space<vmem>>, vector<1x8x32xbf16>,
    return
  }
  func.func @transform_0(%arg0: i32) -> (i32, i32, i32) {
    %c0_i32 = arith.constant 0 : i32
    %c0_i32_0 = arith.constant 0 : i32
    %c0_i32_1 = arith.constant 0 : i32
    return %arg0, %c0_i32, %c0_i32_0 : i32, i32, i32
  }
  func.func @transform_1(%arg0: i32) -> (i32, i32, i32) {
    %c0_i32 = arith.constant 0 : i32
    %c0_i32_0 = arith.constant 0 : i32
    %c0_i32_1 = arith.constant 0 : i32
    return %arg0, %c0_i32, %c0_i32_0 : i32, i32, i32
  }
  func.func @transform_2(%arg0: i32) -> (i32, i32) {
    %c0_i32 = arith.constant 0 : i32
    %c0_i32_0 = arith.constant 0 : i32
    %c0_i32_1 = arith.constant 0 : i32
    return %c0_i32, %c0_i32_0 : i32, i32
  }
  func.func @transform_3(%arg0: i32) -> (i32, i32) {
    %c0_i32 = arith.constant 0 : i32
    %c0_i32_0 = arith.constant 0 : i32
    %c0_i32_1 = arith.constant 0 : i32
    return %c0_i32, %c0_i32_0 : i32, i32
  }
  func.func @transform_4(%arg0: i32) -> (i32, i32) {
    %c0_i32 = arith.constant 0 : i32
    %c0_i32_0 = arith.constant 0 : i32
    %c0_i32_1 = arith.constant 0 : i32
    return %c0_i32, %c0_i32_0 : i32, i32
  }
  func.func @transform_5(%arg0: i32) -> (i32, i32) {
    %c0_i32 = arith.constant 0 : i32
    %c0_i32_0 = arith.constant 0 : i32
    %c0_i32_1 = arith.constant 0 : i32
    return %c0_i32, %c0_i32_0 : i32, i32
  }
  func.func @transform_6(%arg0: i32) -> (i32, i32) {
    %c0_i32 = arith.constant 0 : i32
    %c0_i32_0 = arith.constant 0 : i32
    %c0_i32_1 = arith.constant 0 : i32
    return %c0_i32, %c0_i32_0 : i32, i32
  }
  func.func @transform_7(%arg0: i32) -> (i32, i32) {
    %c0_i32 = arith.constant 0 : i32
    %c0_i32_0 = arith.constant 0 : i32
    %c0_i32_1 = arith.constant 0 : i32
    return %c0_i32, %c0_i32_0 : i32, i32
  }
  func.func @transform_8(%arg0: i32) -> (i32, i32) {
    %c0_i32 = arith.constant 0 : i32
    %c0_i32_0 = arith.constant 0 : i32
    %c0_i32_1 = arith.constant 0 : i32
    return %c0_i32, %c0_i32_0 : i32, i32
  }
  func.func @transform_9(%arg0: i32) -> (i32, i32) {
    %c0_i32 = arith.constant 0 : i32
    %c0_i32_0 = arith.constant 0 : i32
    %c0_i32_1 = arith.constant 0 : i32
    return %c0_i32, %c0_i32_0 : i32, i32
  }
  func.func @transform_10(%arg0: i32) -> (i32, i32) {
    %c0_i32 = arith.constant 0 : i32
    %c0_i32_0 = arith.constant 0 : i32
    %c0_i32_1 = arith.constant 0 : i32
    return %c0_i32, %c0_i32_0 : i32, i32
  }
  func.func @transform_11(%arg0: i32) -> (i32, i32) {
    %c0_i32 = arith.constant 0 : i32
    %c0_i32_0 = arith.constant 0 : i32
    %c0_i32_1 = arith.constant 0 : i32
    return %c0_i32, %c0_i32_0 : i32, i32
  }
  func.func @transform_12(%arg0: i32) -> (i32, i32) {
    %c0_i32 = arith.constant 0 : i32
    %c0_i32_0 = arith.constant 0 : i32
    %c0_i32_1 = arith.constant 0 : i32
    return %c0_i32, %c0_i32_0 : i32, i32
  }
  func.func @transform_13(%arg0: i32) -> (i32, i32) {
    %c0_i32 = arith.constant 0 : i32
    %c0_i32_0 = arith.constant 0 : i32
    %c0_i32_1 = arith.constant 0 : i32
    return %c0_i32, %c0_i32_0 : i32, i32
  }
  func.func @transform_14(%arg0: i32) -> (i32, i32) {
    %c0_i32 = arith.constant 0 : i32
    %c0_i32_0 = arith.constant 0 : i32
    %c0_i32_1 = arith.constant 0 : i32
    return %c0_i32, %c0_i32_0 : i32, i32
  }
  func.func @transform_15(%arg0: i32) -> (i32, i32) {
    %c0_i32 = arith.constant 0 : i32
    %c0_i32_0 = arith.constant 0 : i32
    %c0_i32_1 = arith.constant 0 : i32
    return %c0_i32, %c0_i32_0 : i32, i32
  }
  func.func @transform_16(%arg0: i32) -> (i32, i32) {
    %c0_i32 = arith.constant 0 : i32
    %c0_i32_0 = arith.constant 0 : i32
    %c0_i32_1 = arith.constant 0 : i32
    return %c0_i32, %c0_i32_0 : i32, i32
  }
  func.func @transform_17(%arg0: i32) -> (i32, i32) {
    %c0_i32 = arith.constant 0 : i32
    %c0_i32_0 = arith.constant 0 : i32
    %c0_i32_1 = arith.constant 0 : i32
    return %c0_i32, %c0_i32_0 : i32, i32
  }
  func.func @transform_18(%arg0: i32) -> (i32, i32) {
    %c0_i32 = arith.constant 0 : i32
    %c0_i32_0 = arith.constant 0 : i32
    %c0_i32_1 = arith.constant 0 : i32
    return %c0_i32, %c0_i32_0 : i32, i32
  }
  func.func @transform_19(%arg0: i32) -> (i32, i32) {
    %c0_i32 = arith.constant 0 : i32
    %c0_i32_0 = arith.constant 0 : i32
    %c0_i32_1 = arith.constant 0 : i32
    return %c0_i32, %c0_i32_0 : i32, i32
  }
  func.func @transform_20(%arg0: i32) -> (i32, i32) {
    %c0_i32 = arith.constant 0 : i32
    %c0_i32_0 = arith.constant 0 : i32
    %c0_i32_1 = arith.constant 0 : i32
    return %c0_i32, %c0_i32_0 : i32, i32
  }
  func.func @transform_21(%arg0: i32) -> (i32, i32) {
    %c0_i32 = arith.constant 0 : i32
    %c0_i32_0 = arith.constant 0 : i32
    %c0_i32_1 = arith.constant 0 : i32
    return %c0_i32, %c0_i32_0 : i32, i32
  }
  func.func @transform_22(%arg0: i32) -> (i32, i32) {
    %c0_i32 = arith.constant 0 : i32
    %c0_i32_0 = arith.constant 0 : i32
    %c0_i32_1 = arith.constant 0 : i32
    return %c0_i32, %c0_i32_0 : i32, i32
  }
  func.func @transform_23(%arg0: i32) -> (i32, i32, i32) {
    %c0_i32 = arith.constant 0 : i32
    %c0_i32_0 = arith.constant 0 : i32
    %c0_i32_1 = arith.constant 0 : i32
    return %arg0, %c0_i32, %c0_i32_0 : i32, i32, i32
  }
}

module attributes {stable_mosaic.version = 11 : i64} {
  func.func @_decoder_layer_kernel(%arg0: i32, %arg1: memref<1x8x32xbf16, #tpu.memory_space<vmem>>, %arg2: memref<1x8x32xbf16, #tpu.memory_space<vmem>>, %arg3: memref<8x8xf32, #tpu.memory_space<vmem>>, %arg4: memref<32x96xbf16, #tpu.memory_space<vmem>>, %arg5: memref<1x96xf32, #tpu.memory_space<vmem>>, %arg6: memref<32x32xbf16, #tpu.memory_space<vmem>>, %arg7: memref<1x32xf32, #tpu.memory_space<vmem>>, %arg8: memref<1x32xf32, #tpu.memory_space<vmem>>, %arg9: memref<1x32xf32, #tpu.memory_space<vmem>>, %arg10: memref<32x32xbf16, #tpu.memory_space<vmem>>, %arg11: memref<1x32xf32, #tpu.memory_space<vmem>>, %arg12: memref<32x64xbf16, #tpu.memory_space<vmem>>, %arg13: memref<1x64xf32, #tpu.memory_space<vmem>>, %arg14: memref<32x32xbf16, #tpu.memory_space<vmem>>, %arg15: memref<1x32xf32, #tpu.memory_space<vmem>>, %arg16: memref<1x32xf32, #tpu.memory_space<vmem>>, %arg17: memref<1x32xf32, #tpu.memory_space<vmem>>, %arg18: memref<32x64xbf16, #tpu.memory_space<vmem>>, %arg19: memref<1x64xf32, #tpu.memory_space<vmem>>, %arg20: memref<64x32xbf16, #tpu.memory_space<vmem>>, %arg21: memref<1x32xf32, #tpu.memory_space<vmem>>, %arg22: memref<1x32xf32, #tpu.memory_space<vmem>>, %arg23: memref<1x32xf32, #tpu.memory_space<vmem>>, %arg24: memref<1x8x32xbf16, #tpu.memory_space<vmem>>) attributes {dimension_semantics = [#tpu.dimension_semantics<parallel>], iteration_bounds = array<i64: 2>, scalar_prefetch = 0 : i64, scratch_operands = 0 : i64, tpu.core_type = #tpu.core_type<tc>, window_params = [{transform_indices = @transform_0, window_bounds = array<i64: 1, 8, 32>}, {transform_indices = @transform_1, window_bounds = array<i64: 1, 8, 32>}, {pipeline_mode = #tpu.pipeline_mode<synchronous>, transform_indices = @transform_2, window_bounds = array<i64: 8, 8>}, {pipeline_mode = #tpu.pipeline_mode<synchronous>, transform_indices = @transform_3, window_bounds = array<i64: 32, 96>}, {pipeline_mode = #tpu.pipeline_mode<synchronous>, transform_indices = @transform_4, window_bounds = array<i64: 1, 96>}, {pipeline_mode = #tpu.pipeline_mode<synchronous>, transform_indices = @transform_5, window_bounds = array<i64: 32, 32>}, {pipeline_mode = #tpu.pipeline_mode<synchronous>, transform_indices = @transform_6, window_bounds = array<i64: 1, 32>}, {pipeline_mode = #tpu.pipeline_mode<synchronous>, transform_indices = @transform_7, window_bounds = array<i64: 1, 32>}, {pipeline_mode = #tpu.pipeline_mode<synchronous>, transform_indices = @transform_8, window_bounds = array<i64: 1, 32>}, {pipeline_mode = #tpu.pipeline_mode<synchronous>, transform_indices = @transform_9, window_bounds = array<i64: 32, 32>}, {pipeline_mode = #tpu.pipeline_mode<synchronous>, transform_indices = @transform_10, window_bounds = array<i64: 1, 32>}, {pipeline_mode = #tpu.pipeline_mode<synchronous>, transform_indices = @transform_11, window_bounds = array<i64: 32, 64>}, {pipeline_mode = #tpu.pipeline_mode<synchronous>, transform_indices = @transform_12, window_bounds = array<i64: 1, 64>}, {pipeline_mode = #tpu.pipeline_mode<synchronous>, transform_indices = @transform_13, window_bounds = array<i64: 32, 32>}, {pipeline_mode = #tpu.pipeline_mode<synchronous>, transform_indices = @transform_14, window_bounds = array<i64: 1, 32>}, {pipeline_mode = #tpu.pipeline_mode<synchronous>, transform_indices = @transform_15, window_bounds = array<i64: 1, 32>}, {pipeline_mode = #tpu.pipeline_mode<synchronous>, transform_indices = @transform_16, window_bounds = array<i64: 1, 32>}, {pipeline_mode = #tpu.pipeline_mode<synchronous>, transform_indices = @transform_17, window_bounds = array<i64: 32, 64>}, {pipeline_mode = #tpu.pipeline_mode<synchronous>, transform_indices = @transform_18, window_bounds = array<i64: 1, 64>}, {pipeline_mode = #tpu.pipeline_mode<synchronous>, transform_indices = @transform_19, window_bounds = array<i64: 64, 32>}, {pipeline_mode = #tpu.pipeline_mode<synchronous>, transform_indices = @transform_20, window_bounds = array<i64: 1, 32>}, {pipeline_mode = #tpu.pipeline_mode<synchronous>, transform_indices = @transform_21, window_bounds = array<i64: 1, 32>}, {pipeline_mode = #tpu.pipeline_mode<synchronous>, transform_indices = @transform_22, window_bounds = array<i64: 1, 32>}, {transform_indices = @transform_23, window_bounds = array<i64: 1, 8, 32>}]} {
    %c0 = arith.constant 0 : index
    %c0_0 = arith.constant 0 : index
    %c0_1 = arith.constant 0 : index
    %0 = vector.load %arg1[%c0, %c0_0, %c0_1] : memref<1x8x32xbf16, #tpu.memory_space<vmem>>, vector<1x8x32xbf16>
    %1 = vector.shape_cast %0 : vector<1x8x32xbf16> to vector<8x32xbf16>
    %2 = arith.extf %1 : vector<8x32xbf16> to vector<8x32xf32>
    %c0_2 = arith.constant 0 : index
    %c0_3 = arith.constant 0 : index
    %c0_4 = arith.constant 0 : index
    %3 = vector.load %arg2[%c0_2, %c0_3, %c0_4] : memref<1x8x32xbf16, #tpu.memory_space<vmem>>, vector<1x8x32xbf16>
    %4 = vector.shape_cast %3 : vector<1x8x32xbf16> to vector<8x32xbf16>
    %5 = arith.extf %4 : vector<8x32xbf16> to vector<8x32xf32>
    %c0_5 = arith.constant 0 : index
    %c0_6 = arith.constant 0 : index
    %6 = vector.load %arg4[%c0_5, %c0_6] : memref<32x96xbf16, #tpu.memory_space<vmem>>, vector<32x96xbf16>
    %7 = arith.truncf %2 : vector<8x32xf32> to vector<8x32xbf16>
    %cst = arith.constant dense<0.000000e+00> : vector<8x96xf32>
    %8 = tpu.matmul %7, %6, %cst {dimension_numbers = #tpu.dot_dimension_numbers<[1], [0], [0], [1], [0, 0, 1, 1], [], []>} : vector<8x32xbf16>, vector<32x96xbf16>, vector<8x96xf32> -> vector<8x96xf32>
    %c0_7 = arith.constant 0 : index
    %c0_8 = arith.constant 0 : index
    %9 = vector.load %arg5[%c0_7, %c0_8] : memref<1x96xf32, #tpu.memory_space<vmem>>, vector<1x96xf32>
    %10 = vector.broadcast %9 : vector<1x96xf32> to vector<8x96xf32>
    %11 = arith.addf %8, %10 : vector<8x96xf32>
    %12 = vector.extract_strided_slice %11 {offsets = [0, 0], sizes = [8, 32], strides = [1, 1]} : vector<8x96xf32> to vector<8x32xf32>
    %13 = vector.extract_strided_slice %11 {offsets = [0, 32], sizes = [8, 32], strides = [1, 1]} : vector<8x96xf32> to vector<8x32xf32>
    %14 = vector.extract_strided_slice %11 {offsets = [0, 64], sizes = [8, 32], strides = [1, 1]} : vector<8x96xf32> to vector<8x32xf32>
    %c0_9 = arith.constant 0 : index
    %c0_10 = arith.constant 0 : index
    %15 = vector.load %arg6[%c0_9, %c0_10] : memref<32x32xbf16, #tpu.memory_space<vmem>>, vector<32x32xbf16>
    %c0_11 = arith.constant 0 : index
    %c0_12 = arith.constant 0 : index
    %16 = vector.load %arg3[%c0_11, %c0_12] : memref<8x8xf32, #tpu.memory_space<vmem>>, vector<8x8xf32>
    %17 = vector.extract_strided_slice %12 {offsets = [0, 0], sizes = [8, 8], strides = [1, 1]} : vector<8x32xf32> to vector<8x8xf32>
    %18 = vector.extract_strided_slice %13 {offsets = [0, 0], sizes = [8, 8], strides = [1, 1]} : vector<8x32xf32> to vector<8x8xf32>
    %19 = vector.extract_strided_slice %14 {offsets = [0, 0], sizes = [8, 8], strides = [1, 1]} : vector<8x32xf32> to vector<8x8xf32>
    %20 = arith.truncf %17 : vector<8x8xf32> to vector<8x8xbf16>
    %21 = arith.truncf %18 : vector<8x8xf32> to vector<8x8xbf16>
    %cst_13 = arith.constant dense<0.000000e+00> : vector<8x8xf32>
    %22 = tpu.matmul %20, %21, %cst_13 {dimension_numbers = #tpu.dot_dimension_numbers<[1], [1], [0], [0], [0, 0, 1, 0], [], []>} : vector<8x8xbf16>, vector<8x8xbf16>, vector<8x8xf32> -> vector<8x8xf32>
    %cst_14 = arith.constant 0.353553385 : f32
    %23 = vector.broadcast %cst_14 : f32 to vector<8x8xf32>
    %24 = arith.mulf %22, %23 : vector<8x8xf32>
    %25 = arith.addf %24, %16 : vector<8x8xf32>
    %cst_15 = arith.constant dense<0xFF800000> : vector<8xf32>
    %26 = vector.multi_reduction <maximumf>, %25, %cst_15 [1] : vector<8x8xf32> to vector<8xf32>
    %27 = vector.shape_cast %26 : vector<8xf32> to vector<8x1xf32>
    %28 = vector.broadcast %27 : vector<8x1xf32> to vector<8x8xf32>
    %29 = arith.subf %25, %28 : vector<8x8xf32>
    %30 = math.exp %29 : vector<8x8xf32>
    %cst_16 = arith.constant dense<0.000000e+00> : vector<8xf32>
    %31 = vector.multi_reduction <add>, %30, %cst_16 [1] : vector<8x8xf32> to vector<8xf32>
    %32 = vector.shape_cast %31 : vector<8xf32> to vector<8x1xf32>
    %33 = tpu.reciprocal %32 {approx = true} : vector<8x1xf32> -> vector<8x1xf32>
    %34 = vector.broadcast %33 : vector<8x1xf32> to vector<8x8xf32>
    %35 = arith.mulf %30, %34 : vector<8x8xf32>
    %36 = arith.truncf %35 : vector<8x8xf32> to vector<8x8xbf16>
    %37 = arith.truncf %19 : vector<8x8xf32> to vector<8x8xbf16>
    %cst_17 = arith.constant dense<0.000000e+00> : vector<8x8xf32>
    %38 = tpu.matmul %36, %37, %cst_17 {dimension_numbers = #tpu.dot_dimension_numbers<[1], [0], [0], [1], [0, 0, 1, 1], [], []>} : vector<8x8xbf16>, vector<8x8xbf16>, vector<8x8xf32> -> vector<8x8xf32>
    %39 = vector.extract_strided_slice %12 {offsets = [0, 8], sizes = [8, 8], strides = [1, 1]} : vector<8x32xf32> to vector<8x8xf32>
    %40 = vector.extract_strided_slice %13 {offsets = [0, 8], sizes = [8, 8], strides = [1, 1]} : vector<8x32xf32> to vector<8x8xf32>
    %41 = vector.extract_strided_slice %14 {offsets = [0, 8], sizes = [8, 8], strides = [1, 1]} : vector<8x32xf32> to vector<8x8xf32>
    %42 = arith.truncf %39 : vector<8x8xf32> to vector<8x8xbf16>
    %43 = arith.truncf %40 : vector<8x8xf32> to vector<8x8xbf16>
    %cst_18 = arith.constant dense<0.000000e+00> : vector<8x8xf32>
    %44 = tpu.matmul %42, %43, %cst_18 {dimension_numbers = #tpu.dot_dimension_numbers<[1], [1], [0], [0], [0, 0, 1, 0], [], []>} : vector<8x8xbf16>, vector<8x8xbf16>, vector<8x8xf32> -> vector<8x8xf32>
    %cst_19 = arith.constant 0.353553385 : f32
    %45 = vector.broadcast %cst_19 : f32 to vector<8x8xf32>
    %46 = arith.mulf %44, %45 : vector<8x8xf32>
    %47 = arith.addf %46, %16 : vector<8x8xf32>
    %cst_20 = arith.constant dense<0xFF800000> : vector<8xf32>
    %48 = vector.multi_reduction <maximumf>, %47, %cst_20 [1] : vector<8x8xf32> to vector<8xf32>
    %49 = vector.shape_cast %48 : vector<8xf32> to vector<8x1xf32>
    %50 = vector.broadcast %49 : vector<8x1xf32> to vector<8x8xf32>
    %51 = arith.subf %47, %50 : vector<8x8xf32>
    %52 = math.exp %51 : vector<8x8xf32>
    %cst_21 = arith.constant dense<0.000000e+00> : vector<8xf32>
    %53 = vector.multi_reduction <add>, %52, %cst_21 [1] : vector<8x8xf32> to vector<8xf32>
    %54 = vector.shape_cast %53 : vector<8xf32> to vector<8x1xf32>
    %55 = tpu.reciprocal %54 {approx = true} : vector<8x1xf32> -> vector<8x1xf32>
    %56 = vector.broadcast %55 : vector<8x1xf32> to vector<8x8xf32>
    %57 = arith.mulf %52, %56 : vector<8x8xf32>
    %58 = arith.truncf %57 : vector<8x8xf32> to vector<8x8xbf16>
    %59 = arith.truncf %41 : vector<8x8xf32> to vector<8x8xbf16>
    %cst_22 = arith.constant dense<0.000000e+00> : vector<8x8xf32>
    %60 = tpu.matmul %58, %59, %cst_22 {dimension_numbers = #tpu.dot_dimension_numbers<[1], [0], [0], [1], [0, 0, 1, 1], [], []>} : vector<8x8xbf16>, vector<8x8xbf16>, vector<8x8xf32> -> vector<8x8xf32>
    %61 = vector.extract_strided_slice %12 {offsets = [0, 16], sizes = [8, 8], strides = [1, 1]} : vector<8x32xf32> to vector<8x8xf32>
    %62 = vector.extract_strided_slice %13 {offsets = [0, 16], sizes = [8, 8], strides = [1, 1]} : vector<8x32xf32> to vector<8x8xf32>
    %63 = vector.extract_strided_slice %14 {offsets = [0, 16], sizes = [8, 8], strides = [1, 1]} : vector<8x32xf32> to vector<8x8xf32>
    %64 = arith.truncf %61 : vector<8x8xf32> to vector<8x8xbf16>
    %65 = arith.truncf %62 : vector<8x8xf32> to vector<8x8xbf16>
    %cst_23 = arith.constant dense<0.000000e+00> : vector<8x8xf32>
    %66 = tpu.matmul %64, %65, %cst_23 {dimension_numbers = #tpu.dot_dimension_numbers<[1], [1], [0], [0], [0, 0, 1, 0], [], []>} : vector<8x8xbf16>, vector<8x8xbf16>, vector<8x8xf32> -> vector<8x8xf32>
    %cst_24 = arith.constant 0.353553385 : f32
    %67 = vector.broadcast %cst_24 : f32 to vector<8x8xf32>
    %68 = arith.mulf %66, %67 : vector<8x8xf32>
    %69 = arith.addf %68, %16 : vector<8x8xf32>
    %cst_25 = arith.constant dense<0xFF800000> : vector<8xf32>
    %70 = vector.multi_reduction <maximumf>, %69, %cst_25 [1] : vector<8x8xf32> to vector<8xf32>
    %71 = vector.shape_cast %70 : vector<8xf32> to vector<8x1xf32>
    %72 = vector.broadcast %71 : vector<8x1xf32> to vector<8x8xf32>
    %73 = arith.subf %69, %72 : vector<8x8xf32>
    %74 = math.exp %73 : vector<8x8xf32>
    %cst_26 = arith.constant dense<0.000000e+00> : vector<8xf32>
    %75 = vector.multi_reduction <add>, %74, %cst_26 [1] : vector<8x8xf32> to vector<8xf32>
    %76 = vector.shape_cast %75 : vector<8xf32> to vector<8x1xf32>
    %77 = tpu.reciprocal %76 {approx = true} : vector<8x1xf32> -> vector<8x1xf32>
    %78 = vector.broadcast %77 : vector<8x1xf32> to vector<8x8xf32>
    %79 = arith.mulf %74, %78 : vector<8x8xf32>
    %80 = arith.truncf %79 : vector<8x8xf32> to vector<8x8xbf16>
    %81 = arith.truncf %63 : vector<8x8xf32> to vector<8x8xbf16>
    %cst_27 = arith.constant dense<0.000000e+00> : vector<8x8xf32>
    %82 = tpu.matmul %80, %81, %cst_27 {dimension_numbers = #tpu.dot_dimension_numbers<[1], [0], [0], [1], [0, 0, 1, 1], [], []>} : vector<8x8xbf16>, vector<8x8xbf16>, vector<8x8xf32> -> vector<8x8xf32>
    %83 = vector.extract_strided_slice %12 {offsets = [0, 24], sizes = [8, 8], strides = [1, 1]} : vector<8x32xf32> to vector<8x8xf32>
    %84 = vector.extract_strided_slice %13 {offsets = [0, 24], sizes = [8, 8], strides = [1, 1]} : vector<8x32xf32> to vector<8x8xf32>
    %85 = vector.extract_strided_slice %14 {offsets = [0, 24], sizes = [8, 8], strides = [1, 1]} : vector<8x32xf32> to vector<8x8xf32>
    %86 = arith.truncf %83 : vector<8x8xf32> to vector<8x8xbf16>
    %87 = arith.truncf %84 : vector<8x8xf32> to vector<8x8xbf16>
    %cst_28 = arith.constant dense<0.000000e+00> : vector<8x8xf32>
    %88 = tpu.matmul %86, %87, %cst_28 {dimension_numbers = #tpu.dot_dimension_numbers<[1], [1], [0], [0], [0, 0, 1, 0], [], []>} : vector<8x8xbf16>, vector<8x8xbf16>, vector<8x8xf32> -> vector<8x8xf32>
    %cst_29 = arith.constant 0.353553385 : f32
    %89 = vector.broadcast %cst_29 : f32 to vector<8x8xf32>
    %90 = arith.mulf %88, %89 : vector<8x8xf32>
    %91 = arith.addf %90, %16 : vector<8x8xf32>
    %cst_30 = arith.constant dense<0xFF800000> : vector<8xf32>
    %92 = vector.multi_reduction <maximumf>, %91, %cst_30 [1] : vector<8x8xf32> to vector<8xf32>
    %93 = vector.shape_cast %92 : vector<8xf32> to vector<8x1xf32>
    %94 = vector.broadcast %93 : vector<8x1xf32> to vector<8x8xf32>
    %95 = arith.subf %91, %94 : vector<8x8xf32>
    %96 = math.exp %95 : vector<8x8xf32>
    %cst_31 = arith.constant dense<0.000000e+00> : vector<8xf32>
    %97 = vector.multi_reduction <add>, %96, %cst_31 [1] : vector<8x8xf32> to vector<8xf32>
    %98 = vector.shape_cast %97 : vector<8xf32> to vector<8x1xf32>
    %99 = tpu.reciprocal %98 {approx = true} : vector<8x1xf32> -> vector<8x1xf32>
    %100 = vector.broadcast %99 : vector<8x1xf32> to vector<8x8xf32>
    %101 = arith.mulf %96, %100 : vector<8x8xf32>
    %102 = arith.truncf %101 : vector<8x8xf32> to vector<8x8xbf16>
    %103 = arith.truncf %85 : vector<8x8xf32> to vector<8x8xbf16>
    %cst_32 = arith.constant dense<0.000000e+00> : vector<8x8xf32>
    %104 = tpu.matmul %102, %103, %cst_32 {dimension_numbers = #tpu.dot_dimension_numbers<[1], [0], [0], [1], [0, 0, 1, 1], [], []>} : vector<8x8xbf16>, vector<8x8xbf16>, vector<8x8xf32> -> vector<8x8xf32>
    %105 = tpu.concatenate %38, %60, %82, %104 in 1 : vector<8x8xf32>, vector<8x8xf32>, vector<8x8xf32>, vector<8x8xf32> -> vector<8x32xf32>
    %106 = arith.truncf %105 : vector<8x32xf32> to vector<8x32xbf16>
    %cst_33 = arith.constant dense<0.000000e+00> : vector<8x32xf32>
    %107 = tpu.matmul %106, %15, %cst_33 {dimension_numbers = #tpu.dot_dimension_numbers<[1], [0], [0], [1], [0, 0, 1, 1], [], []>} : vector<8x32xbf16>, vector<32x32xbf16>, vector<8x32xf32> -> vector<8x32xf32>
    %c0_34 = arith.constant 0 : index
    %c0_35 = arith.constant 0 : index
    %108 = vector.load %arg7[%c0_34, %c0_35] : memref<1x32xf32, #tpu.memory_space<vmem>>, vector<1x32xf32>
    %109 = vector.broadcast %108 : vector<1x32xf32> to vector<8x32xf32>
    %110 = arith.addf %107, %109 : vector<8x32xf32>
    %111 = arith.addf %2, %110 : vector<8x32xf32>
    %c0_36 = arith.constant 0 : index
    %c0_37 = arith.constant 0 : index
    %112 = vector.load %arg8[%c0_36, %c0_37] : memref<1x32xf32, #tpu.memory_space<vmem>>, vector<1x32xf32>
    %c0_38 = arith.constant 0 : index
    %c0_39 = arith.constant 0 : index
    %113 = vector.load %arg9[%c0_38, %c0_39] : memref<1x32xf32, #tpu.memory_space<vmem>>, vector<1x32xf32>
    %cst_40 = arith.constant dense<0.000000e+00> : vector<8xf32>
    %114 = vector.multi_reduction <add>, %111, %cst_40 [1] : vector<8x32xf32> to vector<8xf32>
    %115 = vector.shape_cast %114 : vector<8xf32> to vector<8x1xf32>
    %cst_41 = arith.constant 3.200000e+01 : f32
    %116 = vector.broadcast %cst_41 : f32 to vector<8x1xf32>
    %117 = arith.divf %115, %116 : vector<8x1xf32>
    %118 = vector.broadcast %117 : vector<8x1xf32> to vector<8x32xf32>
    %119 = arith.subf %111, %118 : vector<8x32xf32>
    %120 = arith.mulf %119, %119 : vector<8x32xf32>
    %cst_42 = arith.constant dense<0.000000e+00> : vector<8xf32>
    %121 = vector.multi_reduction <add>, %120, %cst_42 [1] : vector<8x32xf32> to vector<8xf32>
    %122 = vector.shape_cast %121 : vector<8xf32> to vector<8x1xf32>
    %cst_43 = arith.constant 3.200000e+01 : f32
    %123 = vector.broadcast %cst_43 : f32 to vector<8x1xf32>
    %124 = arith.divf %122, %123 : vector<8x1xf32>
    %cst_44 = arith.constant 9.99999974E-6 : f32
    %125 = vector.broadcast %cst_44 : f32 to vector<8x1xf32>
    %126 = arith.addf %124, %125 : vector<8x1xf32>
    %127 = math.rsqrt %126 : vector<8x1xf32>
    %128 = vector.broadcast %127 : vector<8x1xf32> to vector<8x32xf32>
    %129 = arith.mulf %119, %128 : vector<8x32xf32>
    %130 = vector.broadcast %112 : vector<1x32xf32> to vector<8x32xf32>
    %131 = arith.mulf %129, %130 : vector<8x32xf32>
    %132 = vector.broadcast %113 : vector<1x32xf32> to vector<8x32xf32>
    %133 = arith.addf %131, %132 : vector<8x32xf32>
    %c0_45 = arith.constant 0 : index
    %c0_46 = arith.constant 0 : index
    %134 = vector.load %arg10[%c0_45, %c0_46] : memref<32x32xbf16, #tpu.memory_space<vmem>>, vector<32x32xbf16>
    %135 = arith.truncf %133 : vector<8x32xf32> to vector<8x32xbf16>
    %cst_47 = arith.constant dense<0.000000e+00> : vector<8x32xf32>
    %136 = tpu.matmul %135, %134, %cst_47 {dimension_numbers = #tpu.dot_dimension_numbers<[1], [0], [0], [1], [0, 0, 1, 1], [], []>} : vector<8x32xbf16>, vector<32x32xbf16>, vector<8x32xf32> -> vector<8x32xf32>
    %c0_48 = arith.constant 0 : index
    %c0_49 = arith.constant 0 : index
    %137 = vector.load %arg11[%c0_48, %c0_49] : memref<1x32xf32, #tpu.memory_space<vmem>>, vector<1x32xf32>
    %138 = vector.broadcast %137 : vector<1x32xf32> to vector<8x32xf32>
    %139 = arith.addf %136, %138 : vector<8x32xf32>
    %c0_50 = arith.constant 0 : index
    %c0_51 = arith.constant 0 : index
    %140 = vector.load %arg12[%c0_50, %c0_51] : memref<32x64xbf16, #tpu.memory_space<vmem>>, vector<32x64xbf16>
    %141 = arith.truncf %5 : vector<8x32xf32> to vector<8x32xbf16>
    %cst_52 = arith.constant dense<0.000000e+00> : vector<8x64xf32>
    %142 = tpu.matmul %141, %140, %cst_52 {dimension_numbers = #tpu.dot_dimension_numbers<[1], [0], [0], [1], [0, 0, 1, 1], [], []>} : vector<8x32xbf16>, vector<32x64xbf16>, vector<8x64xf32> -> vector<8x64xf32>
    %c0_53 = arith.constant 0 : index
    %c0_54 = arith.constant 0 : index
    %143 = vector.load %arg13[%c0_53, %c0_54] : memref<1x64xf32, #tpu.memory_space<vmem>>, vector<1x64xf32>
    %144 = vector.broadcast %143 : vector<1x64xf32> to vector<8x64xf32>
    %145 = arith.addf %142, %144 : vector<8x64xf32>
    %146 = vector.extract_strided_slice %145 {offsets = [0, 0], sizes = [8, 32], strides = [1, 1]} : vector<8x64xf32> to vector<8x32xf32>
    %147 = vector.extract_strided_slice %145 {offsets = [0, 32], sizes = [8, 32], strides = [1, 1]} : vector<8x64xf32> to vector<8x32xf32>
    %c0_55 = arith.constant 0 : index
    %c0_56 = arith.constant 0 : index
    %148 = vector.load %arg14[%c0_55, %c0_56] : memref<32x32xbf16, #tpu.memory_space<vmem>>, vector<32x32xbf16>
    %149 = vector.extract_strided_slice %139 {offsets = [0, 0], sizes = [8, 8], strides = [1, 1]} : vector<8x32xf32> to vector<8x8xf32>
    %150 = vector.extract_strided_slice %146 {offsets = [0, 0], sizes = [8, 8], strides = [1, 1]} : vector<8x32xf32> to vector<8x8xf32>
    %151 = vector.extract_strided_slice %147 {offsets = [0, 0], sizes = [8, 8], strides = [1, 1]} : vector<8x32xf32> to vector<8x8xf32>
    %152 = arith.truncf %149 : vector<8x8xf32> to vector<8x8xbf16>
    %153 = arith.truncf %150 : vector<8x8xf32> to vector<8x8xbf16>
    %cst_57 = arith.constant dense<0.000000e+00> : vector<8x8xf32>
    %154 = tpu.matmul %152, %153, %cst_57 {dimension_numbers = #tpu.dot_dimension_numbers<[1], [1], [0], [0], [0, 0, 1, 0], [], []>} : vector<8x8xbf16>, vector<8x8xbf16>, vector<8x8xf32> -> vector<8x8xf32>
    %cst_58 = arith.constant 0.353553385 : f32
    %155 = vector.broadcast %cst_58 : f32 to vector<8x8xf32>
    %156 = arith.mulf %154, %155 : vector<8x8xf32>
    %cst_59 = arith.constant dense<0xFF800000> : vector<8xf32>
    %157 = vector.multi_reduction <maximumf>, %156, %cst_59 [1] : vector<8x8xf32> to vector<8xf32>
    %158 = vector.shape_cast %157 : vector<8xf32> to vector<8x1xf32>
    %159 = vector.broadcast %158 : vector<8x1xf32> to vector<8x8xf32>
    %160 = arith.subf %156, %159 : vector<8x8xf32>
    %161 = math.exp %160 : vector<8x8xf32>
    %cst_60 = arith.constant dense<0.000000e+00> : vector<8xf32>
    %162 = vector.multi_reduction <add>, %161, %cst_60 [1] : vector<8x8xf32> to vector<8xf32>
    %163 = vector.shape_cast %162 : vector<8xf32> to vector<8x1xf32>
    %164 = tpu.reciprocal %163 {approx = true} : vector<8x1xf32> -> vector<8x1xf32>
    %165 = vector.broadcast %164 : vector<8x1xf32> to vector<8x8xf32>
    %166 = arith.mulf %161, %165 : vector<8x8xf32>
    %167 = arith.truncf %166 : vector<8x8xf32> to vector<8x8xbf16>
    %168 = arith.truncf %151 : vector<8x8xf32> to vector<8x8xbf16>
    %cst_61 = arith.constant dense<0.000000e+00> : vector<8x8xf32>
    %169 = tpu.matmul %167, %168, %cst_61 {dimension_numbers = #tpu.dot_dimension_numbers<[1], [0], [0], [1], [0, 0, 1, 1], [], []>} : vector<8x8xbf16>, vector<8x8xbf16>, vector<8x8xf32> -> vector<8x8xf32>
    %170 = vector.extract_strided_slice %139 {offsets = [0, 8], sizes = [8, 8], strides = [1, 1]} : vector<8x32xf32> to vector<8x8xf32>
    %171 = vector.extract_strided_slice %146 {offsets = [0, 8], sizes = [8, 8], strides = [1, 1]} : vector<8x32xf32> to vector<8x8xf32>
    %172 = vector.extract_strided_slice %147 {offsets = [0, 8], sizes = [8, 8], strides = [1, 1]} : vector<8x32xf32> to vector<8x8xf32>
    %173 = arith.truncf %170 : vector<8x8xf32> to vector<8x8xbf16>
    %174 = arith.truncf %171 : vector<8x8xf32> to vector<8x8xbf16>
    %cst_62 = arith.constant dense<0.000000e+00> : vector<8x8xf32>
    %175 = tpu.matmul %173, %174, %cst_62 {dimension_numbers = #tpu.dot_dimension_numbers<[1], [1], [0], [0], [0, 0, 1, 0], [], []>} : vector<8x8xbf16>, vector<8x8xbf16>, vector<8x8xf32> -> vector<8x8xf32>
    %cst_63 = arith.constant 0.353553385 : f32
    %176 = vector.broadcast %cst_63 : f32 to vector<8x8xf32>
    %177 = arith.mulf %175, %176 : vector<8x8xf32>
    %cst_64 = arith.constant dense<0xFF800000> : vector<8xf32>
    %178 = vector.multi_reduction <maximumf>, %177, %cst_64 [1] : vector<8x8xf32> to vector<8xf32>
    %179 = vector.shape_cast %178 : vector<8xf32> to vector<8x1xf32>
    %180 = vector.broadcast %179 : vector<8x1xf32> to vector<8x8xf32>
    %181 = arith.subf %177, %180 : vector<8x8xf32>
    %182 = math.exp %181 : vector<8x8xf32>
    %cst_65 = arith.constant dense<0.000000e+00> : vector<8xf32>
    %183 = vector.multi_reduction <add>, %182, %cst_65 [1] : vector<8x8xf32> to vector<8xf32>
    %184 = vector.shape_cast %183 : vector<8xf32> to vector<8x1xf32>
    %185 = tpu.reciprocal %184 {approx = true} : vector<8x1xf32> -> vector<8x1xf32>
    %186 = vector.broadcast %185 : vector<8x1xf32> to vector<8x8xf32>
    %187 = arith.mulf %182, %186 : vector<8x8xf32>
    %188 = arith.truncf %187 : vector<8x8xf32> to vector<8x8xbf16>
    %189 = arith.truncf %172 : vector<8x8xf32> to vector<8x8xbf16>
    %cst_66 = arith.constant dense<0.000000e+00> : vector<8x8xf32>
    %190 = tpu.matmul %188, %189, %cst_66 {dimension_numbers = #tpu.dot_dimension_numbers<[1], [0], [0], [1], [0, 0, 1, 1], [], []>} : vector<8x8xbf16>, vector<8x8xbf16>, vector<8x8xf32> -> vector<8x8xf32>
    %191 = vector.extract_strided_slice %139 {offsets = [0, 16], sizes = [8, 8], strides = [1, 1]} : vector<8x32xf32> to vector<8x8xf32>
    %192 = vector.extract_strided_slice %146 {offsets = [0, 16], sizes = [8, 8], strides = [1, 1]} : vector<8x32xf32> to vector<8x8xf32>
    %193 = vector.extract_strided_slice %147 {offsets = [0, 16], sizes = [8, 8], strides = [1, 1]} : vector<8x32xf32> to vector<8x8xf32>
    %194 = arith.truncf %191 : vector<8x8xf32> to vector<8x8xbf16>
    %195 = arith.truncf %192 : vector<8x8xf32> to vector<8x8xbf16>
    %cst_67 = arith.constant dense<0.000000e+00> : vector<8x8xf32>
    %196 = tpu.matmul %194, %195, %cst_67 {dimension_numbers = #tpu.dot_dimension_numbers<[1], [1], [0], [0], [0, 0, 1, 0], [], []>} : vector<8x8xbf16>, vector<8x8xbf16>, vector<8x8xf32> -> vector<8x8xf32>
    %cst_68 = arith.constant 0.353553385 : f32
    %197 = vector.broadcast %cst_68 : f32 to vector<8x8xf32>
    %198 = arith.mulf %196, %197 : vector<8x8xf32>
    %cst_69 = arith.constant dense<0xFF800000> : vector<8xf32>
    %199 = vector.multi_reduction <maximumf>, %198, %cst_69 [1] : vector<8x8xf32> to vector<8xf32>
    %200 = vector.shape_cast %199 : vector<8xf32> to vector<8x1xf32>
    %201 = vector.broadcast %200 : vector<8x1xf32> to vector<8x8xf32>
    %202 = arith.subf %198, %201 : vector<8x8xf32>
    %203 = math.exp %202 : vector<8x8xf32>
    %cst_70 = arith.constant dense<0.000000e+00> : vector<8xf32>
    %204 = vector.multi_reduction <add>, %203, %cst_70 [1] : vector<8x8xf32> to vector<8xf32>
    %205 = vector.shape_cast %204 : vector<8xf32> to vector<8x1xf32>
    %206 = tpu.reciprocal %205 {approx = true} : vector<8x1xf32> -> vector<8x1xf32>
    %207 = vector.broadcast %206 : vector<8x1xf32> to vector<8x8xf32>
    %208 = arith.mulf %203, %207 : vector<8x8xf32>
    %209 = arith.truncf %208 : vector<8x8xf32> to vector<8x8xbf16>
    %210 = arith.truncf %193 : vector<8x8xf32> to vector<8x8xbf16>
    %cst_71 = arith.constant dense<0.000000e+00> : vector<8x8xf32>
    %211 = tpu.matmul %209, %210, %cst_71 {dimension_numbers = #tpu.dot_dimension_numbers<[1], [0], [0], [1], [0, 0, 1, 1], [], []>} : vector<8x8xbf16>, vector<8x8xbf16>, vector<8x8xf32> -> vector<8x8xf32>
    %212 = vector.extract_strided_slice %139 {offsets = [0, 24], sizes = [8, 8], strides = [1, 1]} : vector<8x32xf32> to vector<8x8xf32>
    %213 = vector.extract_strided_slice %146 {offsets = [0, 24], sizes = [8, 8], strides = [1, 1]} : vector<8x32xf32> to vector<8x8xf32>
    %214 = vector.extract_strided_slice %147 {offsets = [0, 24], sizes = [8, 8], strides = [1, 1]} : vector<8x32xf32> to vector<8x8xf32>
    %215 = arith.truncf %212 : vector<8x8xf32> to vector<8x8xbf16>
    %216 = arith.truncf %213 : vector<8x8xf32> to vector<8x8xbf16>
    %cst_72 = arith.constant dense<0.000000e+00> : vector<8x8xf32>
    %217 = tpu.matmul %215, %216, %cst_72 {dimension_numbers = #tpu.dot_dimension_numbers<[1], [1], [0], [0], [0, 0, 1, 0], [], []>} : vector<8x8xbf16>, vector<8x8xbf16>, vector<8x8xf32> -> vector<8x8xf32>
    %cst_73 = arith.constant 0.353553385 : f32
    %218 = vector.broadcast %cst_73 : f32 to vector<8x8xf32>
    %219 = arith.mulf %217, %218 : vector<8x8xf32>
    %cst_74 = arith.constant dense<0xFF800000> : vector<8xf32>
    %220 = vector.multi_reduction <maximumf>, %219, %cst_74 [1] : vector<8x8xf32> to vector<8xf32>
    %221 = vector.shape_cast %220 : vector<8xf32> to vector<8x1xf32>
    %222 = vector.broadcast %221 : vector<8x1xf32> to vector<8x8xf32>
    %223 = arith.subf %219, %222 : vector<8x8xf32>
    %224 = math.exp %223 : vector<8x8xf32>
    %cst_75 = arith.constant dense<0.000000e+00> : vector<8xf32>
    %225 = vector.multi_reduction <add>, %224, %cst_75 [1] : vector<8x8xf32> to vector<8xf32>
    %226 = vector.shape_cast %225 : vector<8xf32> to vector<8x1xf32>
    %227 = tpu.reciprocal %226 {approx = true} : vector<8x1xf32> -> vector<8x1xf32>
    %228 = vector.broadcast %227 : vector<8x1xf32> to vector<8x8xf32>
    %229 = arith.mulf %224, %228 : vector<8x8xf32>
    %230 = arith.truncf %229 : vector<8x8xf32> to vector<8x8xbf16>
    %231 = arith.truncf %214 : vector<8x8xf32> to vector<8x8xbf16>
    %cst_76 = arith.constant dense<0.000000e+00> : vector<8x8xf32>
    %232 = tpu.matmul %230, %231, %cst_76 {dimension_numbers = #tpu.dot_dimension_numbers<[1], [0], [0], [1], [0, 0, 1, 1], [], []>} : vector<8x8xbf16>, vector<8x8xbf16>, vector<8x8xf32> -> vector<8x8xf32>
    %233 = tpu.concatenate %169, %190, %211, %232 in 1 : vector<8x8xf32>, vector<8x8xf32>, vector<8x8xf32>, vector<8x8xf32> -> vector<8x32xf32>
    %234 = arith.truncf %233 : vector<8x32xf32> to vector<8x32xbf16>
    %cst_77 = arith.constant dense<0.000000e+00> : vector<8x32xf32>
    %235 = tpu.matmul %234, %148, %cst_77 {dimension_numbers = #tpu.dot_dimension_numbers<[1], [0], [0], [1], [0, 0, 1, 1], [], []>} : vector<8x32xbf16>, vector<32x32xbf16>, vector<8x32xf32> -> vector<8x32xf32>
    %c0_78 = arith.constant 0 : index
    %c0_79 = arith.constant 0 : index
    %236 = vector.load %arg15[%c0_78, %c0_79] : memref<1x32xf32, #tpu.memory_space<vmem>>, vector<1x32xf32>
    %237 = vector.broadcast %236 : vector<1x32xf32> to vector<8x32xf32>
    %238 = arith.addf %235, %237 : vector<8x32xf32>
    %239 = arith.addf %133, %238 : vector<8x32xf32>
    %c0_80 = arith.constant 0 : index
    %c0_81 = arith.constant 0 : index
    %240 = vector.load %arg16[%c0_80, %c0_81] : memref<1x32xf32, #tpu.memory_space<vmem>>, vector<1x32xf32>
    %c0_82 = arith.constant 0 : index
    %c0_83 = arith.constant 0 : index
    %241 = vector.load %arg17[%c0_82, %c0_83] : memref<1x32xf32, #tpu.memory_space<vmem>>, vector<1x32xf32>
    %cst_84 = arith.constant dense<0.000000e+00> : vector<8xf32>
    %242 = vector.multi_reduction <add>, %239, %cst_84 [1] : vector<8x32xf32> to vector<8xf32>
    %243 = vector.shape_cast %242 : vector<8xf32> to vector<8x1xf32>
    %cst_85 = arith.constant 3.200000e+01 : f32
    %244 = vector.broadcast %cst_85 : f32 to vector<8x1xf32>
    %245 = arith.divf %243, %244 : vector<8x1xf32>
    %246 = vector.broadcast %245 : vector<8x1xf32> to vector<8x32xf32>
    %247 = arith.subf %239, %246 : vector<8x32xf32>
    %248 = arith.mulf %247, %247 : vector<8x32xf32>
    %cst_86 = arith.constant dense<0.000000e+00> : vector<8xf32>
    %249 = vector.multi_reduction <add>, %248, %cst_86 [1] : vector<8x32xf32> to vector<8xf32>
    %250 = vector.shape_cast %249 : vector<8xf32> to vector<8x1xf32>
    %cst_87 = arith.constant 3.200000e+01 : f32
    %251 = vector.broadcast %cst_87 : f32 to vector<8x1xf32>
    %252 = arith.divf %250, %251 : vector<8x1xf32>
    %cst_88 = arith.constant 9.99999974E-6 : f32
    %253 = vector.broadcast %cst_88 : f32 to vector<8x1xf32>
    %254 = arith.addf %252, %253 : vector<8x1xf32>
    %255 = math.rsqrt %254 : vector<8x1xf32>
    %256 = vector.broadcast %255 : vector<8x1xf32> to vector<8x32xf32>
    %257 = arith.mulf %247, %256 : vector<8x32xf32>
    %258 = vector.broadcast %240 : vector<1x32xf32> to vector<8x32xf32>
    %259 = arith.mulf %257, %258 : vector<8x32xf32>
    %260 = vector.broadcast %241 : vector<1x32xf32> to vector<8x32xf32>
    %261 = arith.addf %259, %260 : vector<8x32xf32>
    %c0_89 = arith.constant 0 : index
    %c0_90 = arith.constant 0 : index
    %262 = vector.load %arg18[%c0_89, %c0_90] : memref<32x64xbf16, #tpu.memory_space<vmem>>, vector<32x64xbf16>
    %263 = arith.truncf %261 : vector<8x32xf32> to vector<8x32xbf16>
    %cst_91 = arith.constant dense<0.000000e+00> : vector<8x64xf32>
    %264 = tpu.matmul %263, %262, %cst_91 {dimension_numbers = #tpu.dot_dimension_numbers<[1], [0], [0], [1], [0, 0, 1, 1], [], []>} : vector<8x32xbf16>, vector<32x64xbf16>, vector<8x64xf32> -> vector<8x64xf32>
    %c0_92 = arith.constant 0 : index
    %c0_93 = arith.constant 0 : index
    %265 = vector.load %arg19[%c0_92, %c0_93] : memref<1x64xf32, #tpu.memory_space<vmem>>, vector<1x64xf32>
    %266 = vector.broadcast %265 : vector<1x64xf32> to vector<8x64xf32>
    %267 = arith.addf %264, %266 : vector<8x64xf32>
    %cst_94 = arith.constant 0.000000e+00 : f32
    %268 = vector.broadcast %cst_94 : f32 to vector<8x64xf32>
    %269 = arith.maximumf %267, %268 : vector<8x64xf32>
    %c0_95 = arith.constant 0 : index
    %c0_96 = arith.constant 0 : index
    %270 = vector.load %arg20[%c0_95, %c0_96] : memref<64x32xbf16, #tpu.memory_space<vmem>>, vector<64x32xbf16>
    %271 = arith.truncf %269 : vector<8x64xf32> to vector<8x64xbf16>
    %cst_97 = arith.constant dense<0.000000e+00> : vector<8x32xf32>
    %272 = tpu.matmul %271, %270, %cst_97 {dimension_numbers = #tpu.dot_dimension_numbers<[1], [0], [0], [1], [0, 0, 1, 1], [], []>} : vector<8x64xbf16>, vector<64x32xbf16>, vector<8x32xf32> -> vector<8x32xf32>
    %c0_98 = arith.constant 0 : index
    %c0_99 = arith.constant 0 : index
    %273 = vector.load %arg21[%c0_98, %c0_99] : memref<1x32xf32, #tpu.memory_space<vmem>>, vector<1x32xf32>
    %274 = vector.broadcast %273 : vector<1x32xf32> to vector<8x32xf32>
    %275 = arith.addf %272, %274 : vector<8x32xf32>
    %276 = arith.addf %261, %275 : vector<8x32xf32>
    %c0_100 = arith.constant 0 : index
    %c0_101 = arith.constant 0 : index
    %277 = vector.load %arg22[%c0_100, %c0_101] : memref<1x32xf32, #tpu.memory_space<vmem>>, vector<1x32xf32>
    %c0_102 = arith.constant 0 : index
    %c0_103 = arith.constant 0 : index
    %278 = vector.load %arg23[%c0_102, %c0_103] : memref<1x32xf32, #tpu.memory_space<vmem>>, vector<1x32xf32>
    %cst_104 = arith.constant dense<0.000000e+00> : vector<8xf32>
    %279 = vector.multi_reduction <add>, %276, %cst_104 [1] : vector<8x32xf32> to vector<8xf32>
    %280 = vector.shape_cast %279 : vector<8xf32> to vector<8x1xf32>
    %cst_105 = arith.constant 3.200000e+01 : f32
    %281 = vector.broadcast %cst_105 : f32 to vector<8x1xf32>
    %282 = arith.divf %280, %281 : vector<8x1xf32>
    %283 = vector.broadcast %282 : vector<8x1xf32> to vector<8x32xf32>
    %284 = arith.subf %276, %283 : vector<8x32xf32>
    %285 = arith.mulf %284, %284 : vector<8x32xf32>
    %cst_106 = arith.constant dense<0.000000e+00> : vector<8xf32>
    %286 = vector.multi_reduction <add>, %285, %cst_106 [1] : vector<8x32xf32> to vector<8xf32>
    %287 = vector.shape_cast %286 : vector<8xf32> to vector<8x1xf32>
    %cst_107 = arith.constant 3.200000e+01 : f32
    %288 = vector.broadcast %cst_107 : f32 to vector<8x1xf32>
    %289 = arith.divf %287, %288 : vector<8x1xf32>
    %cst_108 = arith.constant 9.99999974E-6 : f32
    %290 = vector.broadcast %cst_108 : f32 to vector<8x1xf32>
    %291 = arith.addf %289, %290 : vector<8x1xf32>
    %292 = math.rsqrt %291 : vector<8x1xf32>
    %293 = vector.broadcast %292 : vector<8x1xf32> to vector<8x32xf32>
    %294 = arith.mulf %284, %293 : vector<8x32xf32>
    %295 = vector.broadcast %277 : vector<1x32xf32> to vector<8x32xf32>
    %296 = arith.mulf %294, %295 : vector<8x32xf32>
    %297 = vector.broadcast %278 : vector<1x32xf32> to vector<8x32xf32>
    %298 = arith.addf %296, %297 : vector<8x32xf32>
    %299 = arith.truncf %298 : vector<8x32xf32> to vector<8x32xbf16>
    %c0_109 = arith.constant 0 : index
    %c0_110 = arith.constant 0 : index
    %c0_111 = arith.constant 0 : index
    %300 = vector.load %arg24[%c0_109, %c0_110, %c0_111] : memref<1x8x32xbf16, #tpu.memory_space<vmem>>, vector<1x8x32xbf16>
    %301 = vector.shape_cast %300 : vector<1x8x32xbf16> to vector<8x32xbf16>
    %302 = vector.shape_cast %299 : vector<8x32xbf16> to vector<1x8x32xbf16>
    tpu.vector_store %arg24[%c0_109, %c0_110, %c0_111], %302 {strides = array<i32>} : memref<1x8x32xbf16, #tpu.memory_space<vmem>>, vector<1x8x32xbf16>,
    return
  }
  func.func @transform_0(%arg0: i32) -> (i32, i32, i32) {
    %c0_i32 = arith.constant 0 : i32
    %c0_i32_0 = arith.constant 0 : i32
    %c0_i32_1 = arith.constant 0 : i32
    return %arg0, %c0_i32, %c0_i32_0 : i32, i32, i32
  }
  func.func @transform_1(%arg0: i32) -> (i32, i32, i32) {
    %c0_i32 = arith.constant 0 : i32
    %c0_i32_0 = arith.constant 0 : i32
    %c0_i32_1 = arith.constant 0 : i32
    return %arg0, %c0_i32, %c0_i32_0 : i32, i32, i32
  }
  func.func @transform_2(%arg0: i32) -> (i32, i32) {
    %c0_i32 = arith.constant 0 : i32
    %c0_i32_0 = arith.constant 0 : i32
    %c0_i32_1 = arith.constant 0 : i32
    return %c0_i32, %c0_i32_0 : i32, i32
  }
  func.func @transform_3(%arg0: i32) -> (i32, i32) {
    %c0_i32 = arith.constant 0 : i32
    %c0_i32_0 = arith.constant 0 : i32
    %c0_i32_1 = arith.constant 0 : i32
    return %c0_i32, %c0_i32_0 : i32, i32
  }
  func.func @transform_4(%arg0: i32) -> (i32, i32) {
    %c0_i32 = arith.constant 0 : i32
    %c0_i32_0 = arith.constant 0 : i32
    %c0_i32_1 = arith.constant 0 : i32
    return %c0_i32, %c0_i32_0 : i32, i32
  }
  func.func @transform_5(%arg0: i32) -> (i32, i32) {
    %c0_i32 = arith.constant 0 : i32
    %c0_i32_0 = arith.constant 0 : i32
    %c0_i32_1 = arith.constant 0 : i32
    return %c0_i32, %c0_i32_0 : i32, i32
  }
  func.func @transform_6(%arg0: i32) -> (i32, i32) {
    %c0_i32 = arith.constant 0 : i32
    %c0_i32_0 = arith.constant 0 : i32
    %c0_i32_1 = arith.constant 0 : i32
    return %c0_i32, %c0_i32_0 : i32, i32
  }
  func.func @transform_7(%arg0: i32) -> (i32, i32) {
    %c0_i32 = arith.constant 0 : i32
    %c0_i32_0 = arith.constant 0 : i32
    %c0_i32_1 = arith.constant 0 : i32
    return %c0_i32, %c0_i32_0 : i32, i32
  }
  func.func @transform_8(%arg0: i32) -> (i32, i32) {
    %c0_i32 = arith.constant 0 : i32
    %c0_i32_0 = arith.constant 0 : i32
    %c0_i32_1 = arith.constant 0 : i32
    return %c0_i32, %c0_i32_0 : i32, i32
  }
  func.func @transform_9(%arg0: i32) -> (i32, i32) {
    %c0_i32 = arith.constant 0 : i32
    %c0_i32_0 = arith.constant 0 : i32
    %c0_i32_1 = arith.constant 0 : i32
    return %c0_i32, %c0_i32_0 : i32, i32
  }
  func.func @transform_10(%arg0: i32) -> (i32, i32) {
    %c0_i32 = arith.constant 0 : i32
    %c0_i32_0 = arith.constant 0 : i32
    %c0_i32_1 = arith.constant 0 : i32
    return %c0_i32, %c0_i32_0 : i32, i32
  }
  func.func @transform_11(%arg0: i32) -> (i32, i32) {
    %c0_i32 = arith.constant 0 : i32
    %c0_i32_0 = arith.constant 0 : i32
    %c0_i32_1 = arith.constant 0 : i32
    return %c0_i32, %c0_i32_0 : i32, i32
  }
  func.func @transform_12(%arg0: i32) -> (i32, i32) {
    %c0_i32 = arith.constant 0 : i32
    %c0_i32_0 = arith.constant 0 : i32
    %c0_i32_1 = arith.constant 0 : i32
    return %c0_i32, %c0_i32_0 : i32, i32
  }
  func.func @transform_13(%arg0: i32) -> (i32, i32) {
    %c0_i32 = arith.constant 0 : i32
    %c0_i32_0 = arith.constant 0 : i32
    %c0_i32_1 = arith.constant 0 : i32
    return %c0_i32, %c0_i32_0 : i32, i32
  }
  func.func @transform_14(%arg0: i32) -> (i32, i32) {
    %c0_i32 = arith.constant 0 : i32
    %c0_i32_0 = arith.constant 0 : i32
    %c0_i32_1 = arith.constant 0 : i32
    return %c0_i32, %c0_i32_0 : i32, i32
  }
  func.func @transform_15(%arg0: i32) -> (i32, i32) {
    %c0_i32 = arith.constant 0 : i32
    %c0_i32_0 = arith.constant 0 : i32
    %c0_i32_1 = arith.constant 0 : i32
    return %c0_i32, %c0_i32_0 : i32, i32
  }
  func.func @transform_16(%arg0: i32) -> (i32, i32) {
    %c0_i32 = arith.constant 0 : i32
    %c0_i32_0 = arith.constant 0 : i32
    %c0_i32_1 = arith.constant 0 : i32
    return %c0_i32, %c0_i32_0 : i32, i32
  }
  func.func @transform_17(%arg0: i32) -> (i32, i32) {
    %c0_i32 = arith.constant 0 : i32
    %c0_i32_0 = arith.constant 0 : i32
    %c0_i32_1 = arith.constant 0 : i32
    return %c0_i32, %c0_i32_0 : i32, i32
  }
  func.func @transform_18(%arg0: i32) -> (i32, i32) {
    %c0_i32 = arith.constant 0 : i32
    %c0_i32_0 = arith.constant 0 : i32
    %c0_i32_1 = arith.constant 0 : i32
    return %c0_i32, %c0_i32_0 : i32, i32
  }
  func.func @transform_19(%arg0: i32) -> (i32, i32) {
    %c0_i32 = arith.constant 0 : i32
    %c0_i32_0 = arith.constant 0 : i32
    %c0_i32_1 = arith.constant 0 : i32
    return %c0_i32, %c0_i32_0 : i32, i32
  }
  func.func @transform_20(%arg0: i32) -> (i32, i32) {
    %c0_i32 = arith.constant 0 : i32
    %c0_i32_0 = arith.constant 0 : i32
    %c0_i32_1 = arith.constant 0 : i32
    return %c0_i32, %c0_i32_0 : i32, i32
  }
  func.func @transform_21(%arg0: i32) -> (i32, i32) {
    %c0_i32 = arith.constant 0 : i32
    %c0_i32_0 = arith.constant 0 : i32
    %c0_i32_1 = arith.constant 0 : i32
    return %c0_i32, %c0_i32_0 : i32, i32
  }
  func.func @transform_22(%arg0: i32) -> (i32, i32) {
    %c0_i32 = arith.constant 0 : i32
    %c0_i32_0 = arith.constant 0 : i32
    %c0_i32_1 = arith.constant 0 : i32
    return %c0_i32, %c0_i32_0 : i32, i32
  }
  func.func @transform_23(%arg0: i32) -> (i32, i32, i32) {
    %c0_i32 = arith.constant 0 : i32
    %c0_i32_0 = arith.constant 0 : i32
    %c0_i32_1 = arith.constant 0 : i32
    return %arg0, %c0_i32, %c0_i32_0 : i32, i32, i32
  }
}

module attributes {stable_mosaic.version = 11 : i64} {
  func.func @_norm_proj_kernel(%arg0: i32, %arg1: memref<16x32xbf16, #tpu.memory_space<vmem>>, %arg2: memref<1x32xf32, #tpu.memory_space<vmem>>, %arg3: memref<1x32xf32, #tpu.memory_space<vmem>>, %arg4: memref<32x128xbf16, #tpu.memory_space<vmem>>, %arg5: memref<1x128xf32, #tpu.memory_space<vmem>>, %arg6: memref<16x128xf32, #tpu.memory_space<vmem>>) attributes {dimension_semantics = [#tpu.dimension_semantics<parallel>], iteration_bounds = array<i64: 1>, scalar_prefetch = 0 : i64, scratch_operands = 0 : i64, tpu.core_type = #tpu.core_type<tc>, window_params = [{pipeline_mode = #tpu.pipeline_mode<synchronous>, transform_indices = @transform_0, window_bounds = array<i64: 16, 32>}, {pipeline_mode = #tpu.pipeline_mode<synchronous>, transform_indices = @transform_1, window_bounds = array<i64: 1, 32>}, {pipeline_mode = #tpu.pipeline_mode<synchronous>, transform_indices = @transform_2, window_bounds = array<i64: 1, 32>}, {transform_indices = @transform_3, window_bounds = array<i64: 32, 128>}, {transform_indices = @transform_4, window_bounds = array<i64: 1, 128>}, {transform_indices = @transform_5, window_bounds = array<i64: 16, 128>}]} {
    %c0 = arith.constant 0 : index
    %c0_0 = arith.constant 0 : index
    %0 = vector.load %arg1[%c0, %c0_0] : memref<16x32xbf16, #tpu.memory_space<vmem>>, vector<16x32xbf16>
    %1 = arith.extf %0 : vector<16x32xbf16> to vector<16x32xf32>
    %c0_1 = arith.constant 0 : index
    %c0_2 = arith.constant 0 : index
    %2 = vector.load %arg2[%c0_1, %c0_2] : memref<1x32xf32, #tpu.memory_space<vmem>>, vector<1x32xf32>
    %c0_3 = arith.constant 0 : index
    %c0_4 = arith.constant 0 : index
    %3 = vector.load %arg3[%c0_3, %c0_4] : memref<1x32xf32, #tpu.memory_space<vmem>>, vector<1x32xf32>
    %cst = arith.constant dense<0.000000e+00> : vector<16xf32>
    %4 = vector.multi_reduction <add>, %1, %cst [1] : vector<16x32xf32> to vector<16xf32>
    %5 = vector.shape_cast %4 : vector<16xf32> to vector<16x1xf32>
    %cst_5 = arith.constant 3.200000e+01 : f32
    %6 = vector.broadcast %cst_5 : f32 to vector<16x1xf32>
    %7 = arith.divf %5, %6 : vector<16x1xf32>
    %8 = vector.broadcast %7 : vector<16x1xf32> to vector<16x32xf32>
    %9 = arith.subf %1, %8 : vector<16x32xf32>
    %10 = arith.mulf %9, %9 : vector<16x32xf32>
    %cst_6 = arith.constant dense<0.000000e+00> : vector<16xf32>
    %11 = vector.multi_reduction <add>, %10, %cst_6 [1] : vector<16x32xf32> to vector<16xf32>
    %12 = vector.shape_cast %11 : vector<16xf32> to vector<16x1xf32>
    %cst_7 = arith.constant 3.200000e+01 : f32
    %13 = vector.broadcast %cst_7 : f32 to vector<16x1xf32>
    %14 = arith.divf %12, %13 : vector<16x1xf32>
    %cst_8 = arith.constant 9.99999974E-6 : f32
    %15 = vector.broadcast %cst_8 : f32 to vector<16x1xf32>
    %16 = arith.addf %14, %15 : vector<16x1xf32>
    %17 = math.rsqrt %16 : vector<16x1xf32>
    %18 = vector.broadcast %17 : vector<16x1xf32> to vector<16x32xf32>
    %19 = arith.mulf %9, %18 : vector<16x32xf32>
    %20 = vector.broadcast %2 : vector<1x32xf32> to vector<16x32xf32>
    %21 = arith.mulf %19, %20 : vector<16x32xf32>
    %22 = vector.broadcast %3 : vector<1x32xf32> to vector<16x32xf32>
    %23 = arith.addf %21, %22 : vector<16x32xf32>
    %c0_9 = arith.constant 0 : index
    %c0_10 = arith.constant 0 : index
    %24 = vector.load %arg4[%c0_9, %c0_10] : memref<32x128xbf16, #tpu.memory_space<vmem>>, vector<32x128xbf16>
    %25 = arith.truncf %23 : vector<16x32xf32> to vector<16x32xbf16>
    %cst_11 = arith.constant dense<0.000000e+00> : vector<16x128xf32>
    %26 = tpu.matmul %25, %24, %cst_11 {dimension_numbers = #tpu.dot_dimension_numbers<[1], [0], [0], [1], [0, 0, 1, 1], [], []>} : vector<16x32xbf16>, vector<32x128xbf16>, vector<16x128xf32> -> vector<16x128xf32>
    %c0_12 = arith.constant 0 : index
    %c0_13 = arith.constant 0 : index
    %27 = vector.load %arg5[%c0_12, %c0_13] : memref<1x128xf32, #tpu.memory_space<vmem>>, vector<1x128xf32>
    %28 = vector.broadcast %27 : vector<1x128xf32> to vector<16x128xf32>
    %29 = arith.addf %26, %28 : vector<16x128xf32>
    %c0_14 = arith.constant 0 : index
    %c0_15 = arith.constant 0 : index
    %30 = vector.load %arg6[%c0_14, %c0_15] : memref<16x128xf32, #tpu.memory_space<vmem>>, vector<16x128xf32>
    tpu.vector_store %arg6[%c0_14, %c0_15], %29 {strides = array<i32>} : memref<16x128xf32, #tpu.memory_space<vmem>>, vector<16x128xf32>,
    return
  }
  func.func @transform_0(%arg0: i32) -> (i32, i32) {
    %c0_i32 = arith.constant 0 : i32
    %c0_i32_0 = arith.constant 0 : i32
    %c0_i32_1 = arith.constant 0 : i32
    return %c0_i32, %c0_i32_0 : i32, i32
  }
  func.func @transform_1(%arg0: i32) -> (i32, i32) {
    %c0_i32 = arith.constant 0 : i32
    %c0_i32_0 = arith.constant 0 : i32
    %c0_i32_1 = arith.constant 0 : i32
    return %c0_i32, %c0_i32_0 : i32, i32
  }
  func.func @transform_2(%arg0: i32) -> (i32, i32) {
    %c0_i32 = arith.constant 0 : i32
    %c0_i32_0 = arith.constant 0 : i32
    %c0_i32_1 = arith.constant 0 : i32
    return %c0_i32, %c0_i32_0 : i32, i32
  }
  func.func @transform_3(%arg0: i32) -> (i32, i32) {
    %c0_i32 = arith.constant 0 : i32
    %c0_i32_0 = arith.constant 0 : i32
    return %c0_i32, %arg0 : i32, i32
  }
  func.func @transform_4(%arg0: i32) -> (i32, i32) {
    %c0_i32 = arith.constant 0 : i32
    %c0_i32_0 = arith.constant 0 : i32
    return %c0_i32, %arg0 : i32, i32
  }
  func.func @transform_5(%arg0: i32) -> (i32, i32) {
    %c0_i32 = arith.constant 0 : i32
    %c0_i32_0 = arith.constant 0 : i32
    return %c0_i32, %arg0 : i32, i32
  }
}

</mosaic_0001>

<llo_original>
// kernel: default_transformer_forward.5
$region0: #{default_transformer_forward.5}
  #allocation0 [shape = 'u32[]', space=smem, size = 0x4, offset = 0x4, fixed_abs, tag = 'smem constant byte address 0x4 - core index']
  #allocation1 [shape = 'u32[144,128]{1,0:T(1,128)}', space=vmem, size = 0x12000, scoped, tag = 'internal scratch']
  %s0 = inlined_call_operand.vmem [shape: bf16[2,8,32], index: 0, kind: input, shape index: {}]
  %s1 = inlined_call_operand.vmem [shape: bf16[32,96], index: 1, kind: input, shape index: {}]
  %s2 = inlined_call_operand.vmem [shape: f32[1,96], index: 2, kind: input, shape index: {}]
  %s3 = inlined_call_operand.vmem [shape: bf16[32,32], index: 3, kind: input, shape index: {}]
  %s4 = inlined_call_operand.vmem [shape: f32[1,32], index: 4, kind: input, shape index: {}]
  %s5 = inlined_call_operand.vmem [shape: f32[1,32], index: 5, kind: input, shape index: {}]
  %s6 = inlined_call_operand.vmem [shape: f32[1,32], index: 6, kind: input, shape index: {}]
  %s7 = inlined_call_operand.vmem [shape: bf16[32,64], index: 7, kind: input, shape index: {}]
  %s8 = inlined_call_operand.vmem [shape: f32[1,64], index: 8, kind: input, shape index: {}]
  %s9 = inlined_call_operand.vmem [shape: bf16[64,32], index: 9, kind: input, shape index: {}]
  %s10 = inlined_call_operand.vmem [shape: f32[1,32], index: 10, kind: input, shape index: {}]
  %s11 = inlined_call_operand.vmem [shape: f32[1,32], index: 11, kind: input, shape index: {}]
  %s12 = inlined_call_operand.vmem [shape: f32[1,32], index: 12, kind: input, shape index: {}]
  %s13 = inlined_call_operand.vmem [shape: bf16[2,8,32], index: 13, kind: output, shape index: {}]
  %s14 = sld [smem:[#allocation0]]
  $region85: #{default_transformer_forward.5} parent=0
    _
  %s16 = ssub.s32 1, %s14
  %s17 = scalar_select 0, %s16, %s14
  loop: start=0, step=1, limit=4
  $region2: #{default_transformer_forward.5} parent=0 // loop_pre_header
    _
  $region3: #{default_transformer_forward.5} parent=0 // loop_header
    %s19 = sphi 0, %s23
    %p20 = scmp.ge.s32.totalorder %s19, 4
    %s29 = sphi 0, %s31
    %s32 = sphi 0, %s29
    %s33 = sphi 0, %s32
    %s49 = sphi 0, %s33
    %s53 = sphi 0, %s53
    %s55 = sphi 0, %s53
    %s56 = sphi 0, %s55
    %s70 = sphi 0, %s56
    %s74 = sphi 0, %s74
    %s76 = sphi 0, %s74
    %s77 = sphi 0, %s76
    %s91 = sphi 0, %s77
    %s95 = sphi 0, %s95
    %s97 = sphi 0, %s95
    %s98 = sphi 0, %s97
    %s112 = sphi 0, %s98
    %s116 = sphi 0, %s116
    %s118 = sphi 0, %s116
    %s119 = sphi 0, %s118
    %s133 = sphi 0, %s119
    %s137 = sphi 0, %s137
    %s139 = sphi 0, %s137
    %s140 = sphi 0, %s139
    %s154 = sphi 0, %s140
    %s158 = sphi 0, %s158
    %s160 = sphi 0, %s158
    %s161 = sphi 0, %s160
    %s175 = sphi 0, %s161
    %s179 = sphi 0, %s179
    %s181 = sphi 0, %s179
    %s182 = sphi 0, %s181
    %s196 = sphi 0, %s182
    %s200 = sphi 0, %s200
    %s202 = sphi 0, %s200
    %s203 = sphi 0, %s202
    %s217 = sphi 0, %s203
    %s221 = sphi 0, %s221
    %s223 = sphi 0, %s221
    %s224 = sphi 0, %s223
    %s238 = sphi 0, %s224
    %s242 = sphi 0, %s242
    %s244 = sphi 0, %s242
    %s245 = sphi 0, %s244
    %s259 = sphi 0, %s245
    %s263 = sphi 0, %s263
    %s265 = sphi 0, %s263
    %s266 = sphi 0, %s265
    %s280 = sphi 0, %s266
    %s284 = sphi 0, %s284
    %s286 = sphi 0, %s284
    %s287 = sphi 0, %s286
    %s301 = sphi 0, %s287
    %s307 = sphi 0, %s309
    %s310 = sphi 0, %s307
    %s311 = sphi 0, %s310
    %s327 = sphi 0, %s311
  $region4: #{default_transformer_forward.5} parent=0 // loop_header_branch
    %22 = sbr.rel (%p20) target = $region8
  $region5: #{default_transformer_forward.5} parent=0 // loop_body
    %s24 = ssub.s32 %s19, 1
    %s25 = ssub.s32 %s19, 2
    %s26 = sadd.s32 %s19, 1
    %s27 = ssub.s32 %s19, %s26
    %p28 = scmp.eq.s32.totalorder %s27, 0
    %s30 = sadd.s32 %s29, 1
    %s31 = scalar_select %p28, %s29, %s30
    %p34 = pneg %p28
    %p35 = scmp.eq.s32.totalorder %s19, 1
    %p36 = por %p34, %p35
    %p37 = scmp.ne.s32.totalorder %s29, %s32
    %p38 = scmp.eq.s32.totalorder %s19, 0
    %p39 = por %p37, %p38
    %p40 = scmp.ne.s32.totalorder %s29, %s32
    %p41 = scmp.eq.s32.totalorder %s24, 1
    %p42 = por %p40, %p41
    %p43 = scmp.ne.s32.totalorder %s32, %s33
    %p44 = scmp.eq.s32.totalorder %s24, 0
    %p45 = por %p43, %p44
    %p46 = scmp.ne.s32.totalorder %s32, %s33
    %p47 = scmp.eq.s32.totalorder %s25, 1
    %p48 = por %p46, %p47
    %p50 = scmp.ne.s32.totalorder %s33, %s49
    %p51 = scmp.eq.s32.totalorder %s25, 0
    %p52 = por %p50, %p51
    %s54 = sadd.s32 %s53, 1
    %p57 = scmp.eq.s32.totalorder %s19, 1
    %p58 = scmp.ne.s32.totalorder %s53, %s55
    %p59 = scmp.eq.s32.totalorder %s19, 0
    %p60 = por %p58, %p59
    %p61 = scmp.ne.s32.totalorder %s53, %s55
    %p62 = scmp.eq.s32.totalorder %s24, 1
    %p63 = por %p61, %p62
    %p64 = scmp.ne.s32.totalorder %s55, %s56
    %p65 = scmp.eq.s32.totalorder %s24, 0
    %p66 = por %p64, %p65
    %p67 = scmp.ne.s32.totalorder %s55, %s56
    %p68 = scmp.eq.s32.totalorder %s25, 1
    %p69 = por %p67, %p68
    %p71 = scmp.ne.s32.totalorder %s56, %s70
    %p72 = scmp.eq.s32.totalorder %s25, 0
    %p73 = por %p71, %p72
    %s75 = sadd.s32 %s74, 1
    %p78 = scmp.eq.s32.totalorder %s19, 1
    %p79 = scmp.ne.s32.totalorder %s74, %s76
    %p80 = scmp.eq.s32.totalorder %s19, 0
    %p81 = por %p79, %p80
    %p82 = scmp.ne.s32.totalorder %s74, %s76
    %p83 = scmp.eq.s32.totalorder %s24, 1
    %p84 = por %p82, %p83
    %p85 = scmp.ne.s32.totalorder %s76, %s77
    %p86 = scmp.eq.s32.totalorder %s24, 0
    %p87 = por %p85, %p86
    %p88 = scmp.ne.s32.totalorder %s76, %s77
    %p89 = scmp.eq.s32.totalorder %s25, 1
    %p90 = por %p88, %p89
    %p92 = scmp.ne.s32.totalorder %s77, %s91
    %p93 = scmp.eq.s32.totalorder %s25, 0
    %p94 = por %p92, %p93
    %s96 = sadd.s32 %s95, 1
    %p99 = scmp.eq.s32.totalorder %s19, 1
    %p100 = scmp.ne.s32.totalorder %s95, %s97
    %p101 = scmp.eq.s32.totalorder %s19, 0
    %p102 = por %p100, %p101
    %p103 = scmp.ne.s32.totalorder %s95, %s97
    %p104 = scmp.eq.s32.totalorder %s24, 1
    %p105 = por %p103, %p104
    %p106 = scmp.ne.s32.totalorder %s97, %s98
    %p107 = scmp.eq.s32.totalorder %s24, 0
    %p108 = por %p106, %p107
    %p109 = scmp.ne.s32.totalorder %s97, %s98
    %p110 = scmp.eq.s32.totalorder %s25, 1
    %p111 = por %p109, %p110
    %p113 = scmp.ne.s32.totalorder %s98, %s112
    %p114 = scmp.eq.s32.totalorder %s25, 0
    %p115 = por %p113, %p114
    %s117 = sadd.s32 %s116, 1
    %p120 = scmp.eq.s32.totalorder %s19, 1
    %p121 = scmp.ne.s32.totalorder %s116, %s118
    %p122 = scmp.eq.s32.totalorder %s19, 0
    %p123 = por %p121, %p122
    %p124 = scmp.ne.s32.totalorder %s116, %s118
    %p125 = scmp.eq.s32.totalorder %s24, 1
    %p126 = por %p124, %p125
    %p127 = scmp.ne.s32.totalorder %s118, %s119
    %p128 = scmp.eq.s32.totalorder %s24, 0
    %p129 = por %p127, %p128
    %p130 = scmp.ne.s32.totalorder %s118, %s119
    %p131 = scmp.eq.s32.totalorder %s25, 1
    %p132 = por %p130, %p131
    %p134 = scmp.ne.s32.totalorder %s119, %s133
    %p135 = scmp.eq.s32.totalorder %s25, 0
    %p136 = por %p134, %p135
    %s138 = sadd.s32 %s137, 1
    %p141 = scmp.eq.s32.totalorder %s19, 1
    %p142 = scmp.ne.s32.totalorder %s137, %s139
    %p143 = scmp.eq.s32.totalorder %s19, 0
    %p144 = por %p142, %p143
    %p145 = scmp.ne.s32.totalorder %s137, %s139
    %p146 = scmp.eq.s32.totalorder %s24, 1
    %p147 = por %p145, %p146
    %p148 = scmp.ne.s32.totalorder %s139, %s140
    %p149 = scmp.eq.s32.totalorder %s24, 0
    %p150 = por %p148, %p149
    %p151 = scmp.ne.s32.totalorder %s139, %s140
    %p152 = scmp.eq.s32.totalorder %s25, 1
    %p153 = por %p151, %p152
    %p155 = scmp.ne.s32.totalorder %s140, %s154
    %p156 = scmp.eq.s32.totalorder %s25, 0
    %p157 = por %p155, %p156
    %s159 = sadd.s32 %s158, 1
    %p162 = scmp.eq.s32.totalorder %s19, 1
    %p163 = scmp.ne.s32.totalorder %s158, %s160
    %p164 = scmp.eq.s32.totalorder %s19, 0
    %p165 = por %p163, %p164
    %p166 = scmp.ne.s32.totalorder %s158, %s160
    %p167 = scmp.eq.s32.totalorder %s24, 1
    %p168 = por %p166, %p167
    %p169 = scmp.ne.s32.totalorder %s160, %s161
    %p170 = scmp.eq.s32.totalorder %s24, 0
    %p171 = por %p169, %p170
    %p172 = scmp.ne.s32.totalorder %s160, %s161
    %p173 = scmp.eq.s32.totalorder %s25, 1
    %p174 = por %p172, %p173
    %p176 = scmp.ne.s32.totalorder %s161, %s175
    %p177 = scmp.eq.s32.totalorder %s25, 0
    %p178 = por %p176, %p177
    %s180 = sadd.s32 %s179, 1
    %p183 = scmp.eq.s32.totalorder %s19, 1
    %p184 = scmp.ne.s32.totalorder %s179, %s181
    %p185 = scmp.eq.s32.totalorder %s19, 0
    %p186 = por %p184, %p185
    %p187 = scmp.ne.s32.totalorder %s179, %s181
    %p188 = scmp.eq.s32.totalorder %s24, 1
    %p189 = por %p187, %p188
    %p190 = scmp.ne.s32.totalorder %s181, %s182
    %p191 = scmp.eq.s32.totalorder %s24, 0
    %p192 = por %p190, %p191
    %p193 = scmp.ne.s32.totalorder %s181, %s182
    %p194 = scmp.eq.s32.totalorder %s25, 1
    %p195 = por %p193, %p194
    %p197 = scmp.ne.s32.totalorder %s182, %s196
    %p198 = scmp.eq.s32.totalorder %s25, 0
    %p199 = por %p197, %p198
    %s201 = sadd.s32 %s200, 1
    %p204 = scmp.eq.s32.totalorder %s19, 1
    %p205 = scmp.ne.s32.totalorder %s200, %s202
    %p206 = scmp.eq.s32.totalorder %s19, 0
    %p207 = por %p205, %p206
    %p208 = scmp.ne.s32.totalorder %s200, %s202
    %p209 = scmp.eq.s32.totalorder %s24, 1
    %p210 = por %p208, %p209
    %p211 = scmp.ne.s32.totalorder %s202, %s203
    %p212 = scmp.eq.s32.totalorder %s24, 0
    %p213 = por %p211, %p212
    %p214 = scmp.ne.s32.totalorder %s202, %s203
    %p215 = scmp.eq.s32.totalorder %s25, 1
    %p216 = por %p214, %p215
    %p218 = scmp.ne.s32.totalorder %s203, %s217
    %p219 = scmp.eq.s32.totalorder %s25, 0
    %p220 = por %p218, %p219
    %s222 = sadd.s32 %s221, 1
    %p225 = scmp.eq.s32.totalorder %s19, 1
    %p226 = scmp.ne.s32.totalorder %s221, %s223
    %p227 = scmp.eq.s32.totalorder %s19, 0
    %p228 = por %p226, %p227
    %p229 = scmp.ne.s32.totalorder %s221, %s223
    %p230 = scmp.eq.s32.totalorder %s24, 1
    %p231 = por %p229, %p230
    %p232 = scmp.ne.s32.totalorder %s223, %s224
    %p233 = scmp.eq.s32.totalorder %s24, 0
    %p234 = por %p232, %p233
    %p235 = scmp.ne.s32.totalorder %s223, %s224
    %p236 = scmp.eq.s32.totalorder %s25, 1
    %p237 = por %p235, %p236
    %p239 = scmp.ne.s32.totalorder %s224, %s238
    %p240 = scmp.eq.s32.totalorder %s25, 0
    %p241 = por %p239, %p240
    %s243 = sadd.s32 %s242, 1
    %p246 = scmp.eq.s32.totalorder %s19, 1
    %p247 = scmp.ne.s32.totalorder %s242, %s244
    %p248 = scmp.eq.s32.totalorder %s19, 0
    %p249 = por %p247, %p248
    %p250 = scmp.ne.s32.totalorder %s242, %s244
    %p251 = scmp.eq.s32.totalorder %s24, 1
    %p252 = por %p250, %p251
    %p253 = scmp.ne.s32.totalorder %s244, %s245
    %p254 = scmp.eq.s32.totalorder %s24, 0
    %p255 = por %p253, %p254
    %p256 = scmp.ne.s32.totalorder %s244, %s245
    %p257 = scmp.eq.s32.totalorder %s25, 1
    %p258 = por %p256, %p257
    %p260 = scmp.ne.s32.totalorder %s245, %s259
    %p261 = scmp.eq.s32.totalorder %s25, 0
    %p262 = por %p260, %p261
    %s264 = sadd.s32 %s263, 1
    %p267 = scmp.eq.s32.totalorder %s19, 1
    %p268 = scmp.ne.s32.totalorder %s263, %s265
    %p269 = scmp.eq.s32.totalorder %s19, 0
    %p270 = por %p268, %p269
    %p271 = scmp.ne.s32.totalorder %s263, %s265
    %p272 = scmp.eq.s32.totalorder %s24, 1
    %p273 = por %p271, %p272
    %p274 = scmp.ne.s32.totalorder %s265, %s266
    %p275 = scmp.eq.s32.totalorder %s24, 0
    %p276 = por %p274, %p275
    %p277 = scmp.ne.s32.totalorder %s265, %s266
    %p278 = scmp.eq.s32.totalorder %s25, 1
    %p279 = por %p277, %p278
    %p281 = scmp.ne.s32.totalorder %s266, %s280
    %p282 = scmp.eq.s32.totalorder %s25, 0
    %p283 = por %p281, %p282
    %s285 = sadd.s32 %s284, 1
    %p288 = scmp.eq.s32.totalorder %s19, 1
    %p289 = scmp.ne.s32.totalorder %s284, %s286
    %p290 = scmp.eq.s32.totalorder %s19, 0
    %p291 = por %p289, %p290
    %p292 = scmp.ne.s32.totalorder %s284, %s286
    %p293 = scmp.eq.s32.totalorder %s24, 1
    %p294 = por %p292, %p293
    %p295 = scmp.ne.s32.totalorder %s286, %s287
    %p296 = scmp.eq.s32.totalorder %s24, 0
    %p297 = por %p295, %p296
    %p298 = scmp.ne.s32.totalorder %s286, %s287
    %p299 = scmp.eq.s32.totalorder %s25, 1
    %p300 = por %p298, %p299
    %p302 = scmp.ne.s32.totalorder %s287, %s301
    %p303 = scmp.eq.s32.totalorder %s25, 0
    %p304 = por %p302, %p303
    %s305 = ssub.s32 %s19, %s26
    %p306 = scmp.eq.s32.totalorder %s305, 0
    %s308 = sadd.s32 %s307, 1
    %s309 = scalar_select %p306, %s307, %s308
    %p312 = pneg %p306
    %p313 = scmp.eq.s32.totalorder %s19, 1
    %p314 = por %p312, %p313
    %p315 = scmp.ne.s32.totalorder %s307, %s310
    %p316 = scmp.eq.s32.totalorder %s19, 0
    %p317 = por %p315, %p316
    %p318 = scmp.ne.s32.totalorder %s307, %s310
    %p319 = scmp.eq.s32.totalorder %s24, 1
    %p320 = por %p318, %p319
    %p321 = scmp.ne.s32.totalorder %s310, %s311
    %p322 = scmp.eq.s32.totalorder %s24, 0
    %p323 = por %p321, %p322
    %p324 = scmp.ne.s32.totalorder %s310, %s311
    %p325 = scmp.eq.s32.totalorder %s25, 1
    %p326 = por %p324, %p325
    %p328 = scmp.ne.s32.totalorder %s311, %s327
    %p329 = scmp.eq.s32.totalorder %s25, 0
    %p330 = por %p328, %p329
    %p331 = scmp.le.s32.totalorder 1, %s19
    %p332 = scmp.lt.s32.totalorder %s19, 3
    %p333 = pnand %p331, %p332
    %p334 = pneg %p333
    // Predicated region
    $region9: #{default_transformer_forward.5} parent=5 // pred_check
      _
    $region10: #{default_transformer_forward.5} parent=5 // pred_check_branch
      %336 = sbr.rel (%p333) target = $region12
    $region11: #{default_transformer_forward.5} parent=5 // pred_region
      %s337 = ssub.s32 %s19, 1
      // Predicated region
      $region13: #{default_transformer_forward.5} parent=11 // pred_check
        %p338 = pneg %p66
      $region14: #{default_transformer_forward.5} parent=11 // pred_check_branch
        %340 = sbr.rel (%p338) target = $region16
      $region15: #{default_transformer_forward.5} parent=11 // pred_region
        _
      $region16: #{default_transformer_forward.5} parent=11 // pred_fallthru
        _
      // Predicated region
      $region17: #{default_transformer_forward.5} parent=11 // pred_check
        %p341 = pneg %p87
      $region18: #{default_transformer_forward.5} parent=11 // pred_check_branch
        %343 = sbr.rel (%p341) target = $region20
      $region19: #{default_transformer_forward.5} parent=11 // pred_region
        _
      $region20: #{default_transformer_forward.5} parent=11 // pred_fallthru
        _
      // Predicated region
      $region21: #{default_transformer_forward.5} parent=11 // pred_check
        %p344 = pneg %p108
      $region22: #{default_transformer_forward.5} parent=11 // pred_check_branch
        %346 = sbr.rel (%p344) target = $region24
      $region23: #{default_transformer_forward.5} parent=11 // pred_region
        _
      $region24: #{default_transformer_forward.5} parent=11 // pred_fallthru
        _
      // Predicated region
      $region25: #{default_transformer_forward.5} parent=11 // pred_check
        %p347 = pneg %p129
      $region26: #{default_transformer_forward.5} parent=11 // pred_check_branch
        %349 = sbr.rel (%p347) target = $region28
      $region27: #{default_transformer_forward.5} parent=11 // pred_region
        _
      $region28: #{default_transformer_forward.5} parent=11 // pred_fallthru
        _
      // Predicated region
      $region29: #{default_transformer_forward.5} parent=11 // pred_check
        %p350 = pneg %p150
      $region30: #{default_transformer_forward.5} parent=11 // pred_check_branch
        %352 = sbr.rel (%p350) target = $region32
      $region31: #{default_transformer_forward.5} parent=11 // pred_region
        _
      $region32: #{default_transformer_forward.5} parent=11 // pred_fallthru
        _
      // Predicated region
      $region33: #{default_transformer_forward.5} parent=11 // pred_check
        %p353 = pneg %p171
      $region34: #{default_transformer_forward.5} parent=11 // pred_check_branch
        %355 = sbr.rel (%p353) target = $region36
      $region35: #{default_transformer_forward.5} parent=11 // pred_region
        _
      $region36: #{default_transformer_forward.5} parent=11 // pred_fallthru
        _
      // Predicated region
      $region37: #{default_transformer_forward.5} parent=11 // pred_check
        %p356 = pneg %p192
      $region38: #{default_transformer_forward.5} parent=11 // pred_check_branch
        %358 = sbr.rel (%p356) target = $region40
      $region39: #{default_transformer_forward.5} parent=11 // pred_region
        _
      $region40: #{default_transformer_forward.5} parent=11 // pred_fallthru
        _
      // Predicated region
      $region41: #{default_transformer_forward.5} parent=11 // pred_check
        %p359 = pneg %p213
      $region42: #{default_transformer_forward.5} parent=11 // pred_check_branch
        %361 = sbr.rel (%p359) target = $region44
      $region43: #{default_transformer_forward.5} parent=11 // pred_region
        _
      $region44: #{default_transformer_forward.5} parent=11 // pred_fallthru
        _
      // Predicated region
      $region45: #{default_transformer_forward.5} parent=11 // pred_check
        %p362 = pneg %p234
      $region46: #{default_transformer_forward.5} parent=11 // pred_check_branch
        %364 = sbr.rel (%p362) target = $region48
      $region47: #{default_transformer_forward.5} parent=11 // pred_region
        _
      $region48: #{default_transformer_forward.5} parent=11 // pred_fallthru
        _
      // Predicated region
      $region49: #{default_transformer_forward.5} parent=11 // pred_check
        %p365 = pneg %p255
      $region50: #{default_transformer_forward.5} parent=11 // pred_check_branch
        %367 = sbr.rel (%p365) target = $region52
      $region51: #{default_transformer_forward.5} parent=11 // pred_region
        _
      $region52: #{default_transformer_forward.5} parent=11 // pred_fallthru
        _
      // Predicated region
      $region53: #{default_transformer_forward.5} parent=11 // pred_check
        %p368 = pneg %p276
      $region54: #{default_transformer_forward.5} parent=11 // pred_check_branch
        %370 = sbr.rel (%p368) target = $region56
      $region55: #{default_transformer_forward.5} parent=11 // pred_region
        _
      $region56: #{default_transformer_forward.5} parent=11 // pred_fallthru
        _
      // Predicated region
      $region57: #{default_transformer_forward.5} parent=11 // pred_check
        %p371 = pneg %p297
      $region58: #{default_transformer_forward.5} parent=11 // pred_check_branch
        %373 = sbr.rel (%p371) target = $region60
      $region59: #{default_transformer_forward.5} parent=11 // pred_region
        _
      $region60: #{default_transformer_forward.5} parent=11 // pred_fallthru
        _
    $region12: #{default_transformer_forward.5} parent=5 // pred_fallthru
      _
    %p374 = scmp.lt.s32.totalorder %s19, 2
    // Predicated region
    $region61: #{default_transformer_forward.5} parent=5 // pred_check
      %p375 = pneg %p374
    $region62: #{default_transformer_forward.5} parent=5 // pred_check_branch
      %377 = sbr.rel (%p375) target = $region64
    $region63: #{default_transformer_forward.5} parent=5 // pred_region
      // Predicated region
      $region65: #{default_transformer_forward.5} parent=63 // pred_check
        %p378 = pneg %p39
      $region66: #{default_transformer_forward.5} parent=63 // pred_check_branch
        %380 = sbr.rel (%p378) target = $region68
      $region67: #{default_transformer_forward.5} parent=63 // pred_region
        %p381 = scmp.lt.s32.totalorder %s19, 1
        %s382 = scalar_select %p381, %s19, 1
        %s383 = smul.addr %s382, 4
        %s384 = scalar_lea.vmem %s0, %s383
      $region68: #{default_transformer_forward.5} parent=63 // pred_fallthru
        _
    $region64: #{default_transformer_forward.5} parent=5 // pred_fallthru
      _
    %p385 = scmp.le.s32.totalorder 1, %s19
    %p386 = scmp.lt.s32.totalorder %s19, 3
    %p387 = pnand %p385, %p386
    %p388 = pneg %p387
    // Predicated region
    $region69: #{default_transformer_forward.5} parent=5 // pred_check
      _
    $region70: #{default_transformer_forward.5} parent=5 // pred_check_branch
      %390 = sbr.rel (%p387) target = $region72
    $region71: #{default_transformer_forward.5} parent=5 // pred_region
      %s391 = ssub.s32 %s19, 1
      %p392 = scmp.lt.s32.totalorder %s24, 1
      %s393 = scalar_select %p392, %s24, 1
      %s394 = smul.addr %s393, 4
      %s395 = scalar_lea.vmem %s0, %s394
      %p396 = pneg %p45
      %p397 = pneg %p42
      %p398 = pneg %p66
      %p399 = pneg %p63
      %p400 = pneg %p87
      %p401 = pneg %p84
      %p402 = pneg %p108
      %p403 = pneg %p105
      %p404 = pneg %p129
      %p405 = pneg %p126
      %p406 = pneg %p150
      %p407 = pneg %p147
      %p408 = pneg %p171
      %p409 = pneg %p168
      %p410 = pneg %p192
      %p411 = pneg %p189
      %p412 = pneg %p213
      %p413 = pneg %p210
      %p414 = pneg %p234
      %p415 = pneg %p231
      %p416 = pneg %p255
      %p417 = pneg %p252
      %p418 = pneg %p276
      %p419 = pneg %p273
      %p420 = pneg %p297
      %p421 = pneg %p294
      %p422 = pneg %p323
      %p423 = pneg %p320
      %p424 = scmp.lt.s32.totalorder %s24, 1
      %s425 = scalar_select %p424, %s24, 1
      %s426 = smul.addr %s425, 4
      %s427 = scalar_lea.vmem %s13, %s426
      %p428 = scmp.lt.s32.totalorder %s24, 1
      %s429 = scalar_select %p428, %s24, 1
      %s430 = smul.addr %s429, 4
      %s431 = scalar_lea.vmem %s0, %s430
      %p432 = scmp.lt.s32.totalorder %s24, 1
      %s433 = scalar_select %p432, %s24, 1
      %s434 = smul.addr %s433, 4
      %s435 = scalar_lea.vmem %s13, %s434
      %v437 = vld [vmem:[%s431] sm:$0xf]
      %v438 = vunpack.c.l.bf16 %v437
      %v439 = vld [vmem:[%s1] sm:$0xf]
      %v440 = vld [vmem:[%s1 + $0x4] sm:$0xf]
      %v441 = vld [vmem:[%s1 + $0x8] sm:$0xf]
      %v442 = vld [vmem:[%s1 + $0xc] sm:$0xf]
      %v443 = vld [vmem:[%s2] sm:$0x1]
      %v445 = vlaneseq
      %v446 = vshrl.u32 %v445, 7
      %v447 = vsub.s32 0, %v446
      %v448 = vrot.slane %v443, %v447
      %v454 = vunpack.c.l.b16 %v439
      %v455 = vunpack.c.l.b16 %v440
      %v456 = vunpack.c.l.b16 %v441
      %v457 = vunpack.c.l.b16 %v442
      %v458 = vpack.c.b16 %v455, %v454
      %v459 = vpack.c.b16 %v457, %v456
      %vm462 = vcmask 261120
      %v464 = vsel %vm462, %v437, 0
      %466 = vmatprep.subr.bf16.mxu0 0
      %467 = vmatpush1.bf16.msra.mxu0 %v458
      %468 = vmatprep.subr.bf16.mxu0 0
      %469 = vmatpush1.bf16.msra.mxu0 %v459
      %470 = vmatprep.subr.bf16.mxu0 0
      %471 = vmatpush1.bf16.msra.mxu0 0
      %472 = vmatprep.subr.bf16.mxu0 0
      %473 = vmatpush1.bf16.msra.mxu0 0
      %474 = vmatprep.subr.bf16.mxu0 0
      %475 = vmatpush1.bf16.msra.mxu0 0
      %476 = vmatprep.subr.bf16.mxu0 0
      %477 = vmatpush1.bf16.msra.mxu0 0
      %478 = vmatprep.subr.bf16.mxu0 0
      %479 = vmatpush1.bf16.msra.mxu0 0
      %480 = vmatprep.subr.bf16.mxu0 0
      %481 = vmatpush1.bf16.msra.mxu0 0
      %482 = vmatprep.subr.bf16.mxu0 0
      %483 = vmatpush1.bf16.msra.mxu0 0
      %484 = vmatprep.subr.bf16.mxu0 0
      %485 = vmatpush1.bf16.msra.mxu0 0
      %486 = vmatprep.subr.bf16.mxu0 0
      %487 = vmatpush1.bf16.msra.mxu0 0
      %488 = vmatprep.subr.bf16.mxu0 0
      %489 = vmatpush1.bf16.msra.mxu0 0
      %490 = vmatprep.subr.bf16.mxu0 0
      %491 = vmatpush1.bf16.msra.mxu0 0
      %492 = vmatprep.subr.bf16.mxu0 0
      %493 = vmatpush1.bf16.msra.mxu0 0
      %494 = vmatprep.subr.bf16.mxu0 0
      %495 = vmatpush1.bf16.msra.mxu0 0
      %496 = vmatprep.subr.bf16.mxu0 0
      %497 = vmatpush1.bf16.msra.mxu0 0
      %498 = vmatprep.mubr.bf16.mxu0 0
      %499 = vmatmul.mubr.bf16.gmra.mrb[0].mxu0 %v464
      %v500 = vpop.f32.mrb[0].mxu0
      %v501 = vadd.f32 %v448, %v500
      %v502 = vpop.f32.mrb[0].mxu0
      %v503 = vpop.f32.mrb[0].mxu0
      %v504 = vpop.f32.mrb[0].mxu0
      %505 = vdwg.mxu0
      %v506 = vld [vmem:[%s3] sm:$0xf]
      %v507 = vld [vmem:[%s3 + $0x4] sm:$0xf]
      %v508 = vld [vmem:[%s3 + $0x8] sm:$0xf]
      %v509 = vld [vmem:[%s3 + $0xc] sm:$0xf]
      %v510 = vpack.c.bf16 %v501, %v501
      %512 = vrot.lane.b32.xlu0 %v510, 96
      %v513 = vpop.permute.xlu0 %512
      %vm514 = vcmask 64512
      %v516 = vsel %vm514, %v510, 0
      %v519 = vsel %vm514, %v513, 0
      %521 = vmatprep.subr.bf16.mxu0 0
      %522 = vmatpush1.bf16.xpose.msra.mxu0 %v519
      %523 = vmatprep.subr.bf16.mxu0 0
      %524 = vmatpush1.bf16.xpose.msra.mxu0 0
      %525 = vmatprep.subr.bf16.mxu0 0
      %526 = vmatpush1.bf16.xpose.msra.mxu0 0
      %527 = vmatprep.subr.bf16.mxu0 0
      %528 = vmatpush1.bf16.xpose.msra.mxu0 0
      %529 = vmatprep.subr.bf16.mxu0 0
      %530 = vmatpush1.bf16.xpose.msra.mxu0 0
      %531 = vmatprep.subr.bf16.mxu0 0
      %532 = vmatpush1.bf16.xpose.msra.mxu0 0
      %533 = vmatprep.subr.bf16.mxu0 0
      %534 = vmatpush1.bf16.xpose.msra.mxu0 0
      %535 = vmatprep.subr.bf16.mxu0 0
      %536 = vmatpush1.bf16.xpose.msra.mxu0 0
      %537 = vmatprep.subr.bf16.mxu0 0
      %538 = vmatpush1.bf16.xpose.msra.mxu0 0
      %539 = vmatprep.subr.bf16.mxu0 0
      %540 = vmatpush1.bf16.xpose.msra.mxu0 0
      %541 = vmatprep.subr.bf16.mxu0 0
      %542 = vmatpush1.bf16.xpose.msra.mxu0 0
      %543 = vmatprep.subr.bf16.mxu0 0
      %544 = vmatpush1.bf16.xpose.msra.mxu0 0
      %545 = vmatprep.subr.bf16.mxu0 0
      %546 = vmatpush1.bf16.xpose.msra.mxu0 0
      %547 = vmatprep.subr.bf16.mxu0 0
      %548 = vmatpush1.bf16.xpose.msra.mxu0 0
      %549 = vmatprep.subr.bf16.mxu0 0
      %550 = vmatpush1.bf16.xpose.msra.mxu0 0
      %551 = vmatprep.subr.bf16.mxu0 0
      %552 = vmatpush1.bf16.xpose.msra.mxu0 0
      %553 = vmatprep.mubr.bf16.mxu0 0
      %554 = vmatmul.mubr.bf16.gmra.mrb[0].mxu0 %v516
      %v555 = vpop.f32.mrb[0].mxu0
      %v556 = vadd.f32 0.0, %v555
      %v557 = vpop.f32.mrb[0].mxu0
      %v558 = vpop.f32.mrb[0].mxu0
      %v559 = vpop.f32.mrb[0].mxu0
      %560 = vdwg.mxu0
      %v561 = vmul.f32 %v556, 0.35355338
      %v562 = vsel %vm514, %v561, -inf
      %563 = vmax.xlane.f32.xlu0 %v562
      %v564 = vpop.xlane.xlu0 %563
      %v565 = vsub.f32 %v561, %v564
      %v566 = vmul.f32 %v565, 1.442695
      %v567 = vpow.pop %v566
      %v568 = vsel %vm514, %v567, 0.0
      %569 = vadd.xlane.f32.xlu0 %v568
      %v570 = vpop.xlane.xlu0 %569
      %v571 = vrcp.pop %v570
      %v572 = vmul.f32 %v567, %v571
      %v573 = vpack.c.bf16 %v572, %v572
      %574 = vrot.lane.b32.xlu0 %v510, 64
      %v575 = vpop.permute.xlu0 %574
      %v577 = vsel %vm514, %v573, 0
      %vm579 = vcmask 1043456
      %v581 = vsel %vm579, %v575, 0
      %583 = vmatprep.subr.bf16.mxu0 0
      %584 = vmatpush1.bf16.msra.mxu0 %v581
      %585 = vmatprep.subr.bf16.mxu0 0
      %586 = vmatpush1.bf16.msra.mxu0 0
      %587 = vmatprep.subr.bf16.mxu0 0
      %588 = vmatpush1.bf16.msra.mxu0 0
      %589 = vmatprep.subr.bf16.mxu0 0
      %590 = vmatpush1.bf16.msra.mxu0 0
      %591 = vmatprep.subr.bf16.mxu0 0
      %592 = vmatpush1.bf16.msra.mxu0 0
      %593 = vmatprep.subr.bf16.mxu0 0
      %594 = vmatpush1.bf16.msra.mxu0 0
      %595 = vmatprep.subr.bf16.mxu0 0
      %596 = vmatpush1.bf16.msra.mxu0 0
      %597 = vmatprep.subr.bf16.mxu0 0
      %598 = vmatpush1.bf16.msra.mxu0 0
      %599 = vmatprep.subr.bf16.mxu0 0
      %600 = vmatpush1.bf16.msra.mxu0 0
      %601 = vmatprep.subr.bf16.mxu0 0
      %602 = vmatpush1.bf16.msra.mxu0 0
      %603 = vmatprep.subr.bf16.mxu0 0
      %604 = vmatpush1.bf16.msra.mxu0 0
      %605 = vmatprep.subr.bf16.mxu0 0
      %606 = vmatpush1.bf16.msra.mxu0 0
      %607 = vmatprep.subr.bf16.mxu0 0
      %608 = vmatpush1.bf16.msra.mxu0 0
      %609 = vmatprep.subr.bf16.mxu0 0
      %610 = vmatpush1.bf16.msra.mxu0 0
      %611 = vmatprep.subr.bf16.mxu0 0
      %612 = vmatpush1.bf16.msra.mxu0 0
      %613 = vmatprep.subr.bf16.mxu0 0
      %614 = vmatpush1.bf16.msra.mxu0 0
      %615 = vmatprep.mubr.bf16.mxu0 0
      %616 = vmatmul.mubr.bf16.gmra.mrb[0].mxu0 %v577
      %v617 = vpop.f32.mrb[0].mxu0
      %v618 = vadd.f32 0.0, %v617
      %v619 = vpop.f32.mrb[0].mxu0
      %v620 = vpop.f32.mrb[0].mxu0
      %v621 = vpop.f32.mrb[0].mxu0
      %622 = vdwg.mxu0
      %623 = vrot.lane.b32.xlu0 %v510, 120
      %v624 = vpop.permute.xlu0 %623
      %625 = vrot.lane.b32.xlu0 %v510, 88
      %v626 = vpop.permute.xlu0 %625
      %v628 = vsel %vm514, %v624, 0
      %v631 = vsel %vm514, %v626, 0
      %633 = vmatprep.subr.bf16.mxu0 0
      %634 = vmatpush1.bf16.xpose.msra.mxu0 %v631
      %635 = vmatprep.subr.bf16.mxu0 0
      %636 = vmatpush1.bf16.xpose.msra.mxu0 0
      %637 = vmatprep.subr.bf16.mxu0 0
      %638 = vmatpush1.bf16.xpose.msra.mxu0 0
      %639 = vmatprep.subr.bf16.mxu0 0
      %640 = vmatpush1.bf16.xpose.msra.mxu0 0
      %641 = vmatprep.subr.bf16.mxu0 0
      %642 = vmatpush1.bf16.xpose.msra.mxu0 0
      %643 = vmatprep.subr.bf16.mxu0 0
      %644 = vmatpush1.bf16.xpose.msra.mxu0 0
      %645 = vmatprep.subr.bf16.mxu0 0
      %646 = vmatpush1.bf16.xpose.msra.mxu0 0
      %647 = vmatprep.subr.bf16.mxu0 0
      %648 = vmatpush1.bf16.xpose.msra.mxu0 0
      %649 = vmatprep.subr.bf16.mxu0 0
      %650 = vmatpush1.bf16.xpose.msra.mxu0 0
      %651 = vmatprep.subr.bf16.mxu0 0
      %652 = vmatpush1.bf16.xpose.msra.mxu0 0
      %653 = vmatprep.subr.bf16.mxu0 0
      %654 = vmatpush1.bf16.xpose.msra.mxu0 0
      %655 = vmatprep.subr.bf16.mxu0 0
      %656 = vmatpush1.bf16.xpose.msra.mxu0 0
      %657 = vmatprep.subr.bf16.mxu0 0
      %658 = vmatpush1.bf16.xpose.msra.mxu0 0
      %659 = vmatprep.subr.bf16.mxu0 0
      %660 = vmatpush1.bf16.xpose.msra.mxu0 0
      %661 = vmatprep.subr.bf16.mxu0 0
      %662 = vmatpush1.bf16.xpose.msra.mxu0 0
      %663 = vmatprep.subr.bf16.mxu0 0
      %664 = vmatpush1.bf16.xpose.msra.mxu0 0
      %665 = vmatprep.mubr.bf16.mxu0 0
      %666 = vmatmul.mubr.bf16.gmra.mrb[0].mxu0 %v628
      %v667 = vpop.f32.mrb[0].mxu0
      %v668 = vadd.f32 0.0, %v667
      %v669 = vpop.f32.mrb[0].mxu0
      %v670 = vpop.f32.mrb[0].mxu0
      %v671 = vpop.f32.mrb[0].mxu0
      %672 = vdwg.mxu0
      %v673 = vmul.f32 %v668, 0.35355338
      %v674 = vsel %vm514, %v673, -inf
      %675 = vmax.xlane.f32.xlu0 %v674
      %v676 = vpop.xlane.xlu0 %675
      %v677 = vsub.f32 %v673, %v676
      %v678 = vmul.f32 %v677, 1.442695
      %v679 = vpow.pop %v678
      %v680 = vsel %vm514, %v679, 0.0
      %681 = vadd.xlane.f32.xlu0 %v680
      %v682 = vpop.xlane.xlu0 %681
      %v683 = vrcp.pop %v682
      %v684 = vmul.f32 %v679, %v683
      %v685 = vpack.c.bf16 %v684, %v684
      %686 = vrot.lane.b32.xlu0 %v510, 56
      %v687 = vpop.permute.xlu0 %686
      %v689 = vsel %vm514, %v685, 0
      %v692 = vsel %vm579, %v687, 0
      %694 = vmatprep.subr.bf16.mxu0 0
      %695 = vmatpush1.bf16.msra.mxu0 %v692
      %696 = vmatprep.subr.bf16.mxu0 0
      %697 = vmatpush1.bf16.msra.mxu0 0
      %698 = vmatprep.subr.bf16.mxu0 0
      %699 = vmatpush1.bf16.msra.mxu0 0
      %700 = vmatprep.subr.bf16.mxu0 0
      %701 = vmatpush1.bf16.msra.mxu0 0
      %702 = vmatprep.subr.bf16.mxu0 0
      %703 = vmatpush1.bf16.msra.mxu0 0
      %704 = vmatprep.subr.bf16.mxu0 0
      %705 = vmatpush1.bf16.msra.mxu0 0
      %706 = vmatprep.subr.bf16.mxu0 0
      %707 = vmatpush1.bf16.msra.mxu0 0
      %708 = vmatprep.subr.bf16.mxu0 0
      %709 = vmatpush1.bf16.msra.mxu0 0
      %710 = vmatprep.subr.bf16.mxu0 0
      %711 = vmatpush1.bf16.msra.mxu0 0
      %712 = vmatprep.subr.bf16.mxu0 0
      %713 = vmatpush1.bf16.msra.mxu0 0
      %714 = vmatprep.subr.bf16.mxu0 0
      %715 = vmatpush1.bf16.msra.mxu0 0
      %716 = vmatprep.subr.bf16.mxu0 0
      %717 = vmatpush1.bf16.msra.mxu0 0
      %718 = vmatprep.subr.bf16.mxu0 0
      %719 = vmatpush1.bf16.msra.mxu0 0
      %720 = vmatprep.subr.bf16.mxu0 0
      %721 = vmatpush1.bf16.msra.mxu0 0
      %722 = vmatprep.subr.bf16.mxu0 0
      %723 = vmatpush1.bf16.msra.mxu0 0
      %724 = vmatprep.subr.bf16.mxu0 0
      %725 = vmatpush1.bf16.msra.mxu0 0
      %726 = vmatprep.mubr.bf16.mxu0 0
      %727 = vmatmul.mubr.bf16.gmra.mrb[0].mxu0 %v689
      %v728 = vpop.f32.mrb[0].mxu0
      %v729 = vadd.f32 0.0, %v728
      %v730 = vpop.f32.mrb[0].mxu0
      %v731 = vpop.f32.mrb[0].mxu0
      %v732 = vpop.f32.mrb[0].mxu0
      %733 = vdwg.mxu0
      %734 = vrot.lane.b32.xlu0 %v510, 112
      %v735 = vpop.permute.xlu0 %734
      %736 = vrot.lane.b32.xlu0 %v510, 80
      %v737 = vpop.permute.xlu0 %736
      %v739 = vsel %vm514, %v735, 0
      %v742 = vsel %vm514, %v737, 0
      %744 = vmatprep.subr.bf16.mxu0 0
      %745 = vmatpush1.bf16.xpose.msra.mxu0 %v742
      %746 = vmatprep.subr.bf16.mxu0 0
      %747 = vmatpush1.bf16.xpose.msra.mxu0 0
      %748 = vmatprep.subr.bf16.mxu0 0
      %749 = vmatpush1.bf16.xpose.msra.mxu0 0
      %750 = vmatprep.subr.bf16.mxu0 0
      %751 = vmatpush1.bf16.xpose.msra.mxu0 0
      %752 = vmatprep.subr.bf16.mxu0 0
      %753 = vmatpush1.bf16.xpose.msra.mxu0 0
      %754 = vmatprep.subr.bf16.mxu0 0
      %755 = vmatpush1.bf16.xpose.msra.mxu0 0
      %756 = vmatprep.subr.bf16.mxu0 0
      %757 = vmatpush1.bf16.xpose.msra.mxu0 0
      %758 = vmatprep.subr.bf16.mxu0 0
      %759 = vmatpush1.bf16.xpose.msra.mxu0 0
      %760 = vmatprep.subr.bf16.mxu0 0
      %761 = vmatpush1.bf16.xpose.msra.mxu0 0
      %762 = vmatprep.subr.bf16.mxu0 0
      %763 = vmatpush1.bf16.xpose.msra.mxu0 0
      %764 = vmatprep.subr.bf16.mxu0 0
      %765 = vmatpush1.bf16.xpose.msra.mxu0 0
      %766 = vmatprep.subr.bf16.mxu0 0
      %767 = vmatpush1.bf16.xpose.msra.mxu0 0
      %768 = vmatprep.subr.bf16.mxu0 0
      %769 = vmatpush1.bf16.xpose.msra.mxu0 0
      %770 = vmatprep.subr.bf16.mxu0 0
      %771 = vmatpush1.bf16.xpose.msra.mxu0 0
      %772 = vmatprep.subr.bf16.mxu0 0
      %773 = vmatpush1.bf16.xpose.msra.mxu0 0
      %774 = vmatprep.subr.bf16.mxu0 0
      %775 = vmatpush1.bf16.xpose.msra.mxu0 0
      %776 = vmatprep.mubr.bf16.mxu0 0
      %777 = vmatmul.mubr.bf16.gmra.mrb[0].mxu0 %v739
      %v778 = vpop.f32.mrb[0].mxu0
      %v779 = vadd.f32 0.0, %v778
      %v780 = vpop.f32.mrb[0].mxu0
      %v781 = vpop.f32.mrb[0].mxu0
      %v782 = vpop.f32.mrb[0].mxu0
      %783 = vdwg.mxu0
      %v784 = vmul.f32 %v779, 0.35355338
      %v785 = vsel %vm514, %v784, -inf
      %786 = vmax.xlane.f32.xlu0 %v785
      %v787 = vpop.xlane.xlu0 %786
      %v788 = vsub.f32 %v784, %v787
      %v789 = vmul.f32 %v788, 1.442695
      %v790 = vpow.pop %v789
      %v791 = vsel %vm514, %v790, 0.0
      %792 = vadd.xlane.f32.xlu0 %v791
      %v793 = vpop.xlane.xlu0 %792
      %v794 = vrcp.pop %v793
      %v795 = vmul.f32 %v790, %v794
      %v796 = vpack.c.bf16 %v795, %v795
      %797 = vrot.lane.b32.xlu0 %v510, 48
      %v798 = vpop.permute.xlu0 %797
      %v800 = vsel %vm514, %v796, 0
      %v803 = vsel %vm579, %v798, 0
      %805 = vmatprep.subr.bf16.mxu0 0
      %806 = vmatpush1.bf16.msra.mxu0 %v803
      %807 = vmatprep.subr.bf16.mxu0 0
      %808 = vmatpush1.bf16.msra.mxu0 0
      %809 = vmatprep.subr.bf16.mxu0 0
      %810 = vmatpush1.bf16.msra.mxu0 0
      %811 = vmatprep.subr.bf16.mxu0 0
      %812 = vmatpush1.bf16.msra.mxu0 0
      %813 = vmatprep.subr.bf16.mxu0 0
      %814 = vmatpush1.bf16.msra.mxu0 0
      %815 = vmatprep.subr.bf16.mxu0 0
      %816 = vmatpush1.bf16.msra.mxu0 0
      %817 = vmatprep.subr.bf16.mxu0 0
      %818 = vmatpush1.bf16.msra.mxu0 0
      %819 = vmatprep.subr.bf16.mxu0 0
      %820 = vmatpush1.bf16.msra.mxu0 0
      %821 = vmatprep.subr.bf16.mxu0 0
      %822 = vmatpush1.bf16.msra.mxu0 0
      %823 = vmatprep.subr.bf16.mxu0 0
      %824 = vmatpush1.bf16.msra.mxu0 0
      %825 = vmatprep.subr.bf16.mxu0 0
      %826 = vmatpush1.bf16.msra.mxu0 0
      %827 = vmatprep.subr.bf16.mxu0 0
      %828 = vmatpush1.bf16.msra.mxu0 0
      %829 = vmatprep.subr.bf16.mxu0 0
      %830 = vmatpush1.bf16.msra.mxu0 0
      %831 = vmatprep.subr.bf16.mxu0 0
      %832 = vmatpush1.bf16.msra.mxu0 0
      %833 = vmatprep.subr.bf16.mxu0 0
      %834 = vmatpush1.bf16.msra.mxu0 0
      %835 = vmatprep.subr.bf16.mxu0 0
      %836 = vmatpush1.bf16.msra.mxu0 0
      %837 = vmatprep.mubr.bf16.mxu0 0
      %838 = vmatmul.mubr.bf16.gmra.mrb[0].mxu0 %v800
      %v839 = vpop.f32.mrb[0].mxu0
      %v840 = vadd.f32 0.0, %v839
      %v841 = vpop.f32.mrb[0].mxu0
      %v842 = vpop.f32.mrb[0].mxu0
      %v843 = vpop.f32.mrb[0].mxu0
      %844 = vdwg.mxu0
      %845 = vrot.lane.b32.xlu0 %v510, 104
      %v846 = vpop.permute.xlu0 %845
      %847 = vrot.lane.b32.xlu0 %v510, 72
      %v848 = vpop.permute.xlu0 %847
      %v850 = vsel %vm514, %v846, 0
      %v853 = vsel %vm514, %v848, 0
      %855 = vmatprep.subr.bf16.mxu0 0
      %856 = vmatpush1.bf16.xpose.msra.mxu0 %v853
      %857 = vmatprep.subr.bf16.mxu0 0
      %858 = vmatpush1.bf16.xpose.msra.mxu0 0
      %859 = vmatprep.subr.bf16.mxu0 0
      %860 = vmatpush1.bf16.xpose.msra.mxu0 0
      %861 = vmatprep.subr.bf16.mxu0 0
      %862 = vmatpush1.bf16.xpose.msra.mxu0 0
      %863 = vmatprep.subr.bf16.mxu0 0
      %864 = vmatpush1.bf16.xpose.msra.mxu0 0
      %865 = vmatprep.subr.bf16.mxu0 0
      %866 = vmatpush1.bf16.xpose.msra.mxu0 0
      %867 = vmatprep.subr.bf16.mxu0 0
      %868 = vmatpush1.bf16.xpose.msra.mxu0 0
      %869 = vmatprep.subr.bf16.mxu0 0
      %870 = vmatpush1.bf16.xpose.msra.mxu0 0
      %871 = vmatprep.subr.bf16.mxu0 0
      %872 = vmatpush1.bf16.xpose.msra.mxu0 0
      %873 = vmatprep.subr.bf16.mxu0 0
      %874 = vmatpush1.bf16.xpose.msra.mxu0 0
      %875 = vmatprep.subr.bf16.mxu0 0
      %876 = vmatpush1.bf16.xpose.msra.mxu0 0
      %877 = vmatprep.subr.bf16.mxu0 0
      %878 = vmatpush1.bf16.xpose.msra.mxu0 0
      %879 = vmatprep.subr.bf16.mxu0 0
      %880 = vmatpush1.bf16.xpose.msra.mxu0 0
      %881 = vmatprep.subr.bf16.mxu0 0
      %882 = vmatpush1.bf16.xpose.msra.mxu0 0
      %883 = vmatprep.subr.bf16.mxu0 0
      %884 = vmatpush1.bf16.xpose.msra.mxu0 0
      %885 = vmatprep.subr.bf16.mxu0 0
      %886 = vmatpush1.bf16.xpose.msra.mxu0 0
      %887 = vmatprep.mubr.bf16.mxu0 0
      %888 = vmatmul.mubr.bf16.gmra.mrb[0].mxu0 %v850
      %v889 = vpop.f32.mrb[0].mxu0
      %v890 = vadd.f32 0.0, %v889
      %v891 = vpop.f32.mrb[0].mxu0
      %v892 = vpop.f32.mrb[0].mxu0
      %v893 = vpop.f32.mrb[0].mxu0
      %894 = vdwg.mxu0
      %v895 = vmul.f32 %v890, 0.35355338
      %v896 = vsel %vm514, %v895, -inf
      %897 = vmax.xlane.f32.xlu0 %v896
      %v898 = vpop.xlane.xlu0 %897
      %v899 = vsub.f32 %v895, %v898
      %v900 = vmul.f32 %v899, 1.442695
      %v901 = vpow.pop %v900
      %v902 = vsel %vm514, %v901, 0.0
      %903 = vadd.xlane.f32.xlu0 %v902
      %v904 = vpop.xlane.xlu0 %903
      %v905 = vrcp.pop %v904
      %v906 = vmul.f32 %v901, %v905
      %v907 = vpack.c.bf16 %v906, %v906
      %908 = vrot.lane.b32.xlu0 %v510, 40
      %v909 = vpop.permute.xlu0 %908
      %v911 = vsel %vm514, %v907, 0
      %v914 = vsel %vm579, %v909, 0
      %916 = vmatprep.subr.bf16.mxu0 0
      %917 = vmatpush1.bf16.msra.mxu0 %v914
      %918 = vmatprep.subr.bf16.mxu0 0
      %919 = vmatpush1.bf16.msra.mxu0 0
      %920 = vmatprep.subr.bf16.mxu0 0
      %921 = vmatpush1.bf16.msra.mxu0 0
      %922 = vmatprep.subr.bf16.mxu0 0
      %923 = vmatpush1.bf16.msra.mxu0 0
      %924 = vmatprep.subr.bf16.mxu0 0
      %925 = vmatpush1.bf16.msra.mxu0 0
      %926 = vmatprep.subr.bf16.mxu0 0
      %927 = vmatpush1.bf16.msra.mxu0 0
      %928 = vmatprep.subr.bf16.mxu0 0
      %929 = vmatpush1.bf16.msra.mxu0 0
      %930 = vmatprep.subr.bf16.mxu0 0
      %931 = vmatpush1.bf16.msra.mxu0 0
      %932 = vmatprep.subr.bf16.mxu0 0
      %933 = vmatpush1.bf16.msra.mxu0 0
      %934 = vmatprep.subr.bf16.mxu0 0
      %935 = vmatpush1.bf16.msra.mxu0 0
      %936 = vmatprep.subr.bf16.mxu0 0
      %937 = vmatpush1.bf16.msra.mxu0 0
      %938 = vmatprep.subr.bf16.mxu0 0
      %939 = vmatpush1.bf16.msra.mxu0 0
      %940 = vmatprep.subr.bf16.mxu0 0
      %941 = vmatpush1.bf16.msra.mxu0 0
      %942 = vmatprep.subr.bf16.mxu0 0
      %943 = vmatpush1.bf16.msra.mxu0 0
      %944 = vmatprep.subr.bf16.mxu0 0
      %945 = vmatpush1.bf16.msra.mxu0 0
      %946 = vmatprep.subr.bf16.mxu0 0
      %947 = vmatpush1.bf16.msra.mxu0 0
      %948 = vmatprep.mubr.bf16.mxu0 0
      %949 = vmatmul.mubr.bf16.gmra.mrb[0].mxu0 %v911
      %v950 = vpop.f32.mrb[0].mxu0
      %v951 = vadd.f32 0.0, %v950
      %v952 = vpop.f32.mrb[0].mxu0
      %v953 = vpop.f32.mrb[0].mxu0
      %v954 = vpop.f32.mrb[0].mxu0
      %955 = vdwg.mxu0
      %957 = vrot.lane.b32.xlu0 %v729, 8
      %v958 = vpop.permute.xlu0 %957
      %961 = vrot.lane.b32.xlu0 %v840, 16
      %v962 = vpop.permute.xlu0 %961
      %965 = vrot.lane.b32.xlu0 %v951, 24
      %v966 = vpop.permute.xlu0 %965
      %v968 = vsel %vm514, %v618, %v958
      %vm969 = vcmask 130048
      %v970 = vsel %vm969, %v968, %v962
      %vm971 = vcmask 195584
      %v972 = vsel %vm971, %v970, %v966
      %v973 = vpack.c.bf16 %v972, %v972
      %v974 = vld [vmem:[%s4] sm:$0x1]
      %v976 = vlaneseq
      %v977 = vshrl.u32 %v976, 7
      %v978 = vsub.s32 0, %v977
      %v979 = vrot.slane %v974, %v978
      %v985 = vunpack.c.l.b16 %v506
      %v986 = vunpack.c.l.b16 %v507
      %v987 = vunpack.c.l.b16 %v508
      %v988 = vunpack.c.l.b16 %v509
      %v989 = vpack.c.b16 %v986, %v985
      %v990 = vpack.c.b16 %v988, %v987
      %v994 = vsel %vm462, %v973, 0
      %996 = vmatprep.subr.bf16.mxu0 0
      %997 = vmatpush1.bf16.msra.mxu0 %v989
      %998 = vmatprep.subr.bf16.mxu0 0
      %999 = vmatpush1.bf16.msra.mxu0 %v990
      %1000 = vmatprep.subr.bf16.mxu0 0
      %1001 = vmatpush1.bf16.msra.mxu0 0
      %1002 = vmatprep.subr.bf16.mxu0 0
      %1003 = vmatpush1.bf16.msra.mxu0 0
      %1004 = vmatprep.subr.bf16.mxu0 0
      %1005 = vmatpush1.bf16.msra.mxu0 0
      %1006 = vmatprep.subr.bf16.mxu0 0
      %1007 = vmatpush1.bf16.msra.mxu0 0
      %1008 = vmatprep.subr.bf16.mxu0 0
      %1009 = vmatpush1.bf16.msra.mxu0 0
      %1010 = vmatprep.subr.bf16.mxu0 0
      %1011 = vmatpush1.bf16.msra.mxu0 0
      %1012 = vmatprep.subr.bf16.mxu0 0
      %1013 = vmatpush1.bf16.msra.mxu0 0
      %1014 = vmatprep.subr.bf16.mxu0 0
      %1015 = vmatpush1.bf16.msra.mxu0 0
      %1016 = vmatprep.subr.bf16.mxu0 0
      %1017 = vmatpush1.bf16.msra.mxu0 0
      %1018 = vmatprep.subr.bf16.mxu0 0
      %1019 = vmatpush1.bf16.msra.mxu0 0
      %1020 = vmatprep.subr.bf16.mxu0 0
      %1021 = vmatpush1.bf16.msra.mxu0 0
      %1022 = vmatprep.subr.bf16.mxu0 0
      %1023 = vmatpush1.bf16.msra.mxu0 0
      %1024 = vmatprep.subr.bf16.mxu0 0
      %1025 = vmatpush1.bf16.msra.mxu0 0
      %1026 = vmatprep.subr.bf16.mxu0 0
      %1027 = vmatpush1.bf16.msra.mxu0 0
      %1028 = vmatprep.mubr.bf16.mxu0 0
      %1029 = vmatmul.mubr.bf16.gmra.mrb[0].mxu0 %v994
      %v1030 = vpop.f32.mrb[0].mxu0
      %v1031 = vadd.f32 %v979, %v1030
      %v1032 = vpop.f32.mrb[0].mxu0
      %v1033 = vpop.f32.mrb[0].mxu0
      %v1034 = vpop.f32.mrb[0].mxu0
      %1035 = vdwg.mxu0
      %v1036 = vadd.f32 %v438, %v1031
      %v1037 = vld [vmem:[%s5] sm:$0x1]
      %v1038 = vld [vmem:[%s6] sm:$0x1]
      %v1039 = vsel %vm462, %v1036, 0.0
      %1040 = vadd.xlane.f32.xlu0 %v1039
      %v1041 = vpop.xlane.xlu0 %1040
      %v1042 = vrcp.pop 32.0
      %v1043 = vmul.f32 %v1041, %v1042
      %v1044 = vsub.f32 %v1036, %v1043
      %v1045 = vmul.f32 %v1044, %v1044
      %v1046 = vsel %vm462, %v1045, 0.0
      %1047 = vadd.xlane.f32.xlu0 %v1046
      %v1048 = vpop.xlane.xlu0 %1047
      %v1049 = vmul.f32 %v1048, %v1042
      %v1050 = vadd.f32 %v1049, 1e-05
      %v1051 = vrsqrt.pop %v1050
      %v1052 = vmul.f32 %v1044, %v1051
      %v1054 = vlaneseq
      %v1055 = vshrl.u32 %v1054, 7
      %v1056 = vsub.s32 0, %v1055
      %v1057 = vrot.slane %v1037, %v1056
      %v1059 = vmul.f32 %v1052, %v1057
      %v1061 = vlaneseq
      %v1062 = vshrl.u32 %v1061, 7
      %v1063 = vsub.s32 0, %v1062
      %v1064 = vrot.slane %v1038, %v1063
      %v1066 = vadd.f32 %v1059, %v1064
      %v1067 = vld [vmem:[%s7] sm:$0xf]
      %v1068 = vld [vmem:[%s7 + $0x4] sm:$0xf]
      %v1069 = vld [vmem:[%s7 + $0x8] sm:$0xf]
      %v1070 = vld [vmem:[%s7 + $0xc] sm:$0xf]
      %v1071 = vpack.c.bf16 %v1066, %v1066
      %v1072 = vld [vmem:[%s8] sm:$0x1]
      %v1074 = vlaneseq
      %v1075 = vshrl.u32 %v1074, 7
      %v1076 = vsub.s32 0, %v1075
      %v1077 = vrot.slane %v1072, %v1076
      %v1083 = vunpack.c.l.b16 %v1067
      %v1084 = vunpack.c.l.b16 %v1068
      %v1085 = vunpack.c.l.b16 %v1069
      %v1086 = vunpack.c.l.b16 %v1070
      %v1087 = vpack.c.b16 %v1084, %v1083
      %v1088 = vpack.c.b16 %v1086, %v1085
      %v1092 = vsel %vm462, %v1071, 0
      %1094 = vmatprep.subr.bf16.mxu0 0
      %1095 = vmatpush1.bf16.msra.mxu0 %v1087
      %1096 = vmatprep.subr.bf16.mxu0 0
      %1097 = vmatpush1.bf16.msra.mxu0 %v1088
      %1098 = vmatprep.subr.bf16.mxu0 0
      %1099 = vmatpush1.bf16.msra.mxu0 0
      %1100 = vmatprep.subr.bf16.mxu0 0
      %1101 = vmatpush1.bf16.msra.mxu0 0
      %1102 = vmatprep.subr.bf16.mxu0 0
      %1103 = vmatpush1.bf16.msra.mxu0 0
      %1104 = vmatprep.subr.bf16.mxu0 0
      %1105 = vmatpush1.bf16.msra.mxu0 0
      %1106 = vmatprep.subr.bf16.mxu0 0
      %1107 = vmatpush1.bf16.msra.mxu0 0
      %1108 = vmatprep.subr.bf16.mxu0 0
      %1109 = vmatpush1.bf16.msra.mxu0 0
      %1110 = vmatprep.subr.bf16.mxu0 0
      %1111 = vmatpush1.bf16.msra.mxu0 0
      %1112 = vmatprep.subr.bf16.mxu0 0
      %1113 = vmatpush1.bf16.msra.mxu0 0
      %1114 = vmatprep.subr.bf16.mxu0 0
      %1115 = vmatpush1.bf16.msra.mxu0 0
      %1116 = vmatprep.subr.bf16.mxu0 0
      %1117 = vmatpush1.bf16.msra.mxu0 0
      %1118 = vmatprep.subr.bf16.mxu0 0
      %1119 = vmatpush1.bf16.msra.mxu0 0
      %1120 = vmatprep.subr.bf16.mxu0 0
      %1121 = vmatpush1.bf16.msra.mxu0 0
      %1122 = vmatprep.subr.bf16.mxu0 0
      %1123 = vmatpush1.bf16.msra.mxu0 0
      %1124 = vmatprep.subr.bf16.mxu0 0
      %1125 = vmatpush1.bf16.msra.mxu0 0
      %1126 = vmatprep.mubr.bf16.mxu0 0
      %1127 = vmatmul.mubr.bf16.gmra.mrb[0].mxu0 %v1092
      %v1128 = vpop.f32.mrb[0].mxu0
      %v1129 = vadd.f32 %v1077, %v1128
      %v1130 = vpop.f32.mrb[0].mxu0
      %v1131 = vpop.f32.mrb[0].mxu0
      %v1132 = vpop.f32.mrb[0].mxu0
      %1133 = vdwg.mxu0
      %v1134 = vmax.f32 %v1129, 0.0
      %v1135 = vld [vmem:[%s9] sm:$0xf]
      %v1136 = vld [vmem:[%s9 + $0x4] sm:$0xf]
      %v1137 = vld [vmem:[%s9 + $0x8] sm:$0xf]
      %v1138 = vld [vmem:[%s9 + $0xc] sm:$0xf]
      %v1139 = vld [vmem:[%s9 + $0x10] sm:$0xf]
      %v1140 = vld [vmem:[%s9 + $0x14] sm:$0xf]
      %v1141 = vld [vmem:[%s9 + $0x18] sm:$0xf]
      %v1142 = vld [vmem:[%s9 + $0x1c] sm:$0xf]
      %v1143 = vpack.c.bf16 %v1134, %v1134
      %v1144 = vld [vmem:[%s10] sm:$0x1]
      %v1146 = vlaneseq
      %v1147 = vshrl.u32 %v1146, 7
      %v1148 = vsub.s32 0, %v1147
      %v1149 = vrot.slane %v1144, %v1148
      %v1159 = vunpack.c.l.b16 %v1135
      %v1160 = vunpack.c.l.b16 %v1136
      %v1161 = vunpack.c.l.b16 %v1137
      %v1162 = vunpack.c.l.b16 %v1138
      %v1163 = vunpack.c.l.b16 %v1139
      %v1164 = vunpack.c.l.b16 %v1140
      %v1165 = vunpack.c.l.b16 %v1141
      %v1166 = vunpack.c.l.b16 %v1142
      %v1167 = vpack.c.b16 %v1160, %v1159
      %v1168 = vpack.c.b16 %v1162, %v1161
      %v1169 = vpack.c.b16 %v1164, %v1163
      %v1170 = vpack.c.b16 %v1166, %v1165
      %vm1175 = vcmask 523264
      %v1177 = vsel %vm1175, %v1143, 0
      %1179 = vmatprep.subr.bf16.mxu0 0
      %1180 = vmatpush1.bf16.msra.mxu0 %v1167
      %1181 = vmatprep.subr.bf16.mxu0 0
      %1182 = vmatpush1.bf16.msra.mxu0 %v1168
      %1183 = vmatprep.subr.bf16.mxu0 0
      %1184 = vmatpush1.bf16.msra.mxu0 %v1169
      %1185 = vmatprep.subr.bf16.mxu0 0
      %1186 = vmatpush1.bf16.msra.mxu0 %v1170
      %1187 = vmatprep.subr.bf16.mxu0 0
      %1188 = vmatpush1.bf16.msra.mxu0 0
      %1189 = vmatprep.subr.bf16.mxu0 0
      %1190 = vmatpush1.bf16.msra.mxu0 0
      %1191 = vmatprep.subr.bf16.mxu0 0
      %1192 = vmatpush1.bf16.msra.mxu0 0
      %1193 = vmatprep.subr.bf16.mxu0 0
      %1194 = vmatpush1.bf16.msra.mxu0 0
      %1195 = vmatprep.subr.bf16.mxu0 0
      %1196 = vmatpush1.bf16.msra.mxu0 0
      %1197 = vmatprep.subr.bf16.mxu0 0
      %1198 = vmatpush1.bf16.msra.mxu0 0
      %1199 = vmatprep.subr.bf16.mxu0 0
      %1200 = vmatpush1.bf16.msra.mxu0 0
      %1201 = vmatprep.subr.bf16.mxu0 0
      %1202 = vmatpush1.bf16.msra.mxu0 0
      %1203 = vmatprep.subr.bf16.mxu0 0
      %1204 = vmatpush1.bf16.msra.mxu0 0
      %1205 = vmatprep.subr.bf16.mxu0 0
      %1206 = vmatpush1.bf16.msra.mxu0 0
      %1207 = vmatprep.subr.bf16.mxu0 0
      %1208 = vmatpush1.bf16.msra.mxu0 0
      %1209 = vmatprep.subr.bf16.mxu0 0
      %1210 = vmatpush1.bf16.msra.mxu0 0
      %1211 = vmatprep.mubr.bf16.mxu0 0
      %1212 = vmatmul.mubr.bf16.gmra.mrb[0].mxu0 %v1177
      %v1213 = vpop.f32.mrb[0].mxu0
      %v1214 = vadd.f32 %v1149, %v1213
      %v1215 = vpop.f32.mrb[0].mxu0
      %v1216 = vpop.f32.mrb[0].mxu0
      %v1217 = vpop.f32.mrb[0].mxu0
      %1218 = vdwg.mxu0
      %v1219 = vadd.f32 %v1066, %v1214
      %v1220 = vld [vmem:[%s11] sm:$0x1]
      %v1221 = vld [vmem:[%s12] sm:$0x1]
      %v1222 = vsel %vm462, %v1219, 0.0
      %1223 = vadd.xlane.f32.xlu0 %v1222
      %v1224 = vpop.xlane.xlu0 %1223
      %v1225 = vmul.f32 %v1224, %v1042
      %v1226 = vsub.f32 %v1219, %v1225
      %v1227 = vmul.f32 %v1226, %v1226
      %v1228 = vsel %vm462, %v1227, 0.0
      %1229 = vadd.xlane.f32.xlu0 %v1228
      %v1230 = vpop.xlane.xlu0 %1229
      %v1231 = vmul.f32 %v1230, %v1042
      %v1232 = vadd.f32 %v1231, 1e-05
      %v1233 = vrsqrt.pop %v1232
      %v1234 = vmul.f32 %v1226, %v1233
      %v1236 = vlaneseq
      %v1237 = vshrl.u32 %v1236, 7
      %v1238 = vsub.s32 0, %v1237
      %v1239 = vrot.slane %v1220, %v1238
      %v1241 = vmul.f32 %v1234, %v1239
      %v1243 = vlaneseq
      %v1244 = vshrl.u32 %v1243, 7
      %v1245 = vsub.s32 0, %v1244
      %v1246 = vrot.slane %v1221, %v1245
      %v1248 = vadd.f32 %v1241, %v1246
      %v1249 = vpack.c.bf16 %v1248, %v1248
      %vm1250 = vcmask 257024
      %1251 = vst.msk [vmem:[%s435] sm:$0xf] %vm1250, %v1249
      %p1252 = scmp.lt.s32.totalorder %s24, 1
      %s1253 = scalar_select %p1252, %s24, 1
      %s1254 = smul.addr %s1253, 4
      %s1255 = scalar_lea.vmem %s13, %s1254
      // Predicated region
      $region73: #{default_transformer_forward.5} parent=71 // pred_check
        %p1256 = pneg %p320
      $region74: #{default_transformer_forward.5} parent=71 // pred_check_branch
        %1258 = sbr.rel (%p1256) target = $region76
      $region75: #{default_transformer_forward.5} parent=71 // pred_region
        _
      $region76: #{default_transformer_forward.5} parent=71 // pred_fallthru
        _
    $region72: #{default_transformer_forward.5} parent=5 // pred_fallthru
      _
    %p1259 = scmp.le.s32.totalorder 2, %s19
    // Predicated region
    $region77: #{default_transformer_forward.5} parent=5 // pred_check
      %p1260 = pneg %p1259
    $region78: #{default_transformer_forward.5} parent=5 // pred_check_branch
      %1262 = sbr.rel (%p1260) target = $region80
    $region79: #{default_transformer_forward.5} parent=5 // pred_region
      %s1263 = ssub.s32 %s19, 2
      // Predicated region
      $region81: #{default_transformer_forward.5} parent=79 // pred_check
        %p1264 = pneg %p326
      $region82: #{default_transformer_forward.5} parent=79 // pred_check_branch
        %1266 = sbr.rel (%p1264) target = $region84
      $region83: #{default_transformer_forward.5} parent=79 // pred_region
        %p1267 = scmp.lt.s32.totalorder %s25, 1
        %s1268 = scalar_select %p1267, %s25, 1
        %s1269 = smul.addr %s1268, 4
        %s1270 = scalar_lea.vmem %s13, %s1269
      $region84: #{default_transformer_forward.5} parent=79 // pred_fallthru
        _
    $region80: #{default_transformer_forward.5} parent=5 // pred_fallthru
      _
  $region6: #{default_transformer_forward.5} parent=0 // loop_footer
    %s23 = sadd.s32 1, %s19
  $region7: #{default_transformer_forward.5} parent=0 // loop_footer_branch
    %18 = sbr.rel target = $region3
  $region8: #{default_transformer_forward.5} parent=0 // loop_exit
    _

// kernel: default_transformer_forward.6
$region0: #{default_transformer_forward.6}
  #allocation0 [shape = 'u32[]', space=smem, size = 0x4, offset = 0x4, fixed_abs, tag = 'smem constant byte address 0x4 - core index']
  #allocation1 [shape = 'u32[144,128]{1,0:T(1,128)}', space=vmem, size = 0x12000, scoped, tag = 'internal scratch']
  %s0 = inlined_call_operand.vmem [shape: bf16[2,8,32], index: 0, kind: input, shape index: {}]
  %s1 = inlined_call_operand.vmem [shape: bf16[32,96], index: 1, kind: input, shape index: {}]
  %s2 = inlined_call_operand.vmem [shape: f32[1,96], index: 2, kind: input, shape index: {}]
  %s3 = inlined_call_operand.vmem [shape: bf16[32,32], index: 3, kind: input, shape index: {}]
  %s4 = inlined_call_operand.vmem [shape: f32[1,32], index: 4, kind: input, shape index: {}]
  %s5 = inlined_call_operand.vmem [shape: f32[1,32], index: 5, kind: input, shape index: {}]
  %s6 = inlined_call_operand.vmem [shape: f32[1,32], index: 6, kind: input, shape index: {}]
  %s7 = inlined_call_operand.vmem [shape: bf16[32,64], index: 7, kind: input, shape index: {}]
  %s8 = inlined_call_operand.vmem [shape: f32[1,64], index: 8, kind: input, shape index: {}]
  %s9 = inlined_call_operand.vmem [shape: bf16[64,32], index: 9, kind: input, shape index: {}]
  %s10 = inlined_call_operand.vmem [shape: f32[1,32], index: 10, kind: input, shape index: {}]
  %s11 = inlined_call_operand.vmem [shape: f32[1,32], index: 11, kind: input, shape index: {}]
  %s12 = inlined_call_operand.vmem [shape: f32[1,32], index: 12, kind: input, shape index: {}]
  %s13 = inlined_call_operand.vmem [shape: f32[1,32], index: 13, kind: input, shape index: {}]
  %s14 = inlined_call_operand.vmem [shape: f32[1,32], index: 14, kind: input, shape index: {}]
  %s15 = inlined_call_operand.vmem [shape: bf16[2,8,32], index: 15, kind: output, shape index: {}]
  %s16 = sld [smem:[#allocation0]]
  $region93: #{default_transformer_forward.6} parent=0
    _
  %s18 = ssub.s32 1, %s16
  %s19 = scalar_select 0, %s18, %s16
  loop: start=0, step=1, limit=4
  $region2: #{default_transformer_forward.6} parent=0 // loop_pre_header
    _
  $region3: #{default_transformer_forward.6} parent=0 // loop_header
    %s21 = sphi 0, %s25
    %p22 = scmp.ge.s32.totalorder %s21, 4
    %s31 = sphi 0, %s33
    %s34 = sphi 0, %s31
    %s35 = sphi 0, %s34
    %s51 = sphi 0, %s35
    %s55 = sphi 0, %s55
    %s57 = sphi 0, %s55
    %s58 = sphi 0, %s57
    %s72 = sphi 0, %s58
    %s76 = sphi 0, %s76
    %s78 = sphi 0, %s76
    %s79 = sphi 0, %s78
    %s93 = sphi 0, %s79
    %s97 = sphi 0, %s97
    %s99 = sphi 0, %s97
    %s100 = sphi 0, %s99
    %s114 = sphi 0, %s100
    %s118 = sphi 0, %s118
    %s120 = sphi 0, %s118
    %s121 = sphi 0, %s120
    %s135 = sphi 0, %s121
    %s139 = sphi 0, %s139
    %s141 = sphi 0, %s139
    %s142 = sphi 0, %s141
    %s156 = sphi 0, %s142
    %s160 = sphi 0, %s160
    %s162 = sphi 0, %s160
    %s163 = sphi 0, %s162
    %s177 = sphi 0, %s163
    %s181 = sphi 0, %s181
    %s183 = sphi 0, %s181
    %s184 = sphi 0, %s183
    %s198 = sphi 0, %s184
    %s202 = sphi 0, %s202
    %s204 = sphi 0, %s202
    %s205 = sphi 0, %s204
    %s219 = sphi 0, %s205
    %s223 = sphi 0, %s223
    %s225 = sphi 0, %s223
    %s226 = sphi 0, %s225
    %s240 = sphi 0, %s226
    %s244 = sphi 0, %s244
    %s246 = sphi 0, %s244
    %s247 = sphi 0, %s246
    %s261 = sphi 0, %s247
    %s265 = sphi 0, %s265
    %s267 = sphi 0, %s265
    %s268 = sphi 0, %s267
    %s282 = sphi 0, %s268
    %s286 = sphi 0, %s286
    %s288 = sphi 0, %s286
    %s289 = sphi 0, %s288
    %s303 = sphi 0, %s289
    %s307 = sphi 0, %s307
    %s309 = sphi 0, %s307
    %s310 = sphi 0, %s309
    %s324 = sphi 0, %s310
    %s328 = sphi 0, %s328
    %s330 = sphi 0, %s328
    %s331 = sphi 0, %s330
    %s345 = sphi 0, %s331
    %s351 = sphi 0, %s353
    %s354 = sphi 0, %s351
    %s355 = sphi 0, %s354
    %s371 = sphi 0, %s355
  $region4: #{default_transformer_forward.6} parent=0 // loop_header_branch
    %24 = sbr.rel (%p22) target = $region8
  $region5: #{default_transformer_forward.6} parent=0 // loop_body
    %s26 = ssub.s32 %s21, 1
    %s27 = ssub.s32 %s21, 2
    %s28 = sadd.s32 %s21, 1
    %s29 = ssub.s32 %s21, %s28
    %p30 = scmp.eq.s32.totalorder %s29, 0
    %s32 = sadd.s32 %s31, 1
    %s33 = scalar_select %p30, %s31, %s32
    %p36 = pneg %p30
    %p37 = scmp.eq.s32.totalorder %s21, 1
    %p38 = por %p36, %p37
    %p39 = scmp.ne.s32.totalorder %s31, %s34
    %p40 = scmp.eq.s32.totalorder %s21, 0
    %p41 = por %p39, %p40
    %p42 = scmp.ne.s32.totalorder %s31, %s34
    %p43 = scmp.eq.s32.totalorder %s26, 1
    %p44 = por %p42, %p43
    %p45 = scmp.ne.s32.totalorder %s34, %s35
    %p46 = scmp.eq.s32.totalorder %s26, 0
    %p47 = por %p45, %p46
    %p48 = scmp.ne.s32.totalorder %s34, %s35
    %p49 = scmp.eq.s32.totalorder %s27, 1
    %p50 = por %p48, %p49
    %p52 = scmp.ne.s32.totalorder %s35, %s51
    %p53 = scmp.eq.s32.totalorder %s27, 0
    %p54 = por %p52, %p53
    %s56 = sadd.s32 %s55, 1
    %p59 = scmp.eq.s32.totalorder %s21, 1
    %p60 = scmp.ne.s32.totalorder %s55, %s57
    %p61 = scmp.eq.s32.totalorder %s21, 0
    %p62 = por %p60, %p61
    %p63 = scmp.ne.s32.totalorder %s55, %s57
    %p64 = scmp.eq.s32.totalorder %s26, 1
    %p65 = por %p63, %p64
    %p66 = scmp.ne.s32.totalorder %s57, %s58
    %p67 = scmp.eq.s32.totalorder %s26, 0
    %p68 = por %p66, %p67
    %p69 = scmp.ne.s32.totalorder %s57, %s58
    %p70 = scmp.eq.s32.totalorder %s27, 1
    %p71 = por %p69, %p70
    %p73 = scmp.ne.s32.totalorder %s58, %s72
    %p74 = scmp.eq.s32.totalorder %s27, 0
    %p75 = por %p73, %p74
    %s77 = sadd.s32 %s76, 1
    %p80 = scmp.eq.s32.totalorder %s21, 1
    %p81 = scmp.ne.s32.totalorder %s76, %s78
    %p82 = scmp.eq.s32.totalorder %s21, 0
    %p83 = por %p81, %p82
    %p84 = scmp.ne.s32.totalorder %s76, %s78
    %p85 = scmp.eq.s32.totalorder %s26, 1
    %p86 = por %p84, %p85
    %p87 = scmp.ne.s32.totalorder %s78, %s79
    %p88 = scmp.eq.s32.totalorder %s26, 0
    %p89 = por %p87, %p88
    %p90 = scmp.ne.s32.totalorder %s78, %s79
    %p91 = scmp.eq.s32.totalorder %s27, 1
    %p92 = por %p90, %p91
    %p94 = scmp.ne.s32.totalorder %s79, %s93
    %p95 = scmp.eq.s32.totalorder %s27, 0
    %p96 = por %p94, %p95
    %s98 = sadd.s32 %s97, 1
    %p101 = scmp.eq.s32.totalorder %s21, 1
    %p102 = scmp.ne.s32.totalorder %s97, %s99
    %p103 = scmp.eq.s32.totalorder %s21, 0
    %p104 = por %p102, %p103
    %p105 = scmp.ne.s32.totalorder %s97, %s99
    %p106 = scmp.eq.s32.totalorder %s26, 1
    %p107 = por %p105, %p106
    %p108 = scmp.ne.s32.totalorder %s99, %s100
    %p109 = scmp.eq.s32.totalorder %s26, 0
    %p110 = por %p108, %p109
    %p111 = scmp.ne.s32.totalorder %s99, %s100
    %p112 = scmp.eq.s32.totalorder %s27, 1
    %p113 = por %p111, %p112
    %p115 = scmp.ne.s32.totalorder %s100, %s114
    %p116 = scmp.eq.s32.totalorder %s27, 0
    %p117 = por %p115, %p116
    %s119 = sadd.s32 %s118, 1
    %p122 = scmp.eq.s32.totalorder %s21, 1
    %p123 = scmp.ne.s32.totalorder %s118, %s120
    %p124 = scmp.eq.s32.totalorder %s21, 0
    %p125 = por %p123, %p124
    %p126 = scmp.ne.s32.totalorder %s118, %s120
    %p127 = scmp.eq.s32.totalorder %s26, 1
    %p128 = por %p126, %p127
    %p129 = scmp.ne.s32.totalorder %s120, %s121
    %p130 = scmp.eq.s32.totalorder %s26, 0
    %p131 = por %p129, %p130
    %p132 = scmp.ne.s32.totalorder %s120, %s121
    %p133 = scmp.eq.s32.totalorder %s27, 1
    %p134 = por %p132, %p133
    %p136 = scmp.ne.s32.totalorder %s121, %s135
    %p137 = scmp.eq.s32.totalorder %s27, 0
    %p138 = por %p136, %p137
    %s140 = sadd.s32 %s139, 1
    %p143 = scmp.eq.s32.totalorder %s21, 1
    %p144 = scmp.ne.s32.totalorder %s139, %s141
    %p145 = scmp.eq.s32.totalorder %s21, 0
    %p146 = por %p144, %p145
    %p147 = scmp.ne.s32.totalorder %s139, %s141
    %p148 = scmp.eq.s32.totalorder %s26, 1
    %p149 = por %p147, %p148
    %p150 = scmp.ne.s32.totalorder %s141, %s142
    %p151 = scmp.eq.s32.totalorder %s26, 0
    %p152 = por %p150, %p151
    %p153 = scmp.ne.s32.totalorder %s141, %s142
    %p154 = scmp.eq.s32.totalorder %s27, 1
    %p155 = por %p153, %p154
    %p157 = scmp.ne.s32.totalorder %s142, %s156
    %p158 = scmp.eq.s32.totalorder %s27, 0
    %p159 = por %p157, %p158
    %s161 = sadd.s32 %s160, 1
    %p164 = scmp.eq.s32.totalorder %s21, 1
    %p165 = scmp.ne.s32.totalorder %s160, %s162
    %p166 = scmp.eq.s32.totalorder %s21, 0
    %p167 = por %p165, %p166
    %p168 = scmp.ne.s32.totalorder %s160, %s162
    %p169 = scmp.eq.s32.totalorder %s26, 1
    %p170 = por %p168, %p169
    %p171 = scmp.ne.s32.totalorder %s162, %s163
    %p172 = scmp.eq.s32.totalorder %s26, 0
    %p173 = por %p171, %p172
    %p174 = scmp.ne.s32.totalorder %s162, %s163
    %p175 = scmp.eq.s32.totalorder %s27, 1
    %p176 = por %p174, %p175
    %p178 = scmp.ne.s32.totalorder %s163, %s177
    %p179 = scmp.eq.s32.totalorder %s27, 0
    %p180 = por %p178, %p179
    %s182 = sadd.s32 %s181, 1
    %p185 = scmp.eq.s32.totalorder %s21, 1
    %p186 = scmp.ne.s32.totalorder %s181, %s183
    %p187 = scmp.eq.s32.totalorder %s21, 0
    %p188 = por %p186, %p187
    %p189 = scmp.ne.s32.totalorder %s181, %s183
    %p190 = scmp.eq.s32.totalorder %s26, 1
    %p191 = por %p189, %p190
    %p192 = scmp.ne.s32.totalorder %s183, %s184
    %p193 = scmp.eq.s32.totalorder %s26, 0
    %p194 = por %p192, %p193
    %p195 = scmp.ne.s32.totalorder %s183, %s184
    %p196 = scmp.eq.s32.totalorder %s27, 1
    %p197 = por %p195, %p196
    %p199 = scmp.ne.s32.totalorder %s184, %s198
    %p200 = scmp.eq.s32.totalorder %s27, 0
    %p201 = por %p199, %p200
    %s203 = sadd.s32 %s202, 1
    %p206 = scmp.eq.s32.totalorder %s21, 1
    %p207 = scmp.ne.s32.totalorder %s202, %s204
    %p208 = scmp.eq.s32.totalorder %s21, 0
    %p209 = por %p207, %p208
    %p210 = scmp.ne.s32.totalorder %s202, %s204
    %p211 = scmp.eq.s32.totalorder %s26, 1
    %p212 = por %p210, %p211
    %p213 = scmp.ne.s32.totalorder %s204, %s205
    %p214 = scmp.eq.s32.totalorder %s26, 0
    %p215 = por %p213, %p214
    %p216 = scmp.ne.s32.totalorder %s204, %s205
    %p217 = scmp.eq.s32.totalorder %s27, 1
    %p218 = por %p216, %p217
    %p220 = scmp.ne.s32.totalorder %s205, %s219
    %p221 = scmp.eq.s32.totalorder %s27, 0
    %p222 = por %p220, %p221
    %s224 = sadd.s32 %s223, 1
    %p227 = scmp.eq.s32.totalorder %s21, 1
    %p228 = scmp.ne.s32.totalorder %s223, %s225
    %p229 = scmp.eq.s32.totalorder %s21, 0
    %p230 = por %p228, %p229
    %p231 = scmp.ne.s32.totalorder %s223, %s225
    %p232 = scmp.eq.s32.totalorder %s26, 1
    %p233 = por %p231, %p232
    %p234 = scmp.ne.s32.totalorder %s225, %s226
    %p235 = scmp.eq.s32.totalorder %s26, 0
    %p236 = por %p234, %p235
    %p237 = scmp.ne.s32.totalorder %s225, %s226
    %p238 = scmp.eq.s32.totalorder %s27, 1
    %p239 = por %p237, %p238
    %p241 = scmp.ne.s32.totalorder %s226, %s240
    %p242 = scmp.eq.s32.totalorder %s27, 0
    %p243 = por %p241, %p242
    %s245 = sadd.s32 %s244, 1
    %p248 = scmp.eq.s32.totalorder %s21, 1
    %p249 = scmp.ne.s32.totalorder %s244, %s246
    %p250 = scmp.eq.s32.totalorder %s21, 0
    %p251 = por %p249, %p250
    %p252 = scmp.ne.s32.totalorder %s244, %s246
    %p253 = scmp.eq.s32.totalorder %s26, 1
    %p254 = por %p252, %p253
    %p255 = scmp.ne.s32.totalorder %s246, %s247
    %p256 = scmp.eq.s32.totalorder %s26, 0
    %p257 = por %p255, %p256
    %p258 = scmp.ne.s32.totalorder %s246, %s247
    %p259 = scmp.eq.s32.totalorder %s27, 1
    %p260 = por %p258, %p259
    %p262 = scmp.ne.s32.totalorder %s247, %s261
    %p263 = scmp.eq.s32.totalorder %s27, 0
    %p264 = por %p262, %p263
    %s266 = sadd.s32 %s265, 1
    %p269 = scmp.eq.s32.totalorder %s21, 1
    %p270 = scmp.ne.s32.totalorder %s265, %s267
    %p271 = scmp.eq.s32.totalorder %s21, 0
    %p272 = por %p270, %p271
    %p273 = scmp.ne.s32.totalorder %s265, %s267
    %p274 = scmp.eq.s32.totalorder %s26, 1
    %p275 = por %p273, %p274
    %p276 = scmp.ne.s32.totalorder %s267, %s268
    %p277 = scmp.eq.s32.totalorder %s26, 0
    %p278 = por %p276, %p277
    %p279 = scmp.ne.s32.totalorder %s267, %s268
    %p280 = scmp.eq.s32.totalorder %s27, 1
    %p281 = por %p279, %p280
    %p283 = scmp.ne.s32.totalorder %s268, %s282
    %p284 = scmp.eq.s32.totalorder %s27, 0
    %p285 = por %p283, %p284
    %s287 = sadd.s32 %s286, 1
    %p290 = scmp.eq.s32.totalorder %s21, 1
    %p291 = scmp.ne.s32.totalorder %s286, %s288
    %p292 = scmp.eq.s32.totalorder %s21, 0
    %p293 = por %p291, %p292
    %p294 = scmp.ne.s32.totalorder %s286, %s288
    %p295 = scmp.eq.s32.totalorder %s26, 1
    %p296 = por %p294, %p295
    %p297 = scmp.ne.s32.totalorder %s288, %s289
    %p298 = scmp.eq.s32.totalorder %s26, 0
    %p299 = por %p297, %p298
    %p300 = scmp.ne.s32.totalorder %s288, %s289
    %p301 = scmp.eq.s32.totalorder %s27, 1
    %p302 = por %p300, %p301
    %p304 = scmp.ne.s32.totalorder %s289, %s303
    %p305 = scmp.eq.s32.totalorder %s27, 0
    %p306 = por %p304, %p305
    %s308 = sadd.s32 %s307, 1
    %p311 = scmp.eq.s32.totalorder %s21, 1
    %p312 = scmp.ne.s32.totalorder %s307, %s309
    %p313 = scmp.eq.s32.totalorder %s21, 0
    %p314 = por %p312, %p313
    %p315 = scmp.ne.s32.totalorder %s307, %s309
    %p316 = scmp.eq.s32.totalorder %s26, 1
    %p317 = por %p315, %p316
    %p318 = scmp.ne.s32.totalorder %s309, %s310
    %p319 = scmp.eq.s32.totalorder %s26, 0
    %p320 = por %p318, %p319
    %p321 = scmp.ne.s32.totalorder %s309, %s310
    %p322 = scmp.eq.s32.totalorder %s27, 1
    %p323 = por %p321, %p322
    %p325 = scmp.ne.s32.totalorder %s310, %s324
    %p326 = scmp.eq.s32.totalorder %s27, 0
    %p327 = por %p325, %p326
    %s329 = sadd.s32 %s328, 1
    %p332 = scmp.eq.s32.totalorder %s21, 1
    %p333 = scmp.ne.s32.totalorder %s328, %s330
    %p334 = scmp.eq.s32.totalorder %s21, 0
    %p335 = por %p333, %p334
    %p336 = scmp.ne.s32.totalorder %s328, %s330
    %p337 = scmp.eq.s32.totalorder %s26, 1
    %p338 = por %p336, %p337
    %p339 = scmp.ne.s32.totalorder %s330, %s331
    %p340 = scmp.eq.s32.totalorder %s26, 0
    %p341 = por %p339, %p340
    %p342 = scmp.ne.s32.totalorder %s330, %s331
    %p343 = scmp.eq.s32.totalorder %s27, 1
    %p344 = por %p342, %p343
    %p346 = scmp.ne.s32.totalorder %s331, %s345
    %p347 = scmp.eq.s32.totalorder %s27, 0
    %p348 = por %p346, %p347
    %s349 = ssub.s32 %s21, %s28
    %p350 = scmp.eq.s32.totalorder %s349, 0
    %s352 = sadd.s32 %s351, 1
    %s353 = scalar_select %p350, %s351, %s352
    %p356 = pneg %p350
    %p357 = scmp.eq.s32.totalorder %s21, 1
    %p358 = por %p356, %p357
    %p359 = scmp.ne.s32.totalorder %s351, %s354
    %p360 = scmp.eq.s32.totalorder %s21, 0
    %p361 = por %p359, %p360
    %p362 = scmp.ne.s32.totalorder %s351, %s354
    %p363 = scmp.eq.s32.totalorder %s26, 1
    %p364 = por %p362, %p363
    %p365 = scmp.ne.s32.totalorder %s354, %s355
    %p366 = scmp.eq.s32.totalorder %s26, 0
    %p367 = por %p365, %p366
    %p368 = scmp.ne.s32.totalorder %s354, %s355
    %p369 = scmp.eq.s32.totalorder %s27, 1
    %p370 = por %p368, %p369
    %p372 = scmp.ne.s32.totalorder %s355, %s371
    %p373 = scmp.eq.s32.totalorder %s27, 0
    %p374 = por %p372, %p373
    %p375 = scmp.le.s32.totalorder 1, %s21
    %p376 = scmp.lt.s32.totalorder %s21, 3
    %p377 = pnand %p375, %p376
    %p378 = pneg %p377
    // Predicated region
    $region9: #{default_transformer_forward.6} parent=5 // pred_check
      _
    $region10: #{default_transformer_forward.6} parent=5 // pred_check_branch
      %380 = sbr.rel (%p377) target = $region12
    $region11: #{default_transformer_forward.6} parent=5 // pred_region
      %s381 = ssub.s32 %s21, 1
      // Predicated region
      $region13: #{default_transformer_forward.6} parent=11 // pred_check
        %p382 = pneg %p68
      $region14: #{default_transformer_forward.6} parent=11 // pred_check_branch
        %384 = sbr.rel (%p382) target = $region16
      $region15: #{default_transformer_forward.6} parent=11 // pred_region
        _
      $region16: #{default_transformer_forward.6} parent=11 // pred_fallthru
        _
      // Predicated region
      $region17: #{default_transformer_forward.6} parent=11 // pred_check
        %p385 = pneg %p89
      $region18: #{default_transformer_forward.6} parent=11 // pred_check_branch
        %387 = sbr.rel (%p385) target = $region20
      $region19: #{default_transformer_forward.6} parent=11 // pred_region
        _
      $region20: #{default_transformer_forward.6} parent=11 // pred_fallthru
        _
      // Predicated region
      $region21: #{default_transformer_forward.6} parent=11 // pred_check
        %p388 = pneg %p110
      $region22: #{default_transformer_forward.6} parent=11 // pred_check_branch
        %390 = sbr.rel (%p388) target = $region24
      $region23: #{default_transformer_forward.6} parent=11 // pred_region
        _
      $region24: #{default_transformer_forward.6} parent=11 // pred_fallthru
        _
      // Predicated region
      $region25: #{default_transformer_forward.6} parent=11 // pred_check
        %p391 = pneg %p131
      $region26: #{default_transformer_forward.6} parent=11 // pred_check_branch
        %393 = sbr.rel (%p391) target = $region28
      $region27: #{default_transformer_forward.6} parent=11 // pred_region
        _
      $region28: #{default_transformer_forward.6} parent=11 // pred_fallthru
        _
      // Predicated region
      $region29: #{default_transformer_forward.6} parent=11 // pred_check
        %p394 = pneg %p152
      $region30: #{default_transformer_forward.6} parent=11 // pred_check_branch
        %396 = sbr.rel (%p394) target = $region32
      $region31: #{default_transformer_forward.6} parent=11 // pred_region
        _
      $region32: #{default_transformer_forward.6} parent=11 // pred_fallthru
        _
      // Predicated region
      $region33: #{default_transformer_forward.6} parent=11 // pred_check
        %p397 = pneg %p173
      $region34: #{default_transformer_forward.6} parent=11 // pred_check_branch
        %399 = sbr.rel (%p397) target = $region36
      $region35: #{default_transformer_forward.6} parent=11 // pred_region
        _
      $region36: #{default_transformer_forward.6} parent=11 // pred_fallthru
        _
      // Predicated region
      $region37: #{default_transformer_forward.6} parent=11 // pred_check
        %p400 = pneg %p194
      $region38: #{default_transformer_forward.6} parent=11 // pred_check_branch
        %402 = sbr.rel (%p400) target = $region40
      $region39: #{default_transformer_forward.6} parent=11 // pred_region
        _
      $region40: #{default_transformer_forward.6} parent=11 // pred_fallthru
        _
      // Predicated region
      $region41: #{default_transformer_forward.6} parent=11 // pred_check
        %p403 = pneg %p215
      $region42: #{default_transformer_forward.6} parent=11 // pred_check_branch
        %405 = sbr.rel (%p403) target = $region44
      $region43: #{default_transformer_forward.6} parent=11 // pred_region
        _
      $region44: #{default_transformer_forward.6} parent=11 // pred_fallthru
        _
      // Predicated region
      $region45: #{default_transformer_forward.6} parent=11 // pred_check
        %p406 = pneg %p236
      $region46: #{default_transformer_forward.6} parent=11 // pred_check_branch
        %408 = sbr.rel (%p406) target = $region48
      $region47: #{default_transformer_forward.6} parent=11 // pred_region
        _
      $region48: #{default_transformer_forward.6} parent=11 // pred_fallthru
        _
      // Predicated region
      $region49: #{default_transformer_forward.6} parent=11 // pred_check
        %p409 = pneg %p257
      $region50: #{default_transformer_forward.6} parent=11 // pred_check_branch
        %411 = sbr.rel (%p409) target = $region52
      $region51: #{default_transformer_forward.6} parent=11 // pred_region
        _
      $region52: #{default_transformer_forward.6} parent=11 // pred_fallthru
        _
      // Predicated region
      $region53: #{default_transformer_forward.6} parent=11 // pred_check
        %p412 = pneg %p278
      $region54: #{default_transformer_forward.6} parent=11 // pred_check_branch
        %414 = sbr.rel (%p412) target = $region56
      $region55: #{default_transformer_forward.6} parent=11 // pred_region
        _
      $region56: #{default_transformer_forward.6} parent=11 // pred_fallthru
        _
      // Predicated region
      $region57: #{default_transformer_forward.6} parent=11 // pred_check
        %p415 = pneg %p299
      $region58: #{default_transformer_forward.6} parent=11 // pred_check_branch
        %417 = sbr.rel (%p415) target = $region60
      $region59: #{default_transformer_forward.6} parent=11 // pred_region
        _
      $region60: #{default_transformer_forward.6} parent=11 // pred_fallthru
        _
      // Predicated region
      $region61: #{default_transformer_forward.6} parent=11 // pred_check
        %p418 = pneg %p320
      $region62: #{default_transformer_forward.6} parent=11 // pred_check_branch
        %420 = sbr.rel (%p418) target = $region64
      $region63: #{default_transformer_forward.6} parent=11 // pred_region
        _
      $region64: #{default_transformer_forward.6} parent=11 // pred_fallthru
        _
      // Predicated region
      $region65: #{default_transformer_forward.6} parent=11 // pred_check
        %p421 = pneg %p341
      $region66: #{default_transformer_forward.6} parent=11 // pred_check_branch
        %423 = sbr.rel (%p421) target = $region68
      $region67: #{default_transformer_forward.6} parent=11 // pred_region
        _
      $region68: #{default_transformer_forward.6} parent=11 // pred_fallthru
        _
    $region12: #{default_transformer_forward.6} parent=5 // pred_fallthru
      _
    %p424 = scmp.lt.s32.totalorder %s21, 2
    // Predicated region
    $region69: #{default_transformer_forward.6} parent=5 // pred_check
      %p425 = pneg %p424
    $region70: #{default_transformer_forward.6} parent=5 // pred_check_branch
      %427 = sbr.rel (%p425) target = $region72
    $region71: #{default_transformer_forward.6} parent=5 // pred_region
      // Predicated region
      $region73: #{default_transformer_forward.6} parent=71 // pred_check
        %p428 = pneg %p41
      $region74: #{default_transformer_forward.6} parent=71 // pred_check_branch
        %430 = sbr.rel (%p428) target = $region76
      $region75: #{default_transformer_forward.6} parent=71 // pred_region
        %p431 = scmp.lt.s32.totalorder %s21, 1
        %s432 = scalar_select %p431, %s21, 1
        %s433 = smul.addr %s432, 4
        %s434 = scalar_lea.vmem %s0, %s433
      $region76: #{default_transformer_forward.6} parent=71 // pred_fallthru
        _
    $region72: #{default_transformer_forward.6} parent=5 // pred_fallthru
      _
    %p435 = scmp.le.s32.totalorder 1, %s21
    %p436 = scmp.lt.s32.totalorder %s21, 3
    %p437 = pnand %p435, %p436
    %p438 = pneg %p437
    // Predicated region
    $region77: #{default_transformer_forward.6} parent=5 // pred_check
      _
    $region78: #{default_transformer_forward.6} parent=5 // pred_check_branch
      %440 = sbr.rel (%p437) target = $region80
    $region79: #{default_transformer_forward.6} parent=5 // pred_region
      %s441 = ssub.s32 %s21, 1
      %p442 = scmp.lt.s32.totalorder %s26, 1
      %s443 = scalar_select %p442, %s26, 1
      %s444 = smul.addr %s443, 4
      %s445 = scalar_lea.vmem %s0, %s444
      %p446 = pneg %p47
      %p447 = pneg %p44
      %p448 = pneg %p68
      %p449 = pneg %p65
      %p450 = pneg %p89
      %p451 = pneg %p86
      %p452 = pneg %p110
      %p453 = pneg %p107
      %p454 = pneg %p131
      %p455 = pneg %p128
      %p456 = pneg %p152
      %p457 = pneg %p149
      %p458 = pneg %p173
      %p459 = pneg %p170
      %p460 = pneg %p194
      %p461 = pneg %p191
      %p462 = pneg %p215
      %p463 = pneg %p212
      %p464 = pneg %p236
      %p465 = pneg %p233
      %p466 = pneg %p257
      %p467 = pneg %p254
      %p468 = pneg %p278
      %p469 = pneg %p275
      %p470 = pneg %p299
      %p471 = pneg %p296
      %p472 = pneg %p320
      %p473 = pneg %p317
      %p474 = pneg %p341
      %p475 = pneg %p338
      %p476 = pneg %p367
      %p477 = pneg %p364
      %p478 = scmp.lt.s32.totalorder %s26, 1
      %s479 = scalar_select %p478, %s26, 1
      %s480 = smul.addr %s479, 4
      %s481 = scalar_lea.vmem %s15, %s480
      %p482 = scmp.lt.s32.totalorder %s26, 1
      %s483 = scalar_select %p482, %s26, 1
      %s484 = smul.addr %s483, 4
      %s485 = scalar_lea.vmem %s0, %s484
      %p486 = scmp.lt.s32.totalorder %s26, 1
      %s487 = scalar_select %p486, %s26, 1
      %s488 = smul.addr %s487, 4
      %s489 = scalar_lea.vmem %s15, %s488
      %v491 = vld [vmem:[%s485] sm:$0xf]
      %v492 = vunpack.c.l.bf16 %v491
      %v493 = vld [vmem:[%s1] sm:$0xf]
      %v494 = vld [vmem:[%s1 + $0x4] sm:$0xf]
      %v495 = vld [vmem:[%s1 + $0x8] sm:$0xf]
      %v496 = vld [vmem:[%s1 + $0xc] sm:$0xf]
      %v497 = vld [vmem:[%s2] sm:$0x1]
      %v499 = vlaneseq
      %v500 = vshrl.u32 %v499, 7
      %v501 = vsub.s32 0, %v500
      %v502 = vrot.slane %v497, %v501
      %v508 = vunpack.c.l.b16 %v493
      %v509 = vunpack.c.l.b16 %v494
      %v510 = vunpack.c.l.b16 %v495
      %v511 = vunpack.c.l.b16 %v496
      %v512 = vpack.c.b16 %v509, %v508
      %v513 = vpack.c.b16 %v511, %v510
      %vm516 = vcmask 261120
      %v518 = vsel %vm516, %v491, 0
      %520 = vmatprep.subr.bf16.mxu0 0
      %521 = vmatpush1.bf16.msra.mxu0 %v512
      %522 = vmatprep.subr.bf16.mxu0 0
      %523 = vmatpush1.bf16.msra.mxu0 %v513
      %524 = vmatprep.subr.bf16.mxu0 0
      %525 = vmatpush1.bf16.msra.mxu0 0
      %526 = vmatprep.subr.bf16.mxu0 0
      %527 = vmatpush1.bf16.msra.mxu0 0
      %528 = vmatprep.subr.bf16.mxu0 0
      %529 = vmatpush1.bf16.msra.mxu0 0
      %530 = vmatprep.subr.bf16.mxu0 0
      %531 = vmatpush1.bf16.msra.mxu0 0
      %532 = vmatprep.subr.bf16.mxu0 0
      %533 = vmatpush1.bf16.msra.mxu0 0
      %534 = vmatprep.subr.bf16.mxu0 0
      %535 = vmatpush1.bf16.msra.mxu0 0
      %536 = vmatprep.subr.bf16.mxu0 0
      %537 = vmatpush1.bf16.msra.mxu0 0
      %538 = vmatprep.subr.bf16.mxu0 0
      %539 = vmatpush1.bf16.msra.mxu0 0
      %540 = vmatprep.subr.bf16.mxu0 0
      %541 = vmatpush1.bf16.msra.mxu0 0
      %542 = vmatprep.subr.bf16.mxu0 0
      %543 = vmatpush1.bf16.msra.mxu0 0
      %544 = vmatprep.subr.bf16.mxu0 0
      %545 = vmatpush1.bf16.msra.mxu0 0
      %546 = vmatprep.subr.bf16.mxu0 0
      %547 = vmatpush1.bf16.msra.mxu0 0
      %548 = vmatprep.subr.bf16.mxu0 0
      %549 = vmatpush1.bf16.msra.mxu0 0
      %550 = vmatprep.subr.bf16.mxu0 0
      %551 = vmatpush1.bf16.msra.mxu0 0
      %552 = vmatprep.mubr.bf16.mxu0 0
      %553 = vmatmul.mubr.bf16.gmra.mrb[0].mxu0 %v518
      %v554 = vpop.f32.mrb[0].mxu0
      %v555 = vadd.f32 %v502, %v554
      %v556 = vpop.f32.mrb[0].mxu0
      %v557 = vpop.f32.mrb[0].mxu0
      %v558 = vpop.f32.mrb[0].mxu0
      %559 = vdwg.mxu0
      %v560 = vld [vmem:[%s3] sm:$0xf]
      %v561 = vld [vmem:[%s3 + $0x4] sm:$0xf]
      %v562 = vld [vmem:[%s3 + $0x8] sm:$0xf]
      %v563 = vld [vmem:[%s3 + $0xc] sm:$0xf]
      %v564 = vpack.c.bf16 %v555, %v555
      %566 = vrot.lane.b32.xlu0 %v564, 96
      %v567 = vpop.permute.xlu0 %566
      %vm568 = vcmask 64512
      %v570 = vsel %vm568, %v564, 0
      %v573 = vsel %vm568, %v567, 0
      %575 = vmatprep.subr.bf16.mxu0 0
      %576 = vmatpush1.bf16.xpose.msra.mxu0 %v573
      %577 = vmatprep.subr.bf16.mxu0 0
      %578 = vmatpush1.bf16.xpose.msra.mxu0 0
      %579 = vmatprep.subr.bf16.mxu0 0
      %580 = vmatpush1.bf16.xpose.msra.mxu0 0
      %581 = vmatprep.subr.bf16.mxu0 0
      %582 = vmatpush1.bf16.xpose.msra.mxu0 0
      %583 = vmatprep.subr.bf16.mxu0 0
      %584 = vmatpush1.bf16.xpose.msra.mxu0 0
      %585 = vmatprep.subr.bf16.mxu0 0
      %586 = vmatpush1.bf16.xpose.msra.mxu0 0
      %587 = vmatprep.subr.bf16.mxu0 0
      %588 = vmatpush1.bf16.xpose.msra.mxu0 0
      %589 = vmatprep.subr.bf16.mxu0 0
      %590 = vmatpush1.bf16.xpose.msra.mxu0 0
      %591 = vmatprep.subr.bf16.mxu0 0
      %592 = vmatpush1.bf16.xpose.msra.mxu0 0
      %593 = vmatprep.subr.bf16.mxu0 0
      %594 = vmatpush1.bf16.xpose.msra.mxu0 0
      %595 = vmatprep.subr.bf16.mxu0 0
      %596 = vmatpush1.bf16.xpose.msra.mxu0 0
      %597 = vmatprep.subr.bf16.mxu0 0
      %598 = vmatpush1.bf16.xpose.msra.mxu0 0
      %599 = vmatprep.subr.bf16.mxu0 0
      %600 = vmatpush1.bf16.xpose.msra.mxu0 0
      %601 = vmatprep.subr.bf16.mxu0 0
      %602 = vmatpush1.bf16.xpose.msra.mxu0 0
      %603 = vmatprep.subr.bf16.mxu0 0
      %604 = vmatpush1.bf16.xpose.msra.mxu0 0
      %605 = vmatprep.subr.bf16.mxu0 0
      %606 = vmatpush1.bf16.xpose.msra.mxu0 0
      %607 = vmatprep.mubr.bf16.mxu0 0
      %608 = vmatmul.mubr.bf16.gmra.mrb[0].mxu0 %v570
      %v609 = vpop.f32.mrb[0].mxu0
      %v610 = vadd.f32 0.0, %v609
      %v611 = vpop.f32.mrb[0].mxu0
      %v612 = vpop.f32.mrb[0].mxu0
      %v613 = vpop.f32.mrb[0].mxu0
      %614 = vdwg.mxu0
      %v615 = vmul.f32 %v610, 0.35355338
      %v616 = vsel %vm568, %v615, -inf
      %617 = vmax.xlane.f32.xlu0 %v616
      %v618 = vpop.xlane.xlu0 %617
      %v619 = vsub.f32 %v615, %v618
      %v620 = vmul.f32 %v619, 1.442695
      %v621 = vpow.pop %v620
      %v622 = vsel %vm568, %v621, 0.0
      %623 = vadd.xlane.f32.xlu0 %v622
      %v624 = vpop.xlane.xlu0 %623
      %v625 = vrcp.pop %v624
      %v626 = vmul.f32 %v621, %v625
      %v627 = vpack.c.bf16 %v626, %v626
      %628 = vrot.lane.b32.xlu0 %v564, 64
      %v629 = vpop.permute.xlu0 %628
      %v631 = vsel %vm568, %v627, 0
      %vm633 = vcmask 1043456
      %v635 = vsel %vm633, %v629, 0
      %637 = vmatprep.subr.bf16.mxu0 0
      %638 = vmatpush1.bf16.msra.mxu0 %v635
      %639 = vmatprep.subr.bf16.mxu0 0
      %640 = vmatpush1.bf16.msra.mxu0 0
      %641 = vmatprep.subr.bf16.mxu0 0
      %642 = vmatpush1.bf16.msra.mxu0 0
      %643 = vmatprep.subr.bf16.mxu0 0
      %644 = vmatpush1.bf16.msra.mxu0 0
      %645 = vmatprep.subr.bf16.mxu0 0
      %646 = vmatpush1.bf16.msra.mxu0 0
      %647 = vmatprep.subr.bf16.mxu0 0
      %648 = vmatpush1.bf16.msra.mxu0 0
      %649 = vmatprep.subr.bf16.mxu0 0
      %650 = vmatpush1.bf16.msra.mxu0 0
      %651 = vmatprep.subr.bf16.mxu0 0
      %652 = vmatpush1.bf16.msra.mxu0 0
      %653 = vmatprep.subr.bf16.mxu0 0
      %654 = vmatpush1.bf16.msra.mxu0 0
      %655 = vmatprep.subr.bf16.mxu0 0
      %656 = vmatpush1.bf16.msra.mxu0 0
      %657 = vmatprep.subr.bf16.mxu0 0
      %658 = vmatpush1.bf16.msra.mxu0 0
      %659 = vmatprep.subr.bf16.mxu0 0
      %660 = vmatpush1.bf16.msra.mxu0 0
      %661 = vmatprep.subr.bf16.mxu0 0
      %662 = vmatpush1.bf16.msra.mxu0 0
      %663 = vmatprep.subr.bf16.mxu0 0
      %664 = vmatpush1.bf16.msra.mxu0 0
      %665 = vmatprep.subr.bf16.mxu0 0
      %666 = vmatpush1.bf16.msra.mxu0 0
      %667 = vmatprep.subr.bf16.mxu0 0
      %668 = vmatpush1.bf16.msra.mxu0 0
      %669 = vmatprep.mubr.bf16.mxu0 0
      %670 = vmatmul.mubr.bf16.gmra.mrb[0].mxu0 %v631
      %v671 = vpop.f32.mrb[0].mxu0
      %v672 = vadd.f32 0.0, %v671
      %v673 = vpop.f32.mrb[0].mxu0
      %v674 = vpop.f32.mrb[0].mxu0
      %v675 = vpop.f32.mrb[0].mxu0
      %676 = vdwg.mxu0
      %677 = vrot.lane.b32.xlu0 %v564, 120
      %v678 = vpop.permute.xlu0 %677
      %679 = vrot.lane.b32.xlu0 %v564, 88
      %v680 = vpop.permute.xlu0 %679
      %v682 = vsel %vm568, %v678, 0
      %v685 = vsel %vm568, %v680, 0
      %687 = vmatprep.subr.bf16.mxu0 0
      %688 = vmatpush1.bf16.xpose.msra.mxu0 %v685
      %689 = vmatprep.subr.bf16.mxu0 0
      %690 = vmatpush1.bf16.xpose.msra.mxu0 0
      %691 = vmatprep.subr.bf16.mxu0 0
      %692 = vmatpush1.bf16.xpose.msra.mxu0 0
      %693 = vmatprep.subr.bf16.mxu0 0
      %694 = vmatpush1.bf16.xpose.msra.mxu0 0
      %695 = vmatprep.subr.bf16.mxu0 0
      %696 = vmatpush1.bf16.xpose.msra.mxu0 0
      %697 = vmatprep.subr.bf16.mxu0 0
      %698 = vmatpush1.bf16.xpose.msra.mxu0 0
      %699 = vmatprep.subr.bf16.mxu0 0
      %700 = vmatpush1.bf16.xpose.msra.mxu0 0
      %701 = vmatprep.subr.bf16.mxu0 0
      %702 = vmatpush1.bf16.xpose.msra.mxu0 0
      %703 = vmatprep.subr.bf16.mxu0 0
      %704 = vmatpush1.bf16.xpose.msra.mxu0 0
      %705 = vmatprep.subr.bf16.mxu0 0
      %706 = vmatpush1.bf16.xpose.msra.mxu0 0
      %707 = vmatprep.subr.bf16.mxu0 0
      %708 = vmatpush1.bf16.xpose.msra.mxu0 0
      %709 = vmatprep.subr.bf16.mxu0 0
      %710 = vmatpush1.bf16.xpose.msra.mxu0 0
      %711 = vmatprep.subr.bf16.mxu0 0
      %712 = vmatpush1.bf16.xpose.msra.mxu0 0
      %713 = vmatprep.subr.bf16.mxu0 0
      %714 = vmatpush1.bf16.xpose.msra.mxu0 0
      %715 = vmatprep.subr.bf16.mxu0 0
      %716 = vmatpush1.bf16.xpose.msra.mxu0 0
      %717 = vmatprep.subr.bf16.mxu0 0
      %718 = vmatpush1.bf16.xpose.msra.mxu0 0
      %719 = vmatprep.mubr.bf16.mxu0 0
      %720 = vmatmul.mubr.bf16.gmra.mrb[0].mxu0 %v682
      %v721 = vpop.f32.mrb[0].mxu0
      %v722 = vadd.f32 0.0, %v721
      %v723 = vpop.f32.mrb[0].mxu0
      %v724 = vpop.f32.mrb[0].mxu0
      %v725 = vpop.f32.mrb[0].mxu0
      %726 = vdwg.mxu0
      %v727 = vmul.f32 %v722, 0.35355338
      %v728 = vsel %vm568, %v727, -inf
      %729 = vmax.xlane.f32.xlu0 %v728
      %v730 = vpop.xlane.xlu0 %729
      %v731 = vsub.f32 %v727, %v730
      %v732 = vmul.f32 %v731, 1.442695
      %v733 = vpow.pop %v732
      %v734 = vsel %vm568, %v733, 0.0
      %735 = vadd.xlane.f32.xlu0 %v734
      %v736 = vpop.xlane.xlu0 %735
      %v737 = vrcp.pop %v736
      %v738 = vmul.f32 %v733, %v737
      %v739 = vpack.c.bf16 %v738, %v738
      %740 = vrot.lane.b32.xlu0 %v564, 56
      %v741 = vpop.permute.xlu0 %740
      %v743 = vsel %vm568, %v739, 0
      %v746 = vsel %vm633, %v741, 0
      %748 = vmatprep.subr.bf16.mxu0 0
      %749 = vmatpush1.bf16.msra.mxu0 %v746
      %750 = vmatprep.subr.bf16.mxu0 0
      %751 = vmatpush1.bf16.msra.mxu0 0
      %752 = vmatprep.subr.bf16.mxu0 0
      %753 = vmatpush1.bf16.msra.mxu0 0
      %754 = vmatprep.subr.bf16.mxu0 0
      %755 = vmatpush1.bf16.msra.mxu0 0
      %756 = vmatprep.subr.bf16.mxu0 0
      %757 = vmatpush1.bf16.msra.mxu0 0
      %758 = vmatprep.subr.bf16.mxu0 0
      %759 = vmatpush1.bf16.msra.mxu0 0
      %760 = vmatprep.subr.bf16.mxu0 0
      %761 = vmatpush1.bf16.msra.mxu0 0
      %762 = vmatprep.subr.bf16.mxu0 0
      %763 = vmatpush1.bf16.msra.mxu0 0
      %764 = vmatprep.subr.bf16.mxu0 0
      %765 = vmatpush1.bf16.msra.mxu0 0
      %766 = vmatprep.subr.bf16.mxu0 0
      %767 = vmatpush1.bf16.msra.mxu0 0
      %768 = vmatprep.subr.bf16.mxu0 0
      %769 = vmatpush1.bf16.msra.mxu0 0
      %770 = vmatprep.subr.bf16.mxu0 0
      %771 = vmatpush1.bf16.msra.mxu0 0
      %772 = vmatprep.subr.bf16.mxu0 0
      %773 = vmatpush1.bf16.msra.mxu0 0
      %774 = vmatprep.subr.bf16.mxu0 0
      %775 = vmatpush1.bf16.msra.mxu0 0
      %776 = vmatprep.subr.bf16.mxu0 0
      %777 = vmatpush1.bf16.msra.mxu0 0
      %778 = vmatprep.subr.bf16.mxu0 0
      %779 = vmatpush1.bf16.msra.mxu0 0
      %780 = vmatprep.mubr.bf16.mxu0 0
      %781 = vmatmul.mubr.bf16.gmra.mrb[0].mxu0 %v743
      %v782 = vpop.f32.mrb[0].mxu0
      %v783 = vadd.f32 0.0, %v782
      %v784 = vpop.f32.mrb[0].mxu0
      %v785 = vpop.f32.mrb[0].mxu0
      %v786 = vpop.f32.mrb[0].mxu0
      %787 = vdwg.mxu0
      %788 = vrot.lane.b32.xlu0 %v564, 112
      %v789 = vpop.permute.xlu0 %788
      %790 = vrot.lane.b32.xlu0 %v564, 80
      %v791 = vpop.permute.xlu0 %790
      %v793 = vsel %vm568, %v789, 0
      %v796 = vsel %vm568, %v791, 0
      %798 = vmatprep.subr.bf16.mxu0 0
      %799 = vmatpush1.bf16.xpose.msra.mxu0 %v796
      %800 = vmatprep.subr.bf16.mxu0 0
      %801 = vmatpush1.bf16.xpose.msra.mxu0 0
      %802 = vmatprep.subr.bf16.mxu0 0
      %803 = vmatpush1.bf16.xpose.msra.mxu0 0
      %804 = vmatprep.subr.bf16.mxu0 0
      %805 = vmatpush1.bf16.xpose.msra.mxu0 0
      %806 = vmatprep.subr.bf16.mxu0 0
      %807 = vmatpush1.bf16.xpose.msra.mxu0 0
      %808 = vmatprep.subr.bf16.mxu0 0
      %809 = vmatpush1.bf16.xpose.msra.mxu0 0
      %810 = vmatprep.subr.bf16.mxu0 0
      %811 = vmatpush1.bf16.xpose.msra.mxu0 0
      %812 = vmatprep.subr.bf16.mxu0 0
      %813 = vmatpush1.bf16.xpose.msra.mxu0 0
      %814 = vmatprep.subr.bf16.mxu0 0
      %815 = vmatpush1.bf16.xpose.msra.mxu0 0
      %816 = vmatprep.subr.bf16.mxu0 0
      %817 = vmatpush1.bf16.xpose.msra.mxu0 0
      %818 = vmatprep.subr.bf16.mxu0 0
      %819 = vmatpush1.bf16.xpose.msra.mxu0 0
      %820 = vmatprep.subr.bf16.mxu0 0
      %821 = vmatpush1.bf16.xpose.msra.mxu0 0
      %822 = vmatprep.subr.bf16.mxu0 0
      %823 = vmatpush1.bf16.xpose.msra.mxu0 0
      %824 = vmatprep.subr.bf16.mxu0 0
      %825 = vmatpush1.bf16.xpose.msra.mxu0 0
      %826 = vmatprep.subr.bf16.mxu0 0
      %827 = vmatpush1.bf16.xpose.msra.mxu0 0
      %828 = vmatprep.subr.bf16.mxu0 0
      %829 = vmatpush1.bf16.xpose.msra.mxu0 0
      %830 = vmatprep.mubr.bf16.mxu0 0
      %831 = vmatmul.mubr.bf16.gmra.mrb[0].mxu0 %v793
      %v832 = vpop.f32.mrb[0].mxu0
      %v833 = vadd.f32 0.0, %v832
      %v834 = vpop.f32.mrb[0].mxu0
      %v835 = vpop.f32.mrb[0].mxu0
      %v836 = vpop.f32.mrb[0].mxu0
      %837 = vdwg.mxu0
      %v838 = vmul.f32 %v833, 0.35355338
      %v839 = vsel %vm568, %v838, -inf
      %840 = vmax.xlane.f32.xlu0 %v839
      %v841 = vpop.xlane.xlu0 %840
      %v842 = vsub.f32 %v838, %v841
      %v843 = vmul.f32 %v842, 1.442695
      %v844 = vpow.pop %v843
      %v845 = vsel %vm568, %v844, 0.0
      %846 = vadd.xlane.f32.xlu0 %v845
      %v847 = vpop.xlane.xlu0 %846
      %v848 = vrcp.pop %v847
      %v849 = vmul.f32 %v844, %v848
      %v850 = vpack.c.bf16 %v849, %v849
      %851 = vrot.lane.b32.xlu0 %v564, 48
      %v852 = vpop.permute.xlu0 %851
      %v854 = vsel %vm568, %v850, 0
      %v857 = vsel %vm633, %v852, 0
      %859 = vmatprep.subr.bf16.mxu0 0
      %860 = vmatpush1.bf16.msra.mxu0 %v857
      %861 = vmatprep.subr.bf16.mxu0 0
      %862 = vmatpush1.bf16.msra.mxu0 0
      %863 = vmatprep.subr.bf16.mxu0 0
      %864 = vmatpush1.bf16.msra.mxu0 0
      %865 = vmatprep.subr.bf16.mxu0 0
      %866 = vmatpush1.bf16.msra.mxu0 0
      %867 = vmatprep.subr.bf16.mxu0 0
      %868 = vmatpush1.bf16.msra.mxu0 0
      %869 = vmatprep.subr.bf16.mxu0 0
      %870 = vmatpush1.bf16.msra.mxu0 0
      %871 = vmatprep.subr.bf16.mxu0 0
      %872 = vmatpush1.bf16.msra.mxu0 0
      %873 = vmatprep.subr.bf16.mxu0 0
      %874 = vmatpush1.bf16.msra.mxu0 0
      %875 = vmatprep.subr.bf16.mxu0 0
      %876 = vmatpush1.bf16.msra.mxu0 0
      %877 = vmatprep.subr.bf16.mxu0 0
      %878 = vmatpush1.bf16.msra.mxu0 0
      %879 = vmatprep.subr.bf16.mxu0 0
      %880 = vmatpush1.bf16.msra.mxu0 0
      %881 = vmatprep.subr.bf16.mxu0 0
      %882 = vmatpush1.bf16.msra.mxu0 0
      %883 = vmatprep.subr.bf16.mxu0 0
      %884 = vmatpush1.bf16.msra.mxu0 0
      %885 = vmatprep.subr.bf16.mxu0 0
      %886 = vmatpush1.bf16.msra.mxu0 0
      %887 = vmatprep.subr.bf16.mxu0 0
      %888 = vmatpush1.bf16.msra.mxu0 0
      %889 = vmatprep.subr.bf16.mxu0 0
      %890 = vmatpush1.bf16.msra.mxu0 0
      %891 = vmatprep.mubr.bf16.mxu0 0
      %892 = vmatmul.mubr.bf16.gmra.mrb[0].mxu0 %v854
      %v893 = vpop.f32.mrb[0].mxu0
      %v894 = vadd.f32 0.0, %v893
      %v895 = vpop.f32.mrb[0].mxu0
      %v896 = vpop.f32.mrb[0].mxu0
      %v897 = vpop.f32.mrb[0].mxu0
      %898 = vdwg.mxu0
      %899 = vrot.lane.b32.xlu0 %v564, 104
      %v900 = vpop.permute.xlu0 %899
      %901 = vrot.lane.b32.xlu0 %v564, 72
      %v902 = vpop.permute.xlu0 %901
      %v904 = vsel %vm568, %v900, 0
      %v907 = vsel %vm568, %v902, 0
      %909 = vmatprep.subr.bf16.mxu0 0
      %910 = vmatpush1.bf16.xpose.msra.mxu0 %v907
      %911 = vmatprep.subr.bf16.mxu0 0
      %912 = vmatpush1.bf16.xpose.msra.mxu0 0
      %913 = vmatprep.subr.bf16.mxu0 0
      %914 = vmatpush1.bf16.xpose.msra.mxu0 0
      %915 = vmatprep.subr.bf16.mxu0 0
      %916 = vmatpush1.bf16.xpose.msra.mxu0 0
      %917 = vmatprep.subr.bf16.mxu0 0
      %918 = vmatpush1.bf16.xpose.msra.mxu0 0
      %919 = vmatprep.subr.bf16.mxu0 0
      %920 = vmatpush1.bf16.xpose.msra.mxu0 0
      %921 = vmatprep.subr.bf16.mxu0 0
      %922 = vmatpush1.bf16.xpose.msra.mxu0 0
      %923 = vmatprep.subr.bf16.mxu0 0
      %924 = vmatpush1.bf16.xpose.msra.mxu0 0
      %925 = vmatprep.subr.bf16.mxu0 0
      %926 = vmatpush1.bf16.xpose.msra.mxu0 0
      %927 = vmatprep.subr.bf16.mxu0 0
      %928 = vmatpush1.bf16.xpose.msra.mxu0 0
      %929 = vmatprep.subr.bf16.mxu0 0
      %930 = vmatpush1.bf16.xpose.msra.mxu0 0
      %931 = vmatprep.subr.bf16.mxu0 0
      %932 = vmatpush1.bf16.xpose.msra.mxu0 0
      %933 = vmatprep.subr.bf16.mxu0 0
      %934 = vmatpush1.bf16.xpose.msra.mxu0 0
      %935 = vmatprep.subr.bf16.mxu0 0
      %936 = vmatpush1.bf16.xpose.msra.mxu0 0
      %937 = vmatprep.subr.bf16.mxu0 0
      %938 = vmatpush1.bf16.xpose.msra.mxu0 0
      %939 = vmatprep.subr.bf16.mxu0 0
      %940 = vmatpush1.bf16.xpose.msra.mxu0 0
      %941 = vmatprep.mubr.bf16.mxu0 0
      %942 = vmatmul.mubr.bf16.gmra.mrb[0].mxu0 %v904
      %v943 = vpop.f32.mrb[0].mxu0
      %v944 = vadd.f32 0.0, %v943
      %v945 = vpop.f32.mrb[0].mxu0
      %v946 = vpop.f32.mrb[0].mxu0
      %v947 = vpop.f32.mrb[0].mxu0
      %948 = vdwg.mxu0
      %v949 = vmul.f32 %v944, 0.35355338
      %v950 = vsel %vm568, %v949, -inf
      %951 = vmax.xlane.f32.xlu0 %v950
      %v952 = vpop.xlane.xlu0 %951
      %v953 = vsub.f32 %v949, %v952
      %v954 = vmul.f32 %v953, 1.442695
      %v955 = vpow.pop %v954
      %v956 = vsel %vm568, %v955, 0.0
      %957 = vadd.xlane.f32.xlu0 %v956
      %v958 = vpop.xlane.xlu0 %957
      %v959 = vrcp.pop %v958
      %v960 = vmul.f32 %v955, %v959
      %v961 = vpack.c.bf16 %v960, %v960
      %962 = vrot.lane.b32.xlu0 %v564, 40
      %v963 = vpop.permute.xlu0 %962
      %v965 = vsel %vm568, %v961, 0
      %v968 = vsel %vm633, %v963, 0
      %970 = vmatprep.subr.bf16.mxu0 0
      %971 = vmatpush1.bf16.msra.mxu0 %v968
      %972 = vmatprep.subr.bf16.mxu0 0
      %973 = vmatpush1.bf16.msra.mxu0 0
      %974 = vmatprep.subr.bf16.mxu0 0
      %975 = vmatpush1.bf16.msra.mxu0 0
      %976 = vmatprep.subr.bf16.mxu0 0
      %977 = vmatpush1.bf16.msra.mxu0 0
      %978 = vmatprep.subr.bf16.mxu0 0
      %979 = vmatpush1.bf16.msra.mxu0 0
      %980 = vmatprep.subr.bf16.mxu0 0
      %981 = vmatpush1.bf16.msra.mxu0 0
      %982 = vmatprep.subr.bf16.mxu0 0
      %983 = vmatpush1.bf16.msra.mxu0 0
      %984 = vmatprep.subr.bf16.mxu0 0
      %985 = vmatpush1.bf16.msra.mxu0 0
      %986 = vmatprep.subr.bf16.mxu0 0
      %987 = vmatpush1.bf16.msra.mxu0 0
      %988 = vmatprep.subr.bf16.mxu0 0
      %989 = vmatpush1.bf16.msra.mxu0 0
      %990 = vmatprep.subr.bf16.mxu0 0
      %991 = vmatpush1.bf16.msra.mxu0 0
      %992 = vmatprep.subr.bf16.mxu0 0
      %993 = vmatpush1.bf16.msra.mxu0 0
      %994 = vmatprep.subr.bf16.mxu0 0
      %995 = vmatpush1.bf16.msra.mxu0 0
      %996 = vmatprep.subr.bf16.mxu0 0
      %997 = vmatpush1.bf16.msra.mxu0 0
      %998 = vmatprep.subr.bf16.mxu0 0
      %999 = vmatpush1.bf16.msra.mxu0 0
      %1000 = vmatprep.subr.bf16.mxu0 0
      %1001 = vmatpush1.bf16.msra.mxu0 0
      %1002 = vmatprep.mubr.bf16.mxu0 0
      %1003 = vmatmul.mubr.bf16.gmra.mrb[0].mxu0 %v965
      %v1004 = vpop.f32.mrb[0].mxu0
      %v1005 = vadd.f32 0.0, %v1004
      %v1006 = vpop.f32.mrb[0].mxu0
      %v1007 = vpop.f32.mrb[0].mxu0
      %v1008 = vpop.f32.mrb[0].mxu0
      %1009 = vdwg.mxu0
      %1011 = vrot.lane.b32.xlu0 %v783, 8
      %v1012 = vpop.permute.xlu0 %1011
      %1015 = vrot.lane.b32.xlu0 %v894, 16
      %v1016 = vpop.permute.xlu0 %1015
      %1019 = vrot.lane.b32.xlu0 %v1005, 24
      %v1020 = vpop.permute.xlu0 %1019
      %v1022 = vsel %vm568, %v672, %v1012
      %vm1023 = vcmask 130048
      %v1024 = vsel %vm1023, %v1022, %v1016
      %vm1025 = vcmask 195584
      %v1026 = vsel %vm1025, %v1024, %v1020
      %v1027 = vpack.c.bf16 %v1026, %v1026
      %v1028 = vld [vmem:[%s4] sm:$0x1]
      %v1030 = vlaneseq
      %v1031 = vshrl.u32 %v1030, 7
      %v1032 = vsub.s32 0, %v1031
      %v1033 = vrot.slane %v1028, %v1032
      %v1039 = vunpack.c.l.b16 %v560
      %v1040 = vunpack.c.l.b16 %v561
      %v1041 = vunpack.c.l.b16 %v562
      %v1042 = vunpack.c.l.b16 %v563
      %v1043 = vpack.c.b16 %v1040, %v1039
      %v1044 = vpack.c.b16 %v1042, %v1041
      %v1048 = vsel %vm516, %v1027, 0
      %1050 = vmatprep.subr.bf16.mxu0 0
      %1051 = vmatpush1.bf16.msra.mxu0 %v1043
      %1052 = vmatprep.subr.bf16.mxu0 0
      %1053 = vmatpush1.bf16.msra.mxu0 %v1044
      %1054 = vmatprep.subr.bf16.mxu0 0
      %1055 = vmatpush1.bf16.msra.mxu0 0
      %1056 = vmatprep.subr.bf16.mxu0 0
      %1057 = vmatpush1.bf16.msra.mxu0 0
      %1058 = vmatprep.subr.bf16.mxu0 0
      %1059 = vmatpush1.bf16.msra.mxu0 0
      %1060 = vmatprep.subr.bf16.mxu0 0
      %1061 = vmatpush1.bf16.msra.mxu0 0
      %1062 = vmatprep.subr.bf16.mxu0 0
      %1063 = vmatpush1.bf16.msra.mxu0 0
      %1064 = vmatprep.subr.bf16.mxu0 0
      %1065 = vmatpush1.bf16.msra.mxu0 0
      %1066 = vmatprep.subr.bf16.mxu0 0
      %1067 = vmatpush1.bf16.msra.mxu0 0
      %1068 = vmatprep.subr.bf16.mxu0 0
      %1069 = vmatpush1.bf16.msra.mxu0 0
      %1070 = vmatprep.subr.bf16.mxu0 0
      %1071 = vmatpush1.bf16.msra.mxu0 0
      %1072 = vmatprep.subr.bf16.mxu0 0
      %1073 = vmatpush1.bf16.msra.mxu0 0
      %1074 = vmatprep.subr.bf16.mxu0 0
      %1075 = vmatpush1.bf16.msra.mxu0 0
      %1076 = vmatprep.subr.bf16.mxu0 0
      %1077 = vmatpush1.bf16.msra.mxu0 0
      %1078 = vmatprep.subr.bf16.mxu0 0
      %1079 = vmatpush1.bf16.msra.mxu0 0
      %1080 = vmatprep.subr.bf16.mxu0 0
      %1081 = vmatpush1.bf16.msra.mxu0 0
      %1082 = vmatprep.mubr.bf16.mxu0 0
      %1083 = vmatmul.mubr.bf16.gmra.mrb[0].mxu0 %v1048
      %v1084 = vpop.f32.mrb[0].mxu0
      %v1085 = vadd.f32 %v1033, %v1084
      %v1086 = vpop.f32.mrb[0].mxu0
      %v1087 = vpop.f32.mrb[0].mxu0
      %v1088 = vpop.f32.mrb[0].mxu0
      %1089 = vdwg.mxu0
      %v1090 = vadd.f32 %v492, %v1085
      %v1091 = vld [vmem:[%s5] sm:$0x1]
      %v1092 = vld [vmem:[%s6] sm:$0x1]
      %v1093 = vsel %vm516, %v1090, 0.0
      %1094 = vadd.xlane.f32.xlu0 %v1093
      %v1095 = vpop.xlane.xlu0 %1094
      %v1096 = vrcp.pop 32.0
      %v1097 = vmul.f32 %v1095, %v1096
      %v1098 = vsub.f32 %v1090, %v1097
      %v1099 = vmul.f32 %v1098, %v1098
      %v1100 = vsel %vm516, %v1099, 0.0
      %1101 = vadd.xlane.f32.xlu0 %v1100
      %v1102 = vpop.xlane.xlu0 %1101
      %v1103 = vmul.f32 %v1102, %v1096
      %v1104 = vadd.f32 %v1103, 1e-05
      %v1105 = vrsqrt.pop %v1104
      %v1106 = vmul.f32 %v1098, %v1105
      %v1108 = vlaneseq
      %v1109 = vshrl.u32 %v1108, 7
      %v1110 = vsub.s32 0, %v1109
      %v1111 = vrot.slane %v1091, %v1110
      %v1113 = vmul.f32 %v1106, %v1111
      %v1115 = vlaneseq
      %v1116 = vshrl.u32 %v1115, 7
      %v1117 = vsub.s32 0, %v1116
      %v1118 = vrot.slane %v1092, %v1117
      %v1120 = vadd.f32 %v1113, %v1118
      %v1121 = vld [vmem:[%s7] sm:$0xf]
      %v1122 = vld [vmem:[%s7 + $0x4] sm:$0xf]
      %v1123 = vld [vmem:[%s7 + $0x8] sm:$0xf]
      %v1124 = vld [vmem:[%s7 + $0xc] sm:$0xf]
      %v1125 = vpack.c.bf16 %v1120, %v1120
      %v1126 = vld [vmem:[%s8] sm:$0x1]
      %v1128 = vlaneseq
      %v1129 = vshrl.u32 %v1128, 7
      %v1130 = vsub.s32 0, %v1129
      %v1131 = vrot.slane %v1126, %v1130
      %v1137 = vunpack.c.l.b16 %v1121
      %v1138 = vunpack.c.l.b16 %v1122
      %v1139 = vunpack.c.l.b16 %v1123
      %v1140 = vunpack.c.l.b16 %v1124
      %v1141 = vpack.c.b16 %v1138, %v1137
      %v1142 = vpack.c.b16 %v1140, %v1139
      %v1146 = vsel %vm516, %v1125, 0
      %1148 = vmatprep.subr.bf16.mxu0 0
      %1149 = vmatpush1.bf16.msra.mxu0 %v1141
      %1150 = vmatprep.subr.bf16.mxu0 0
      %1151 = vmatpush1.bf16.msra.mxu0 %v1142
      %1152 = vmatprep.subr.bf16.mxu0 0
      %1153 = vmatpush1.bf16.msra.mxu0 0
      %1154 = vmatprep.subr.bf16.mxu0 0
      %1155 = vmatpush1.bf16.msra.mxu0 0
      %1156 = vmatprep.subr.bf16.mxu0 0
      %1157 = vmatpush1.bf16.msra.mxu0 0
      %1158 = vmatprep.subr.bf16.mxu0 0
      %1159 = vmatpush1.bf16.msra.mxu0 0
      %1160 = vmatprep.subr.bf16.mxu0 0
      %1161 = vmatpush1.bf16.msra.mxu0 0
      %1162 = vmatprep.subr.bf16.mxu0 0
      %1163 = vmatpush1.bf16.msra.mxu0 0
      %1164 = vmatprep.subr.bf16.mxu0 0
      %1165 = vmatpush1.bf16.msra.mxu0 0
      %1166 = vmatprep.subr.bf16.mxu0 0
      %1167 = vmatpush1.bf16.msra.mxu0 0
      %1168 = vmatprep.subr.bf16.mxu0 0
      %1169 = vmatpush1.bf16.msra.mxu0 0
      %1170 = vmatprep.subr.bf16.mxu0 0
      %1171 = vmatpush1.bf16.msra.mxu0 0
      %1172 = vmatprep.subr.bf16.mxu0 0
      %1173 = vmatpush1.bf16.msra.mxu0 0
      %1174 = vmatprep.subr.bf16.mxu0 0
      %1175 = vmatpush1.bf16.msra.mxu0 0
      %1176 = vmatprep.subr.bf16.mxu0 0
      %1177 = vmatpush1.bf16.msra.mxu0 0
      %1178 = vmatprep.subr.bf16.mxu0 0
      %1179 = vmatpush1.bf16.msra.mxu0 0
      %1180 = vmatprep.mubr.bf16.mxu0 0
      %1181 = vmatmul.mubr.bf16.gmra.mrb[0].mxu0 %v1146
      %v1182 = vpop.f32.mrb[0].mxu0
      %v1183 = vadd.f32 %v1131, %v1182
      %v1184 = vpop.f32.mrb[0].mxu0
      %v1185 = vpop.f32.mrb[0].mxu0
      %v1186 = vpop.f32.mrb[0].mxu0
      %1187 = vdwg.mxu0
      %v1188 = vmax.f32 %v1183, 0.0
      %v1189 = vld [vmem:[%s9] sm:$0xf]
      %v1190 = vld [vmem:[%s9 + $0x4] sm:$0xf]
      %v1191 = vld [vmem:[%s9 + $0x8] sm:$0xf]
      %v1192 = vld [vmem:[%s9 + $0xc] sm:$0xf]
      %v1193 = vld [vmem:[%s9 + $0x10] sm:$0xf]
      %v1194 = vld [vmem:[%s9 + $0x14] sm:$0xf]
      %v1195 = vld [vmem:[%s9 + $0x18] sm:$0xf]
      %v1196 = vld [vmem:[%s9 + $0x1c] sm:$0xf]
      %v1197 = vpack.c.bf16 %v1188, %v1188
      %v1198 = vld [vmem:[%s10] sm:$0x1]
      %v1200 = vlaneseq
      %v1201 = vshrl.u32 %v1200, 7
      %v1202 = vsub.s32 0, %v1201
      %v1203 = vrot.slane %v1198, %v1202
      %v1213 = vunpack.c.l.b16 %v1189
      %v1214 = vunpack.c.l.b16 %v1190
      %v1215 = vunpack.c.l.b16 %v1191
      %v1216 = vunpack.c.l.b16 %v1192
      %v1217 = vunpack.c.l.b16 %v1193
      %v1218 = vunpack.c.l.b16 %v1194
      %v1219 = vunpack.c.l.b16 %v1195
      %v1220 = vunpack.c.l.b16 %v1196
      %v1221 = vpack.c.b16 %v1214, %v1213
      %v1222 = vpack.c.b16 %v1216, %v1215
      %v1223 = vpack.c.b16 %v1218, %v1217
      %v1224 = vpack.c.b16 %v1220, %v1219
      %vm1229 = vcmask 523264
      %v1231 = vsel %vm1229, %v1197, 0
      %1233 = vmatprep.subr.bf16.mxu0 0
      %1234 = vmatpush1.bf16.msra.mxu0 %v1221
      %1235 = vmatprep.subr.bf16.mxu0 0
      %1236 = vmatpush1.bf16.msra.mxu0 %v1222
      %1237 = vmatprep.subr.bf16.mxu0 0
      %1238 = vmatpush1.bf16.msra.mxu0 %v1223
      %1239 = vmatprep.subr.bf16.mxu0 0
      %1240 = vmatpush1.bf16.msra.mxu0 %v1224
      %1241 = vmatprep.subr.bf16.mxu0 0
      %1242 = vmatpush1.bf16.msra.mxu0 0
      %1243 = vmatprep.subr.bf16.mxu0 0
      %1244 = vmatpush1.bf16.msra.mxu0 0
      %1245 = vmatprep.subr.bf16.mxu0 0
      %1246 = vmatpush1.bf16.msra.mxu0 0
      %1247 = vmatprep.subr.bf16.mxu0 0
      %1248 = vmatpush1.bf16.msra.mxu0 0
      %1249 = vmatprep.subr.bf16.mxu0 0
      %1250 = vmatpush1.bf16.msra.mxu0 0
      %1251 = vmatprep.subr.bf16.mxu0 0
      %1252 = vmatpush1.bf16.msra.mxu0 0
      %1253 = vmatprep.subr.bf16.mxu0 0
      %1254 = vmatpush1.bf16.msra.mxu0 0
      %1255 = vmatprep.subr.bf16.mxu0 0
      %1256 = vmatpush1.bf16.msra.mxu0 0
      %1257 = vmatprep.subr.bf16.mxu0 0
      %1258 = vmatpush1.bf16.msra.mxu0 0
      %1259 = vmatprep.subr.bf16.mxu0 0
      %1260 = vmatpush1.bf16.msra.mxu0 0
      %1261 = vmatprep.subr.bf16.mxu0 0
      %1262 = vmatpush1.bf16.msra.mxu0 0
      %1263 = vmatprep.subr.bf16.mxu0 0
      %1264 = vmatpush1.bf16.msra.mxu0 0
      %1265 = vmatprep.mubr.bf16.mxu0 0
      %1266 = vmatmul.mubr.bf16.gmra.mrb[0].mxu0 %v1231
      %v1267 = vpop.f32.mrb[0].mxu0
      %v1268 = vadd.f32 %v1203, %v1267
      %v1269 = vpop.f32.mrb[0].mxu0
      %v1270 = vpop.f32.mrb[0].mxu0
      %v1271 = vpop.f32.mrb[0].mxu0
      %1272 = vdwg.mxu0
      %v1273 = vadd.f32 %v1120, %v1268
      %v1274 = vld [vmem:[%s11] sm:$0x1]
      %v1275 = vld [vmem:[%s12] sm:$0x1]
      %v1276 = vsel %vm516, %v1273, 0.0
      %1277 = vadd.xlane.f32.xlu0 %v1276
      %v1278 = vpop.xlane.xlu0 %1277
      %v1279 = vmul.f32 %v1278, %v1096
      %v1280 = vsub.f32 %v1273, %v1279
      %v1281 = vmul.f32 %v1280, %v1280
      %v1282 = vsel %vm516, %v1281, 0.0
      %1283 = vadd.xlane.f32.xlu0 %v1282
      %v1284 = vpop.xlane.xlu0 %1283
      %v1285 = vmul.f32 %v1284, %v1096
      %v1286 = vadd.f32 %v1285, 1e-05
      %v1287 = vrsqrt.pop %v1286
      %v1288 = vmul.f32 %v1280, %v1287
      %v1290 = vlaneseq
      %v1291 = vshrl.u32 %v1290, 7
      %v1292 = vsub.s32 0, %v1291
      %v1293 = vrot.slane %v1274, %v1292
      %v1295 = vmul.f32 %v1288, %v1293
      %v1297 = vlaneseq
      %v1298 = vshrl.u32 %v1297, 7
      %v1299 = vsub.s32 0, %v1298
      %v1300 = vrot.slane %v1275, %v1299
      %v1302 = vadd.f32 %v1295, %v1300
      %v1303 = vld [vmem:[%s13] sm:$0x1]
      %v1304 = vld [vmem:[%s14] sm:$0x1]
      %v1305 = vsel %vm516, %v1302, 0.0
      %1306 = vadd.xlane.f32.xlu0 %v1305
      %v1307 = vpop.xlane.xlu0 %1306
      %v1308 = vmul.f32 %v1307, %v1096
      %v1309 = vsub.f32 %v1302, %v1308
      %v1310 = vmul.f32 %v1309, %v1309
      %v1311 = vsel %vm516, %v1310, 0.0
      %1312 = vadd.xlane.f32.xlu0 %v1311
      %v1313 = vpop.xlane.xlu0 %1312
      %v1314 = vmul.f32 %v1313, %v1096
      %v1315 = vadd.f32 %v1314, 1e-05
      %v1316 = vrsqrt.pop %v1315
      %v1317 = vmul.f32 %v1309, %v1316
      %v1319 = vlaneseq
      %v1320 = vshrl.u32 %v1319, 7
      %v1321 = vsub.s32 0, %v1320
      %v1322 = vrot.slane %v1303, %v1321
      %v1324 = vmul.f32 %v1317, %v1322
      %v1326 = vlaneseq
      %v1327 = vshrl.u32 %v1326, 7
      %v1328 = vsub.s32 0, %v1327
      %v1329 = vrot.slane %v1304, %v1328
      %v1331 = vadd.f32 %v1324, %v1329
      %v1332 = vpack.c.bf16 %v1331, %v1331
      %vm1333 = vcmask 257024
      %1334 = vst.msk [vmem:[%s489] sm:$0xf] %vm1333, %v1332
      %p1335 = scmp.lt.s32.totalorder %s26, 1
      %s1336 = scalar_select %p1335, %s26, 1
      %s1337 = smul.addr %s1336, 4
      %s1338 = scalar_lea.vmem %s15, %s1337
      // Predicated region
      $region81: #{default_transformer_forward.6} parent=79 // pred_check
        %p1339 = pneg %p364
      $region82: #{default_transformer_forward.6} parent=79 // pred_check_branch
        %1341 = sbr.rel (%p1339) target = $region84
      $region83: #{default_transformer_forward.6} parent=79 // pred_region
        _
      $region84: #{default_transformer_forward.6} parent=79 // pred_fallthru
        _
    $region80: #{default_transformer_forward.6} parent=5 // pred_fallthru
      _
    %p1342 = scmp.le.s32.totalorder 2, %s21
    // Predicated region
    $region85: #{default_transformer_forward.6} parent=5 // pred_check
      %p1343 = pneg %p1342
    $region86: #{default_transformer_forward.6} parent=5 // pred_check_branch
      %1345 = sbr.rel (%p1343) target = $region88
    $region87: #{default_transformer_forward.6} parent=5 // pred_region
      %s1346 = ssub.s32 %s21, 2
      // Predicated region
      $region89: #{default_transformer_forward.6} parent=87 // pred_check
        %p1347 = pneg %p370
      $region90: #{default_transformer_forward.6} parent=87 // pred_check_branch
        %1349 = sbr.rel (%p1347) target = $region92
      $region91: #{default_transformer_forward.6} parent=87 // pred_region
        %p1350 = scmp.lt.s32.totalorder %s27, 1
        %s1351 = scalar_select %p1350, %s27, 1
        %s1352 = smul.addr %s1351, 4
        %s1353 = scalar_lea.vmem %s15, %s1352
      $region92: #{default_transformer_forward.6} parent=87 // pred_fallthru
        _
    $region88: #{default_transformer_forward.6} parent=5 // pred_fallthru
      _
  $region6: #{default_transformer_forward.6} parent=0 // loop_footer
    %s25 = sadd.s32 1, %s21
  $region7: #{default_transformer_forward.6} parent=0 // loop_footer_branch
    %20 = sbr.rel target = $region3
  $region8: #{default_transformer_forward.6} parent=0 // loop_exit
    _

// kernel: default_transformer_forward.8
$region0: #{default_transformer_forward.8}
  #allocation0 [shape = 'u32[]', space=smem, size = 0x4, offset = 0x4, fixed_abs, tag = 'smem constant byte address 0x4 - core index']
  #allocation1 [shape = 'u32[144,128]{1,0:T(1,128)}', space=vmem, size = 0x12000, scoped, tag = 'internal scratch']
  %s0 = inlined_call_operand.vmem [shape: bf16[2,8,32], index: 0, kind: input, shape index: {}]
  %s1 = inlined_call_operand.vmem [shape: bf16[2,8,32], index: 1, kind: input, shape index: {}]
  %s2 = inlined_call_operand.vmem [shape: f32[8,8], index: 2, kind: input, shape index: {}]
  %s3 = inlined_call_operand.vmem [shape: bf16[32,96], index: 3, kind: input, shape index: {}]
  %s4 = inlined_call_operand.vmem [shape: f32[1,96], index: 4, kind: input, shape index: {}]
  %s5 = inlined_call_operand.vmem [shape: bf16[32,32], index: 5, kind: input, shape index: {}]
  %s6 = inlined_call_operand.vmem [shape: f32[1,32], index: 6, kind: input, shape index: {}]
  %s7 = inlined_call_operand.vmem [shape: f32[1,32], index: 7, kind: input, shape index: {}]
  %s8 = inlined_call_operand.vmem [shape: f32[1,32], index: 8, kind: input, shape index: {}]
  %s9 = inlined_call_operand.vmem [shape: bf16[32,32], index: 9, kind: input, shape index: {}]
  %s10 = inlined_call_operand.vmem [shape: f32[1,32], index: 10, kind: input, shape index: {}]
  %s11 = inlined_call_operand.vmem [shape: bf16[32,64], index: 11, kind: input, shape index: {}]
  %s12 = inlined_call_operand.vmem [shape: f32[1,64], index: 12, kind: input, shape index: {}]
  %s13 = inlined_call_operand.vmem [shape: bf16[32,32], index: 13, kind: input, shape index: {}]
  %s14 = inlined_call_operand.vmem [shape: f32[1,32], index: 14, kind: input, shape index: {}]
  %s15 = inlined_call_operand.vmem [shape: f32[1,32], index: 15, kind: input, shape index: {}]
  %s16 = inlined_call_operand.vmem [shape: f32[1,32], index: 16, kind: input, shape index: {}]
  %s17 = inlined_call_operand.vmem [shape: bf16[32,64], index: 17, kind: input, shape index: {}]
  %s18 = inlined_call_operand.vmem [shape: f32[1,64], index: 18, kind: input, shape index: {}]
  %s19 = inlined_call_operand.vmem [shape: bf16[64,32], index: 19, kind: input, shape index: {}]
  %s20 = inlined_call_operand.vmem [shape: f32[1,32], index: 20, kind: input, shape index: {}]
  %s21 = inlined_call_operand.hbm [shape: f32[1,32], index: 21, kind: input, shape index: {}]
  %s22 = inlined_call_operand.hbm [shape: f32[1,32], index: 22, kind: input, shape index: {}]
  %s23 = inlined_call_operand.vmem [shape: bf16[2,8,32], index: 23, kind: output, shape index: {}]
  %s24 = sld [smem:[#allocation0]]
  $region133: #{default_transformer_forward.8} parent=0
    _
  %s26 = ssub.s32 1, %s24
  %s27 = scalar_select 0, %s26, %s24
  $region1: #{default_transformer_forward.8} parent=0
    #allocation2 [shape = 'u8[512]{0}', space=vmem, size = 0x400, scoped, tag = 'input window, operand 21, single buffered']
    #allocation3 [shape = 's32[2]{0}', space=sflag, size = 0x8, scoped, tag = 'scoped memory for default_transformer_forward.8']
    #allocation4 [shape = 'u8[512]{0}', space=vmem, size = 0x400, scoped, tag = 'input window, operand 22, single buffered']
    #allocation5 [shape = 's32[1]{0}', space=sflag, size = 0x4, scoped, tag = 'scoped memory for default_transformer_forward.8']
    %28 = vsyncpa [#allocation3], 0
    %29 = vsyncpa [#allocation5], 0
    loop: start=0, step=1, limit=4
    $region2: #{default_transformer_forward.8} parent=1 // loop_pre_header
      _
    $region3: #{default_transformer_forward.8} parent=1 // loop_header
      %s31 = sphi 0, %s35
      %p32 = scmp.ge.s32.totalorder %s31, 4
      %s41 = sphi 0, %s43
      %s44 = sphi 0, %s41
      %s45 = sphi 0, %s44
      %s61 = sphi 0, %s45
      %s67 = sphi 0, %s69
      %s70 = sphi 0, %s67
      %s71 = sphi 0, %s70
      %s87 = sphi 0, %s71
      %s91 = sphi 0, %s91
      %s93 = sphi 0, %s91
      %s94 = sphi 0, %s93
      %s108 = sphi 0, %s94
      %s112 = sphi 0, %s112
      %s114 = sphi 0, %s112
      %s115 = sphi 0, %s114
      %s129 = sphi 0, %s115
      %s133 = sphi 0, %s133
      %s135 = sphi 0, %s133
      %s136 = sphi 0, %s135
      %s150 = sphi 0, %s136
      %s154 = sphi 0, %s154
      %s156 = sphi 0, %s154
      %s157 = sphi 0, %s156
      %s171 = sphi 0, %s157
      %s175 = sphi 0, %s175
      %s177 = sphi 0, %s175
      %s178 = sphi 0, %s177
      %s192 = sphi 0, %s178
      %s196 = sphi 0, %s196
      %s198 = sphi 0, %s196
      %s199 = sphi 0, %s198
      %s213 = sphi 0, %s199
      %s217 = sphi 0, %s217
      %s219 = sphi 0, %s217
      %s220 = sphi 0, %s219
      %s234 = sphi 0, %s220
      %s238 = sphi 0, %s238
      %s240 = sphi 0, %s238
      %s241 = sphi 0, %s240
      %s255 = sphi 0, %s241
      %s259 = sphi 0, %s259
      %s261 = sphi 0, %s259
      %s262 = sphi 0, %s261
      %s276 = sphi 0, %s262
      %s280 = sphi 0, %s280
      %s282 = sphi 0, %s280
      %s283 = sphi 0, %s282
      %s297 = sphi 0, %s283
      %s301 = sphi 0, %s301
      %s303 = sphi 0, %s301
      %s304 = sphi 0, %s303
      %s318 = sphi 0, %s304
      %s322 = sphi 0, %s322
      %s324 = sphi 0, %s322
      %s325 = sphi 0, %s324
      %s339 = sphi 0, %s325
      %s343 = sphi 0, %s343
      %s345 = sphi 0, %s343
      %s346 = sphi 0, %s345
      %s360 = sphi 0, %s346
      %s364 = sphi 0, %s364
      %s366 = sphi 0, %s364
      %s367 = sphi 0, %s366
      %s381 = sphi 0, %s367
      %s385 = sphi 0, %s385
      %s387 = sphi 0, %s385
      %s388 = sphi 0, %s387
      %s402 = sphi 0, %s388
      %s406 = sphi 0, %s406
      %s408 = sphi 0, %s406
      %s409 = sphi 0, %s408
      %s423 = sphi 0, %s409
      %s427 = sphi 0, %s427
      %s429 = sphi 0, %s427
      %s430 = sphi 0, %s429
      %s444 = sphi 0, %s430
      %s448 = sphi 0, %s448
      %s450 = sphi 0, %s448
      %s451 = sphi 0, %s450
      %s465 = sphi 0, %s451
      %s469 = sphi 0, %s469
      %s471 = sphi 0, %s469
      %s472 = sphi 0, %s471
      %s486 = sphi 0, %s472
      %s490 = sphi 0, %s490
      %s492 = sphi 0, %s490
      %s493 = sphi 0, %s492
      %s507 = sphi 0, %s493
      %s511 = sphi 0, %s511
      %s513 = sphi 0, %s511
      %s514 = sphi 0, %s513
      %s528 = sphi 0, %s514
      %s534 = sphi 0, %s536
      %s537 = sphi 0, %s534
      %s538 = sphi 0, %s537
      %s554 = sphi 0, %s538
    $region4: #{default_transformer_forward.8} parent=1 // loop_header_branch
      %34 = sbr.rel (%p32) target = $region8
    $region5: #{default_transformer_forward.8} parent=1 // loop_body
      %s36 = ssub.s32 %s31, 1
      %s37 = ssub.s32 %s31, 2
      %s38 = sadd.s32 %s31, 1
      %s39 = ssub.s32 %s31, %s38
      %p40 = scmp.eq.s32.totalorder %s39, 0
      %s42 = sadd.s32 %s41, 1
      %s43 = scalar_select %p40, %s41, %s42
      %p46 = pneg %p40
      %p47 = scmp.eq.s32.totalorder %s31, 1
      %p48 = por %p46, %p47
      %p49 = scmp.ne.s32.totalorder %s41, %s44
      %p50 = scmp.eq.s32.totalorder %s31, 0
      %p51 = por %p49, %p50
      %p52 = scmp.ne.s32.totalorder %s41, %s44
      %p53 = scmp.eq.s32.totalorder %s36, 1
      %p54 = por %p52, %p53
      %p55 = scmp.ne.s32.totalorder %s44, %s45
      %p56 = scmp.eq.s32.totalorder %s36, 0
      %p57 = por %p55, %p56
      %p58 = scmp.ne.s32.totalorder %s44, %s45
      %p59 = scmp.eq.s32.totalorder %s37, 1
      %p60 = por %p58, %p59
      %p62 = scmp.ne.s32.totalorder %s45, %s61
      %p63 = scmp.eq.s32.totalorder %s37, 0
      %p64 = por %p62, %p63
      %s65 = ssub.s32 %s31, %s38
      %p66 = scmp.eq.s32.totalorder %s65, 0
      %s68 = sadd.s32 %s67, 1
      %s69 = scalar_select %p66, %s67, %s68
      %p72 = pneg %p66
      %p73 = scmp.eq.s32.totalorder %s31, 1
      %p74 = por %p72, %p73
      %p75 = scmp.ne.s32.totalorder %s67, %s70
      %p76 = scmp.eq.s32.totalorder %s31, 0
      %p77 = por %p75, %p76
      %p78 = scmp.ne.s32.totalorder %s67, %s70
      %p79 = scmp.eq.s32.totalorder %s36, 1
      %p80 = por %p78, %p79
      %p81 = scmp.ne.s32.totalorder %s70, %s71
      %p82 = scmp.eq.s32.totalorder %s36, 0
      %p83 = por %p81, %p82
      %p84 = scmp.ne.s32.totalorder %s70, %s71
      %p85 = scmp.eq.s32.totalorder %s37, 1
      %p86 = por %p84, %p85
      %p88 = scmp.ne.s32.totalorder %s71, %s87
      %p89 = scmp.eq.s32.totalorder %s37, 0
      %p90 = por %p88, %p89
      %s92 = sadd.s32 %s91, 1
      %p95 = scmp.eq.s32.totalorder %s31, 1
      %p96 = scmp.ne.s32.totalorder %s91, %s93
      %p97 = scmp.eq.s32.totalorder %s31, 0
      %p98 = por %p96, %p97
      %p99 = scmp.ne.s32.totalorder %s91, %s93
      %p100 = scmp.eq.s32.totalorder %s36, 1
      %p101 = por %p99, %p100
      %p102 = scmp.ne.s32.totalorder %s93, %s94
      %p103 = scmp.eq.s32.totalorder %s36, 0
      %p104 = por %p102, %p103
      %p105 = scmp.ne.s32.totalorder %s93, %s94
      %p106 = scmp.eq.s32.totalorder %s37, 1
      %p107 = por %p105, %p106
      %p109 = scmp.ne.s32.totalorder %s94, %s108
      %p110 = scmp.eq.s32.totalorder %s37, 0
      %p111 = por %p109, %p110
      %s113 = sadd.s32 %s112, 1
      %p116 = scmp.eq.s32.totalorder %s31, 1
      %p117 = scmp.ne.s32.totalorder %s112, %s114
      %p118 = scmp.eq.s32.totalorder %s31, 0
      %p119 = por %p117, %p118
      %p120 = scmp.ne.s32.totalorder %s112, %s114
      %p121 = scmp.eq.s32.totalorder %s36, 1
      %p122 = por %p120, %p121
      %p123 = scmp.ne.s32.totalorder %s114, %s115
      %p124 = scmp.eq.s32.totalorder %s36, 0
      %p125 = por %p123, %p124
      %p126 = scmp.ne.s32.totalorder %s114, %s115
      %p127 = scmp.eq.s32.totalorder %s37, 1
      %p128 = por %p126, %p127
      %p130 = scmp.ne.s32.totalorder %s115, %s129
      %p131 = scmp.eq.s32.totalorder %s37, 0
      %p132 = por %p130, %p131
      %s134 = sadd.s32 %s133, 1
      %p137 = scmp.eq.s32.totalorder %s31, 1
      %p138 = scmp.ne.s32.totalorder %s133, %s135
      %p139 = scmp.eq.s32.totalorder %s31, 0
      %p140 = por %p138, %p139
      %p141 = scmp.ne.s32.totalorder %s133, %s135
      %p142 = scmp.eq.s32.totalorder %s36, 1
      %p143 = por %p141, %p142
      %p144 = scmp.ne.s32.totalorder %s135, %s136
      %p145 = scmp.eq.s32.totalorder %s36, 0
      %p146 = por %p144, %p145
      %p147 = scmp.ne.s32.totalorder %s135, %s136
      %p148 = scmp.eq.s32.totalorder %s37, 1
      %p149 = por %p147, %p148
      %p151 = scmp.ne.s32.totalorder %s136, %s150
      %p152 = scmp.eq.s32.totalorder %s37, 0
      %p153 = por %p151, %p152
      %s155 = sadd.s32 %s154, 1
      %p158 = scmp.eq.s32.totalorder %s31, 1
      %p159 = scmp.ne.s32.totalorder %s154, %s156
      %p160 = scmp.eq.s32.totalorder %s31, 0
      %p161 = por %p159, %p160
      %p162 = scmp.ne.s32.totalorder %s154, %s156
      %p163 = scmp.eq.s32.totalorder %s36, 1
      %p164 = por %p162, %p163
      %p165 = scmp.ne.s32.totalorder %s156, %s157
      %p166 = scmp.eq.s32.totalorder %s36, 0
      %p167 = por %p165, %p166
      %p168 = scmp.ne.s32.totalorder %s156, %s157
      %p169 = scmp.eq.s32.totalorder %s37, 1
      %p170 = por %p168, %p169
      %p172 = scmp.ne.s32.totalorder %s157, %s171
      %p173 = scmp.eq.s32.totalorder %s37, 0
      %p174 = por %p172, %p173
      %s176 = sadd.s32 %s175, 1
      %p179 = scmp.eq.s32.totalorder %s31, 1
      %p180 = scmp.ne.s32.totalorder %s175, %s177
      %p181 = scmp.eq.s32.totalorder %s31, 0
      %p182 = por %p180, %p181
      %p183 = scmp.ne.s32.totalorder %s175, %s177
      %p184 = scmp.eq.s32.totalorder %s36, 1
      %p185 = por %p183, %p184
      %p186 = scmp.ne.s32.totalorder %s177, %s178
      %p187 = scmp.eq.s32.totalorder %s36, 0
      %p188 = por %p186, %p187
      %p189 = scmp.ne.s32.totalorder %s177, %s178
      %p190 = scmp.eq.s32.totalorder %s37, 1
      %p191 = por %p189, %p190
      %p193 = scmp.ne.s32.totalorder %s178, %s192
      %p194 = scmp.eq.s32.totalorder %s37, 0
      %p195 = por %p193, %p194
      %s197 = sadd.s32 %s196, 1
      %p200 = scmp.eq.s32.totalorder %s31, 1
      %p201 = scmp.ne.s32.totalorder %s196, %s198
      %p202 = scmp.eq.s32.totalorder %s31, 0
      %p203 = por %p201, %p202
      %p204 = scmp.ne.s32.totalorder %s196, %s198
      %p205 = scmp.eq.s32.totalorder %s36, 1
      %p206 = por %p204, %p205
      %p207 = scmp.ne.s32.totalorder %s198, %s199
      %p208 = scmp.eq.s32.totalorder %s36, 0
      %p209 = por %p207, %p208
      %p210 = scmp.ne.s32.totalorder %s198, %s199
      %p211 = scmp.eq.s32.totalorder %s37, 1
      %p212 = por %p210, %p211
      %p214 = scmp.ne.s32.totalorder %s199, %s213
      %p215 = scmp.eq.s32.totalorder %s37, 0
      %p216 = por %p214, %p215
      %s218 = sadd.s32 %s217, 1
      %p221 = scmp.eq.s32.totalorder %s31, 1
      %p222 = scmp.ne.s32.totalorder %s217, %s219
      %p223 = scmp.eq.s32.totalorder %s31, 0
      %p224 = por %p222, %p223
      %p225 = scmp.ne.s32.totalorder %s217, %s219
      %p226 = scmp.eq.s32.totalorder %s36, 1
      %p227 = por %p225, %p226
      %p228 = scmp.ne.s32.totalorder %s219, %s220
      %p229 = scmp.eq.s32.totalorder %s36, 0
      %p230 = por %p228, %p229
      %p231 = scmp.ne.s32.totalorder %s219, %s220
      %p232 = scmp.eq.s32.totalorder %s37, 1
      %p233 = por %p231, %p232
      %p235 = scmp.ne.s32.totalorder %s220, %s234
      %p236 = scmp.eq.s32.totalorder %s37, 0
      %p237 = por %p235, %p236
      %s239 = sadd.s32 %s238, 1
      %p242 = scmp.eq.s32.totalorder %s31, 1
      %p243 = scmp.ne.s32.totalorder %s238, %s240
      %p244 = scmp.eq.s32.totalorder %s31, 0
      %p245 = por %p243, %p244
      %p246 = scmp.ne.s32.totalorder %s238, %s240
      %p247 = scmp.eq.s32.totalorder %s36, 1
      %p248 = por %p246, %p247
      %p249 = scmp.ne.s32.totalorder %s240, %s241
      %p250 = scmp.eq.s32.totalorder %s36, 0
      %p251 = por %p249, %p250
      %p252 = scmp.ne.s32.totalorder %s240, %s241
      %p253 = scmp.eq.s32.totalorder %s37, 1
      %p254 = por %p252, %p253
      %p256 = scmp.ne.s32.totalorder %s241, %s255
      %p257 = scmp.eq.s32.totalorder %s37, 0
      %p258 = por %p256, %p257
      %s260 = sadd.s32 %s259, 1
      %p263 = scmp.eq.s32.totalorder %s31, 1
      %p264 = scmp.ne.s32.totalorder %s259, %s261
      %p265 = scmp.eq.s32.totalorder %s31, 0
      %p266 = por %p264, %p265
      %p267 = scmp.ne.s32.totalorder %s259, %s261
      %p268 = scmp.eq.s32.totalorder %s36, 1
      %p269 = por %p267, %p268
      %p270 = scmp.ne.s32.totalorder %s261, %s262
      %p271 = scmp.eq.s32.totalorder %s36, 0
      %p272 = por %p270, %p271
      %p273 = scmp.ne.s32.totalorder %s261, %s262
      %p274 = scmp.eq.s32.totalorder %s37, 1
      %p275 = por %p273, %p274
      %p277 = scmp.ne.s32.totalorder %s262, %s276
      %p278 = scmp.eq.s32.totalorder %s37, 0
      %p279 = por %p277, %p278
      %s281 = sadd.s32 %s280, 1
      %p284 = scmp.eq.s32.totalorder %s31, 1
      %p285 = scmp.ne.s32.totalorder %s280, %s282
      %p286 = scmp.eq.s32.totalorder %s31, 0
      %p287 = por %p285, %p286
      %p288 = scmp.ne.s32.totalorder %s280, %s282
      %p289 = scmp.eq.s32.totalorder %s36, 1
      %p290 = por %p288, %p289
      %p291 = scmp.ne.s32.totalorder %s282, %s283
      %p292 = scmp.eq.s32.totalorder %s36, 0
      %p293 = por %p291, %p292
      %p294 = scmp.ne.s32.totalorder %s282, %s283
      %p295 = scmp.eq.s32.totalorder %s37, 1
      %p296 = por %p294, %p295
      %p298 = scmp.ne.s32.totalorder %s283, %s297
      %p299 = scmp.eq.s32.totalorder %s37, 0
      %p300 = por %p298, %p299
      %s302 = sadd.s32 %s301, 1
      %p305 = scmp.eq.s32.totalorder %s31, 1
      %p306 = scmp.ne.s32.totalorder %s301, %s303
      %p307 = scmp.eq.s32.totalorder %s31, 0
      %p308 = por %p306, %p307
      %p309 = scmp.ne.s32.totalorder %s301, %s303
      %p310 = scmp.eq.s32.totalorder %s36, 1
      %p311 = por %p309, %p310
      %p312 = scmp.ne.s32.totalorder %s303, %s304
      %p313 = scmp.eq.s32.totalorder %s36, 0
      %p314 = por %p312, %p313
      %p315 = scmp.ne.s32.totalorder %s303, %s304
      %p316 = scmp.eq.s32.totalorder %s37, 1
      %p317 = por %p315, %p316
      %p319 = scmp.ne.s32.totalorder %s304, %s318
      %p320 = scmp.eq.s32.totalorder %s37, 0
      %p321 = por %p319, %p320
      %s323 = sadd.s32 %s322, 1
      %p326 = scmp.eq.s32.totalorder %s31, 1
      %p327 = scmp.ne.s32.totalorder %s322, %s324
      %p328 = scmp.eq.s32.totalorder %s31, 0
      %p329 = por %p327, %p328
      %p330 = scmp.ne.s32.totalorder %s322, %s324
      %p331 = scmp.eq.s32.totalorder %s36, 1
      %p332 = por %p330, %p331
      %p333 = scmp.ne.s32.totalorder %s324, %s325
      %p334 = scmp.eq.s32.totalorder %s36, 0
      %p335 = por %p333, %p334
      %p336 = scmp.ne.s32.totalorder %s324, %s325
      %p337 = scmp.eq.s32.totalorder %s37, 1
      %p338 = por %p336, %p337
      %p340 = scmp.ne.s32.totalorder %s325, %s339
      %p341 = scmp.eq.s32.totalorder %s37, 0
      %p342 = por %p340, %p341
      %s344 = sadd.s32 %s343, 1
      %p347 = scmp.eq.s32.totalorder %s31, 1
      %p348 = scmp.ne.s32.totalorder %s343, %s345
      %p349 = scmp.eq.s32.totalorder %s31, 0
      %p350 = por %p348, %p349
      %p351 = scmp.ne.s32.totalorder %s343, %s345
      %p352 = scmp.eq.s32.totalorder %s36, 1
      %p353 = por %p351, %p352
      %p354 = scmp.ne.s32.totalorder %s345, %s346
      %p355 = scmp.eq.s32.totalorder %s36, 0
      %p356 = por %p354, %p355
      %p357 = scmp.ne.s32.totalorder %s345, %s346
      %p358 = scmp.eq.s32.totalorder %s37, 1
      %p359 = por %p357, %p358
      %p361 = scmp.ne.s32.totalorder %s346, %s360
      %p362 = scmp.eq.s32.totalorder %s37, 0
      %p363 = por %p361, %p362
      %s365 = sadd.s32 %s364, 1
      %p368 = scmp.eq.s32.totalorder %s31, 1
      %p369 = scmp.ne.s32.totalorder %s364, %s366
      %p370 = scmp.eq.s32.totalorder %s31, 0
      %p371 = por %p369, %p370
      %p372 = scmp.ne.s32.totalorder %s364, %s366
      %p373 = scmp.eq.s32.totalorder %s36, 1
      %p374 = por %p372, %p373
      %p375 = scmp.ne.s32.totalorder %s366, %s367
      %p376 = scmp.eq.s32.totalorder %s36, 0
      %p377 = por %p375, %p376
      %p378 = scmp.ne.s32.totalorder %s366, %s367
      %p379 = scmp.eq.s32.totalorder %s37, 1
      %p380 = por %p378, %p379
      %p382 = scmp.ne.s32.totalorder %s367, %s381
      %p383 = scmp.eq.s32.totalorder %s37, 0
      %p384 = por %p382, %p383
      %s386 = sadd.s32 %s385, 1
      %p389 = scmp.eq.s32.totalorder %s31, 1
      %p390 = scmp.ne.s32.totalorder %s385, %s387
      %p391 = scmp.eq.s32.totalorder %s31, 0
      %p392 = por %p390, %p391
      %p393 = scmp.ne.s32.totalorder %s385, %s387
      %p394 = scmp.eq.s32.totalorder %s36, 1
      %p395 = por %p393, %p394
      %p396 = scmp.ne.s32.totalorder %s387, %s388
      %p397 = scmp.eq.s32.totalorder %s36, 0
      %p398 = por %p396, %p397
      %p399 = scmp.ne.s32.totalorder %s387, %s388
      %p400 = scmp.eq.s32.totalorder %s37, 1
      %p401 = por %p399, %p400
      %p403 = scmp.ne.s32.totalorder %s388, %s402
      %p404 = scmp.eq.s32.totalorder %s37, 0
      %p405 = por %p403, %p404
      %s407 = sadd.s32 %s406, 1
      %p410 = scmp.eq.s32.totalorder %s31, 1
      %p411 = scmp.ne.s32.totalorder %s406, %s408
      %p412 = scmp.eq.s32.totalorder %s31, 0
      %p413 = por %p411, %p412
      %p414 = scmp.ne.s32.totalorder %s406, %s408
      %p415 = scmp.eq.s32.totalorder %s36, 1
      %p416 = por %p414, %p415
      %p417 = scmp.ne.s32.totalorder %s408, %s409
      %p418 = scmp.eq.s32.totalorder %s36, 0
      %p419 = por %p417, %p418
      %p420 = scmp.ne.s32.totalorder %s408, %s409
      %p421 = scmp.eq.s32.totalorder %s37, 1
      %p422 = por %p420, %p421
      %p424 = scmp.ne.s32.totalorder %s409, %s423
      %p425 = scmp.eq.s32.totalorder %s37, 0
      %p426 = por %p424, %p425
      %s428 = sadd.s32 %s427, 1
      %p431 = scmp.eq.s32.totalorder %s31, 1
      %p432 = scmp.ne.s32.totalorder %s427, %s429
      %p433 = scmp.eq.s32.totalorder %s31, 0
      %p434 = por %p432, %p433
      %p435 = scmp.ne.s32.totalorder %s427, %s429
      %p436 = scmp.eq.s32.totalorder %s36, 1
      %p437 = por %p435, %p436
      %p438 = scmp.ne.s32.totalorder %s429, %s430
      %p439 = scmp.eq.s32.totalorder %s36, 0
      %p440 = por %p438, %p439
      %p441 = scmp.ne.s32.totalorder %s429, %s430
      %p442 = scmp.eq.s32.totalorder %s37, 1
      %p443 = por %p441, %p442
      %p445 = scmp.ne.s32.totalorder %s430, %s444
      %p446 = scmp.eq.s32.totalorder %s37, 0
      %p447 = por %p445, %p446
      %s449 = sadd.s32 %s448, 1
      %p452 = scmp.eq.s32.totalorder %s31, 1
      %p453 = scmp.ne.s32.totalorder %s448, %s450
      %p454 = scmp.eq.s32.totalorder %s31, 0
      %p455 = por %p453, %p454
      %p456 = scmp.ne.s32.totalorder %s448, %s450
      %p457 = scmp.eq.s32.totalorder %s36, 1
      %p458 = por %p456, %p457
      %p459 = scmp.ne.s32.totalorder %s450, %s451
      %p460 = scmp.eq.s32.totalorder %s36, 0
      %p461 = por %p459, %p460
      %p462 = scmp.ne.s32.totalorder %s450, %s451
      %p463 = scmp.eq.s32.totalorder %s37, 1
      %p464 = por %p462, %p463
      %p466 = scmp.ne.s32.totalorder %s451, %s465
      %p467 = scmp.eq.s32.totalorder %s37, 0
      %p468 = por %p466, %p467
      %s470 = sadd.s32 %s469, 1
      %p473 = scmp.eq.s32.totalorder %s31, 1
      %p474 = scmp.ne.s32.totalorder %s469, %s471
      %p475 = scmp.eq.s32.totalorder %s31, 0
      %p476 = por %p474, %p475
      %p477 = scmp.ne.s32.totalorder %s469, %s471
      %p478 = scmp.eq.s32.totalorder %s36, 1
      %p479 = por %p477, %p478
      %p480 = scmp.ne.s32.totalorder %s471, %s472
      %p481 = scmp.eq.s32.totalorder %s36, 0
      %p482 = por %p480, %p481
      %p483 = scmp.ne.s32.totalorder %s471, %s472
      %p484 = scmp.eq.s32.totalorder %s37, 1
      %p485 = por %p483, %p484
      %p487 = scmp.ne.s32.totalorder %s472, %s486
      %p488 = scmp.eq.s32.totalorder %s37, 0
      %p489 = por %p487, %p488
      %s491 = sadd.s32 %s490, 1
      %p494 = scmp.eq.s32.totalorder %s31, 1
      %p495 = scmp.ne.s32.totalorder %s490, %s492
      %p496 = scmp.eq.s32.totalorder %s31, 0
      %p497 = por %p495, %p496
      %p498 = scmp.ne.s32.totalorder %s490, %s492
      %p499 = scmp.eq.s32.totalorder %s36, 1
      %p500 = por %p498, %p499
      %p501 = scmp.ne.s32.totalorder %s492, %s493
      %p502 = scmp.eq.s32.totalorder %s36, 0
      %p503 = por %p501, %p502
      %p504 = scmp.ne.s32.totalorder %s492, %s493
      %p505 = scmp.eq.s32.totalorder %s37, 1
      %p506 = por %p504, %p505
      %p508 = scmp.ne.s32.totalorder %s493, %s507
      %p509 = scmp.eq.s32.totalorder %s37, 0
      %p510 = por %p508, %p509
      %s512 = sadd.s32 %s511, 1
      %p515 = scmp.eq.s32.totalorder %s31, 1
      %p516 = scmp.ne.s32.totalorder %s511, %s513
      %p517 = scmp.eq.s32.totalorder %s31, 0
      %p518 = por %p516, %p517
      %p519 = scmp.ne.s32.totalorder %s511, %s513
      %p520 = scmp.eq.s32.totalorder %s36, 1
      %p521 = por %p519, %p520
      %p522 = scmp.ne.s32.totalorder %s513, %s514
      %p523 = scmp.eq.s32.totalorder %s36, 0
      %p524 = por %p522, %p523
      %p525 = scmp.ne.s32.totalorder %s513, %s514
      %p526 = scmp.eq.s32.totalorder %s37, 1
      %p527 = por %p525, %p526
      %p529 = scmp.ne.s32.totalorder %s514, %s528
      %p530 = scmp.eq.s32.totalorder %s37, 0
      %p531 = por %p529, %p530
      %s532 = ssub.s32 %s31, %s38
      %p533 = scmp.eq.s32.totalorder %s532, 0
      %s535 = sadd.s32 %s534, 1
      %s536 = scalar_select %p533, %s534, %s535
      %p539 = pneg %p533
      %p540 = scmp.eq.s32.totalorder %s31, 1
      %p541 = por %p539, %p540
      %p542 = scmp.ne.s32.totalorder %s534, %s537
      %p543 = scmp.eq.s32.totalorder %s31, 0
      %p544 = por %p542, %p543
      %p545 = scmp.ne.s32.totalorder %s534, %s537
      %p546 = scmp.eq.s32.totalorder %s36, 1
      %p547 = por %p545, %p546
      %p548 = scmp.ne.s32.totalorder %s537, %s538
      %p549 = scmp.eq.s32.totalorder %s36, 0
      %p550 = por %p548, %p549
      %p551 = scmp.ne.s32.totalorder %s537, %s538
      %p552 = scmp.eq.s32.totalorder %s37, 1
      %p553 = por %p551, %p552
      %p555 = scmp.ne.s32.totalorder %s538, %s554
      %p556 = scmp.eq.s32.totalorder %s37, 0
      %p557 = por %p555, %p556
      %p558 = scmp.le.s32.totalorder 1, %s31
      %p559 = scmp.lt.s32.totalorder %s31, 3
      %p560 = pnand %p558, %p559
      %p561 = pneg %p560
      // Predicated region
      $region9: #{default_transformer_forward.8} parent=5 // pred_check
        _
      $region10: #{default_transformer_forward.8} parent=5 // pred_check_branch
        %563 = sbr.rel (%p560) target = $region12
      $region11: #{default_transformer_forward.8} parent=5 // pred_region
        %s564 = ssub.s32 %s31, 1
        // Predicated region
        $region13: #{default_transformer_forward.8} parent=11 // pred_check
          %p565 = pneg %p104
        $region14: #{default_transformer_forward.8} parent=11 // pred_check_branch
          %567 = sbr.rel (%p565) target = $region16
        $region15: #{default_transformer_forward.8} parent=11 // pred_region
          _
        $region16: #{default_transformer_forward.8} parent=11 // pred_fallthru
          _
        // Predicated region
        $region17: #{default_transformer_forward.8} parent=11 // pred_check
          %p568 = pneg %p125
        $region18: #{default_transformer_forward.8} parent=11 // pred_check_branch
          %570 = sbr.rel (%p568) target = $region20
        $region19: #{default_transformer_forward.8} parent=11 // pred_region
          _
        $region20: #{default_transformer_forward.8} parent=11 // pred_fallthru
          _
        // Predicated region
        $region21: #{default_transformer_forward.8} parent=11 // pred_check
          %p571 = pneg %p146
        $region22: #{default_transformer_forward.8} parent=11 // pred_check_branch
          %573 = sbr.rel (%p571) target = $region24
        $region23: #{default_transformer_forward.8} parent=11 // pred_region
          _
        $region24: #{default_transformer_forward.8} parent=11 // pred_fallthru
          _
        // Predicated region
        $region25: #{default_transformer_forward.8} parent=11 // pred_check
          %p574 = pneg %p167
        $region26: #{default_transformer_forward.8} parent=11 // pred_check_branch
          %576 = sbr.rel (%p574) target = $region28
        $region27: #{default_transformer_forward.8} parent=11 // pred_region
          _
        $region28: #{default_transformer_forward.8} parent=11 // pred_fallthru
          _
        // Predicated region
        $region29: #{default_transformer_forward.8} parent=11 // pred_check
          %p577 = pneg %p188
        $region30: #{default_transformer_forward.8} parent=11 // pred_check_branch
          %579 = sbr.rel (%p577) target = $region32
        $region31: #{default_transformer_forward.8} parent=11 // pred_region
          _
        $region32: #{default_transformer_forward.8} parent=11 // pred_fallthru
          _
        // Predicated region
        $region33: #{default_transformer_forward.8} parent=11 // pred_check
          %p580 = pneg %p209
        $region34: #{default_transformer_forward.8} parent=11 // pred_check_branch
          %582 = sbr.rel (%p580) target = $region36
        $region35: #{default_transformer_forward.8} parent=11 // pred_region
          _
        $region36: #{default_transformer_forward.8} parent=11 // pred_fallthru
          _
        // Predicated region
        $region37: #{default_transformer_forward.8} parent=11 // pred_check
          %p583 = pneg %p230
        $region38: #{default_transformer_forward.8} parent=11 // pred_check_branch
          %585 = sbr.rel (%p583) target = $region40
        $region39: #{default_transformer_forward.8} parent=11 // pred_region
          _
        $region40: #{default_transformer_forward.8} parent=11 // pred_fallthru
          _
        // Predicated region
        $region41: #{default_transformer_forward.8} parent=11 // pred_check
          %p586 = pneg %p251
        $region42: #{default_transformer_forward.8} parent=11 // pred_check_branch
          %588 = sbr.rel (%p586) target = $region44
        $region43: #{default_transformer_forward.8} parent=11 // pred_region
          _
        $region44: #{default_transformer_forward.8} parent=11 // pred_fallthru
          _
        // Predicated region
        $region45: #{default_transformer_forward.8} parent=11 // pred_check
          %p589 = pneg %p272
        $region46: #{default_transformer_forward.8} parent=11 // pred_check_branch
          %591 = sbr.rel (%p589) target = $region48
        $region47: #{default_transformer_forward.8} parent=11 // pred_region
          _
        $region48: #{default_transformer_forward.8} parent=11 // pred_fallthru
          _
        // Predicated region
        $region49: #{default_transformer_forward.8} parent=11 // pred_check
          %p592 = pneg %p293
        $region50: #{default_transformer_forward.8} parent=11 // pred_check_branch
          %594 = sbr.rel (%p592) target = $region52
        $region51: #{default_transformer_forward.8} parent=11 // pred_region
          _
        $region52: #{default_transformer_forward.8} parent=11 // pred_fallthru
          _
        // Predicated region
        $region53: #{default_transformer_forward.8} parent=11 // pred_check
          %p595 = pneg %p314
        $region54: #{default_transformer_forward.8} parent=11 // pred_check_branch
          %597 = sbr.rel (%p595) target = $region56
        $region55: #{default_transformer_forward.8} parent=11 // pred_region
          _
        $region56: #{default_transformer_forward.8} parent=11 // pred_fallthru
          _
        // Predicated region
        $region57: #{default_transformer_forward.8} parent=11 // pred_check
          %p598 = pneg %p335
        $region58: #{default_transformer_forward.8} parent=11 // pred_check_branch
          %600 = sbr.rel (%p598) target = $region60
        $region59: #{default_transformer_forward.8} parent=11 // pred_region
          _
        $region60: #{default_transformer_forward.8} parent=11 // pred_fallthru
          _
        // Predicated region
        $region61: #{default_transformer_forward.8} parent=11 // pred_check
          %p601 = pneg %p356
        $region62: #{default_transformer_forward.8} parent=11 // pred_check_branch
          %603 = sbr.rel (%p601) target = $region64
        $region63: #{default_transformer_forward.8} parent=11 // pred_region
          _
        $region64: #{default_transformer_forward.8} parent=11 // pred_fallthru
          _
        // Predicated region
        $region65: #{default_transformer_forward.8} parent=11 // pred_check
          %p604 = pneg %p377
        $region66: #{default_transformer_forward.8} parent=11 // pred_check_branch
          %606 = sbr.rel (%p604) target = $region68
        $region67: #{default_transformer_forward.8} parent=11 // pred_region
          _
        $region68: #{default_transformer_forward.8} parent=11 // pred_fallthru
          _
        // Predicated region
        $region69: #{default_transformer_forward.8} parent=11 // pred_check
          %p607 = pneg %p398
        $region70: #{default_transformer_forward.8} parent=11 // pred_check_branch
          %609 = sbr.rel (%p607) target = $region72
        $region71: #{default_transformer_forward.8} parent=11 // pred_region
          _
        $region72: #{default_transformer_forward.8} parent=11 // pred_fallthru
          _
        // Predicated region
        $region73: #{default_transformer_forward.8} parent=11 // pred_check
          %p610 = pneg %p419
        $region74: #{default_transformer_forward.8} parent=11 // pred_check_branch
          %612 = sbr.rel (%p610) target = $region76
        $region75: #{default_transformer_forward.8} parent=11 // pred_region
          _
        $region76: #{default_transformer_forward.8} parent=11 // pred_fallthru
          _
        // Predicated region
        $region77: #{default_transformer_forward.8} parent=11 // pred_check
          %p613 = pneg %p440
        $region78: #{default_transformer_forward.8} parent=11 // pred_check_branch
          %615 = sbr.rel (%p613) target = $region80
        $region79: #{default_transformer_forward.8} parent=11 // pred_region
          _
        $region80: #{default_transformer_forward.8} parent=11 // pred_fallthru
          _
        // Predicated region
        $region81: #{default_transformer_forward.8} parent=11 // pred_check
          %p616 = pneg %p461
        $region82: #{default_transformer_forward.8} parent=11 // pred_check_branch
          %618 = sbr.rel (%p616) target = $region84
        $region83: #{default_transformer_forward.8} parent=11 // pred_region
          _
        $region84: #{default_transformer_forward.8} parent=11 // pred_fallthru
          _
        // Predicated region
        $region85: #{default_transformer_forward.8} parent=11 // pred_check
          %p619 = pneg %p482
        $region86: #{default_transformer_forward.8} parent=11 // pred_check_branch
          %621 = sbr.rel (%p619) target = $region88
        $region87: #{default_transformer_forward.8} parent=11 // pred_region
          _
        $region88: #{default_transformer_forward.8} parent=11 // pred_fallthru
          _
        // Predicated region
        $region89: #{default_transformer_forward.8} parent=11 // pred_check
          %p622 = pneg %p503
        $region90: #{default_transformer_forward.8} parent=11 // pred_check_branch
          %624 = sbr.rel (%p622) target = $region92
        $region91: #{default_transformer_forward.8} parent=11 // pred_region
          %s626 = ssub.s32 16, 16
          %627 = vsyncadd [#allocation3], %s626
          %s629 = sshll.u32 [#allocation2], 4
          %s630 = int_to_ptr.vmem [resolvable:$true] %s629
          %632 = dma.hbm_to_vmem [thread:$0]  %s21, 16, %s630, [#allocation3]
        $region92: #{default_transformer_forward.8} parent=11 // pred_fallthru
          _
        // Predicated region
        $region93: #{default_transformer_forward.8} parent=11 // pred_check
          %p633 = pneg %p524
        $region94: #{default_transformer_forward.8} parent=11 // pred_check_branch
          %635 = sbr.rel (%p633) target = $region96
        $region95: #{default_transformer_forward.8} parent=11 // pred_region
          %s637 = ssub.s32 16, 16
          %638 = vsyncadd [#allocation5], %s637
          %s640 = sshll.u32 [#allocation4], 4
          %s641 = int_to_ptr.vmem [resolvable:$true] %s640
          %643 = dma.hbm_to_vmem [thread:$0]  %s22, 16, %s641, [#allocation5]
        $region96: #{default_transformer_forward.8} parent=11 // pred_fallthru
          _
      $region12: #{default_transformer_forward.8} parent=5 // pred_fallthru
        _
      %p644 = scmp.lt.s32.totalorder %s31, 2
      // Predicated region
      $region97: #{default_transformer_forward.8} parent=5 // pred_check
        %p645 = pneg %p644
      $region98: #{default_transformer_forward.8} parent=5 // pred_check_branch
        %647 = sbr.rel (%p645) target = $region100
      $region99: #{default_transformer_forward.8} parent=5 // pred_region
        // Predicated region
        $region101: #{default_transformer_forward.8} parent=99 // pred_check
          %p648 = pneg %p51
        $region102: #{default_transformer_forward.8} parent=99 // pred_check_branch
          %650 = sbr.rel (%p648) target = $region104
        $region103: #{default_transformer_forward.8} parent=99 // pred_region
          %p651 = scmp.lt.s32.totalorder %s31, 1
          %s652 = scalar_select %p651, %s31, 1
          %s653 = smul.addr %s652, 4
          %s654 = scalar_lea.vmem %s0, %s653
        $region104: #{default_transformer_forward.8} parent=99 // pred_fallthru
          _
        // Predicated region
        $region105: #{default_transformer_forward.8} parent=99 // pred_check
          %p655 = pneg %p77
        $region106: #{default_transformer_forward.8} parent=99 // pred_check_branch
          %657 = sbr.rel (%p655) target = $region108
        $region107: #{default_transformer_forward.8} parent=99 // pred_region
          %p658 = scmp.lt.s32.totalorder %s31, 1
          %s659 = scalar_select %p658, %s31, 1
          %s660 = smul.addr %s659, 4
          %s661 = scalar_lea.vmem %s1, %s660
        $region108: #{default_transformer_forward.8} parent=99 // pred_fallthru
          _
      $region100: #{default_transformer_forward.8} parent=5 // pred_fallthru
        _
      %p662 = scmp.le.s32.totalorder 1, %s31
      %p663 = scmp.lt.s32.totalorder %s31, 3
      %p664 = pnand %p662, %p663
      %p665 = pneg %p664
      // Predicated region
      $region109: #{default_transformer_forward.8} parent=5 // pred_check
        _
      $region110: #{default_transformer_forward.8} parent=5 // pred_check_branch
        %667 = sbr.rel (%p664) target = $region112
      $region111: #{default_transformer_forward.8} parent=5 // pred_region
        %s668 = ssub.s32 %s31, 1
        // Predicated region
        $region113: #{default_transformer_forward.8} parent=111 // pred_check
          %p669 = pneg %p503
        $region114: #{default_transformer_forward.8} parent=111 // pred_check_branch
          %671 = sbr.rel (%p669) target = $region116
        $region115: #{default_transformer_forward.8} parent=111 // pred_region
          %672 = dma.done [#allocation3], 16
        $region116: #{default_transformer_forward.8} parent=111 // pred_fallthru
          _
        // Predicated region
        $region117: #{default_transformer_forward.8} parent=111 // pred_check
          %p673 = pneg %p524
        $region118: #{default_transformer_forward.8} parent=111 // pred_check_branch
          %675 = sbr.rel (%p673) target = $region120
        $region119: #{default_transformer_forward.8} parent=111 // pred_region
          %676 = dma.done [#allocation5], 16
        $region120: #{default_transformer_forward.8} parent=111 // pred_fallthru
          _
        %p677 = scmp.lt.s32.totalorder %s36, 1
        %s678 = scalar_select %p677, %s36, 1
        %s679 = smul.addr %s678, 4
        %s680 = scalar_lea.vmem %s0, %s679
        %p681 = pneg %p57
        %p682 = pneg %p54
        %p683 = scmp.lt.s32.totalorder %s36, 1
        %s684 = scalar_select %p683, %s36, 1
        %s685 = smul.addr %s684, 4
        %s686 = scalar_lea.vmem %s1, %s685
        %p687 = pneg %p83
        %p688 = pneg %p80
        %p689 = pneg %p104
        %p690 = pneg %p101
        %p691 = pneg %p125
        %p692 = pneg %p122
        %p693 = pneg %p146
        %p694 = pneg %p143
        %p695 = pneg %p167
        %p696 = pneg %p164
        %p697 = pneg %p188
        %p698 = pneg %p185
        %p699 = pneg %p209
        %p700 = pneg %p206
        %p701 = pneg %p230
        %p702 = pneg %p227
        %p703 = pneg %p251
        %p704 = pneg %p248
        %p705 = pneg %p272
        %p706 = pneg %p269
        %p707 = pneg %p293
        %p708 = pneg %p290
        %p709 = pneg %p314
        %p710 = pneg %p311
        %p711 = pneg %p335
        %p712 = pneg %p332
        %p713 = pneg %p356
        %p714 = pneg %p353
        %p715 = pneg %p377
        %p716 = pneg %p374
        %p717 = pneg %p398
        %p718 = pneg %p395
        %p719 = pneg %p419
        %p720 = pneg %p416
        %p721 = pneg %p440
        %p722 = pneg %p437
        %p723 = pneg %p461
        %p724 = pneg %p458
        %p725 = pneg %p482
        %p726 = pneg %p479
        %p727 = pneg %p503
        %p728 = pneg %p500
        %p729 = pneg %p524
        %p730 = pneg %p521
        %p731 = pneg %p550
        %p732 = pneg %p547
        %p733 = scmp.lt.s32.totalorder %s36, 1
        %s734 = scalar_select %p733, %s36, 1
        %s735 = smul.addr %s734, 4
        %s736 = scalar_lea.vmem %s23, %s735
        %p737 = scmp.lt.s32.totalorder %s36, 1
        %s738 = scalar_select %p737, %s36, 1
        %s739 = smul.addr %s738, 4
        %s740 = scalar_lea.vmem %s0, %s739
        %p741 = scmp.lt.s32.totalorder %s36, 1
        %s742 = scalar_select %p741, %s36, 1
        %s743 = smul.addr %s742, 4
        %s744 = scalar_lea.vmem %s1, %s743
        %p745 = scmp.lt.s32.totalorder %s36, 1
        %s746 = scalar_select %p745, %s36, 1
        %s747 = smul.addr %s746, 4
        %s748 = scalar_lea.vmem %s23, %s747
        %v750 = vld [vmem:[%s740] sm:$0xf]
        %v751 = vunpack.c.l.bf16 %v750
        %v752 = vld [vmem:[%s744] sm:$0xf]
        %v753 = vld [vmem:[%s3] sm:$0xf]
        %v754 = vld [vmem:[%s3 + $0x4] sm:$0xf]
        %v755 = vld [vmem:[%s3 + $0x8] sm:$0xf]
        %v756 = vld [vmem:[%s3 + $0xc] sm:$0xf]
        %v757 = vld [vmem:[%s4] sm:$0x1]
        %v759 = vlaneseq
        %v760 = vshrl.u32 %v759, 7
        %v761 = vsub.s32 0, %v760
        %v762 = vrot.slane %v757, %v761
        %v768 = vunpack.c.l.b16 %v753
        %v769 = vunpack.c.l.b16 %v754
        %v770 = vunpack.c.l.b16 %v755
        %v771 = vunpack.c.l.b16 %v756
        %v772 = vpack.c.b16 %v769, %v768
        %v773 = vpack.c.b16 %v771, %v770
        %vm776 = vcmask 261120
        %v778 = vsel %vm776, %v750, 0
        %780 = vmatprep.subr.bf16.mxu0 0
        %781 = vmatpush1.bf16.msra.mxu0 %v772
        %782 = vmatprep.subr.bf16.mxu0 0
        %783 = vmatpush1.bf16.msra.mxu0 %v773
        %784 = vmatprep.subr.bf16.mxu0 0
        %785 = vmatpush1.bf16.msra.mxu0 0
        %786 = vmatprep.subr.bf16.mxu0 0
        %787 = vmatpush1.bf16.msra.mxu0 0
        %788 = vmatprep.subr.bf16.mxu0 0
        %789 = vmatpush1.bf16.msra.mxu0 0
        %790 = vmatprep.subr.bf16.mxu0 0
        %791 = vmatpush1.bf16.msra.mxu0 0
        %792 = vmatprep.subr.bf16.mxu0 0
        %793 = vmatpush1.bf16.msra.mxu0 0
        %794 = vmatprep.subr.bf16.mxu0 0
        %795 = vmatpush1.bf16.msra.mxu0 0
        %796 = vmatprep.subr.bf16.mxu0 0
        %797 = vmatpush1.bf16.msra.mxu0 0
        %798 = vmatprep.subr.bf16.mxu0 0
        %799 = vmatpush1.bf16.msra.mxu0 0
        %800 = vmatprep.subr.bf16.mxu0 0
        %801 = vmatpush1.bf16.msra.mxu0 0
        %802 = vmatprep.subr.bf16.mxu0 0
        %803 = vmatpush1.bf16.msra.mxu0 0
        %804 = vmatprep.subr.bf16.mxu0 0
        %805 = vmatpush1.bf16.msra.mxu0 0
        %806 = vmatprep.subr.bf16.mxu0 0
        %807 = vmatpush1.bf16.msra.mxu0 0
        %808 = vmatprep.subr.bf16.mxu0 0
        %809 = vmatpush1.bf16.msra.mxu0 0
        %810 = vmatprep.subr.bf16.mxu0 0
        %811 = vmatpush1.bf16.msra.mxu0 0
        %812 = vmatprep.mubr.bf16.mxu0 0
        %813 = vmatmul.mubr.bf16.gmra.mrb[0].mxu0 %v778
        %v814 = vpop.f32.mrb[0].mxu0
        %v815 = vadd.f32 %v762, %v814
        %v816 = vpop.f32.mrb[0].mxu0
        %v817 = vpop.f32.mrb[0].mxu0
        %v818 = vpop.f32.mrb[0].mxu0
        %819 = vdwg.mxu0
        %v820 = vld [vmem:[%s5] sm:$0xf]
        %v821 = vld [vmem:[%s5 + $0x4] sm:$0xf]
        %v822 = vld [vmem:[%s5 + $0x8] sm:$0xf]
        %v823 = vld [vmem:[%s5 + $0xc] sm:$0xf]
        %v824 = vld [vmem:[%s2] sm:$0xff]
        %v825 = vpack.c.bf16 %v815, %v815
        %827 = vrot.lane.b32.xlu0 %v825, 96
        %v828 = vpop.permute.xlu0 %827
        %vm829 = vcmask 64512
        %v831 = vsel %vm829, %v825, 0
        %v834 = vsel %vm829, %v828, 0
        %836 = vmatprep.subr.bf16.mxu0 0
        %837 = vmatpush1.bf16.xpose.msra.mxu0 %v834
        %838 = vmatprep.subr.bf16.mxu0 0
        %839 = vmatpush1.bf16.xpose.msra.mxu0 0
        %840 = vmatprep.subr.bf16.mxu0 0
        %841 = vmatpush1.bf16.xpose.msra.mxu0 0
        %842 = vmatprep.subr.bf16.mxu0 0
        %843 = vmatpush1.bf16.xpose.msra.mxu0 0
        %844 = vmatprep.subr.bf16.mxu0 0
        %845 = vmatpush1.bf16.xpose.msra.mxu0 0
        %846 = vmatprep.subr.bf16.mxu0 0
        %847 = vmatpush1.bf16.xpose.msra.mxu0 0
        %848 = vmatprep.subr.bf16.mxu0 0
        %849 = vmatpush1.bf16.xpose.msra.mxu0 0
        %850 = vmatprep.subr.bf16.mxu0 0
        %851 = vmatpush1.bf16.xpose.msra.mxu0 0
        %852 = vmatprep.subr.bf16.mxu0 0
        %853 = vmatpush1.bf16.xpose.msra.mxu0 0
        %854 = vmatprep.subr.bf16.mxu0 0
        %855 = vmatpush1.bf16.xpose.msra.mxu0 0
        %856 = vmatprep.subr.bf16.mxu0 0
        %857 = vmatpush1.bf16.xpose.msra.mxu0 0
        %858 = vmatprep.subr.bf16.mxu0 0
        %859 = vmatpush1.bf16.xpose.msra.mxu0 0
        %860 = vmatprep.subr.bf16.mxu0 0
        %861 = vmatpush1.bf16.xpose.msra.mxu0 0
        %862 = vmatprep.subr.bf16.mxu0 0
        %863 = vmatpush1.bf16.xpose.msra.mxu0 0
        %864 = vmatprep.subr.bf16.mxu0 0
        %865 = vmatpush1.bf16.xpose.msra.mxu0 0
        %866 = vmatprep.subr.bf16.mxu0 0
        %867 = vmatpush1.bf16.xpose.msra.mxu0 0
        %868 = vmatprep.mubr.bf16.mxu0 0
        %869 = vmatmul.mubr.bf16.gmra.mrb[0].mxu0 %v831
        %v870 = vpop.f32.mrb[0].mxu0
        %v871 = vadd.f32 0.0, %v870
        %v872 = vpop.f32.mrb[0].mxu0
        %v873 = vpop.f32.mrb[0].mxu0
        %v874 = vpop.f32.mrb[0].mxu0
        %875 = vdwg.mxu0
        %v876 = vmul.f32 %v871, 0.35355338
        %v877 = vadd.f32 %v876, %v824
        %v878 = vsel %vm829, %v877, -inf
        %879 = vmax.xlane.f32.xlu0 %v878
        %v880 = vpop.xlane.xlu0 %879
        %v881 = vsub.f32 %v877, %v880
        %v882 = vmul.f32 %v881, 1.442695
        %v883 = vpow.pop %v882
        %v884 = vsel %vm829, %v883, 0.0
        %885 = vadd.xlane.f32.xlu0 %v884
        %v886 = vpop.xlane.xlu0 %885
        %v887 = vrcp.pop %v886
        %v888 = vmul.f32 %v883, %v887
        %v889 = vpack.c.bf16 %v888, %v888
        %890 = vrot.lane.b32.xlu0 %v825, 64
        %v891 = vpop.permute.xlu0 %890
        %v893 = vsel %vm829, %v889, 0
        %vm895 = vcmask 1043456
        %v897 = vsel %vm895, %v891, 0
        %899 = vmatprep.subr.bf16.mxu0 0
        %900 = vmatpush1.bf16.msra.mxu0 %v897
        %901 = vmatprep.subr.bf16.mxu0 0
        %902 = vmatpush1.bf16.msra.mxu0 0
        %903 = vmatprep.subr.bf16.mxu0 0
        %904 = vmatpush1.bf16.msra.mxu0 0
        %905 = vmatprep.subr.bf16.mxu0 0
        %906 = vmatpush1.bf16.msra.mxu0 0
        %907 = vmatprep.subr.bf16.mxu0 0
        %908 = vmatpush1.bf16.msra.mxu0 0
        %909 = vmatprep.subr.bf16.mxu0 0
        %910 = vmatpush1.bf16.msra.mxu0 0
        %911 = vmatprep.subr.bf16.mxu0 0
        %912 = vmatpush1.bf16.msra.mxu0 0
        %913 = vmatprep.subr.bf16.mxu0 0
        %914 = vmatpush1.bf16.msra.mxu0 0
        %915 = vmatprep.subr.bf16.mxu0 0
        %916 = vmatpush1.bf16.msra.mxu0 0
        %917 = vmatprep.subr.bf16.mxu0 0
        %918 = vmatpush1.bf16.msra.mxu0 0
        %919 = vmatprep.subr.bf16.mxu0 0
        %920 = vmatpush1.bf16.msra.mxu0 0
        %921 = vmatprep.subr.bf16.mxu0 0
        %922 = vmatpush1.bf16.msra.mxu0 0
        %923 = vmatprep.subr.bf16.mxu0 0
        %924 = vmatpush1.bf16.msra.mxu0 0
        %925 = vmatprep.subr.bf16.mxu0 0
        %926 = vmatpush1.bf16.msra.mxu0 0
        %927 = vmatprep.subr.bf16.mxu0 0
        %928 = vmatpush1.bf16.msra.mxu0 0
        %929 = vmatprep.subr.bf16.mxu0 0
        %930 = vmatpush1.bf16.msra.mxu0 0
        %931 = vmatprep.mubr.bf16.mxu0 0
        %932 = vmatmul.mubr.bf16.gmra.mrb[0].mxu0 %v893
        %v933 = vpop.f32.mrb[0].mxu0
        %v934 = vadd.f32 0.0, %v933
        %v935 = vpop.f32.mrb[0].mxu0
        %v936 = vpop.f32.mrb[0].mxu0
        %v937 = vpop.f32.mrb[0].mxu0
        %938 = vdwg.mxu0
        %939 = vrot.lane.b32.xlu0 %v825, 120
        %v940 = vpop.permute.xlu0 %939
        %941 = vrot.lane.b32.xlu0 %v825, 88
        %v942 = vpop.permute.xlu0 %941
        %v944 = vsel %vm829, %v940, 0
        %v947 = vsel %vm829, %v942, 0
        %949 = vmatprep.subr.bf16.mxu0 0
        %950 = vmatpush1.bf16.xpose.msra.mxu0 %v947
        %951 = vmatprep.subr.bf16.mxu0 0
        %952 = vmatpush1.bf16.xpose.msra.mxu0 0
        %953 = vmatprep.subr.bf16.mxu0 0
        %954 = vmatpush1.bf16.xpose.msra.mxu0 0
        %955 = vmatprep.subr.bf16.mxu0 0
        %956 = vmatpush1.bf16.xpose.msra.mxu0 0
        %957 = vmatprep.subr.bf16.mxu0 0
        %958 = vmatpush1.bf16.xpose.msra.mxu0 0
        %959 = vmatprep.subr.bf16.mxu0 0
        %960 = vmatpush1.bf16.xpose.msra.mxu0 0
        %961 = vmatprep.subr.bf16.mxu0 0
        %962 = vmatpush1.bf16.xpose.msra.mxu0 0
        %963 = vmatprep.subr.bf16.mxu0 0
        %964 = vmatpush1.bf16.xpose.msra.mxu0 0
        %965 = vmatprep.subr.bf16.mxu0 0
        %966 = vmatpush1.bf16.xpose.msra.mxu0 0
        %967 = vmatprep.subr.bf16.mxu0 0
        %968 = vmatpush1.bf16.xpose.msra.mxu0 0
        %969 = vmatprep.subr.bf16.mxu0 0
        %970 = vmatpush1.bf16.xpose.msra.mxu0 0
        %971 = vmatprep.subr.bf16.mxu0 0
        %972 = vmatpush1.bf16.xpose.msra.mxu0 0
        %973 = vmatprep.subr.bf16.mxu0 0
        %974 = vmatpush1.bf16.xpose.msra.mxu0 0
        %975 = vmatprep.subr.bf16.mxu0 0
        %976 = vmatpush1.bf16.xpose.msra.mxu0 0
        %977 = vmatprep.subr.bf16.mxu0 0
        %978 = vmatpush1.bf16.xpose.msra.mxu0 0
        %979 = vmatprep.subr.bf16.mxu0 0
        %980 = vmatpush1.bf16.xpose.msra.mxu0 0
        %981 = vmatprep.mubr.bf16.mxu0 0
        %982 = vmatmul.mubr.bf16.gmra.mrb[0].mxu0 %v944
        %v983 = vpop.f32.mrb[0].mxu0
        %v984 = vadd.f32 0.0, %v983
        %v985 = vpop.f32.mrb[0].mxu0
        %v986 = vpop.f32.mrb[0].mxu0
        %v987 = vpop.f32.mrb[0].mxu0
        %988 = vdwg.mxu0
        %v989 = vmul.f32 %v984, 0.35355338
        %v990 = vadd.f32 %v989, %v824
        %v991 = vsel %vm829, %v990, -inf
        %992 = vmax.xlane.f32.xlu0 %v991
        %v993 = vpop.xlane.xlu0 %992
        %v994 = vsub.f32 %v990, %v993
        %v995 = vmul.f32 %v994, 1.442695
        %v996 = vpow.pop %v995
        %v997 = vsel %vm829, %v996, 0.0
        %998 = vadd.xlane.f32.xlu0 %v997
        %v999 = vpop.xlane.xlu0 %998
        %v1000 = vrcp.pop %v999
        %v1001 = vmul.f32 %v996, %v1000
        %v1002 = vpack.c.bf16 %v1001, %v1001
        %1003 = vrot.lane.b32.xlu0 %v825, 56
        %v1004 = vpop.permute.xlu0 %1003
        %v1006 = vsel %vm829, %v1002, 0
        %v1009 = vsel %vm895, %v1004, 0
        %1011 = vmatprep.subr.bf16.mxu0 0
        %1012 = vmatpush1.bf16.msra.mxu0 %v1009
        %1013 = vmatprep.subr.bf16.mxu0 0
        %1014 = vmatpush1.bf16.msra.mxu0 0
        %1015 = vmatprep.subr.bf16.mxu0 0
        %1016 = vmatpush1.bf16.msra.mxu0 0
        %1017 = vmatprep.subr.bf16.mxu0 0
        %1018 = vmatpush1.bf16.msra.mxu0 0
        %1019 = vmatprep.subr.bf16.mxu0 0
        %1020 = vmatpush1.bf16.msra.mxu0 0
        %1021 = vmatprep.subr.bf16.mxu0 0
        %1022 = vmatpush1.bf16.msra.mxu0 0
        %1023 = vmatprep.subr.bf16.mxu0 0
        %1024 = vmatpush1.bf16.msra.mxu0 0
        %1025 = vmatprep.subr.bf16.mxu0 0
        %1026 = vmatpush1.bf16.msra.mxu0 0
        %1027 = vmatprep.subr.bf16.mxu0 0
        %1028 = vmatpush1.bf16.msra.mxu0 0
        %1029 = vmatprep.subr.bf16.mxu0 0
        %1030 = vmatpush1.bf16.msra.mxu0 0
        %1031 = vmatprep.subr.bf16.mxu0 0
        %1032 = vmatpush1.bf16.msra.mxu0 0
        %1033 = vmatprep.subr.bf16.mxu0 0
        %1034 = vmatpush1.bf16.msra.mxu0 0
        %1035 = vmatprep.subr.bf16.mxu0 0
        %1036 = vmatpush1.bf16.msra.mxu0 0
        %1037 = vmatprep.subr.bf16.mxu0 0
        %1038 = vmatpush1.bf16.msra.mxu0 0
        %1039 = vmatprep.subr.bf16.mxu0 0
        %1040 = vmatpush1.bf16.msra.mxu0 0
        %1041 = vmatprep.subr.bf16.mxu0 0
        %1042 = vmatpush1.bf16.msra.mxu0 0
        %1043 = vmatprep.mubr.bf16.mxu0 0
        %1044 = vmatmul.mubr.bf16.gmra.mrb[0].mxu0 %v1006
        %v1045 = vpop.f32.mrb[0].mxu0
        %v1046 = vadd.f32 0.0, %v1045
        %v1047 = vpop.f32.mrb[0].mxu0
        %v1048 = vpop.f32.mrb[0].mxu0
        %v1049 = vpop.f32.mrb[0].mxu0
        %1050 = vdwg.mxu0
        %1051 = vrot.lane.b32.xlu0 %v825, 112
        %v1052 = vpop.permute.xlu0 %1051
        %1053 = vrot.lane.b32.xlu0 %v825, 80
        %v1054 = vpop.permute.xlu0 %1053
        %v1056 = vsel %vm829, %v1052, 0
        %v1059 = vsel %vm829, %v1054, 0
        %1061 = vmatprep.subr.bf16.mxu0 0
        %1062 = vmatpush1.bf16.xpose.msra.mxu0 %v1059
        %1063 = vmatprep.subr.bf16.mxu0 0
        %1064 = vmatpush1.bf16.xpose.msra.mxu0 0
        %1065 = vmatprep.subr.bf16.mxu0 0
        %1066 = vmatpush1.bf16.xpose.msra.mxu0 0
        %1067 = vmatprep.subr.bf16.mxu0 0
        %1068 = vmatpush1.bf16.xpose.msra.mxu0 0
        %1069 = vmatprep.subr.bf16.mxu0 0
        %1070 = vmatpush1.bf16.xpose.msra.mxu0 0
        %1071 = vmatprep.subr.bf16.mxu0 0
        %1072 = vmatpush1.bf16.xpose.msra.mxu0 0
        %1073 = vmatprep.subr.bf16.mxu0 0
        %1074 = vmatpush1.bf16.xpose.msra.mxu0 0
        %1075 = vmatprep.subr.bf16.mxu0 0
        %1076 = vmatpush1.bf16.xpose.msra.mxu0 0
        %1077 = vmatprep.subr.bf16.mxu0 0
        %1078 = vmatpush1.bf16.xpose.msra.mxu0 0
        %1079 = vmatprep.subr.bf16.mxu0 0
        %1080 = vmatpush1.bf16.xpose.msra.mxu0 0
        %1081 = vmatprep.subr.bf16.mxu0 0
        %1082 = vmatpush1.bf16.xpose.msra.mxu0 0
        %1083 = vmatprep.subr.bf16.mxu0 0
        %1084 = vmatpush1.bf16.xpose.msra.mxu0 0
        %1085 = vmatprep.subr.bf16.mxu0 0
        %1086 = vmatpush1.bf16.xpose.msra.mxu0 0
        %1087 = vmatprep.subr.bf16.mxu0 0
        %1088 = vmatpush1.bf16.xpose.msra.mxu0 0
        %1089 = vmatprep.subr.bf16.mxu0 0
        %1090 = vmatpush1.bf16.xpose.msra.mxu0 0
        %1091 = vmatprep.subr.bf16.mxu0 0
        %1092 = vmatpush1.bf16.xpose.msra.mxu0 0
        %1093 = vmatprep.mubr.bf16.mxu0 0
        %1094 = vmatmul.mubr.bf16.gmra.mrb[0].mxu0 %v1056
        %v1095 = vpop.f32.mrb[0].mxu0
        %v1096 = vadd.f32 0.0, %v1095
        %v1097 = vpop.f32.mrb[0].mxu0
        %v1098 = vpop.f32.mrb[0].mxu0
        %v1099 = vpop.f32.mrb[0].mxu0
        %1100 = vdwg.mxu0
        %v1101 = vmul.f32 %v1096, 0.35355338
        %v1102 = vadd.f32 %v1101, %v824
        %v1103 = vsel %vm829, %v1102, -inf
        %1104 = vmax.xlane.f32.xlu0 %v1103
        %v1105 = vpop.xlane.xlu0 %1104
        %v1106 = vsub.f32 %v1102, %v1105
        %v1107 = vmul.f32 %v1106, 1.442695
        %v1108 = vpow.pop %v1107
        %v1109 = vsel %vm829, %v1108, 0.0
        %1110 = vadd.xlane.f32.xlu0 %v1109
        %v1111 = vpop.xlane.xlu0 %1110
        %v1112 = vrcp.pop %v1111
        %v1113 = vmul.f32 %v1108, %v1112
        %v1114 = vpack.c.bf16 %v1113, %v1113
        %1115 = vrot.lane.b32.xlu0 %v825, 48
        %v1116 = vpop.permute.xlu0 %1115
        %v1118 = vsel %vm829, %v1114, 0
        %v1121 = vsel %vm895, %v1116, 0
        %1123 = vmatprep.subr.bf16.mxu0 0
        %1124 = vmatpush1.bf16.msra.mxu0 %v1121
        %1125 = vmatprep.subr.bf16.mxu0 0
        %1126 = vmatpush1.bf16.msra.mxu0 0
        %1127 = vmatprep.subr.bf16.mxu0 0
        %1128 = vmatpush1.bf16.msra.mxu0 0
        %1129 = vmatprep.subr.bf16.mxu0 0
        %1130 = vmatpush1.bf16.msra.mxu0 0
        %1131 = vmatprep.subr.bf16.mxu0 0
        %1132 = vmatpush1.bf16.msra.mxu0 0
        %1133 = vmatprep.subr.bf16.mxu0 0
        %1134 = vmatpush1.bf16.msra.mxu0 0
        %1135 = vmatprep.subr.bf16.mxu0 0
        %1136 = vmatpush1.bf16.msra.mxu0 0
        %1137 = vmatprep.subr.bf16.mxu0 0
        %1138 = vmatpush1.bf16.msra.mxu0 0
        %1139 = vmatprep.subr.bf16.mxu0 0
        %1140 = vmatpush1.bf16.msra.mxu0 0
        %1141 = vmatprep.subr.bf16.mxu0 0
        %1142 = vmatpush1.bf16.msra.mxu0 0
        %1143 = vmatprep.subr.bf16.mxu0 0
        %1144 = vmatpush1.bf16.msra.mxu0 0
        %1145 = vmatprep.subr.bf16.mxu0 0
        %1146 = vmatpush1.bf16.msra.mxu0 0
        %1147 = vmatprep.subr.bf16.mxu0 0
        %1148 = vmatpush1.bf16.msra.mxu0 0
        %1149 = vmatprep.subr.bf16.mxu0 0
        %1150 = vmatpush1.bf16.msra.mxu0 0
        %1151 = vmatprep.subr.bf16.mxu0 0
        %1152 = vmatpush1.bf16.msra.mxu0 0
        %1153 = vmatprep.subr.bf16.mxu0 0
        %1154 = vmatpush1.bf16.msra.mxu0 0
        %1155 = vmatprep.mubr.bf16.mxu0 0
        %1156 = vmatmul.mubr.bf16.gmra.mrb[0].mxu0 %v1118
        %v1157 = vpop.f32.mrb[0].mxu0
        %v1158 = vadd.f32 0.0, %v1157
        %v1159 = vpop.f32.mrb[0].mxu0
        %v1160 = vpop.f32.mrb[0].mxu0
        %v1161 = vpop.f32.mrb[0].mxu0
        %1162 = vdwg.mxu0
        %1163 = vrot.lane.b32.xlu0 %v825, 104
        %v1164 = vpop.permute.xlu0 %1163
        %1165 = vrot.lane.b32.xlu0 %v825, 72
        %v1166 = vpop.permute.xlu0 %1165
        %v1168 = vsel %vm829, %v1164, 0
        %v1171 = vsel %vm829, %v1166, 0
        %1173 = vmatprep.subr.bf16.mxu0 0
        %1174 = vmatpush1.bf16.xpose.msra.mxu0 %v1171
        %1175 = vmatprep.subr.bf16.mxu0 0
        %1176 = vmatpush1.bf16.xpose.msra.mxu0 0
        %1177 = vmatprep.subr.bf16.mxu0 0
        %1178 = vmatpush1.bf16.xpose.msra.mxu0 0
        %1179 = vmatprep.subr.bf16.mxu0 0
        %1180 = vmatpush1.bf16.xpose.msra.mxu0 0
        %1181 = vmatprep.subr.bf16.mxu0 0
        %1182 = vmatpush1.bf16.xpose.msra.mxu0 0
        %1183 = vmatprep.subr.bf16.mxu0 0
        %1184 = vmatpush1.bf16.xpose.msra.mxu0 0
        %1185 = vmatprep.subr.bf16.mxu0 0
        %1186 = vmatpush1.bf16.xpose.msra.mxu0 0
        %1187 = vmatprep.subr.bf16.mxu0 0
        %1188 = vmatpush1.bf16.xpose.msra.mxu0 0
        %1189 = vmatprep.subr.bf16.mxu0 0
        %1190 = vmatpush1.bf16.xpose.msra.mxu0 0
        %1191 = vmatprep.subr.bf16.mxu0 0
        %1192 = vmatpush1.bf16.xpose.msra.mxu0 0
        %1193 = vmatprep.subr.bf16.mxu0 0
        %1194 = vmatpush1.bf16.xpose.msra.mxu0 0
        %1195 = vmatprep.subr.bf16.mxu0 0
        %1196 = vmatpush1.bf16.xpose.msra.mxu0 0
        %1197 = vmatprep.subr.bf16.mxu0 0
        %1198 = vmatpush1.bf16.xpose.msra.mxu0 0
        %1199 = vmatprep.subr.bf16.mxu0 0
        %1200 = vmatpush1.bf16.xpose.msra.mxu0 0
        %1201 = vmatprep.subr.bf16.mxu0 0
        %1202 = vmatpush1.bf16.xpose.msra.mxu0 0
        %1203 = vmatprep.subr.bf16.mxu0 0
        %1204 = vmatpush1.bf16.xpose.msra.mxu0 0
        %1205 = vmatprep.mubr.bf16.mxu0 0
        %1206 = vmatmul.mubr.bf16.gmra.mrb[0].mxu0 %v1168
        %v1207 = vpop.f32.mrb[0].mxu0
        %v1208 = vadd.f32 0.0, %v1207
        %v1209 = vpop.f32.mrb[0].mxu0
        %v1210 = vpop.f32.mrb[0].mxu0
        %v1211 = vpop.f32.mrb[0].mxu0
        %1212 = vdwg.mxu0
        %v1213 = vmul.f32 %v1208, 0.35355338
        %v1214 = vadd.f32 %v1213, %v824
        %v1215 = vsel %vm829, %v1214, -inf
        %1216 = vmax.xlane.f32.xlu0 %v1215
        %v1217 = vpop.xlane.xlu0 %1216
        %v1218 = vsub.f32 %v1214, %v1217
        %v1219 = vmul.f32 %v1218, 1.442695
        %v1220 = vpow.pop %v1219
        %v1221 = vsel %vm829, %v1220, 0.0
        %1222 = vadd.xlane.f32.xlu0 %v1221
        %v1223 = vpop.xlane.xlu0 %1222
        %v1224 = vrcp.pop %v1223
        %v1225 = vmul.f32 %v1220, %v1224
        %v1226 = vpack.c.bf16 %v1225, %v1225
        %1227 = vrot.lane.b32.xlu0 %v825, 40
        %v1228 = vpop.permute.xlu0 %1227
        %v1230 = vsel %vm829, %v1226, 0
        %v1233 = vsel %vm895, %v1228, 0
        %1235 = vmatprep.subr.bf16.mxu0 0
        %1236 = vmatpush1.bf16.msra.mxu0 %v1233
        %1237 = vmatprep.subr.bf16.mxu0 0
        %1238 = vmatpush1.bf16.msra.mxu0 0
        %1239 = vmatprep.subr.bf16.mxu0 0
        %1240 = vmatpush1.bf16.msra.mxu0 0
        %1241 = vmatprep.subr.bf16.mxu0 0
        %1242 = vmatpush1.bf16.msra.mxu0 0
        %1243 = vmatprep.subr.bf16.mxu0 0
        %1244 = vmatpush1.bf16.msra.mxu0 0
        %1245 = vmatprep.subr.bf16.mxu0 0
        %1246 = vmatpush1.bf16.msra.mxu0 0
        %1247 = vmatprep.subr.bf16.mxu0 0
        %1248 = vmatpush1.bf16.msra.mxu0 0
        %1249 = vmatprep.subr.bf16.mxu0 0
        %1250 = vmatpush1.bf16.msra.mxu0 0
        %1251 = vmatprep.subr.bf16.mxu0 0
        %1252 = vmatpush1.bf16.msra.mxu0 0
        %1253 = vmatprep.subr.bf16.mxu0 0
        %1254 = vmatpush1.bf16.msra.mxu0 0
        %1255 = vmatprep.subr.bf16.mxu0 0
        %1256 = vmatpush1.bf16.msra.mxu0 0
        %1257 = vmatprep.subr.bf16.mxu0 0
        %1258 = vmatpush1.bf16.msra.mxu0 0
        %1259 = vmatprep.subr.bf16.mxu0 0
        %1260 = vmatpush1.bf16.msra.mxu0 0
        %1261 = vmatprep.subr.bf16.mxu0 0
        %1262 = vmatpush1.bf16.msra.mxu0 0
        %1263 = vmatprep.subr.bf16.mxu0 0
        %1264 = vmatpush1.bf16.msra.mxu0 0
        %1265 = vmatprep.subr.bf16.mxu0 0
        %1266 = vmatpush1.bf16.msra.mxu0 0
        %1267 = vmatprep.mubr.bf16.mxu0 0
        %1268 = vmatmul.mubr.bf16.gmra.mrb[0].mxu0 %v1230
        %v1269 = vpop.f32.mrb[0].mxu0
        %v1270 = vadd.f32 0.0, %v1269
        %v1271 = vpop.f32.mrb[0].mxu0
        %v1272 = vpop.f32.mrb[0].mxu0
        %v1273 = vpop.f32.mrb[0].mxu0
        %1274 = vdwg.mxu0
        %1276 = vrot.lane.b32.xlu0 %v1046, 8
        %v1277 = vpop.permute.xlu0 %1276
        %1280 = vrot.lane.b32.xlu0 %v1158, 16
        %v1281 = vpop.permute.xlu0 %1280
        %1284 = vrot.lane.b32.xlu0 %v1270, 24
        %v1285 = vpop.permute.xlu0 %1284
        %v1287 = vsel %vm829, %v934, %v1277
        %vm1288 = vcmask 130048
        %v1289 = vsel %vm1288, %v1287, %v1281
        %vm1290 = vcmask 195584
        %v1291 = vsel %vm1290, %v1289, %v1285
        %v1292 = vpack.c.bf16 %v1291, %v1291
        %v1293 = vld [vmem:[%s6] sm:$0x1]
        %v1295 = vlaneseq
        %v1296 = vshrl.u32 %v1295, 7
        %v1297 = vsub.s32 0, %v1296
        %v1298 = vrot.slane %v1293, %v1297
        %v1304 = vunpack.c.l.b16 %v820
        %v1305 = vunpack.c.l.b16 %v821
        %v1306 = vunpack.c.l.b16 %v822
        %v1307 = vunpack.c.l.b16 %v823
        %v1308 = vpack.c.b16 %v1305, %v1304
        %v1309 = vpack.c.b16 %v1307, %v1306
        %v1313 = vsel %vm776, %v1292, 0
        %1315 = vmatprep.subr.bf16.mxu0 0
        %1316 = vmatpush1.bf16.msra.mxu0 %v1308
        %1317 = vmatprep.subr.bf16.mxu0 0
        %1318 = vmatpush1.bf16.msra.mxu0 %v1309
        %1319 = vmatprep.subr.bf16.mxu0 0
        %1320 = vmatpush1.bf16.msra.mxu0 0
        %1321 = vmatprep.subr.bf16.mxu0 0
        %1322 = vmatpush1.bf16.msra.mxu0 0
        %1323 = vmatprep.subr.bf16.mxu0 0
        %1324 = vmatpush1.bf16.msra.mxu0 0
        %1325 = vmatprep.subr.bf16.mxu0 0
        %1326 = vmatpush1.bf16.msra.mxu0 0
        %1327 = vmatprep.subr.bf16.mxu0 0
        %1328 = vmatpush1.bf16.msra.mxu0 0
        %1329 = vmatprep.subr.bf16.mxu0 0
        %1330 = vmatpush1.bf16.msra.mxu0 0
        %1331 = vmatprep.subr.bf16.mxu0 0
        %1332 = vmatpush1.bf16.msra.mxu0 0
        %1333 = vmatprep.subr.bf16.mxu0 0
        %1334 = vmatpush1.bf16.msra.mxu0 0
        %1335 = vmatprep.subr.bf16.mxu0 0
        %1336 = vmatpush1.bf16.msra.mxu0 0
        %1337 = vmatprep.subr.bf16.mxu0 0
        %1338 = vmatpush1.bf16.msra.mxu0 0
        %1339 = vmatprep.subr.bf16.mxu0 0
        %1340 = vmatpush1.bf16.msra.mxu0 0
        %1341 = vmatprep.subr.bf16.mxu0 0
        %1342 = vmatpush1.bf16.msra.mxu0 0
        %1343 = vmatprep.subr.bf16.mxu0 0
        %1344 = vmatpush1.bf16.msra.mxu0 0
        %1345 = vmatprep.subr.bf16.mxu0 0
        %1346 = vmatpush1.bf16.msra.mxu0 0
        %1347 = vmatprep.mubr.bf16.mxu0 0
        %1348 = vmatmul.mubr.bf16.gmra.mrb[0].mxu0 %v1313
        %v1349 = vpop.f32.mrb[0].mxu0
        %v1350 = vadd.f32 %v1298, %v1349
        %v1351 = vpop.f32.mrb[0].mxu0
        %v1352 = vpop.f32.mrb[0].mxu0
        %v1353 = vpop.f32.mrb[0].mxu0
        %1354 = vdwg.mxu0
        %v1355 = vadd.f32 %v751, %v1350
        %v1356 = vld [vmem:[%s7] sm:$0x1]
        %v1357 = vld [vmem:[%s8] sm:$0x1]
        %v1358 = vsel %vm776, %v1355, 0.0
        %1359 = vadd.xlane.f32.xlu0 %v1358
        %v1360 = vpop.xlane.xlu0 %1359
        %v1361 = vrcp.pop 32.0
        %v1362 = vmul.f32 %v1360, %v1361
        %v1363 = vsub.f32 %v1355, %v1362
        %v1364 = vmul.f32 %v1363, %v1363
        %v1365 = vsel %vm776, %v1364, 0.0
        %1366 = vadd.xlane.f32.xlu0 %v1365
        %v1367 = vpop.xlane.xlu0 %1366
        %v1368 = vmul.f32 %v1367, %v1361
        %v1369 = vadd.f32 %v1368, 1e-05
        %v1370 = vrsqrt.pop %v1369
        %v1371 = vmul.f32 %v1363, %v1370
        %v1373 = vlaneseq
        %v1374 = vshrl.u32 %v1373, 7
        %v1375 = vsub.s32 0, %v1374
        %v1376 = vrot.slane %v1356, %v1375
        %v1378 = vmul.f32 %v1371, %v1376
        %v1380 = vlaneseq
        %v1381 = vshrl.u32 %v1380, 7
        %v1382 = vsub.s32 0, %v1381
        %v1383 = vrot.slane %v1357, %v1382
        %v1385 = vadd.f32 %v1378, %v1383
        %v1386 = vld [vmem:[%s9] sm:$0xf]
        %v1387 = vld [vmem:[%s9 + $0x4] sm:$0xf]
        %v1388 = vld [vmem:[%s9 + $0x8] sm:$0xf]
        %v1389 = vld [vmem:[%s9 + $0xc] sm:$0xf]
        %v1390 = vpack.c.bf16 %v1385, %v1385
        %v1391 = vld [vmem:[%s10] sm:$0x1]
        %v1393 = vlaneseq
        %v1394 = vshrl.u32 %v1393, 7
        %v1395 = vsub.s32 0, %v1394
        %v1396 = vrot.slane %v1391, %v1395
        %v1402 = vunpack.c.l.b16 %v1386
        %v1403 = vunpack.c.l.b16 %v1387
        %v1404 = vunpack.c.l.b16 %v1388
        %v1405 = vunpack.c.l.b16 %v1389
        %v1406 = vpack.c.b16 %v1403, %v1402
        %v1407 = vpack.c.b16 %v1405, %v1404
        %v1411 = vsel %vm776, %v1390, 0
        %1413 = vmatprep.subr.bf16.mxu0 0
        %1414 = vmatpush1.bf16.msra.mxu0 %v1406
        %1415 = vmatprep.subr.bf16.mxu0 0
        %1416 = vmatpush1.bf16.msra.mxu0 %v1407
        %1417 = vmatprep.subr.bf16.mxu0 0
        %1418 = vmatpush1.bf16.msra.mxu0 0
        %1419 = vmatprep.subr.bf16.mxu0 0
        %1420 = vmatpush1.bf16.msra.mxu0 0
        %1421 = vmatprep.subr.bf16.mxu0 0
        %1422 = vmatpush1.bf16.msra.mxu0 0
        %1423 = vmatprep.subr.bf16.mxu0 0
        %1424 = vmatpush1.bf16.msra.mxu0 0
        %1425 = vmatprep.subr.bf16.mxu0 0
        %1426 = vmatpush1.bf16.msra.mxu0 0
        %1427 = vmatprep.subr.bf16.mxu0 0
        %1428 = vmatpush1.bf16.msra.mxu0 0
        %1429 = vmatprep.subr.bf16.mxu0 0
        %1430 = vmatpush1.bf16.msra.mxu0 0
        %1431 = vmatprep.subr.bf16.mxu0 0
        %1432 = vmatpush1.bf16.msra.mxu0 0
        %1433 = vmatprep.subr.bf16.mxu0 0
        %1434 = vmatpush1.bf16.msra.mxu0 0
        %1435 = vmatprep.subr.bf16.mxu0 0
        %1436 = vmatpush1.bf16.msra.mxu0 0
        %1437 = vmatprep.subr.bf16.mxu0 0
        %1438 = vmatpush1.bf16.msra.mxu0 0
        %1439 = vmatprep.subr.bf16.mxu0 0
        %1440 = vmatpush1.bf16.msra.mxu0 0
        %1441 = vmatprep.subr.bf16.mxu0 0
        %1442 = vmatpush1.bf16.msra.mxu0 0
        %1443 = vmatprep.subr.bf16.mxu0 0
        %1444 = vmatpush1.bf16.msra.mxu0 0
        %1445 = vmatprep.mubr.bf16.mxu0 0
        %1446 = vmatmul.mubr.bf16.gmra.mrb[0].mxu0 %v1411
        %v1447 = vpop.f32.mrb[0].mxu0
        %v1448 = vadd.f32 %v1396, %v1447
        %v1449 = vpop.f32.mrb[0].mxu0
        %v1450 = vpop.f32.mrb[0].mxu0
        %v1451 = vpop.f32.mrb[0].mxu0
        %1452 = vdwg.mxu0
        %v1453 = vld [vmem:[%s11] sm:$0xf]
        %v1454 = vld [vmem:[%s11 + $0x4] sm:$0xf]
        %v1455 = vld [vmem:[%s11 + $0x8] sm:$0xf]
        %v1456 = vld [vmem:[%s11 + $0xc] sm:$0xf]
        %v1457 = vld [vmem:[%s12] sm:$0x1]
        %v1459 = vlaneseq
        %v1460 = vshrl.u32 %v1459, 7
        %v1461 = vsub.s32 0, %v1460
        %v1462 = vrot.slane %v1457, %v1461
        %v1468 = vunpack.c.l.b16 %v1453
        %v1469 = vunpack.c.l.b16 %v1454
        %v1470 = vunpack.c.l.b16 %v1455
        %v1471 = vunpack.c.l.b16 %v1456
        %v1472 = vpack.c.b16 %v1469, %v1468
        %v1473 = vpack.c.b16 %v1471, %v1470
        %v1477 = vsel %vm776, %v752, 0
        %1479 = vmatprep.subr.bf16.mxu0 0
        %1480 = vmatpush1.bf16.msra.mxu0 %v1472
        %1481 = vmatprep.subr.bf16.mxu0 0
        %1482 = vmatpush1.bf16.msra.mxu0 %v1473
        %1483 = vmatprep.subr.bf16.mxu0 0
        %1484 = vmatpush1.bf16.msra.mxu0 0
        %1485 = vmatprep.subr.bf16.mxu0 0
        %1486 = vmatpush1.bf16.msra.mxu0 0
        %1487 = vmatprep.subr.bf16.mxu0 0
        %1488 = vmatpush1.bf16.msra.mxu0 0
        %1489 = vmatprep.subr.bf16.mxu0 0
        %1490 = vmatpush1.bf16.msra.mxu0 0
        %1491 = vmatprep.subr.bf16.mxu0 0
        %1492 = vmatpush1.bf16.msra.mxu0 0
        %1493 = vmatprep.subr.bf16.mxu0 0
        %1494 = vmatpush1.bf16.msra.mxu0 0
        %1495 = vmatprep.subr.bf16.mxu0 0
        %1496 = vmatpush1.bf16.msra.mxu0 0
        %1497 = vmatprep.subr.bf16.mxu0 0
        %1498 = vmatpush1.bf16.msra.mxu0 0
        %1499 = vmatprep.subr.bf16.mxu0 0
        %1500 = vmatpush1.bf16.msra.mxu0 0
        %1501 = vmatprep.subr.bf16.mxu0 0
        %1502 = vmatpush1.bf16.msra.mxu0 0
        %1503 = vmatprep.subr.bf16.mxu0 0
        %1504 = vmatpush1.bf16.msra.mxu0 0
        %1505 = vmatprep.subr.bf16.mxu0 0
        %1506 = vmatpush1.bf16.msra.mxu0 0
        %1507 = vmatprep.subr.bf16.mxu0 0
        %1508 = vmatpush1.bf16.msra.mxu0 0
        %1509 = vmatprep.subr.bf16.mxu0 0
        %1510 = vmatpush1.bf16.msra.mxu0 0
        %1511 = vmatprep.mubr.bf16.mxu0 0
        %1512 = vmatmul.mubr.bf16.gmra.mrb[0].mxu0 %v1477
        %v1513 = vpop.f32.mrb[0].mxu0
        %v1514 = vadd.f32 %v1462, %v1513
        %v1515 = vpop.f32.mrb[0].mxu0
        %v1516 = vpop.f32.mrb[0].mxu0
        %v1517 = vpop.f32.mrb[0].mxu0
        %1518 = vdwg.mxu0
        %v1519 = vld [vmem:[%s13] sm:$0xf]
        %v1520 = vld [vmem:[%s13 + $0x4] sm:$0xf]
        %v1521 = vld [vmem:[%s13 + $0x8] sm:$0xf]
        %v1522 = vld [vmem:[%s13 + $0xc] sm:$0xf]
        %v1523 = vpack.c.bf16 %v1448, %v1448
        %v1524 = vpack.c.bf16 %v1514, %v1514
        %v1526 = vsel %vm829, %v1523, 0
        %v1529 = vsel %vm829, %v1524, 0
        %1531 = vmatprep.subr.bf16.mxu0 0
        %1532 = vmatpush1.bf16.xpose.msra.mxu0 %v1529
        %1533 = vmatprep.subr.bf16.mxu0 0
        %1534 = vmatpush1.bf16.xpose.msra.mxu0 0
        %1535 = vmatprep.subr.bf16.mxu0 0
        %1536 = vmatpush1.bf16.xpose.msra.mxu0 0
        %1537 = vmatprep.subr.bf16.mxu0 0
        %1538 = vmatpush1.bf16.xpose.msra.mxu0 0
        %1539 = vmatprep.subr.bf16.mxu0 0
        %1540 = vmatpush1.bf16.xpose.msra.mxu0 0
        %1541 = vmatprep.subr.bf16.mxu0 0
        %1542 = vmatpush1.bf16.xpose.msra.mxu0 0
        %1543 = vmatprep.subr.bf16.mxu0 0
        %1544 = vmatpush1.bf16.xpose.msra.mxu0 0
        %1545 = vmatprep.subr.bf16.mxu0 0
        %1546 = vmatpush1.bf16.xpose.msra.mxu0 0
        %1547 = vmatprep.subr.bf16.mxu0 0
        %1548 = vmatpush1.bf16.xpose.msra.mxu0 0
        %1549 = vmatprep.subr.bf16.mxu0 0
        %1550 = vmatpush1.bf16.xpose.msra.mxu0 0
        %1551 = vmatprep.subr.bf16.mxu0 0
        %1552 = vmatpush1.bf16.xpose.msra.mxu0 0
        %1553 = vmatprep.subr.bf16.mxu0 0
        %1554 = vmatpush1.bf16.xpose.msra.mxu0 0
        %1555 = vmatprep.subr.bf16.mxu0 0
        %1556 = vmatpush1.bf16.xpose.msra.mxu0 0
        %1557 = vmatprep.subr.bf16.mxu0 0
        %1558 = vmatpush1.bf16.xpose.msra.mxu0 0
        %1559 = vmatprep.subr.bf16.mxu0 0
        %1560 = vmatpush1.bf16.xpose.msra.mxu0 0
        %1561 = vmatprep.subr.bf16.mxu0 0
        %1562 = vmatpush1.bf16.xpose.msra.mxu0 0
        %1563 = vmatprep.mubr.bf16.mxu0 0
        %1564 = vmatmul.mubr.bf16.gmra.mrb[0].mxu0 %v1526
        %v1565 = vpop.f32.mrb[0].mxu0
        %v1566 = vadd.f32 0.0, %v1565
        %v1567 = vpop.f32.mrb[0].mxu0
        %v1568 = vpop.f32.mrb[0].mxu0
        %v1569 = vpop.f32.mrb[0].mxu0
        %1570 = vdwg.mxu0
        %v1571 = vmul.f32 %v1566, 0.35355338
        %v1572 = vsel %vm829, %v1571, -inf
        %1573 = vmax.xlane.f32.xlu0 %v1572
        %v1574 = vpop.xlane.xlu0 %1573
        %v1575 = vsub.f32 %v1571, %v1574
        %v1576 = vmul.f32 %v1575, 1.442695
        %v1577 = vpow.pop %v1576
        %v1578 = vsel %vm829, %v1577, 0.0
        %1579 = vadd.xlane.f32.xlu0 %v1578
        %v1580 = vpop.xlane.xlu0 %1579
        %v1581 = vrcp.pop %v1580
        %v1582 = vmul.f32 %v1577, %v1581
        %v1583 = vpack.c.bf16 %v1582, %v1582
        %1585 = vrot.lane.b32.xlu0 %v1524, 96
        %v1586 = vpop.permute.xlu0 %1585
        %v1588 = vsel %vm829, %v1583, 0
        %v1591 = vsel %vm895, %v1586, 0
        %1593 = vmatprep.subr.bf16.mxu0 0
        %1594 = vmatpush1.bf16.msra.mxu0 %v1591
        %1595 = vmatprep.subr.bf16.mxu0 0
        %1596 = vmatpush1.bf16.msra.mxu0 0
        %1597 = vmatprep.subr.bf16.mxu0 0
        %1598 = vmatpush1.bf16.msra.mxu0 0
        %1599 = vmatprep.subr.bf16.mxu0 0
        %1600 = vmatpush1.bf16.msra.mxu0 0
        %1601 = vmatprep.subr.bf16.mxu0 0
        %1602 = vmatpush1.bf16.msra.mxu0 0
        %1603 = vmatprep.subr.bf16.mxu0 0
        %1604 = vmatpush1.bf16.msra.mxu0 0
        %1605 = vmatprep.subr.bf16.mxu0 0
        %1606 = vmatpush1.bf16.msra.mxu0 0
        %1607 = vmatprep.subr.bf16.mxu0 0
        %1608 = vmatpush1.bf16.msra.mxu0 0
        %1609 = vmatprep.subr.bf16.mxu0 0
        %1610 = vmatpush1.bf16.msra.mxu0 0
        %1611 = vmatprep.subr.bf16.mxu0 0
        %1612 = vmatpush1.bf16.msra.mxu0 0
        %1613 = vmatprep.subr.bf16.mxu0 0
        %1614 = vmatpush1.bf16.msra.mxu0 0
        %1615 = vmatprep.subr.bf16.mxu0 0
        %1616 = vmatpush1.bf16.msra.mxu0 0
        %1617 = vmatprep.subr.bf16.mxu0 0
        %1618 = vmatpush1.bf16.msra.mxu0 0
        %1619 = vmatprep.subr.bf16.mxu0 0
        %1620 = vmatpush1.bf16.msra.mxu0 0
        %1621 = vmatprep.subr.bf16.mxu0 0
        %1622 = vmatpush1.bf16.msra.mxu0 0
        %1623 = vmatprep.subr.bf16.mxu0 0
        %1624 = vmatpush1.bf16.msra.mxu0 0
        %1625 = vmatprep.mubr.bf16.mxu0 0
        %1626 = vmatmul.mubr.bf16.gmra.mrb[0].mxu0 %v1588
        %v1627 = vpop.f32.mrb[0].mxu0
        %v1628 = vadd.f32 0.0, %v1627
        %v1629 = vpop.f32.mrb[0].mxu0
        %v1630 = vpop.f32.mrb[0].mxu0
        %v1631 = vpop.f32.mrb[0].mxu0
        %1632 = vdwg.mxu0
        %1634 = vrot.lane.b32.xlu0 %v1523, 120
        %v1635 = vpop.permute.xlu0 %1634
        %1636 = vrot.lane.b32.xlu0 %v1524, 120
        %v1637 = vpop.permute.xlu0 %1636
        %v1639 = vsel %vm829, %v1635, 0
        %v1642 = vsel %vm829, %v1637, 0
        %1644 = vmatprep.subr.bf16.mxu0 0
        %1645 = vmatpush1.bf16.xpose.msra.mxu0 %v1642
        %1646 = vmatprep.subr.bf16.mxu0 0
        %1647 = vmatpush1.bf16.xpose.msra.mxu0 0
        %1648 = vmatprep.subr.bf16.mxu0 0
        %1649 = vmatpush1.bf16.xpose.msra.mxu0 0
        %1650 = vmatprep.subr.bf16.mxu0 0
        %1651 = vmatpush1.bf16.xpose.msra.mxu0 0
        %1652 = vmatprep.subr.bf16.mxu0 0
        %1653 = vmatpush1.bf16.xpose.msra.mxu0 0
        %1654 = vmatprep.subr.bf16.mxu0 0
        %1655 = vmatpush1.bf16.xpose.msra.mxu0 0
        %1656 = vmatprep.subr.bf16.mxu0 0
        %1657 = vmatpush1.bf16.xpose.msra.mxu0 0
        %1658 = vmatprep.subr.bf16.mxu0 0
        %1659 = vmatpush1.bf16.xpose.msra.mxu0 0
        %1660 = vmatprep.subr.bf16.mxu0 0
        %1661 = vmatpush1.bf16.xpose.msra.mxu0 0
        %1662 = vmatprep.subr.bf16.mxu0 0
        %1663 = vmatpush1.bf16.xpose.msra.mxu0 0
        %1664 = vmatprep.subr.bf16.mxu0 0
        %1665 = vmatpush1.bf16.xpose.msra.mxu0 0
        %1666 = vmatprep.subr.bf16.mxu0 0
        %1667 = vmatpush1.bf16.xpose.msra.mxu0 0
        %1668 = vmatprep.subr.bf16.mxu0 0
        %1669 = vmatpush1.bf16.xpose.msra.mxu0 0
        %1670 = vmatprep.subr.bf16.mxu0 0
        %1671 = vmatpush1.bf16.xpose.msra.mxu0 0
        %1672 = vmatprep.subr.bf16.mxu0 0
        %1673 = vmatpush1.bf16.xpose.msra.mxu0 0
        %1674 = vmatprep.subr.bf16.mxu0 0
        %1675 = vmatpush1.bf16.xpose.msra.mxu0 0
        %1676 = vmatprep.mubr.bf16.mxu0 0
        %1677 = vmatmul.mubr.bf16.gmra.mrb[0].mxu0 %v1639
        %v1678 = vpop.f32.mrb[0].mxu0
        %v1679 = vadd.f32 0.0, %v1678
        %v1680 = vpop.f32.mrb[0].mxu0
        %v1681 = vpop.f32.mrb[0].mxu0
        %v1682 = vpop.f32.mrb[0].mxu0
        %1683 = vdwg.mxu0
        %v1684 = vmul.f32 %v1679, 0.35355338
        %v1685 = vsel %vm829, %v1684, -inf
        %1686 = vmax.xlane.f32.xlu0 %v1685
        %v1687 = vpop.xlane.xlu0 %1686
        %v1688 = vsub.f32 %v1684, %v1687
        %v1689 = vmul.f32 %v1688, 1.442695
        %v1690 = vpow.pop %v1689
        %v1691 = vsel %vm829, %v1690, 0.0
        %1692 = vadd.xlane.f32.xlu0 %v1691
        %v1693 = vpop.xlane.xlu0 %1692
        %v1694 = vrcp.pop %v1693
        %v1695 = vmul.f32 %v1690, %v1694
        %v1696 = vpack.c.bf16 %v1695, %v1695
        %1697 = vrot.lane.b32.xlu0 %v1524, 88
        %v1698 = vpop.permute.xlu0 %1697
        %v1700 = vsel %vm829, %v1696, 0
        %v1703 = vsel %vm895, %v1698, 0
        %1705 = vmatprep.subr.bf16.mxu0 0
        %1706 = vmatpush1.bf16.msra.mxu0 %v1703
        %1707 = vmatprep.subr.bf16.mxu0 0
        %1708 = vmatpush1.bf16.msra.mxu0 0
        %1709 = vmatprep.subr.bf16.mxu0 0
        %1710 = vmatpush1.bf16.msra.mxu0 0
        %1711 = vmatprep.subr.bf16.mxu0 0
        %1712 = vmatpush1.bf16.msra.mxu0 0
        %1713 = vmatprep.subr.bf16.mxu0 0
        %1714 = vmatpush1.bf16.msra.mxu0 0
        %1715 = vmatprep.subr.bf16.mxu0 0
        %1716 = vmatpush1.bf16.msra.mxu0 0
        %1717 = vmatprep.subr.bf16.mxu0 0
        %1718 = vmatpush1.bf16.msra.mxu0 0
        %1719 = vmatprep.subr.bf16.mxu0 0
        %1720 = vmatpush1.bf16.msra.mxu0 0
        %1721 = vmatprep.subr.bf16.mxu0 0
        %1722 = vmatpush1.bf16.msra.mxu0 0
        %1723 = vmatprep.subr.bf16.mxu0 0
        %1724 = vmatpush1.bf16.msra.mxu0 0
        %1725 = vmatprep.subr.bf16.mxu0 0
        %1726 = vmatpush1.bf16.msra.mxu0 0
        %1727 = vmatprep.subr.bf16.mxu0 0
        %1728 = vmatpush1.bf16.msra.mxu0 0
        %1729 = vmatprep.subr.bf16.mxu0 0
        %1730 = vmatpush1.bf16.msra.mxu0 0
        %1731 = vmatprep.subr.bf16.mxu0 0
        %1732 = vmatpush1.bf16.msra.mxu0 0
        %1733 = vmatprep.subr.bf16.mxu0 0
        %1734 = vmatpush1.bf16.msra.mxu0 0
        %1735 = vmatprep.subr.bf16.mxu0 0
        %1736 = vmatpush1.bf16.msra.mxu0 0
        %1737 = vmatprep.mubr.bf16.mxu0 0
        %1738 = vmatmul.mubr.bf16.gmra.mrb[0].mxu0 %v1700
        %v1739 = vpop.f32.mrb[0].mxu0
        %v1740 = vadd.f32 0.0, %v1739
        %v1741 = vpop.f32.mrb[0].mxu0
        %v1742 = vpop.f32.mrb[0].mxu0
        %v1743 = vpop.f32.mrb[0].mxu0
        %1744 = vdwg.mxu0
        %1745 = vrot.lane.b32.xlu0 %v1523, 112
        %v1746 = vpop.permute.xlu0 %1745
        %1747 = vrot.lane.b32.xlu0 %v1524, 112
        %v1748 = vpop.permute.xlu0 %1747
        %v1750 = vsel %vm829, %v1746, 0
        %v1753 = vsel %vm829, %v1748, 0
        %1755 = vmatprep.subr.bf16.mxu0 0
        %1756 = vmatpush1.bf16.xpose.msra.mxu0 %v1753
        %1757 = vmatprep.subr.bf16.mxu0 0
        %1758 = vmatpush1.bf16.xpose.msra.mxu0 0
        %1759 = vmatprep.subr.bf16.mxu0 0
        %1760 = vmatpush1.bf16.xpose.msra.mxu0 0
        %1761 = vmatprep.subr.bf16.mxu0 0
        %1762 = vmatpush1.bf16.xpose.msra.mxu0 0
        %1763 = vmatprep.subr.bf16.mxu0 0
        %1764 = vmatpush1.bf16.xpose.msra.mxu0 0
        %1765 = vmatprep.subr.bf16.mxu0 0
        %1766 = vmatpush1.bf16.xpose.msra.mxu0 0
        %1767 = vmatprep.subr.bf16.mxu0 0
        %1768 = vmatpush1.bf16.xpose.msra.mxu0 0
        %1769 = vmatprep.subr.bf16.mxu0 0
        %1770 = vmatpush1.bf16.xpose.msra.mxu0 0
        %1771 = vmatprep.subr.bf16.mxu0 0
        %1772 = vmatpush1.bf16.xpose.msra.mxu0 0
        %1773 = vmatprep.subr.bf16.mxu0 0
        %1774 = vmatpush1.bf16.xpose.msra.mxu0 0
        %1775 = vmatprep.subr.bf16.mxu0 0
        %1776 = vmatpush1.bf16.xpose.msra.mxu0 0
        %1777 = vmatprep.subr.bf16.mxu0 0
        %1778 = vmatpush1.bf16.xpose.msra.mxu0 0
        %1779 = vmatprep.subr.bf16.mxu0 0
        %1780 = vmatpush1.bf16.xpose.msra.mxu0 0
        %1781 = vmatprep.subr.bf16.mxu0 0
        %1782 = vmatpush1.bf16.xpose.msra.mxu0 0
        %1783 = vmatprep.subr.bf16.mxu0 0
        %1784 = vmatpush1.bf16.xpose.msra.mxu0 0
        %1785 = vmatprep.subr.bf16.mxu0 0
        %1786 = vmatpush1.bf16.xpose.msra.mxu0 0
        %1787 = vmatprep.mubr.bf16.mxu0 0
        %1788 = vmatmul.mubr.bf16.gmra.mrb[0].mxu0 %v1750
        %v1789 = vpop.f32.mrb[0].mxu0
        %v1790 = vadd.f32 0.0, %v1789
        %v1791 = vpop.f32.mrb[0].mxu0
        %v1792 = vpop.f32.mrb[0].mxu0
        %v1793 = vpop.f32.mrb[0].mxu0
        %1794 = vdwg.mxu0
        %v1795 = vmul.f32 %v1790, 0.35355338
        %v1796 = vsel %vm829, %v1795, -inf
        %1797 = vmax.xlane.f32.xlu0 %v1796
        %v1798 = vpop.xlane.xlu0 %1797
        %v1799 = vsub.f32 %v1795, %v1798
        %v1800 = vmul.f32 %v1799, 1.442695
        %v1801 = vpow.pop %v1800
        %v1802 = vsel %vm829, %v1801, 0.0
        %1803 = vadd.xlane.f32.xlu0 %v1802
        %v1804 = vpop.xlane.xlu0 %1803
        %v1805 = vrcp.pop %v1804
        %v1806 = vmul.f32 %v1801, %v1805
        %v1807 = vpack.c.bf16 %v1806, %v1806
        %1808 = vrot.lane.b32.xlu0 %v1524, 80
        %v1809 = vpop.permute.xlu0 %1808
        %v1811 = vsel %vm829, %v1807, 0
        %v1814 = vsel %vm895, %v1809, 0
        %1816 = vmatprep.subr.bf16.mxu0 0
        %1817 = vmatpush1.bf16.msra.mxu0 %v1814
        %1818 = vmatprep.subr.bf16.mxu0 0
        %1819 = vmatpush1.bf16.msra.mxu0 0
        %1820 = vmatprep.subr.bf16.mxu0 0
        %1821 = vmatpush1.bf16.msra.mxu0 0
        %1822 = vmatprep.subr.bf16.mxu0 0
        %1823 = vmatpush1.bf16.msra.mxu0 0
        %1824 = vmatprep.subr.bf16.mxu0 0
        %1825 = vmatpush1.bf16.msra.mxu0 0
        %1826 = vmatprep.subr.bf16.mxu0 0
        %1827 = vmatpush1.bf16.msra.mxu0 0
        %1828 = vmatprep.subr.bf16.mxu0 0
        %1829 = vmatpush1.bf16.msra.mxu0 0
        %1830 = vmatprep.subr.bf16.mxu0 0
        %1831 = vmatpush1.bf16.msra.mxu0 0
        %1832 = vmatprep.subr.bf16.mxu0 0
        %1833 = vmatpush1.bf16.msra.mxu0 0
        %1834 = vmatprep.subr.bf16.mxu0 0
        %1835 = vmatpush1.bf16.msra.mxu0 0
        %1836 = vmatprep.subr.bf16.mxu0 0
        %1837 = vmatpush1.bf16.msra.mxu0 0
        %1838 = vmatprep.subr.bf16.mxu0 0
        %1839 = vmatpush1.bf16.msra.mxu0 0
        %1840 = vmatprep.subr.bf16.mxu0 0
        %1841 = vmatpush1.bf16.msra.mxu0 0
        %1842 = vmatprep.subr.bf16.mxu0 0
        %1843 = vmatpush1.bf16.msra.mxu0 0
        %1844 = vmatprep.subr.bf16.mxu0 0
        %1845 = vmatpush1.bf16.msra.mxu0 0
        %1846 = vmatprep.subr.bf16.mxu0 0
        %1847 = vmatpush1.bf16.msra.mxu0 0
        %1848 = vmatprep.mubr.bf16.mxu0 0
        %1849 = vmatmul.mubr.bf16.gmra.mrb[0].mxu0 %v1811
        %v1850 = vpop.f32.mrb[0].mxu0
        %v1851 = vadd.f32 0.0, %v1850
        %v1852 = vpop.f32.mrb[0].mxu0
        %v1853 = vpop.f32.mrb[0].mxu0
        %v1854 = vpop.f32.mrb[0].mxu0
        %1855 = vdwg.mxu0
        %1856 = vrot.lane.b32.xlu0 %v1523, 104
        %v1857 = vpop.permute.xlu0 %1856
        %1858 = vrot.lane.b32.xlu0 %v1524, 104
        %v1859 = vpop.permute.xlu0 %1858
        %v1861 = vsel %vm829, %v1857, 0
        %v1864 = vsel %vm829, %v1859, 0
        %1866 = vmatprep.subr.bf16.mxu0 0
        %1867 = vmatpush1.bf16.xpose.msra.mxu0 %v1864
        %1868 = vmatprep.subr.bf16.mxu0 0
        %1869 = vmatpush1.bf16.xpose.msra.mxu0 0
        %1870 = vmatprep.subr.bf16.mxu0 0
        %1871 = vmatpush1.bf16.xpose.msra.mxu0 0
        %1872 = vmatprep.subr.bf16.mxu0 0
        %1873 = vmatpush1.bf16.xpose.msra.mxu0 0
        %1874 = vmatprep.subr.bf16.mxu0 0
        %1875 = vmatpush1.bf16.xpose.msra.mxu0 0
        %1876 = vmatprep.subr.bf16.mxu0 0
        %1877 = vmatpush1.bf16.xpose.msra.mxu0 0
        %1878 = vmatprep.subr.bf16.mxu0 0
        %1879 = vmatpush1.bf16.xpose.msra.mxu0 0
        %1880 = vmatprep.subr.bf16.mxu0 0
        %1881 = vmatpush1.bf16.xpose.msra.mxu0 0
        %1882 = vmatprep.subr.bf16.mxu0 0
        %1883 = vmatpush1.bf16.xpose.msra.mxu0 0
        %1884 = vmatprep.subr.bf16.mxu0 0
        %1885 = vmatpush1.bf16.xpose.msra.mxu0 0
        %1886 = vmatprep.subr.bf16.mxu0 0
        %1887 = vmatpush1.bf16.xpose.msra.mxu0 0
        %1888 = vmatprep.subr.bf16.mxu0 0
        %1889 = vmatpush1.bf16.xpose.msra.mxu0 0
        %1890 = vmatprep.subr.bf16.mxu0 0
        %1891 = vmatpush1.bf16.xpose.msra.mxu0 0
        %1892 = vmatprep.subr.bf16.mxu0 0
        %1893 = vmatpush1.bf16.xpose.msra.mxu0 0
        %1894 = vmatprep.subr.bf16.mxu0 0
        %1895 = vmatpush1.bf16.xpose.msra.mxu0 0
        %1896 = vmatprep.subr.bf16.mxu0 0
        %1897 = vmatpush1.bf16.xpose.msra.mxu0 0
        %1898 = vmatprep.mubr.bf16.mxu0 0
        %1899 = vmatmul.mubr.bf16.gmra.mrb[0].mxu0 %v1861
        %v1900 = vpop.f32.mrb[0].mxu0
        %v1901 = vadd.f32 0.0, %v1900
        %v1902 = vpop.f32.mrb[0].mxu0
        %v1903 = vpop.f32.mrb[0].mxu0
        %v1904 = vpop.f32.mrb[0].mxu0
        %1905 = vdwg.mxu0
        %v1906 = vmul.f32 %v1901, 0.35355338
        %v1907 = vsel %vm829, %v1906, -inf
        %1908 = vmax.xlane.f32.xlu0 %v1907
        %v1909 = vpop.xlane.xlu0 %1908
        %v1910 = vsub.f32 %v1906, %v1909
        %v1911 = vmul.f32 %v1910, 1.442695
        %v1912 = vpow.pop %v1911
        %v1913 = vsel %vm829, %v1912, 0.0
        %1914 = vadd.xlane.f32.xlu0 %v1913
        %v1915 = vpop.xlane.xlu0 %1914
        %v1916 = vrcp.pop %v1915
        %v1917 = vmul.f32 %v1912, %v1916
        %v1918 = vpack.c.bf16 %v1917, %v1917
        %1919 = vrot.lane.b32.xlu0 %v1524, 72
        %v1920 = vpop.permute.xlu0 %1919
        %v1922 = vsel %vm829, %v1918, 0
        %v1925 = vsel %vm895, %v1920, 0
        %1927 = vmatprep.subr.bf16.mxu0 0
        %1928 = vmatpush1.bf16.msra.mxu0 %v1925
        %1929 = vmatprep.subr.bf16.mxu0 0
        %1930 = vmatpush1.bf16.msra.mxu0 0
        %1931 = vmatprep.subr.bf16.mxu0 0
        %1932 = vmatpush1.bf16.msra.mxu0 0
        %1933 = vmatprep.subr.bf16.mxu0 0
        %1934 = vmatpush1.bf16.msra.mxu0 0
        %1935 = vmatprep.subr.bf16.mxu0 0
        %1936 = vmatpush1.bf16.msra.mxu0 0
        %1937 = vmatprep.subr.bf16.mxu0 0
        %1938 = vmatpush1.bf16.msra.mxu0 0
        %1939 = vmatprep.subr.bf16.mxu0 0
        %1940 = vmatpush1.bf16.msra.mxu0 0
        %1941 = vmatprep.subr.bf16.mxu0 0
        %1942 = vmatpush1.bf16.msra.mxu0 0
        %1943 = vmatprep.subr.bf16.mxu0 0
        %1944 = vmatpush1.bf16.msra.mxu0 0
        %1945 = vmatprep.subr.bf16.mxu0 0
        %1946 = vmatpush1.bf16.msra.mxu0 0
        %1947 = vmatprep.subr.bf16.mxu0 0
        %1948 = vmatpush1.bf16.msra.mxu0 0
        %1949 = vmatprep.subr.bf16.mxu0 0
        %1950 = vmatpush1.bf16.msra.mxu0 0
        %1951 = vmatprep.subr.bf16.mxu0 0
        %1952 = vmatpush1.bf16.msra.mxu0 0
        %1953 = vmatprep.subr.bf16.mxu0 0
        %1954 = vmatpush1.bf16.msra.mxu0 0
        %1955 = vmatprep.subr.bf16.mxu0 0
        %1956 = vmatpush1.bf16.msra.mxu0 0
        %1957 = vmatprep.subr.bf16.mxu0 0
        %1958 = vmatpush1.bf16.msra.mxu0 0
        %1959 = vmatprep.mubr.bf16.mxu0 0
        %1960 = vmatmul.mubr.bf16.gmra.mrb[0].mxu0 %v1922
        %v1961 = vpop.f32.mrb[0].mxu0
        %v1962 = vadd.f32 0.0, %v1961
        %v1963 = vpop.f32.mrb[0].mxu0
        %v1964 = vpop.f32.mrb[0].mxu0
        %v1965 = vpop.f32.mrb[0].mxu0
        %1966 = vdwg.mxu0
        %1968 = vrot.lane.b32.xlu0 %v1740, 8
        %v1969 = vpop.permute.xlu0 %1968
        %1972 = vrot.lane.b32.xlu0 %v1851, 16
        %v1973 = vpop.permute.xlu0 %1972
        %1976 = vrot.lane.b32.xlu0 %v1962, 24
        %v1977 = vpop.permute.xlu0 %1976
        %v1979 = vsel %vm829, %v1628, %v1969
        %v1980 = vsel %vm1288, %v1979, %v1973
        %v1981 = vsel %vm1290, %v1980, %v1977
        %v1982 = vpack.c.bf16 %v1981, %v1981
        %v1983 = vld [vmem:[%s14] sm:$0x1]
        %v1985 = vlaneseq
        %v1986 = vshrl.u32 %v1985, 7
        %v1987 = vsub.s32 0, %v1986
        %v1988 = vrot.slane %v1983, %v1987
        %v1994 = vunpack.c.l.b16 %v1519
        %v1995 = vunpack.c.l.b16 %v1520
        %v1996 = vunpack.c.l.b16 %v1521
        %v1997 = vunpack.c.l.b16 %v1522
        %v1998 = vpack.c.b16 %v1995, %v1994
        %v1999 = vpack.c.b16 %v1997, %v1996
        %v2003 = vsel %vm776, %v1982, 0
        %2005 = vmatprep.subr.bf16.mxu0 0
        %2006 = vmatpush1.bf16.msra.mxu0 %v1998
        %2007 = vmatprep.subr.bf16.mxu0 0
        %2008 = vmatpush1.bf16.msra.mxu0 %v1999
        %2009 = vmatprep.subr.bf16.mxu0 0
        %2010 = vmatpush1.bf16.msra.mxu0 0
        %2011 = vmatprep.subr.bf16.mxu0 0
        %2012 = vmatpush1.bf16.msra.mxu0 0
        %2013 = vmatprep.subr.bf16.mxu0 0
        %2014 = vmatpush1.bf16.msra.mxu0 0
        %2015 = vmatprep.subr.bf16.mxu0 0
        %2016 = vmatpush1.bf16.msra.mxu0 0
        %2017 = vmatprep.subr.bf16.mxu0 0
        %2018 = vmatpush1.bf16.msra.mxu0 0
        %2019 = vmatprep.subr.bf16.mxu0 0
        %2020 = vmatpush1.bf16.msra.mxu0 0
        %2021 = vmatprep.subr.bf16.mxu0 0
        %2022 = vmatpush1.bf16.msra.mxu0 0
        %2023 = vmatprep.subr.bf16.mxu0 0
        %2024 = vmatpush1.bf16.msra.mxu0 0
        %2025 = vmatprep.subr.bf16.mxu0 0
        %2026 = vmatpush1.bf16.msra.mxu0 0
        %2027 = vmatprep.subr.bf16.mxu0 0
        %2028 = vmatpush1.bf16.msra.mxu0 0
        %2029 = vmatprep.subr.bf16.mxu0 0
        %2030 = vmatpush1.bf16.msra.mxu0 0
        %2031 = vmatprep.subr.bf16.mxu0 0
        %2032 = vmatpush1.bf16.msra.mxu0 0
        %2033 = vmatprep.subr.bf16.mxu0 0
        %2034 = vmatpush1.bf16.msra.mxu0 0
        %2035 = vmatprep.subr.bf16.mxu0 0
        %2036 = vmatpush1.bf16.msra.mxu0 0
        %2037 = vmatprep.mubr.bf16.mxu0 0
        %2038 = vmatmul.mubr.bf16.gmra.mrb[0].mxu0 %v2003
        %v2039 = vpop.f32.mrb[0].mxu0
        %v2040 = vadd.f32 %v1988, %v2039
        %v2041 = vpop.f32.mrb[0].mxu0
        %v2042 = vpop.f32.mrb[0].mxu0
        %v2043 = vpop.f32.mrb[0].mxu0
        %2044 = vdwg.mxu0
        %v2045 = vadd.f32 %v1385, %v2040
        %v2046 = vld [vmem:[%s15] sm:$0x1]
        %v2047 = vld [vmem:[%s16] sm:$0x1]
        %v2048 = vsel %vm776, %v2045, 0.0
        %2049 = vadd.xlane.f32.xlu0 %v2048
        %v2050 = vpop.xlane.xlu0 %2049
        %v2051 = vmul.f32 %v2050, %v1361
        %v2052 = vsub.f32 %v2045, %v2051
        %v2053 = vmul.f32 %v2052, %v2052
        %v2054 = vsel %vm776, %v2053, 0.0
        %2055 = vadd.xlane.f32.xlu0 %v2054
        %v2056 = vpop.xlane.xlu0 %2055
        %v2057 = vmul.f32 %v2056, %v1361
        %v2058 = vadd.f32 %v2057, 1e-05
        %v2059 = vrsqrt.pop %v2058
        %v2060 = vmul.f32 %v2052, %v2059
        %v2062 = vlaneseq
        %v2063 = vshrl.u32 %v2062, 7
        %v2064 = vsub.s32 0, %v2063
        %v2065 = vrot.slane %v2046, %v2064
        %v2067 = vmul.f32 %v2060, %v2065
        %v2069 = vlaneseq
        %v2070 = vshrl.u32 %v2069, 7
        %v2071 = vsub.s32 0, %v2070
        %v2072 = vrot.slane %v2047, %v2071
        %v2074 = vadd.f32 %v2067, %v2072
        %v2075 = vld [vmem:[%s17] sm:$0xf]
        %v2076 = vld [vmem:[%s17 + $0x4] sm:$0xf]
        %v2077 = vld [vmem:[%s17 + $0x8] sm:$0xf]
        %v2078 = vld [vmem:[%s17 + $0xc] sm:$0xf]
        %v2079 = vpack.c.bf16 %v2074, %v2074
        %v2080 = vld [vmem:[%s18] sm:$0x1]
        %v2082 = vlaneseq
        %v2083 = vshrl.u32 %v2082, 7
        %v2084 = vsub.s32 0, %v2083
        %v2085 = vrot.slane %v2080, %v2084
        %v2091 = vunpack.c.l.b16 %v2075
        %v2092 = vunpack.c.l.b16 %v2076
        %v2093 = vunpack.c.l.b16 %v2077
        %v2094 = vunpack.c.l.b16 %v2078
        %v2095 = vpack.c.b16 %v2092, %v2091
        %v2096 = vpack.c.b16 %v2094, %v2093
        %v2100 = vsel %vm776, %v2079, 0
        %2102 = vmatprep.subr.bf16.mxu0 0
        %2103 = vmatpush1.bf16.msra.mxu0 %v2095
        %2104 = vmatprep.subr.bf16.mxu0 0
        %2105 = vmatpush1.bf16.msra.mxu0 %v2096
        %2106 = vmatprep.subr.bf16.mxu0 0
        %2107 = vmatpush1.bf16.msra.mxu0 0
        %2108 = vmatprep.subr.bf16.mxu0 0
        %2109 = vmatpush1.bf16.msra.mxu0 0
        %2110 = vmatprep.subr.bf16.mxu0 0
        %2111 = vmatpush1.bf16.msra.mxu0 0
        %2112 = vmatprep.subr.bf16.mxu0 0
        %2113 = vmatpush1.bf16.msra.mxu0 0
        %2114 = vmatprep.subr.bf16.mxu0 0
        %2115 = vmatpush1.bf16.msra.mxu0 0
        %2116 = vmatprep.subr.bf16.mxu0 0
        %2117 = vmatpush1.bf16.msra.mxu0 0
        %2118 = vmatprep.subr.bf16.mxu0 0
        %2119 = vmatpush1.bf16.msra.mxu0 0
        %2120 = vmatprep.subr.bf16.mxu0 0
        %2121 = vmatpush1.bf16.msra.mxu0 0
        %2122 = vmatprep.subr.bf16.mxu0 0
        %2123 = vmatpush1.bf16.msra.mxu0 0
        %2124 = vmatprep.subr.bf16.mxu0 0
        %2125 = vmatpush1.bf16.msra.mxu0 0
        %2126 = vmatprep.subr.bf16.mxu0 0
        %2127 = vmatpush1.bf16.msra.mxu0 0
        %2128 = vmatprep.subr.bf16.mxu0 0
        %2129 = vmatpush1.bf16.msra.mxu0 0
        %2130 = vmatprep.subr.bf16.mxu0 0
        %2131 = vmatpush1.bf16.msra.mxu0 0
        %2132 = vmatprep.subr.bf16.mxu0 0
        %2133 = vmatpush1.bf16.msra.mxu0 0
        %2134 = vmatprep.mubr.bf16.mxu0 0
        %2135 = vmatmul.mubr.bf16.gmra.mrb[0].mxu0 %v2100
        %v2136 = vpop.f32.mrb[0].mxu0
        %v2137 = vadd.f32 %v2085, %v2136
        %v2138 = vpop.f32.mrb[0].mxu0
        %v2139 = vpop.f32.mrb[0].mxu0
        %v2140 = vpop.f32.mrb[0].mxu0
        %2141 = vdwg.mxu0
        %v2142 = vmax.f32 %v2137, 0.0
        %v2143 = vld [vmem:[%s19] sm:$0xf]
        %v2144 = vld [vmem:[%s19 + $0x4] sm:$0xf]
        %v2145 = vld [vmem:[%s19 + $0x8] sm:$0xf]
        %v2146 = vld [vmem:[%s19 + $0xc] sm:$0xf]
        %v2147 = vld [vmem:[%s19 + $0x10] sm:$0xf]
        %v2148 = vld [vmem:[%s19 + $0x14] sm:$0xf]
        %v2149 = vld [vmem:[%s19 + $0x18] sm:$0xf]
        %v2150 = vld [vmem:[%s19 + $0x1c] sm:$0xf]
        %v2151 = vpack.c.bf16 %v2142, %v2142
        %v2152 = vld [vmem:[%s20] sm:$0x1]
        %v2154 = vlaneseq
        %v2155 = vshrl.u32 %v2154, 7
        %v2156 = vsub.s32 0, %v2155
        %v2157 = vrot.slane %v2152, %v2156
        %v2167 = vunpack.c.l.b16 %v2143
        %v2168 = vunpack.c.l.b16 %v2144
        %v2169 = vunpack.c.l.b16 %v2145
        %v2170 = vunpack.c.l.b16 %v2146
        %v2171 = vunpack.c.l.b16 %v2147
        %v2172 = vunpack.c.l.b16 %v2148
        %v2173 = vunpack.c.l.b16 %v2149
        %v2174 = vunpack.c.l.b16 %v2150
        %v2175 = vpack.c.b16 %v2168, %v2167
        %v2176 = vpack.c.b16 %v2170, %v2169
        %v2177 = vpack.c.b16 %v2172, %v2171
        %v2178 = vpack.c.b16 %v2174, %v2173
        %vm2183 = vcmask 523264
        %v2185 = vsel %vm2183, %v2151, 0
        %2187 = vmatprep.subr.bf16.mxu0 0
        %2188 = vmatpush1.bf16.msra.mxu0 %v2175
        %2189 = vmatprep.subr.bf16.mxu0 0
        %2190 = vmatpush1.bf16.msra.mxu0 %v2176
        %2191 = vmatprep.subr.bf16.mxu0 0
        %2192 = vmatpush1.bf16.msra.mxu0 %v2177
        %2193 = vmatprep.subr.bf16.mxu0 0
        %2194 = vmatpush1.bf16.msra.mxu0 %v2178
        %2195 = vmatprep.subr.bf16.mxu0 0
        %2196 = vmatpush1.bf16.msra.mxu0 0
        %2197 = vmatprep.subr.bf16.mxu0 0
        %2198 = vmatpush1.bf16.msra.mxu0 0
        %2199 = vmatprep.subr.bf16.mxu0 0
        %2200 = vmatpush1.bf16.msra.mxu0 0
        %2201 = vmatprep.subr.bf16.mxu0 0
        %2202 = vmatpush1.bf16.msra.mxu0 0
        %2203 = vmatprep.subr.bf16.mxu0 0
        %2204 = vmatpush1.bf16.msra.mxu0 0
        %2205 = vmatprep.subr.bf16.mxu0 0
        %2206 = vmatpush1.bf16.msra.mxu0 0
        %2207 = vmatprep.subr.bf16.mxu0 0
        %2208 = vmatpush1.bf16.msra.mxu0 0
        %2209 = vmatprep.subr.bf16.mxu0 0
        %2210 = vmatpush1.bf16.msra.mxu0 0
        %2211 = vmatprep.subr.bf16.mxu0 0
        %2212 = vmatpush1.bf16.msra.mxu0 0
        %2213 = vmatprep.subr.bf16.mxu0 0
        %2214 = vmatpush1.bf16.msra.mxu0 0
        %2215 = vmatprep.subr.bf16.mxu0 0
        %2216 = vmatpush1.bf16.msra.mxu0 0
        %2217 = vmatprep.subr.bf16.mxu0 0
        %2218 = vmatpush1.bf16.msra.mxu0 0
        %2219 = vmatprep.mubr.bf16.mxu0 0
        %2220 = vmatmul.mubr.bf16.gmra.mrb[0].mxu0 %v2185
        %v2221 = vpop.f32.mrb[0].mxu0
        %v2222 = vadd.f32 %v2157, %v2221
        %v2223 = vpop.f32.mrb[0].mxu0
        %v2224 = vpop.f32.mrb[0].mxu0
        %v2225 = vpop.f32.mrb[0].mxu0
        %2226 = vdwg.mxu0
        %v2227 = vadd.f32 %v2074, %v2222
        %v2228 = vld [vmem:[#allocation2] sm:$0x1]
        %v2229 = vld [vmem:[#allocation4] sm:$0x1]
        %v2230 = vsel %vm776, %v2227, 0.0
        %2231 = vadd.xlane.f32.xlu0 %v2230
        %v2232 = vpop.xlane.xlu0 %2231
        %v2233 = vmul.f32 %v2232, %v1361
        %v2234 = vsub.f32 %v2227, %v2233
        %v2235 = vmul.f32 %v2234, %v2234
        %v2236 = vsel %vm776, %v2235, 0.0
        %2237 = vadd.xlane.f32.xlu0 %v2236
        %v2238 = vpop.xlane.xlu0 %2237
        %v2239 = vmul.f32 %v2238, %v1361
        %v2240 = vadd.f32 %v2239, 1e-05
        %v2241 = vrsqrt.pop %v2240
        %v2242 = vmul.f32 %v2234, %v2241
        %v2244 = vlaneseq
        %v2245 = vshrl.u32 %v2244, 7
        %v2246 = vsub.s32 0, %v2245
        %v2247 = vrot.slane %v2228, %v2246
        %v2249 = vmul.f32 %v2242, %v2247
        %v2251 = vlaneseq
        %v2252 = vshrl.u32 %v2251, 7
        %v2253 = vsub.s32 0, %v2252
        %v2254 = vrot.slane %v2229, %v2253
        %v2256 = vadd.f32 %v2249, %v2254
        %v2257 = vpack.c.bf16 %v2256, %v2256
        %vm2258 = vcmask 257024
        %2259 = vst.msk [vmem:[%s748] sm:$0xf] %vm2258, %v2257
        %p2260 = scmp.lt.s32.totalorder %s36, 1
        %s2261 = scalar_select %p2260, %s36, 1
        %s2262 = smul.addr %s2261, 4
        %s2263 = scalar_lea.vmem %s23, %s2262
        // Predicated region
        $region121: #{default_transformer_forward.8} parent=111 // pred_check
          %p2264 = pneg %p547
        $region122: #{default_transformer_forward.8} parent=111 // pred_check_branch
          %2266 = sbr.rel (%p2264) target = $region124
        $region123: #{default_transformer_forward.8} parent=111 // pred_region
          _
        $region124: #{default_transformer_forward.8} parent=111 // pred_fallthru
          _
      $region112: #{default_transformer_forward.8} parent=5 // pred_fallthru
        _
      %p2267 = scmp.le.s32.totalorder 2, %s31
      // Predicated region
      $region125: #{default_transformer_forward.8} parent=5 // pred_check
        %p2268 = pneg %p2267
      $region126: #{default_transformer_forward.8} parent=5 // pred_check_branch
        %2270 = sbr.rel (%p2268) target = $region128
      $region127: #{default_transformer_forward.8} parent=5 // pred_region
        %s2271 = ssub.s32 %s31, 2
        // Predicated region
        $region129: #{default_transformer_forward.8} parent=127 // pred_check
          %p2272 = pneg %p553
        $region130: #{default_transformer_forward.8} parent=127 // pred_check_branch
          %2274 = sbr.rel (%p2272) target = $region132
        $region131: #{default_transformer_forward.8} parent=127 // pred_region
          %p2275 = scmp.lt.s32.totalorder %s37, 1
          %s2276 = scalar_select %p2275, %s37, 1
          %s2277 = smul.addr %s2276, 4
          %s2278 = scalar_lea.vmem %s23, %s2277
        $region132: #{default_transformer_forward.8} parent=127 // pred_fallthru
          _
      $region128: #{default_transformer_forward.8} parent=5 // pred_fallthru
        _
    $region6: #{default_transformer_forward.8} parent=1 // loop_footer
      %s35 = sadd.s32 1, %s31
    $region7: #{default_transformer_forward.8} parent=1 // loop_footer_branch
      %30 = sbr.rel target = $region3
    $region8: #{default_transformer_forward.8} parent=1 // loop_exit
      _
    %2279 = vsyncpa [#allocation3], 1
    %s2280 = scalar_lea.sflag [#allocation3], 1
    %2281 = vsyncpa %s2280, 1
    %2282 = vsyncpa [#allocation5], 1

// kernel: default_transformer_forward.7
$region0: #{default_transformer_forward.7}
  #allocation0 [shape = 'u32[]', space=smem, size = 0x4, offset = 0x4, fixed_abs, tag = 'smem constant byte address 0x4 - core index']
  #allocation1 [shape = 'u32[144,128]{1,0:T(1,128)}', space=vmem, size = 0x12000, scoped, tag = 'internal scratch']
  %s0 = inlined_call_operand.vmem [shape: bf16[2,8,32], index: 0, kind: input, shape index: {}]
  %s1 = inlined_call_operand.vmem [shape: bf16[2,8,32], index: 1, kind: input, shape index: {}]
  %s2 = inlined_call_operand.vmem [shape: f32[8,8], index: 2, kind: input, shape index: {}]
  %s3 = inlined_call_operand.vmem [shape: bf16[32,96], index: 3, kind: input, shape index: {}]
  %s4 = inlined_call_operand.vmem [shape: f32[1,96], index: 4, kind: input, shape index: {}]
  %s5 = inlined_call_operand.vmem [shape: bf16[32,32], index: 5, kind: input, shape index: {}]
  %s6 = inlined_call_operand.vmem [shape: f32[1,32], index: 6, kind: input, shape index: {}]
  %s7 = inlined_call_operand.vmem [shape: f32[1,32], index: 7, kind: input, shape index: {}]
  %s8 = inlined_call_operand.vmem [shape: f32[1,32], index: 8, kind: input, shape index: {}]
  %s9 = inlined_call_operand.vmem [shape: bf16[32,32], index: 9, kind: input, shape index: {}]
  %s10 = inlined_call_operand.vmem [shape: f32[1,32], index: 10, kind: input, shape index: {}]
  %s11 = inlined_call_operand.vmem [shape: bf16[32,64], index: 11, kind: input, shape index: {}]
  %s12 = inlined_call_operand.vmem [shape: f32[1,64], index: 12, kind: input, shape index: {}]
  %s13 = inlined_call_operand.vmem [shape: bf16[32,32], index: 13, kind: input, shape index: {}]
  %s14 = inlined_call_operand.vmem [shape: f32[1,32], index: 14, kind: input, shape index: {}]
  %s15 = inlined_call_operand.vmem [shape: f32[1,32], index: 15, kind: input, shape index: {}]
  %s16 = inlined_call_operand.vmem [shape: f32[1,32], index: 16, kind: input, shape index: {}]
  %s17 = inlined_call_operand.vmem [shape: bf16[32,64], index: 17, kind: input, shape index: {}]
  %s18 = inlined_call_operand.vmem [shape: f32[1,64], index: 18, kind: input, shape index: {}]
  %s19 = inlined_call_operand.vmem [shape: bf16[64,32], index: 19, kind: input, shape index: {}]
  %s20 = inlined_call_operand.vmem [shape: f32[1,32], index: 20, kind: input, shape index: {}]
  %s21 = inlined_call_operand.vmem [shape: f32[1,32], index: 21, kind: input, shape index: {}]
  %s22 = inlined_call_operand.vmem [shape: f32[1,32], index: 22, kind: input, shape index: {}]
  %s23 = inlined_call_operand.vmem [shape: bf16[2,8,32], index: 23, kind: output, shape index: {}]
  %s24 = sld [smem:[#allocation0]]
  $region125: #{default_transformer_forward.7} parent=0
    _
  %s26 = ssub.s32 1, %s24
  %s27 = scalar_select 0, %s26, %s24
  loop: start=0, step=1, limit=4
  $region2: #{default_transformer_forward.7} parent=0 // loop_pre_header
    _
  $region3: #{default_transformer_forward.7} parent=0 // loop_header
    %s29 = sphi 0, %s33
    %p30 = scmp.ge.s32.totalorder %s29, 4
    %s39 = sphi 0, %s41
    %s42 = sphi 0, %s39
    %s43 = sphi 0, %s42
    %s59 = sphi 0, %s43
    %s65 = sphi 0, %s67
    %s68 = sphi 0, %s65
    %s69 = sphi 0, %s68
    %s85 = sphi 0, %s69
    %s89 = sphi 0, %s89
    %s91 = sphi 0, %s89
    %s92 = sphi 0, %s91
    %s106 = sphi 0, %s92
    %s110 = sphi 0, %s110
    %s112 = sphi 0, %s110
    %s113 = sphi 0, %s112
    %s127 = sphi 0, %s113
    %s131 = sphi 0, %s131
    %s133 = sphi 0, %s131
    %s134 = sphi 0, %s133
    %s148 = sphi 0, %s134
    %s152 = sphi 0, %s152
    %s154 = sphi 0, %s152
    %s155 = sphi 0, %s154
    %s169 = sphi 0, %s155
    %s173 = sphi 0, %s173
    %s175 = sphi 0, %s173
    %s176 = sphi 0, %s175
    %s190 = sphi 0, %s176
    %s194 = sphi 0, %s194
    %s196 = sphi 0, %s194
    %s197 = sphi 0, %s196
    %s211 = sphi 0, %s197
    %s215 = sphi 0, %s215
    %s217 = sphi 0, %s215
    %s218 = sphi 0, %s217
    %s232 = sphi 0, %s218
    %s236 = sphi 0, %s236
    %s238 = sphi 0, %s236
    %s239 = sphi 0, %s238
    %s253 = sphi 0, %s239
    %s257 = sphi 0, %s257
    %s259 = sphi 0, %s257
    %s260 = sphi 0, %s259
    %s274 = sphi 0, %s260
    %s278 = sphi 0, %s278
    %s280 = sphi 0, %s278
    %s281 = sphi 0, %s280
    %s295 = sphi 0, %s281
    %s299 = sphi 0, %s299
    %s301 = sphi 0, %s299
    %s302 = sphi 0, %s301
    %s316 = sphi 0, %s302
    %s320 = sphi 0, %s320
    %s322 = sphi 0, %s320
    %s323 = sphi 0, %s322
    %s337 = sphi 0, %s323
    %s341 = sphi 0, %s341
    %s343 = sphi 0, %s341
    %s344 = sphi 0, %s343
    %s358 = sphi 0, %s344
    %s362 = sphi 0, %s362
    %s364 = sphi 0, %s362
    %s365 = sphi 0, %s364
    %s379 = sphi 0, %s365
    %s383 = sphi 0, %s383
    %s385 = sphi 0, %s383
    %s386 = sphi 0, %s385
    %s400 = sphi 0, %s386
    %s404 = sphi 0, %s404
    %s406 = sphi 0, %s404
    %s407 = sphi 0, %s406
    %s421 = sphi 0, %s407
    %s425 = sphi 0, %s425
    %s427 = sphi 0, %s425
    %s428 = sphi 0, %s427
    %s442 = sphi 0, %s428
    %s446 = sphi 0, %s446
    %s448 = sphi 0, %s446
    %s449 = sphi 0, %s448
    %s463 = sphi 0, %s449
    %s467 = sphi 0, %s467
    %s469 = sphi 0, %s467
    %s470 = sphi 0, %s469
    %s484 = sphi 0, %s470
    %s488 = sphi 0, %s488
    %s490 = sphi 0, %s488
    %s491 = sphi 0, %s490
    %s505 = sphi 0, %s491
    %s509 = sphi 0, %s509
    %s511 = sphi 0, %s509
    %s512 = sphi 0, %s511
    %s526 = sphi 0, %s512
    %s532 = sphi 0, %s534
    %s535 = sphi 0, %s532
    %s536 = sphi 0, %s535
    %s552 = sphi 0, %s536
  $region4: #{default_transformer_forward.7} parent=0 // loop_header_branch
    %32 = sbr.rel (%p30) target = $region8
  $region5: #{default_transformer_forward.7} parent=0 // loop_body
    %s34 = ssub.s32 %s29, 1
    %s35 = ssub.s32 %s29, 2
    %s36 = sadd.s32 %s29, 1
    %s37 = ssub.s32 %s29, %s36
    %p38 = scmp.eq.s32.totalorder %s37, 0
    %s40 = sadd.s32 %s39, 1
    %s41 = scalar_select %p38, %s39, %s40
    %p44 = pneg %p38
    %p45 = scmp.eq.s32.totalorder %s29, 1
    %p46 = por %p44, %p45
    %p47 = scmp.ne.s32.totalorder %s39, %s42
    %p48 = scmp.eq.s32.totalorder %s29, 0
    %p49 = por %p47, %p48
    %p50 = scmp.ne.s32.totalorder %s39, %s42
    %p51 = scmp.eq.s32.totalorder %s34, 1
    %p52 = por %p50, %p51
    %p53 = scmp.ne.s32.totalorder %s42, %s43
    %p54 = scmp.eq.s32.totalorder %s34, 0
    %p55 = por %p53, %p54
    %p56 = scmp.ne.s32.totalorder %s42, %s43
    %p57 = scmp.eq.s32.totalorder %s35, 1
    %p58 = por %p56, %p57
    %p60 = scmp.ne.s32.totalorder %s43, %s59
    %p61 = scmp.eq.s32.totalorder %s35, 0
    %p62 = por %p60, %p61
    %s63 = ssub.s32 %s29, %s36
    %p64 = scmp.eq.s32.totalorder %s63, 0
    %s66 = sadd.s32 %s65, 1
    %s67 = scalar_select %p64, %s65, %s66
    %p70 = pneg %p64
    %p71 = scmp.eq.s32.totalorder %s29, 1
    %p72 = por %p70, %p71
    %p73 = scmp.ne.s32.totalorder %s65, %s68
    %p74 = scmp.eq.s32.totalorder %s29, 0
    %p75 = por %p73, %p74
    %p76 = scmp.ne.s32.totalorder %s65, %s68
    %p77 = scmp.eq.s32.totalorder %s34, 1
    %p78 = por %p76, %p77
    %p79 = scmp.ne.s32.totalorder %s68, %s69
    %p80 = scmp.eq.s32.totalorder %s34, 0
    %p81 = por %p79, %p80
    %p82 = scmp.ne.s32.totalorder %s68, %s69
    %p83 = scmp.eq.s32.totalorder %s35, 1
    %p84 = por %p82, %p83
    %p86 = scmp.ne.s32.totalorder %s69, %s85
    %p87 = scmp.eq.s32.totalorder %s35, 0
    %p88 = por %p86, %p87
    %s90 = sadd.s32 %s89, 1
    %p93 = scmp.eq.s32.totalorder %s29, 1
    %p94 = scmp.ne.s32.totalorder %s89, %s91
    %p95 = scmp.eq.s32.totalorder %s29, 0
    %p96 = por %p94, %p95
    %p97 = scmp.ne.s32.totalorder %s89, %s91
    %p98 = scmp.eq.s32.totalorder %s34, 1
    %p99 = por %p97, %p98
    %p100 = scmp.ne.s32.totalorder %s91, %s92
    %p101 = scmp.eq.s32.totalorder %s34, 0
    %p102 = por %p100, %p101
    %p103 = scmp.ne.s32.totalorder %s91, %s92
    %p104 = scmp.eq.s32.totalorder %s35, 1
    %p105 = por %p103, %p104
    %p107 = scmp.ne.s32.totalorder %s92, %s106
    %p108 = scmp.eq.s32.totalorder %s35, 0
    %p109 = por %p107, %p108
    %s111 = sadd.s32 %s110, 1
    %p114 = scmp.eq.s32.totalorder %s29, 1
    %p115 = scmp.ne.s32.totalorder %s110, %s112
    %p116 = scmp.eq.s32.totalorder %s29, 0
    %p117 = por %p115, %p116
    %p118 = scmp.ne.s32.totalorder %s110, %s112
    %p119 = scmp.eq.s32.totalorder %s34, 1
    %p120 = por %p118, %p119
    %p121 = scmp.ne.s32.totalorder %s112, %s113
    %p122 = scmp.eq.s32.totalorder %s34, 0
    %p123 = por %p121, %p122
    %p124 = scmp.ne.s32.totalorder %s112, %s113
    %p125 = scmp.eq.s32.totalorder %s35, 1
    %p126 = por %p124, %p125
    %p128 = scmp.ne.s32.totalorder %s113, %s127
    %p129 = scmp.eq.s32.totalorder %s35, 0
    %p130 = por %p128, %p129
    %s132 = sadd.s32 %s131, 1
    %p135 = scmp.eq.s32.totalorder %s29, 1
    %p136 = scmp.ne.s32.totalorder %s131, %s133
    %p137 = scmp.eq.s32.totalorder %s29, 0
    %p138 = por %p136, %p137
    %p139 = scmp.ne.s32.totalorder %s131, %s133
    %p140 = scmp.eq.s32.totalorder %s34, 1
    %p141 = por %p139, %p140
    %p142 = scmp.ne.s32.totalorder %s133, %s134
    %p143 = scmp.eq.s32.totalorder %s34, 0
    %p144 = por %p142, %p143
    %p145 = scmp.ne.s32.totalorder %s133, %s134
    %p146 = scmp.eq.s32.totalorder %s35, 1
    %p147 = por %p145, %p146
    %p149 = scmp.ne.s32.totalorder %s134, %s148
    %p150 = scmp.eq.s32.totalorder %s35, 0
    %p151 = por %p149, %p150
    %s153 = sadd.s32 %s152, 1
    %p156 = scmp.eq.s32.totalorder %s29, 1
    %p157 = scmp.ne.s32.totalorder %s152, %s154
    %p158 = scmp.eq.s32.totalorder %s29, 0
    %p159 = por %p157, %p158
    %p160 = scmp.ne.s32.totalorder %s152, %s154
    %p161 = scmp.eq.s32.totalorder %s34, 1
    %p162 = por %p160, %p161
    %p163 = scmp.ne.s32.totalorder %s154, %s155
    %p164 = scmp.eq.s32.totalorder %s34, 0
    %p165 = por %p163, %p164
    %p166 = scmp.ne.s32.totalorder %s154, %s155
    %p167 = scmp.eq.s32.totalorder %s35, 1
    %p168 = por %p166, %p167
    %p170 = scmp.ne.s32.totalorder %s155, %s169
    %p171 = scmp.eq.s32.totalorder %s35, 0
    %p172 = por %p170, %p171
    %s174 = sadd.s32 %s173, 1
    %p177 = scmp.eq.s32.totalorder %s29, 1
    %p178 = scmp.ne.s32.totalorder %s173, %s175
    %p179 = scmp.eq.s32.totalorder %s29, 0
    %p180 = por %p178, %p179
    %p181 = scmp.ne.s32.totalorder %s173, %s175
    %p182 = scmp.eq.s32.totalorder %s34, 1
    %p183 = por %p181, %p182
    %p184 = scmp.ne.s32.totalorder %s175, %s176
    %p185 = scmp.eq.s32.totalorder %s34, 0
    %p186 = por %p184, %p185
    %p187 = scmp.ne.s32.totalorder %s175, %s176
    %p188 = scmp.eq.s32.totalorder %s35, 1
    %p189 = por %p187, %p188
    %p191 = scmp.ne.s32.totalorder %s176, %s190
    %p192 = scmp.eq.s32.totalorder %s35, 0
    %p193 = por %p191, %p192
    %s195 = sadd.s32 %s194, 1
    %p198 = scmp.eq.s32.totalorder %s29, 1
    %p199 = scmp.ne.s32.totalorder %s194, %s196
    %p200 = scmp.eq.s32.totalorder %s29, 0
    %p201 = por %p199, %p200
    %p202 = scmp.ne.s32.totalorder %s194, %s196
    %p203 = scmp.eq.s32.totalorder %s34, 1
    %p204 = por %p202, %p203
    %p205 = scmp.ne.s32.totalorder %s196, %s197
    %p206 = scmp.eq.s32.totalorder %s34, 0
    %p207 = por %p205, %p206
    %p208 = scmp.ne.s32.totalorder %s196, %s197
    %p209 = scmp.eq.s32.totalorder %s35, 1
    %p210 = por %p208, %p209
    %p212 = scmp.ne.s32.totalorder %s197, %s211
    %p213 = scmp.eq.s32.totalorder %s35, 0
    %p214 = por %p212, %p213
    %s216 = sadd.s32 %s215, 1
    %p219 = scmp.eq.s32.totalorder %s29, 1
    %p220 = scmp.ne.s32.totalorder %s215, %s217
    %p221 = scmp.eq.s32.totalorder %s29, 0
    %p222 = por %p220, %p221
    %p223 = scmp.ne.s32.totalorder %s215, %s217
    %p224 = scmp.eq.s32.totalorder %s34, 1
    %p225 = por %p223, %p224
    %p226 = scmp.ne.s32.totalorder %s217, %s218
    %p227 = scmp.eq.s32.totalorder %s34, 0
    %p228 = por %p226, %p227
    %p229 = scmp.ne.s32.totalorder %s217, %s218
    %p230 = scmp.eq.s32.totalorder %s35, 1
    %p231 = por %p229, %p230
    %p233 = scmp.ne.s32.totalorder %s218, %s232
    %p234 = scmp.eq.s32.totalorder %s35, 0
    %p235 = por %p233, %p234
    %s237 = sadd.s32 %s236, 1
    %p240 = scmp.eq.s32.totalorder %s29, 1
    %p241 = scmp.ne.s32.totalorder %s236, %s238
    %p242 = scmp.eq.s32.totalorder %s29, 0
    %p243 = por %p241, %p242
    %p244 = scmp.ne.s32.totalorder %s236, %s238
    %p245 = scmp.eq.s32.totalorder %s34, 1
    %p246 = por %p244, %p245
    %p247 = scmp.ne.s32.totalorder %s238, %s239
    %p248 = scmp.eq.s32.totalorder %s34, 0
    %p249 = por %p247, %p248
    %p250 = scmp.ne.s32.totalorder %s238, %s239
    %p251 = scmp.eq.s32.totalorder %s35, 1
    %p252 = por %p250, %p251
    %p254 = scmp.ne.s32.totalorder %s239, %s253
    %p255 = scmp.eq.s32.totalorder %s35, 0
    %p256 = por %p254, %p255
    %s258 = sadd.s32 %s257, 1
    %p261 = scmp.eq.s32.totalorder %s29, 1
    %p262 = scmp.ne.s32.totalorder %s257, %s259
    %p263 = scmp.eq.s32.totalorder %s29, 0
    %p264 = por %p262, %p263
    %p265 = scmp.ne.s32.totalorder %s257, %s259
    %p266 = scmp.eq.s32.totalorder %s34, 1
    %p267 = por %p265, %p266
    %p268 = scmp.ne.s32.totalorder %s259, %s260
    %p269 = scmp.eq.s32.totalorder %s34, 0
    %p270 = por %p268, %p269
    %p271 = scmp.ne.s32.totalorder %s259, %s260
    %p272 = scmp.eq.s32.totalorder %s35, 1
    %p273 = por %p271, %p272
    %p275 = scmp.ne.s32.totalorder %s260, %s274
    %p276 = scmp.eq.s32.totalorder %s35, 0
    %p277 = por %p275, %p276
    %s279 = sadd.s32 %s278, 1
    %p282 = scmp.eq.s32.totalorder %s29, 1
    %p283 = scmp.ne.s32.totalorder %s278, %s280
    %p284 = scmp.eq.s32.totalorder %s29, 0
    %p285 = por %p283, %p284
    %p286 = scmp.ne.s32.totalorder %s278, %s280
    %p287 = scmp.eq.s32.totalorder %s34, 1
    %p288 = por %p286, %p287
    %p289 = scmp.ne.s32.totalorder %s280, %s281
    %p290 = scmp.eq.s32.totalorder %s34, 0
    %p291 = por %p289, %p290
    %p292 = scmp.ne.s32.totalorder %s280, %s281
    %p293 = scmp.eq.s32.totalorder %s35, 1
    %p294 = por %p292, %p293
    %p296 = scmp.ne.s32.totalorder %s281, %s295
    %p297 = scmp.eq.s32.totalorder %s35, 0
    %p298 = por %p296, %p297
    %s300 = sadd.s32 %s299, 1
    %p303 = scmp.eq.s32.totalorder %s29, 1
    %p304 = scmp.ne.s32.totalorder %s299, %s301
    %p305 = scmp.eq.s32.totalorder %s29, 0
    %p306 = por %p304, %p305
    %p307 = scmp.ne.s32.totalorder %s299, %s301
    %p308 = scmp.eq.s32.totalorder %s34, 1
    %p309 = por %p307, %p308
    %p310 = scmp.ne.s32.totalorder %s301, %s302
    %p311 = scmp.eq.s32.totalorder %s34, 0
    %p312 = por %p310, %p311
    %p313 = scmp.ne.s32.totalorder %s301, %s302
    %p314 = scmp.eq.s32.totalorder %s35, 1
    %p315 = por %p313, %p314
    %p317 = scmp.ne.s32.totalorder %s302, %s316
    %p318 = scmp.eq.s32.totalorder %s35, 0
    %p319 = por %p317, %p318
    %s321 = sadd.s32 %s320, 1
    %p324 = scmp.eq.s32.totalorder %s29, 1
    %p325 = scmp.ne.s32.totalorder %s320, %s322
    %p326 = scmp.eq.s32.totalorder %s29, 0
    %p327 = por %p325, %p326
    %p328 = scmp.ne.s32.totalorder %s320, %s322
    %p329 = scmp.eq.s32.totalorder %s34, 1
    %p330 = por %p328, %p329
    %p331 = scmp.ne.s32.totalorder %s322, %s323
    %p332 = scmp.eq.s32.totalorder %s34, 0
    %p333 = por %p331, %p332
    %p334 = scmp.ne.s32.totalorder %s322, %s323
    %p335 = scmp.eq.s32.totalorder %s35, 1
    %p336 = por %p334, %p335
    %p338 = scmp.ne.s32.totalorder %s323, %s337
    %p339 = scmp.eq.s32.totalorder %s35, 0
    %p340 = por %p338, %p339
    %s342 = sadd.s32 %s341, 1
    %p345 = scmp.eq.s32.totalorder %s29, 1
    %p346 = scmp.ne.s32.totalorder %s341, %s343
    %p347 = scmp.eq.s32.totalorder %s29, 0
    %p348 = por %p346, %p347
    %p349 = scmp.ne.s32.totalorder %s341, %s343
    %p350 = scmp.eq.s32.totalorder %s34, 1
    %p351 = por %p349, %p350
    %p352 = scmp.ne.s32.totalorder %s343, %s344
    %p353 = scmp.eq.s32.totalorder %s34, 0
    %p354 = por %p352, %p353
    %p355 = scmp.ne.s32.totalorder %s343, %s344
    %p356 = scmp.eq.s32.totalorder %s35, 1
    %p357 = por %p355, %p356
    %p359 = scmp.ne.s32.totalorder %s344, %s358
    %p360 = scmp.eq.s32.totalorder %s35, 0
    %p361 = por %p359, %p360
    %s363 = sadd.s32 %s362, 1
    %p366 = scmp.eq.s32.totalorder %s29, 1
    %p367 = scmp.ne.s32.totalorder %s362, %s364
    %p368 = scmp.eq.s32.totalorder %s29, 0
    %p369 = por %p367, %p368
    %p370 = scmp.ne.s32.totalorder %s362, %s364
    %p371 = scmp.eq.s32.totalorder %s34, 1
    %p372 = por %p370, %p371
    %p373 = scmp.ne.s32.totalorder %s364, %s365
    %p374 = scmp.eq.s32.totalorder %s34, 0
    %p375 = por %p373, %p374
    %p376 = scmp.ne.s32.totalorder %s364, %s365
    %p377 = scmp.eq.s32.totalorder %s35, 1
    %p378 = por %p376, %p377
    %p380 = scmp.ne.s32.totalorder %s365, %s379
    %p381 = scmp.eq.s32.totalorder %s35, 0
    %p382 = por %p380, %p381
    %s384 = sadd.s32 %s383, 1
    %p387 = scmp.eq.s32.totalorder %s29, 1
    %p388 = scmp.ne.s32.totalorder %s383, %s385
    %p389 = scmp.eq.s32.totalorder %s29, 0
    %p390 = por %p388, %p389
    %p391 = scmp.ne.s32.totalorder %s383, %s385
    %p392 = scmp.eq.s32.totalorder %s34, 1
    %p393 = por %p391, %p392
    %p394 = scmp.ne.s32.totalorder %s385, %s386
    %p395 = scmp.eq.s32.totalorder %s34, 0
    %p396 = por %p394, %p395
    %p397 = scmp.ne.s32.totalorder %s385, %s386
    %p398 = scmp.eq.s32.totalorder %s35, 1
    %p399 = por %p397, %p398
    %p401 = scmp.ne.s32.totalorder %s386, %s400
    %p402 = scmp.eq.s32.totalorder %s35, 0
    %p403 = por %p401, %p402
    %s405 = sadd.s32 %s404, 1
    %p408 = scmp.eq.s32.totalorder %s29, 1
    %p409 = scmp.ne.s32.totalorder %s404, %s406
    %p410 = scmp.eq.s32.totalorder %s29, 0
    %p411 = por %p409, %p410
    %p412 = scmp.ne.s32.totalorder %s404, %s406
    %p413 = scmp.eq.s32.totalorder %s34, 1
    %p414 = por %p412, %p413
    %p415 = scmp.ne.s32.totalorder %s406, %s407
    %p416 = scmp.eq.s32.totalorder %s34, 0
    %p417 = por %p415, %p416
    %p418 = scmp.ne.s32.totalorder %s406, %s407
    %p419 = scmp.eq.s32.totalorder %s35, 1
    %p420 = por %p418, %p419
    %p422 = scmp.ne.s32.totalorder %s407, %s421
    %p423 = scmp.eq.s32.totalorder %s35, 0
    %p424 = por %p422, %p423
    %s426 = sadd.s32 %s425, 1
    %p429 = scmp.eq.s32.totalorder %s29, 1
    %p430 = scmp.ne.s32.totalorder %s425, %s427
    %p431 = scmp.eq.s32.totalorder %s29, 0
    %p432 = por %p430, %p431
    %p433 = scmp.ne.s32.totalorder %s425, %s427
    %p434 = scmp.eq.s32.totalorder %s34, 1
    %p435 = por %p433, %p434
    %p436 = scmp.ne.s32.totalorder %s427, %s428
    %p437 = scmp.eq.s32.totalorder %s34, 0
    %p438 = por %p436, %p437
    %p439 = scmp.ne.s32.totalorder %s427, %s428
    %p440 = scmp.eq.s32.totalorder %s35, 1
    %p441 = por %p439, %p440
    %p443 = scmp.ne.s32.totalorder %s428, %s442
    %p444 = scmp.eq.s32.totalorder %s35, 0
    %p445 = por %p443, %p444
    %s447 = sadd.s32 %s446, 1
    %p450 = scmp.eq.s32.totalorder %s29, 1
    %p451 = scmp.ne.s32.totalorder %s446, %s448
    %p452 = scmp.eq.s32.totalorder %s29, 0
    %p453 = por %p451, %p452
    %p454 = scmp.ne.s32.totalorder %s446, %s448
    %p455 = scmp.eq.s32.totalorder %s34, 1
    %p456 = por %p454, %p455
    %p457 = scmp.ne.s32.totalorder %s448, %s449
    %p458 = scmp.eq.s32.totalorder %s34, 0
    %p459 = por %p457, %p458
    %p460 = scmp.ne.s32.totalorder %s448, %s449
    %p461 = scmp.eq.s32.totalorder %s35, 1
    %p462 = por %p460, %p461
    %p464 = scmp.ne.s32.totalorder %s449, %s463
    %p465 = scmp.eq.s32.totalorder %s35, 0
    %p466 = por %p464, %p465
    %s468 = sadd.s32 %s467, 1
    %p471 = scmp.eq.s32.totalorder %s29, 1
    %p472 = scmp.ne.s32.totalorder %s467, %s469
    %p473 = scmp.eq.s32.totalorder %s29, 0
    %p474 = por %p472, %p473
    %p475 = scmp.ne.s32.totalorder %s467, %s469
    %p476 = scmp.eq.s32.totalorder %s34, 1
    %p477 = por %p475, %p476
    %p478 = scmp.ne.s32.totalorder %s469, %s470
    %p479 = scmp.eq.s32.totalorder %s34, 0
    %p480 = por %p478, %p479
    %p481 = scmp.ne.s32.totalorder %s469, %s470
    %p482 = scmp.eq.s32.totalorder %s35, 1
    %p483 = por %p481, %p482
    %p485 = scmp.ne.s32.totalorder %s470, %s484
    %p486 = scmp.eq.s32.totalorder %s35, 0
    %p487 = por %p485, %p486
    %s489 = sadd.s32 %s488, 1
    %p492 = scmp.eq.s32.totalorder %s29, 1
    %p493 = scmp.ne.s32.totalorder %s488, %s490
    %p494 = scmp.eq.s32.totalorder %s29, 0
    %p495 = por %p493, %p494
    %p496 = scmp.ne.s32.totalorder %s488, %s490
    %p497 = scmp.eq.s32.totalorder %s34, 1
    %p498 = por %p496, %p497
    %p499 = scmp.ne.s32.totalorder %s490, %s491
    %p500 = scmp.eq.s32.totalorder %s34, 0
    %p501 = por %p499, %p500
    %p502 = scmp.ne.s32.totalorder %s490, %s491
    %p503 = scmp.eq.s32.totalorder %s35, 1
    %p504 = por %p502, %p503
    %p506 = scmp.ne.s32.totalorder %s491, %s505
    %p507 = scmp.eq.s32.totalorder %s35, 0
    %p508 = por %p506, %p507
    %s510 = sadd.s32 %s509, 1
    %p513 = scmp.eq.s32.totalorder %s29, 1
    %p514 = scmp.ne.s32.totalorder %s509, %s511
    %p515 = scmp.eq.s32.totalorder %s29, 0
    %p516 = por %p514, %p515
    %p517 = scmp.ne.s32.totalorder %s509, %s511
    %p518 = scmp.eq.s32.totalorder %s34, 1
    %p519 = por %p517, %p518
    %p520 = scmp.ne.s32.totalorder %s511, %s512
    %p521 = scmp.eq.s32.totalorder %s34, 0
    %p522 = por %p520, %p521
    %p523 = scmp.ne.s32.totalorder %s511, %s512
    %p524 = scmp.eq.s32.totalorder %s35, 1
    %p525 = por %p523, %p524
    %p527 = scmp.ne.s32.totalorder %s512, %s526
    %p528 = scmp.eq.s32.totalorder %s35, 0
    %p529 = por %p527, %p528
    %s530 = ssub.s32 %s29, %s36
    %p531 = scmp.eq.s32.totalorder %s530, 0
    %s533 = sadd.s32 %s532, 1
    %s534 = scalar_select %p531, %s532, %s533
    %p537 = pneg %p531
    %p538 = scmp.eq.s32.totalorder %s29, 1
    %p539 = por %p537, %p538
    %p540 = scmp.ne.s32.totalorder %s532, %s535
    %p541 = scmp.eq.s32.totalorder %s29, 0
    %p542 = por %p540, %p541
    %p543 = scmp.ne.s32.totalorder %s532, %s535
    %p544 = scmp.eq.s32.totalorder %s34, 1
    %p545 = por %p543, %p544
    %p546 = scmp.ne.s32.totalorder %s535, %s536
    %p547 = scmp.eq.s32.totalorder %s34, 0
    %p548 = por %p546, %p547
    %p549 = scmp.ne.s32.totalorder %s535, %s536
    %p550 = scmp.eq.s32.totalorder %s35, 1
    %p551 = por %p549, %p550
    %p553 = scmp.ne.s32.totalorder %s536, %s552
    %p554 = scmp.eq.s32.totalorder %s35, 0
    %p555 = por %p553, %p554
    %p556 = scmp.le.s32.totalorder 1, %s29
    %p557 = scmp.lt.s32.totalorder %s29, 3
    %p558 = pnand %p556, %p557
    %p559 = pneg %p558
    // Predicated region
    $region9: #{default_transformer_forward.7} parent=5 // pred_check
      _
    $region10: #{default_transformer_forward.7} parent=5 // pred_check_branch
      %561 = sbr.rel (%p558) target = $region12
    $region11: #{default_transformer_forward.7} parent=5 // pred_region
      %s562 = ssub.s32 %s29, 1
      // Predicated region
      $region13: #{default_transformer_forward.7} parent=11 // pred_check
        %p563 = pneg %p102
      $region14: #{default_transformer_forward.7} parent=11 // pred_check_branch
        %565 = sbr.rel (%p563) target = $region16
      $region15: #{default_transformer_forward.7} parent=11 // pred_region
        _
      $region16: #{default_transformer_forward.7} parent=11 // pred_fallthru
        _
      // Predicated region
      $region17: #{default_transformer_forward.7} parent=11 // pred_check
        %p566 = pneg %p123
      $region18: #{default_transformer_forward.7} parent=11 // pred_check_branch
        %568 = sbr.rel (%p566) target = $region20
      $region19: #{default_transformer_forward.7} parent=11 // pred_region
        _
      $region20: #{default_transformer_forward.7} parent=11 // pred_fallthru
        _
      // Predicated region
      $region21: #{default_transformer_forward.7} parent=11 // pred_check
        %p569 = pneg %p144
      $region22: #{default_transformer_forward.7} parent=11 // pred_check_branch
        %571 = sbr.rel (%p569) target = $region24
      $region23: #{default_transformer_forward.7} parent=11 // pred_region
        _
      $region24: #{default_transformer_forward.7} parent=11 // pred_fallthru
        _
      // Predicated region
      $region25: #{default_transformer_forward.7} parent=11 // pred_check
        %p572 = pneg %p165
      $region26: #{default_transformer_forward.7} parent=11 // pred_check_branch
        %574 = sbr.rel (%p572) target = $region28
      $region27: #{default_transformer_forward.7} parent=11 // pred_region
        _
      $region28: #{default_transformer_forward.7} parent=11 // pred_fallthru
        _
      // Predicated region
      $region29: #{default_transformer_forward.7} parent=11 // pred_check
        %p575 = pneg %p186
      $region30: #{default_transformer_forward.7} parent=11 // pred_check_branch
        %577 = sbr.rel (%p575) target = $region32
      $region31: #{default_transformer_forward.7} parent=11 // pred_region
        _
      $region32: #{default_transformer_forward.7} parent=11 // pred_fallthru
        _
      // Predicated region
      $region33: #{default_transformer_forward.7} parent=11 // pred_check
        %p578 = pneg %p207
      $region34: #{default_transformer_forward.7} parent=11 // pred_check_branch
        %580 = sbr.rel (%p578) target = $region36
      $region35: #{default_transformer_forward.7} parent=11 // pred_region
        _
      $region36: #{default_transformer_forward.7} parent=11 // pred_fallthru
        _
      // Predicated region
      $region37: #{default_transformer_forward.7} parent=11 // pred_check
        %p581 = pneg %p228
      $region38: #{default_transformer_forward.7} parent=11 // pred_check_branch
        %583 = sbr.rel (%p581) target = $region40
      $region39: #{default_transformer_forward.7} parent=11 // pred_region
        _
      $region40: #{default_transformer_forward.7} parent=11 // pred_fallthru
        _
      // Predicated region
      $region41: #{default_transformer_forward.7} parent=11 // pred_check
        %p584 = pneg %p249
      $region42: #{default_transformer_forward.7} parent=11 // pred_check_branch
        %586 = sbr.rel (%p584) target = $region44
      $region43: #{default_transformer_forward.7} parent=11 // pred_region
        _
      $region44: #{default_transformer_forward.7} parent=11 // pred_fallthru
        _
      // Predicated region
      $region45: #{default_transformer_forward.7} parent=11 // pred_check
        %p587 = pneg %p270
      $region46: #{default_transformer_forward.7} parent=11 // pred_check_branch
        %589 = sbr.rel (%p587) target = $region48
      $region47: #{default_transformer_forward.7} parent=11 // pred_region
        _
      $region48: #{default_transformer_forward.7} parent=11 // pred_fallthru
        _
      // Predicated region
      $region49: #{default_transformer_forward.7} parent=11 // pred_check
        %p590 = pneg %p291
      $region50: #{default_transformer_forward.7} parent=11 // pred_check_branch
        %592 = sbr.rel (%p590) target = $region52
      $region51: #{default_transformer_forward.7} parent=11 // pred_region
        _
      $region52: #{default_transformer_forward.7} parent=11 // pred_fallthru
        _
      // Predicated region
      $region53: #{default_transformer_forward.7} parent=11 // pred_check
        %p593 = pneg %p312
      $region54: #{default_transformer_forward.7} parent=11 // pred_check_branch
        %595 = sbr.rel (%p593) target = $region56
      $region55: #{default_transformer_forward.7} parent=11 // pred_region
        _
      $region56: #{default_transformer_forward.7} parent=11 // pred_fallthru
        _
      // Predicated region
      $region57: #{default_transformer_forward.7} parent=11 // pred_check
        %p596 = pneg %p333
      $region58: #{default_transformer_forward.7} parent=11 // pred_check_branch
        %598 = sbr.rel (%p596) target = $region60
      $region59: #{default_transformer_forward.7} parent=11 // pred_region
        _
      $region60: #{default_transformer_forward.7} parent=11 // pred_fallthru
        _
      // Predicated region
      $region61: #{default_transformer_forward.7} parent=11 // pred_check
        %p599 = pneg %p354
      $region62: #{default_transformer_forward.7} parent=11 // pred_check_branch
        %601 = sbr.rel (%p599) target = $region64
      $region63: #{default_transformer_forward.7} parent=11 // pred_region
        _
      $region64: #{default_transformer_forward.7} parent=11 // pred_fallthru
        _
      // Predicated region
      $region65: #{default_transformer_forward.7} parent=11 // pred_check
        %p602 = pneg %p375
      $region66: #{default_transformer_forward.7} parent=11 // pred_check_branch
        %604 = sbr.rel (%p602) target = $region68
      $region67: #{default_transformer_forward.7} parent=11 // pred_region
        _
      $region68: #{default_transformer_forward.7} parent=11 // pred_fallthru
        _
      // Predicated region
      $region69: #{default_transformer_forward.7} parent=11 // pred_check
        %p605 = pneg %p396
      $region70: #{default_transformer_forward.7} parent=11 // pred_check_branch
        %607 = sbr.rel (%p605) target = $region72
      $region71: #{default_transformer_forward.7} parent=11 // pred_region
        _
      $region72: #{default_transformer_forward.7} parent=11 // pred_fallthru
        _
      // Predicated region
      $region73: #{default_transformer_forward.7} parent=11 // pred_check
        %p608 = pneg %p417
      $region74: #{default_transformer_forward.7} parent=11 // pred_check_branch
        %610 = sbr.rel (%p608) target = $region76
      $region75: #{default_transformer_forward.7} parent=11 // pred_region
        _
      $region76: #{default_transformer_forward.7} parent=11 // pred_fallthru
        _
      // Predicated region
      $region77: #{default_transformer_forward.7} parent=11 // pred_check
        %p611 = pneg %p438
      $region78: #{default_transformer_forward.7} parent=11 // pred_check_branch
        %613 = sbr.rel (%p611) target = $region80
      $region79: #{default_transformer_forward.7} parent=11 // pred_region
        _
      $region80: #{default_transformer_forward.7} parent=11 // pred_fallthru
        _
      // Predicated region
      $region81: #{default_transformer_forward.7} parent=11 // pred_check
        %p614 = pneg %p459
      $region82: #{default_transformer_forward.7} parent=11 // pred_check_branch
        %616 = sbr.rel (%p614) target = $region84
      $region83: #{default_transformer_forward.7} parent=11 // pred_region
        _
      $region84: #{default_transformer_forward.7} parent=11 // pred_fallthru
        _
      // Predicated region
      $region85: #{default_transformer_forward.7} parent=11 // pred_check
        %p617 = pneg %p480
      $region86: #{default_transformer_forward.7} parent=11 // pred_check_branch
        %619 = sbr.rel (%p617) target = $region88
      $region87: #{default_transformer_forward.7} parent=11 // pred_region
        _
      $region88: #{default_transformer_forward.7} parent=11 // pred_fallthru
        _
      // Predicated region
      $region89: #{default_transformer_forward.7} parent=11 // pred_check
        %p620 = pneg %p501
      $region90: #{default_transformer_forward.7} parent=11 // pred_check_branch
        %622 = sbr.rel (%p620) target = $region92
      $region91: #{default_transformer_forward.7} parent=11 // pred_region
        _
      $region92: #{default_transformer_forward.7} parent=11 // pred_fallthru
        _
      // Predicated region
      $region93: #{default_transformer_forward.7} parent=11 // pred_check
        %p623 = pneg %p522
      $region94: #{default_transformer_forward.7} parent=11 // pred_check_branch
        %625 = sbr.rel (%p623) target = $region96
      $region95: #{default_transformer_forward.7} parent=11 // pred_region
        _
      $region96: #{default_transformer_forward.7} parent=11 // pred_fallthru
        _
    $region12: #{default_transformer_forward.7} parent=5 // pred_fallthru
      _
    %p626 = scmp.lt.s32.totalorder %s29, 2
    // Predicated region
    $region97: #{default_transformer_forward.7} parent=5 // pred_check
      %p627 = pneg %p626
    $region98: #{default_transformer_forward.7} parent=5 // pred_check_branch
      %629 = sbr.rel (%p627) target = $region100
    $region99: #{default_transformer_forward.7} parent=5 // pred_region
      // Predicated region
      $region101: #{default_transformer_forward.7} parent=99 // pred_check
        %p630 = pneg %p49
      $region102: #{default_transformer_forward.7} parent=99 // pred_check_branch
        %632 = sbr.rel (%p630) target = $region104
      $region103: #{default_transformer_forward.7} parent=99 // pred_region
        %p633 = scmp.lt.s32.totalorder %s29, 1
        %s634 = scalar_select %p633, %s29, 1
        %s635 = smul.addr %s634, 4
        %s636 = scalar_lea.vmem %s0, %s635
      $region104: #{default_transformer_forward.7} parent=99 // pred_fallthru
        _
      // Predicated region
      $region105: #{default_transformer_forward.7} parent=99 // pred_check
        %p637 = pneg %p75
      $region106: #{default_transformer_forward.7} parent=99 // pred_check_branch
        %639 = sbr.rel (%p637) target = $region108
      $region107: #{default_transformer_forward.7} parent=99 // pred_region
        %p640 = scmp.lt.s32.totalorder %s29, 1
        %s641 = scalar_select %p640, %s29, 1
        %s642 = smul.addr %s641, 4
        %s643 = scalar_lea.vmem %s1, %s642
      $region108: #{default_transformer_forward.7} parent=99 // pred_fallthru
        _
    $region100: #{default_transformer_forward.7} parent=5 // pred_fallthru
      _
    %p644 = scmp.le.s32.totalorder 1, %s29
    %p645 = scmp.lt.s32.totalorder %s29, 3
    %p646 = pnand %p644, %p645
    %p647 = pneg %p646
    // Predicated region
    $region109: #{default_transformer_forward.7} parent=5 // pred_check
      _
    $region110: #{default_transformer_forward.7} parent=5 // pred_check_branch
      %649 = sbr.rel (%p646) target = $region112
    $region111: #{default_transformer_forward.7} parent=5 // pred_region
      %s650 = ssub.s32 %s29, 1
      %p651 = scmp.lt.s32.totalorder %s34, 1
      %s652 = scalar_select %p651, %s34, 1
      %s653 = smul.addr %s652, 4
      %s654 = scalar_lea.vmem %s0, %s653
      %p655 = pneg %p55
      %p656 = pneg %p52
      %p657 = scmp.lt.s32.totalorder %s34, 1
      %s658 = scalar_select %p657, %s34, 1
      %s659 = smul.addr %s658, 4
      %s660 = scalar_lea.vmem %s1, %s659
      %p661 = pneg %p81
      %p662 = pneg %p78
      %p663 = pneg %p102
      %p664 = pneg %p99
      %p665 = pneg %p123
      %p666 = pneg %p120
      %p667 = pneg %p144
      %p668 = pneg %p141
      %p669 = pneg %p165
      %p670 = pneg %p162
      %p671 = pneg %p186
      %p672 = pneg %p183
      %p673 = pneg %p207
      %p674 = pneg %p204
      %p675 = pneg %p228
      %p676 = pneg %p225
      %p677 = pneg %p249
      %p678 = pneg %p246
      %p679 = pneg %p270
      %p680 = pneg %p267
      %p681 = pneg %p291
      %p682 = pneg %p288
      %p683 = pneg %p312
      %p684 = pneg %p309
      %p685 = pneg %p333
      %p686 = pneg %p330
      %p687 = pneg %p354
      %p688 = pneg %p351
      %p689 = pneg %p375
      %p690 = pneg %p372
      %p691 = pneg %p396
      %p692 = pneg %p393
      %p693 = pneg %p417
      %p694 = pneg %p414
      %p695 = pneg %p438
      %p696 = pneg %p435
      %p697 = pneg %p459
      %p698 = pneg %p456
      %p699 = pneg %p480
      %p700 = pneg %p477
      %p701 = pneg %p501
      %p702 = pneg %p498
      %p703 = pneg %p522
      %p704 = pneg %p519
      %p705 = pneg %p548
      %p706 = pneg %p545
      %p707 = scmp.lt.s32.totalorder %s34, 1
      %s708 = scalar_select %p707, %s34, 1
      %s709 = smul.addr %s708, 4
      %s710 = scalar_lea.vmem %s23, %s709
      %p711 = scmp.lt.s32.totalorder %s34, 1
      %s712 = scalar_select %p711, %s34, 1
      %s713 = smul.addr %s712, 4
      %s714 = scalar_lea.vmem %s0, %s713
      %p715 = scmp.lt.s32.totalorder %s34, 1
      %s716 = scalar_select %p715, %s34, 1
      %s717 = smul.addr %s716, 4
      %s718 = scalar_lea.vmem %s1, %s717
      %p719 = scmp.lt.s32.totalorder %s34, 1
      %s720 = scalar_select %p719, %s34, 1
      %s721 = smul.addr %s720, 4
      %s722 = scalar_lea.vmem %s23, %s721
      %v724 = vld [vmem:[%s714] sm:$0xf]
      %v725 = vunpack.c.l.bf16 %v724
      %v726 = vld [vmem:[%s718] sm:$0xf]
      %v727 = vld [vmem:[%s3] sm:$0xf]
      %v728 = vld [vmem:[%s3 + $0x4] sm:$0xf]
      %v729 = vld [vmem:[%s3 + $0x8] sm:$0xf]
      %v730 = vld [vmem:[%s3 + $0xc] sm:$0xf]
      %v731 = vld [vmem:[%s4] sm:$0x1]
      %v733 = vlaneseq
      %v734 = vshrl.u32 %v733, 7
      %v735 = vsub.s32 0, %v734
      %v736 = vrot.slane %v731, %v735
      %v742 = vunpack.c.l.b16 %v727
      %v743 = vunpack.c.l.b16 %v728
      %v744 = vunpack.c.l.b16 %v729
      %v745 = vunpack.c.l.b16 %v730
      %v746 = vpack.c.b16 %v743, %v742
      %v747 = vpack.c.b16 %v745, %v744
      %vm750 = vcmask 261120
      %v752 = vsel %vm750, %v724, 0
      %754 = vmatprep.subr.bf16.mxu0 0
      %755 = vmatpush1.bf16.msra.mxu0 %v746
      %756 = vmatprep.subr.bf16.mxu0 0
      %757 = vmatpush1.bf16.msra.mxu0 %v747
      %758 = vmatprep.subr.bf16.mxu0 0
      %759 = vmatpush1.bf16.msra.mxu0 0
      %760 = vmatprep.subr.bf16.mxu0 0
      %761 = vmatpush1.bf16.msra.mxu0 0
      %762 = vmatprep.subr.bf16.mxu0 0
      %763 = vmatpush1.bf16.msra.mxu0 0
      %764 = vmatprep.subr.bf16.mxu0 0
      %765 = vmatpush1.bf16.msra.mxu0 0
      %766 = vmatprep.subr.bf16.mxu0 0
      %767 = vmatpush1.bf16.msra.mxu0 0
      %768 = vmatprep.subr.bf16.mxu0 0
      %769 = vmatpush1.bf16.msra.mxu0 0
      %770 = vmatprep.subr.bf16.mxu0 0
      %771 = vmatpush1.bf16.msra.mxu0 0
      %772 = vmatprep.subr.bf16.mxu0 0
      %773 = vmatpush1.bf16.msra.mxu0 0
      %774 = vmatprep.subr.bf16.mxu0 0
      %775 = vmatpush1.bf16.msra.mxu0 0
      %776 = vmatprep.subr.bf16.mxu0 0
      %777 = vmatpush1.bf16.msra.mxu0 0
      %778 = vmatprep.subr.bf16.mxu0 0
      %779 = vmatpush1.bf16.msra.mxu0 0
      %780 = vmatprep.subr.bf16.mxu0 0
      %781 = vmatpush1.bf16.msra.mxu0 0
      %782 = vmatprep.subr.bf16.mxu0 0
      %783 = vmatpush1.bf16.msra.mxu0 0
      %784 = vmatprep.subr.bf16.mxu0 0
      %785 = vmatpush1.bf16.msra.mxu0 0
      %786 = vmatprep.mubr.bf16.mxu0 0
      %787 = vmatmul.mubr.bf16.gmra.mrb[0].mxu0 %v752
      %v788 = vpop.f32.mrb[0].mxu0
      %v789 = vadd.f32 %v736, %v788
      %v790 = vpop.f32.mrb[0].mxu0
      %v791 = vpop.f32.mrb[0].mxu0
      %v792 = vpop.f32.mrb[0].mxu0
      %793 = vdwg.mxu0
      %v794 = vld [vmem:[%s5] sm:$0xf]
      %v795 = vld [vmem:[%s5 + $0x4] sm:$0xf]
      %v796 = vld [vmem:[%s5 + $0x8] sm:$0xf]
      %v797 = vld [vmem:[%s5 + $0xc] sm:$0xf]
      %v798 = vld [vmem:[%s2] sm:$0xff]
      %v799 = vpack.c.bf16 %v789, %v789
      %801 = vrot.lane.b32.xlu0 %v799, 96
      %v802 = vpop.permute.xlu0 %801
      %vm803 = vcmask 64512
      %v805 = vsel %vm803, %v799, 0
      %v808 = vsel %vm803, %v802, 0
      %810 = vmatprep.subr.bf16.mxu0 0
      %811 = vmatpush1.bf16.xpose.msra.mxu0 %v808
      %812 = vmatprep.subr.bf16.mxu0 0
      %813 = vmatpush1.bf16.xpose.msra.mxu0 0
      %814 = vmatprep.subr.bf16.mxu0 0
      %815 = vmatpush1.bf16.xpose.msra.mxu0 0
      %816 = vmatprep.subr.bf16.mxu0 0
      %817 = vmatpush1.bf16.xpose.msra.mxu0 0
      %818 = vmatprep.subr.bf16.mxu0 0
      %819 = vmatpush1.bf16.xpose.msra.mxu0 0
      %820 = vmatprep.subr.bf16.mxu0 0
      %821 = vmatpush1.bf16.xpose.msra.mxu0 0
      %822 = vmatprep.subr.bf16.mxu0 0
      %823 = vmatpush1.bf16.xpose.msra.mxu0 0
      %824 = vmatprep.subr.bf16.mxu0 0
      %825 = vmatpush1.bf16.xpose.msra.mxu0 0
      %826 = vmatprep.subr.bf16.mxu0 0
      %827 = vmatpush1.bf16.xpose.msra.mxu0 0
      %828 = vmatprep.subr.bf16.mxu0 0
      %829 = vmatpush1.bf16.xpose.msra.mxu0 0
      %830 = vmatprep.subr.bf16.mxu0 0
      %831 = vmatpush1.bf16.xpose.msra.mxu0 0
      %832 = vmatprep.subr.bf16.mxu0 0
      %833 = vmatpush1.bf16.xpose.msra.mxu0 0
      %834 = vmatprep.subr.bf16.mxu0 0
      %835 = vmatpush1.bf16.xpose.msra.mxu0 0
      %836 = vmatprep.subr.bf16.mxu0 0
      %837 = vmatpush1.bf16.xpose.msra.mxu0 0
      %838 = vmatprep.subr.bf16.mxu0 0
      %839 = vmatpush1.bf16.xpose.msra.mxu0 0
      %840 = vmatprep.subr.bf16.mxu0 0
      %841 = vmatpush1.bf16.xpose.msra.mxu0 0
      %842 = vmatprep.mubr.bf16.mxu0 0
      %843 = vmatmul.mubr.bf16.gmra.mrb[0].mxu0 %v805
      %v844 = vpop.f32.mrb[0].mxu0
      %v845 = vadd.f32 0.0, %v844
      %v846 = vpop.f32.mrb[0].mxu0
      %v847 = vpop.f32.mrb[0].mxu0
      %v848 = vpop.f32.mrb[0].mxu0
      %849 = vdwg.mxu0
      %v850 = vmul.f32 %v845, 0.35355338
      %v851 = vadd.f32 %v850, %v798
      %v852 = vsel %vm803, %v851, -inf
      %853 = vmax.xlane.f32.xlu0 %v852
      %v854 = vpop.xlane.xlu0 %853
      %v855 = vsub.f32 %v851, %v854
      %v856 = vmul.f32 %v855, 1.442695
      %v857 = vpow.pop %v856
      %v858 = vsel %vm803, %v857, 0.0
      %859 = vadd.xlane.f32.xlu0 %v858
      %v860 = vpop.xlane.xlu0 %859
      %v861 = vrcp.pop %v860
      %v862 = vmul.f32 %v857, %v861
      %v863 = vpack.c.bf16 %v862, %v862
      %864 = vrot.lane.b32.xlu0 %v799, 64
      %v865 = vpop.permute.xlu0 %864
      %v867 = vsel %vm803, %v863, 0
      %vm869 = vcmask 1043456
      %v871 = vsel %vm869, %v865, 0
      %873 = vmatprep.subr.bf16.mxu0 0
      %874 = vmatpush1.bf16.msra.mxu0 %v871
      %875 = vmatprep.subr.bf16.mxu0 0
      %876 = vmatpush1.bf16.msra.mxu0 0
      %877 = vmatprep.subr.bf16.mxu0 0
      %878 = vmatpush1.bf16.msra.mxu0 0
      %879 = vmatprep.subr.bf16.mxu0 0
      %880 = vmatpush1.bf16.msra.mxu0 0
      %881 = vmatprep.subr.bf16.mxu0 0
      %882 = vmatpush1.bf16.msra.mxu0 0
      %883 = vmatprep.subr.bf16.mxu0 0
      %884 = vmatpush1.bf16.msra.mxu0 0
      %885 = vmatprep.subr.bf16.mxu0 0
      %886 = vmatpush1.bf16.msra.mxu0 0
      %887 = vmatprep.subr.bf16.mxu0 0
      %888 = vmatpush1.bf16.msra.mxu0 0
      %889 = vmatprep.subr.bf16.mxu0 0
      %890 = vmatpush1.bf16.msra.mxu0 0
      %891 = vmatprep.subr.bf16.mxu0 0
      %892 = vmatpush1.bf16.msra.mxu0 0
      %893 = vmatprep.subr.bf16.mxu0 0
      %894 = vmatpush1.bf16.msra.mxu0 0
      %895 = vmatprep.subr.bf16.mxu0 0
      %896 = vmatpush1.bf16.msra.mxu0 0
      %897 = vmatprep.subr.bf16.mxu0 0
      %898 = vmatpush1.bf16.msra.mxu0 0
      %899 = vmatprep.subr.bf16.mxu0 0
      %900 = vmatpush1.bf16.msra.mxu0 0
      %901 = vmatprep.subr.bf16.mxu0 0
      %902 = vmatpush1.bf16.msra.mxu0 0
      %903 = vmatprep.subr.bf16.mxu0 0
      %904 = vmatpush1.bf16.msra.mxu0 0
      %905 = vmatprep.mubr.bf16.mxu0 0
      %906 = vmatmul.mubr.bf16.gmra.mrb[0].mxu0 %v867
      %v907 = vpop.f32.mrb[0].mxu0
      %v908 = vadd.f32 0.0, %v907
      %v909 = vpop.f32.mrb[0].mxu0
      %v910 = vpop.f32.mrb[0].mxu0
      %v911 = vpop.f32.mrb[0].mxu0
      %912 = vdwg.mxu0
      %913 = vrot.lane.b32.xlu0 %v799, 120
      %v914 = vpop.permute.xlu0 %913
      %915 = vrot.lane.b32.xlu0 %v799, 88
      %v916 = vpop.permute.xlu0 %915
      %v918 = vsel %vm803, %v914, 0
      %v921 = vsel %vm803, %v916, 0
      %923 = vmatprep.subr.bf16.mxu0 0
      %924 = vmatpush1.bf16.xpose.msra.mxu0 %v921
      %925 = vmatprep.subr.bf16.mxu0 0
      %926 = vmatpush1.bf16.xpose.msra.mxu0 0
      %927 = vmatprep.subr.bf16.mxu0 0
      %928 = vmatpush1.bf16.xpose.msra.mxu0 0
      %929 = vmatprep.subr.bf16.mxu0 0
      %930 = vmatpush1.bf16.xpose.msra.mxu0 0
      %931 = vmatprep.subr.bf16.mxu0 0
      %932 = vmatpush1.bf16.xpose.msra.mxu0 0
      %933 = vmatprep.subr.bf16.mxu0 0
      %934 = vmatpush1.bf16.xpose.msra.mxu0 0
      %935 = vmatprep.subr.bf16.mxu0 0
      %936 = vmatpush1.bf16.xpose.msra.mxu0 0
      %937 = vmatprep.subr.bf16.mxu0 0
      %938 = vmatpush1.bf16.xpose.msra.mxu0 0
      %939 = vmatprep.subr.bf16.mxu0 0
      %940 = vmatpush1.bf16.xpose.msra.mxu0 0
      %941 = vmatprep.subr.bf16.mxu0 0
      %942 = vmatpush1.bf16.xpose.msra.mxu0 0
      %943 = vmatprep.subr.bf16.mxu0 0
      %944 = vmatpush1.bf16.xpose.msra.mxu0 0
      %945 = vmatprep.subr.bf16.mxu0 0
      %946 = vmatpush1.bf16.xpose.msra.mxu0 0
      %947 = vmatprep.subr.bf16.mxu0 0
      %948 = vmatpush1.bf16.xpose.msra.mxu0 0
      %949 = vmatprep.subr.bf16.mxu0 0
      %950 = vmatpush1.bf16.xpose.msra.mxu0 0
      %951 = vmatprep.subr.bf16.mxu0 0
      %952 = vmatpush1.bf16.xpose.msra.mxu0 0
      %953 = vmatprep.subr.bf16.mxu0 0
      %954 = vmatpush1.bf16.xpose.msra.mxu0 0
      %955 = vmatprep.mubr.bf16.mxu0 0
      %956 = vmatmul.mubr.bf16.gmra.mrb[0].mxu0 %v918
      %v957 = vpop.f32.mrb[0].mxu0
      %v958 = vadd.f32 0.0, %v957
      %v959 = vpop.f32.mrb[0].mxu0
      %v960 = vpop.f32.mrb[0].mxu0
      %v961 = vpop.f32.mrb[0].mxu0
      %962 = vdwg.mxu0
      %v963 = vmul.f32 %v958, 0.35355338
      %v964 = vadd.f32 %v963, %v798
      %v965 = vsel %vm803, %v964, -inf
      %966 = vmax.xlane.f32.xlu0 %v965
      %v967 = vpop.xlane.xlu0 %966
      %v968 = vsub.f32 %v964, %v967
      %v969 = vmul.f32 %v968, 1.442695
      %v970 = vpow.pop %v969
      %v971 = vsel %vm803, %v970, 0.0
      %972 = vadd.xlane.f32.xlu0 %v971
      %v973 = vpop.xlane.xlu0 %972
      %v974 = vrcp.pop %v973
      %v975 = vmul.f32 %v970, %v974
      %v976 = vpack.c.bf16 %v975, %v975
      %977 = vrot.lane.b32.xlu0 %v799, 56
      %v978 = vpop.permute.xlu0 %977
      %v980 = vsel %vm803, %v976, 0
      %v983 = vsel %vm869, %v978, 0
      %985 = vmatprep.subr.bf16.mxu0 0
      %986 = vmatpush1.bf16.msra.mxu0 %v983
      %987 = vmatprep.subr.bf16.mxu0 0
      %988 = vmatpush1.bf16.msra.mxu0 0
      %989 = vmatprep.subr.bf16.mxu0 0
      %990 = vmatpush1.bf16.msra.mxu0 0
      %991 = vmatprep.subr.bf16.mxu0 0
      %992 = vmatpush1.bf16.msra.mxu0 0
      %993 = vmatprep.subr.bf16.mxu0 0
      %994 = vmatpush1.bf16.msra.mxu0 0
      %995 = vmatprep.subr.bf16.mxu0 0
      %996 = vmatpush1.bf16.msra.mxu0 0
      %997 = vmatprep.subr.bf16.mxu0 0
      %998 = vmatpush1.bf16.msra.mxu0 0
      %999 = vmatprep.subr.bf16.mxu0 0
      %1000 = vmatpush1.bf16.msra.mxu0 0
      %1001 = vmatprep.subr.bf16.mxu0 0
      %1002 = vmatpush1.bf16.msra.mxu0 0
      %1003 = vmatprep.subr.bf16.mxu0 0
      %1004 = vmatpush1.bf16.msra.mxu0 0
      %1005 = vmatprep.subr.bf16.mxu0 0
      %1006 = vmatpush1.bf16.msra.mxu0 0
      %1007 = vmatprep.subr.bf16.mxu0 0
      %1008 = vmatpush1.bf16.msra.mxu0 0
      %1009 = vmatprep.subr.bf16.mxu0 0
      %1010 = vmatpush1.bf16.msra.mxu0 0
      %1011 = vmatprep.subr.bf16.mxu0 0
      %1012 = vmatpush1.bf16.msra.mxu0 0
      %1013 = vmatprep.subr.bf16.mxu0 0
      %1014 = vmatpush1.bf16.msra.mxu0 0
      %1015 = vmatprep.subr.bf16.mxu0 0
      %1016 = vmatpush1.bf16.msra.mxu0 0
      %1017 = vmatprep.mubr.bf16.mxu0 0
      %1018 = vmatmul.mubr.bf16.gmra.mrb[0].mxu0 %v980
      %v1019 = vpop.f32.mrb[0].mxu0
      %v1020 = vadd.f32 0.0, %v1019
      %v1021 = vpop.f32.mrb[0].mxu0
      %v1022 = vpop.f32.mrb[0].mxu0
      %v1023 = vpop.f32.mrb[0].mxu0
      %1024 = vdwg.mxu0
      %1025 = vrot.lane.b32.xlu0 %v799, 112
      %v1026 = vpop.permute.xlu0 %1025
      %1027 = vrot.lane.b32.xlu0 %v799, 80
      %v1028 = vpop.permute.xlu0 %1027
      %v1030 = vsel %vm803, %v1026, 0
      %v1033 = vsel %vm803, %v1028, 0
      %1035 = vmatprep.subr.bf16.mxu0 0
      %1036 = vmatpush1.bf16.xpose.msra.mxu0 %v1033
      %1037 = vmatprep.subr.bf16.mxu0 0
      %1038 = vmatpush1.bf16.xpose.msra.mxu0 0
      %1039 = vmatprep.subr.bf16.mxu0 0
      %1040 = vmatpush1.bf16.xpose.msra.mxu0 0
      %1041 = vmatprep.subr.bf16.mxu0 0
      %1042 = vmatpush1.bf16.xpose.msra.mxu0 0
      %1043 = vmatprep.subr.bf16.mxu0 0
      %1044 = vmatpush1.bf16.xpose.msra.mxu0 0
      %1045 = vmatprep.subr.bf16.mxu0 0
      %1046 = vmatpush1.bf16.xpose.msra.mxu0 0
      %1047 = vmatprep.subr.bf16.mxu0 0
      %1048 = vmatpush1.bf16.xpose.msra.mxu0 0
      %1049 = vmatprep.subr.bf16.mxu0 0
      %1050 = vmatpush1.bf16.xpose.msra.mxu0 0
      %1051 = vmatprep.subr.bf16.mxu0 0
      %1052 = vmatpush1.bf16.xpose.msra.mxu0 0
      %1053 = vmatprep.subr.bf16.mxu0 0
      %1054 = vmatpush1.bf16.xpose.msra.mxu0 0
      %1055 = vmatprep.subr.bf16.mxu0 0
      %1056 = vmatpush1.bf16.xpose.msra.mxu0 0
      %1057 = vmatprep.subr.bf16.mxu0 0
      %1058 = vmatpush1.bf16.xpose.msra.mxu0 0
      %1059 = vmatprep.subr.bf16.mxu0 0
      %1060 = vmatpush1.bf16.xpose.msra.mxu0 0
      %1061 = vmatprep.subr.bf16.mxu0 0
      %1062 = vmatpush1.bf16.xpose.msra.mxu0 0
      %1063 = vmatprep.subr.bf16.mxu0 0
      %1064 = vmatpush1.bf16.xpose.msra.mxu0 0
      %1065 = vmatprep.subr.bf16.mxu0 0
      %1066 = vmatpush1.bf16.xpose.msra.mxu0 0
      %1067 = vmatprep.mubr.bf16.mxu0 0
      %1068 = vmatmul.mubr.bf16.gmra.mrb[0].mxu0 %v1030
      %v1069 = vpop.f32.mrb[0].mxu0
      %v1070 = vadd.f32 0.0, %v1069
      %v1071 = vpop.f32.mrb[0].mxu0
      %v1072 = vpop.f32.mrb[0].mxu0
      %v1073 = vpop.f32.mrb[0].mxu0
      %1074 = vdwg.mxu0
      %v1075 = vmul.f32 %v1070, 0.35355338
      %v1076 = vadd.f32 %v1075, %v798
      %v1077 = vsel %vm803, %v1076, -inf
      %1078 = vmax.xlane.f32.xlu0 %v1077
      %v1079 = vpop.xlane.xlu0 %1078
      %v1080 = vsub.f32 %v1076, %v1079
      %v1081 = vmul.f32 %v1080, 1.442695
      %v1082 = vpow.pop %v1081
      %v1083 = vsel %vm803, %v1082, 0.0
      %1084 = vadd.xlane.f32.xlu0 %v1083
      %v1085 = vpop.xlane.xlu0 %1084
      %v1086 = vrcp.pop %v1085
      %v1087 = vmul.f32 %v1082, %v1086
      %v1088 = vpack.c.bf16 %v1087, %v1087
      %1089 = vrot.lane.b32.xlu0 %v799, 48
      %v1090 = vpop.permute.xlu0 %1089
      %v1092 = vsel %vm803, %v1088, 0
      %v1095 = vsel %vm869, %v1090, 0
      %1097 = vmatprep.subr.bf16.mxu0 0
      %1098 = vmatpush1.bf16.msra.mxu0 %v1095
      %1099 = vmatprep.subr.bf16.mxu0 0
      %1100 = vmatpush1.bf16.msra.mxu0 0
      %1101 = vmatprep.subr.bf16.mxu0 0
      %1102 = vmatpush1.bf16.msra.mxu0 0
      %1103 = vmatprep.subr.bf16.mxu0 0
      %1104 = vmatpush1.bf16.msra.mxu0 0
      %1105 = vmatprep.subr.bf16.mxu0 0
      %1106 = vmatpush1.bf16.msra.mxu0 0
      %1107 = vmatprep.subr.bf16.mxu0 0
      %1108 = vmatpush1.bf16.msra.mxu0 0
      %1109 = vmatprep.subr.bf16.mxu0 0
      %1110 = vmatpush1.bf16.msra.mxu0 0
      %1111 = vmatprep.subr.bf16.mxu0 0
      %1112 = vmatpush1.bf16.msra.mxu0 0
      %1113 = vmatprep.subr.bf16.mxu0 0
      %1114 = vmatpush1.bf16.msra.mxu0 0
      %1115 = vmatprep.subr.bf16.mxu0 0
      %1116 = vmatpush1.bf16.msra.mxu0 0
      %1117 = vmatprep.subr.bf16.mxu0 0
      %1118 = vmatpush1.bf16.msra.mxu0 0
      %1119 = vmatprep.subr.bf16.mxu0 0
      %1120 = vmatpush1.bf16.msra.mxu0 0
      %1121 = vmatprep.subr.bf16.mxu0 0
      %1122 = vmatpush1.bf16.msra.mxu0 0
      %1123 = vmatprep.subr.bf16.mxu0 0
      %1124 = vmatpush1.bf16.msra.mxu0 0
      %1125 = vmatprep.subr.bf16.mxu0 0
      %1126 = vmatpush1.bf16.msra.mxu0 0
      %1127 = vmatprep.subr.bf16.mxu0 0
      %1128 = vmatpush1.bf16.msra.mxu0 0
      %1129 = vmatprep.mubr.bf16.mxu0 0
      %1130 = vmatmul.mubr.bf16.gmra.mrb[0].mxu0 %v1092
      %v1131 = vpop.f32.mrb[0].mxu0
      %v1132 = vadd.f32 0.0, %v1131
      %v1133 = vpop.f32.mrb[0].mxu0
      %v1134 = vpop.f32.mrb[0].mxu0
      %v1135 = vpop.f32.mrb[0].mxu0
      %1136 = vdwg.mxu0
      %1137 = vrot.lane.b32.xlu0 %v799, 104
      %v1138 = vpop.permute.xlu0 %1137
      %1139 = vrot.lane.b32.xlu0 %v799, 72
      %v1140 = vpop.permute.xlu0 %1139
      %v1142 = vsel %vm803, %v1138, 0
      %v1145 = vsel %vm803, %v1140, 0
      %1147 = vmatprep.subr.bf16.mxu0 0
      %1148 = vmatpush1.bf16.xpose.msra.mxu0 %v1145
      %1149 = vmatprep.subr.bf16.mxu0 0
      %1150 = vmatpush1.bf16.xpose.msra.mxu0 0
      %1151 = vmatprep.subr.bf16.mxu0 0
      %1152 = vmatpush1.bf16.xpose.msra.mxu0 0
      %1153 = vmatprep.subr.bf16.mxu0 0
      %1154 = vmatpush1.bf16.xpose.msra.mxu0 0
      %1155 = vmatprep.subr.bf16.mxu0 0
      %1156 = vmatpush1.bf16.xpose.msra.mxu0 0
      %1157 = vmatprep.subr.bf16.mxu0 0
      %1158 = vmatpush1.bf16.xpose.msra.mxu0 0
      %1159 = vmatprep.subr.bf16.mxu0 0
      %1160 = vmatpush1.bf16.xpose.msra.mxu0 0
      %1161 = vmatprep.subr.bf16.mxu0 0
      %1162 = vmatpush1.bf16.xpose.msra.mxu0 0
      %1163 = vmatprep.subr.bf16.mxu0 0
      %1164 = vmatpush1.bf16.xpose.msra.mxu0 0
      %1165 = vmatprep.subr.bf16.mxu0 0
      %1166 = vmatpush1.bf16.xpose.msra.mxu0 0
      %1167 = vmatprep.subr.bf16.mxu0 0
      %1168 = vmatpush1.bf16.xpose.msra.mxu0 0
      %1169 = vmatprep.subr.bf16.mxu0 0
      %1170 = vmatpush1.bf16.xpose.msra.mxu0 0
      %1171 = vmatprep.subr.bf16.mxu0 0
      %1172 = vmatpush1.bf16.xpose.msra.mxu0 0
      %1173 = vmatprep.subr.bf16.mxu0 0
      %1174 = vmatpush1.bf16.xpose.msra.mxu0 0
      %1175 = vmatprep.subr.bf16.mxu0 0
      %1176 = vmatpush1.bf16.xpose.msra.mxu0 0
      %1177 = vmatprep.subr.bf16.mxu0 0
      %1178 = vmatpush1.bf16.xpose.msra.mxu0 0
      %1179 = vmatprep.mubr.bf16.mxu0 0
      %1180 = vmatmul.mubr.bf16.gmra.mrb[0].mxu0 %v1142
      %v1181 = vpop.f32.mrb[0].mxu0
      %v1182 = vadd.f32 0.0, %v1181
      %v1183 = vpop.f32.mrb[0].mxu0
      %v1184 = vpop.f32.mrb[0].mxu0
      %v1185 = vpop.f32.mrb[0].mxu0
      %1186 = vdwg.mxu0
      %v1187 = vmul.f32 %v1182, 0.35355338
      %v1188 = vadd.f32 %v1187, %v798
      %v1189 = vsel %vm803, %v1188, -inf
      %1190 = vmax.xlane.f32.xlu0 %v1189
      %v1191 = vpop.xlane.xlu0 %1190
      %v1192 = vsub.f32 %v1188, %v1191
      %v1193 = vmul.f32 %v1192, 1.442695
      %v1194 = vpow.pop %v1193
      %v1195 = vsel %vm803, %v1194, 0.0
      %1196 = vadd.xlane.f32.xlu0 %v1195
      %v1197 = vpop.xlane.xlu0 %1196
      %v1198 = vrcp.pop %v1197
      %v1199 = vmul.f32 %v1194, %v1198
      %v1200 = vpack.c.bf16 %v1199, %v1199
      %1201 = vrot.lane.b32.xlu0 %v799, 40
      %v1202 = vpop.permute.xlu0 %1201
      %v1204 = vsel %vm803, %v1200, 0
      %v1207 = vsel %vm869, %v1202, 0
      %1209 = vmatprep.subr.bf16.mxu0 0
      %1210 = vmatpush1.bf16.msra.mxu0 %v1207
      %1211 = vmatprep.subr.bf16.mxu0 0
      %1212 = vmatpush1.bf16.msra.mxu0 0
      %1213 = vmatprep.subr.bf16.mxu0 0
      %1214 = vmatpush1.bf16.msra.mxu0 0
      %1215 = vmatprep.subr.bf16.mxu0 0
      %1216 = vmatpush1.bf16.msra.mxu0 0
      %1217 = vmatprep.subr.bf16.mxu0 0
      %1218 = vmatpush1.bf16.msra.mxu0 0
      %1219 = vmatprep.subr.bf16.mxu0 0
      %1220 = vmatpush1.bf16.msra.mxu0 0
      %1221 = vmatprep.subr.bf16.mxu0 0
      %1222 = vmatpush1.bf16.msra.mxu0 0
      %1223 = vmatprep.subr.bf16.mxu0 0
      %1224 = vmatpush1.bf16.msra.mxu0 0
      %1225 = vmatprep.subr.bf16.mxu0 0
      %1226 = vmatpush1.bf16.msra.mxu0 0
      %1227 = vmatprep.subr.bf16.mxu0 0
      %1228 = vmatpush1.bf16.msra.mxu0 0
      %1229 = vmatprep.subr.bf16.mxu0 0
      %1230 = vmatpush1.bf16.msra.mxu0 0
      %1231 = vmatprep.subr.bf16.mxu0 0
      %1232 = vmatpush1.bf16.msra.mxu0 0
      %1233 = vmatprep.subr.bf16.mxu0 0
      %1234 = vmatpush1.bf16.msra.mxu0 0
      %1235 = vmatprep.subr.bf16.mxu0 0
      %1236 = vmatpush1.bf16.msra.mxu0 0
      %1237 = vmatprep.subr.bf16.mxu0 0
      %1238 = vmatpush1.bf16.msra.mxu0 0
      %1239 = vmatprep.subr.bf16.mxu0 0
      %1240 = vmatpush1.bf16.msra.mxu0 0
      %1241 = vmatprep.mubr.bf16.mxu0 0
      %1242 = vmatmul.mubr.bf16.gmra.mrb[0].mxu0 %v1204
      %v1243 = vpop.f32.mrb[0].mxu0
      %v1244 = vadd.f32 0.0, %v1243
      %v1245 = vpop.f32.mrb[0].mxu0
      %v1246 = vpop.f32.mrb[0].mxu0
      %v1247 = vpop.f32.mrb[0].mxu0
      %1248 = vdwg.mxu0
      %1250 = vrot.lane.b32.xlu0 %v1020, 8
      %v1251 = vpop.permute.xlu0 %1250
      %1254 = vrot.lane.b32.xlu0 %v1132, 16
      %v1255 = vpop.permute.xlu0 %1254
      %1258 = vrot.lane.b32.xlu0 %v1244, 24
      %v1259 = vpop.permute.xlu0 %1258
      %v1261 = vsel %vm803, %v908, %v1251
      %vm1262 = vcmask 130048
      %v1263 = vsel %vm1262, %v1261, %v1255
      %vm1264 = vcmask 195584
      %v1265 = vsel %vm1264, %v1263, %v1259
      %v1266 = vpack.c.bf16 %v1265, %v1265
      %v1267 = vld [vmem:[%s6] sm:$0x1]
      %v1269 = vlaneseq
      %v1270 = vshrl.u32 %v1269, 7
      %v1271 = vsub.s32 0, %v1270
      %v1272 = vrot.slane %v1267, %v1271
      %v1278 = vunpack.c.l.b16 %v794
      %v1279 = vunpack.c.l.b16 %v795
      %v1280 = vunpack.c.l.b16 %v796
      %v1281 = vunpack.c.l.b16 %v797
      %v1282 = vpack.c.b16 %v1279, %v1278
      %v1283 = vpack.c.b16 %v1281, %v1280
      %v1287 = vsel %vm750, %v1266, 0
      %1289 = vmatprep.subr.bf16.mxu0 0
      %1290 = vmatpush1.bf16.msra.mxu0 %v1282
      %1291 = vmatprep.subr.bf16.mxu0 0
      %1292 = vmatpush1.bf16.msra.mxu0 %v1283
      %1293 = vmatprep.subr.bf16.mxu0 0
      %1294 = vmatpush1.bf16.msra.mxu0 0
      %1295 = vmatprep.subr.bf16.mxu0 0
      %1296 = vmatpush1.bf16.msra.mxu0 0
      %1297 = vmatprep.subr.bf16.mxu0 0
      %1298 = vmatpush1.bf16.msra.mxu0 0
      %1299 = vmatprep.subr.bf16.mxu0 0
      %1300 = vmatpush1.bf16.msra.mxu0 0
      %1301 = vmatprep.subr.bf16.mxu0 0
      %1302 = vmatpush1.bf16.msra.mxu0 0
      %1303 = vmatprep.subr.bf16.mxu0 0
      %1304 = vmatpush1.bf16.msra.mxu0 0
      %1305 = vmatprep.subr.bf16.mxu0 0
      %1306 = vmatpush1.bf16.msra.mxu0 0
      %1307 = vmatprep.subr.bf16.mxu0 0
      %1308 = vmatpush1.bf16.msra.mxu0 0
      %1309 = vmatprep.subr.bf16.mxu0 0
      %1310 = vmatpush1.bf16.msra.mxu0 0
      %1311 = vmatprep.subr.bf16.mxu0 0
      %1312 = vmatpush1.bf16.msra.mxu0 0
      %1313 = vmatprep.subr.bf16.mxu0 0
      %1314 = vmatpush1.bf16.msra.mxu0 0
      %1315 = vmatprep.subr.bf16.mxu0 0
      %1316 = vmatpush1.bf16.msra.mxu0 0
      %1317 = vmatprep.subr.bf16.mxu0 0
      %1318 = vmatpush1.bf16.msra.mxu0 0
      %1319 = vmatprep.subr.bf16.mxu0 0
      %1320 = vmatpush1.bf16.msra.mxu0 0
      %1321 = vmatprep.mubr.bf16.mxu0 0
      %1322 = vmatmul.mubr.bf16.gmra.mrb[0].mxu0 %v1287
      %v1323 = vpop.f32.mrb[0].mxu0
      %v1324 = vadd.f32 %v1272, %v1323
      %v1325 = vpop.f32.mrb[0].mxu0
      %v1326 = vpop.f32.mrb[0].mxu0
      %v1327 = vpop.f32.mrb[0].mxu0
      %1328 = vdwg.mxu0
      %v1329 = vadd.f32 %v725, %v1324
      %v1330 = vld [vmem:[%s7] sm:$0x1]
      %v1331 = vld [vmem:[%s8] sm:$0x1]
      %v1332 = vsel %vm750, %v1329, 0.0
      %1333 = vadd.xlane.f32.xlu0 %v1332
      %v1334 = vpop.xlane.xlu0 %1333
      %v1335 = vrcp.pop 32.0
      %v1336 = vmul.f32 %v1334, %v1335
      %v1337 = vsub.f32 %v1329, %v1336
      %v1338 = vmul.f32 %v1337, %v1337
      %v1339 = vsel %vm750, %v1338, 0.0
      %1340 = vadd.xlane.f32.xlu0 %v1339
      %v1341 = vpop.xlane.xlu0 %1340
      %v1342 = vmul.f32 %v1341, %v1335
      %v1343 = vadd.f32 %v1342, 1e-05
      %v1344 = vrsqrt.pop %v1343
      %v1345 = vmul.f32 %v1337, %v1344
      %v1347 = vlaneseq
      %v1348 = vshrl.u32 %v1347, 7
      %v1349 = vsub.s32 0, %v1348
      %v1350 = vrot.slane %v1330, %v1349
      %v1352 = vmul.f32 %v1345, %v1350
      %v1354 = vlaneseq
      %v1355 = vshrl.u32 %v1354, 7
      %v1356 = vsub.s32 0, %v1355
      %v1357 = vrot.slane %v1331, %v1356
      %v1359 = vadd.f32 %v1352, %v1357
      %v1360 = vld [vmem:[%s9] sm:$0xf]
      %v1361 = vld [vmem:[%s9 + $0x4] sm:$0xf]
      %v1362 = vld [vmem:[%s9 + $0x8] sm:$0xf]
      %v1363 = vld [vmem:[%s9 + $0xc] sm:$0xf]
      %v1364 = vpack.c.bf16 %v1359, %v1359
      %v1365 = vld [vmem:[%s10] sm:$0x1]
      %v1367 = vlaneseq
      %v1368 = vshrl.u32 %v1367, 7
      %v1369 = vsub.s32 0, %v1368
      %v1370 = vrot.slane %v1365, %v1369
      %v1376 = vunpack.c.l.b16 %v1360
      %v1377 = vunpack.c.l.b16 %v1361
      %v1378 = vunpack.c.l.b16 %v1362
      %v1379 = vunpack.c.l.b16 %v1363
      %v1380 = vpack.c.b16 %v1377, %v1376
      %v1381 = vpack.c.b16 %v1379, %v1378
      %v1385 = vsel %vm750, %v1364, 0
      %1387 = vmatprep.subr.bf16.mxu0 0
      %1388 = vmatpush1.bf16.msra.mxu0 %v1380
      %1389 = vmatprep.subr.bf16.mxu0 0
      %1390 = vmatpush1.bf16.msra.mxu0 %v1381
      %1391 = vmatprep.subr.bf16.mxu0 0
      %1392 = vmatpush1.bf16.msra.mxu0 0
      %1393 = vmatprep.subr.bf16.mxu0 0
      %1394 = vmatpush1.bf16.msra.mxu0 0
      %1395 = vmatprep.subr.bf16.mxu0 0
      %1396 = vmatpush1.bf16.msra.mxu0 0
      %1397 = vmatprep.subr.bf16.mxu0 0
      %1398 = vmatpush1.bf16.msra.mxu0 0
      %1399 = vmatprep.subr.bf16.mxu0 0
      %1400 = vmatpush1.bf16.msra.mxu0 0
      %1401 = vmatprep.subr.bf16.mxu0 0
      %1402 = vmatpush1.bf16.msra.mxu0 0
      %1403 = vmatprep.subr.bf16.mxu0 0
      %1404 = vmatpush1.bf16.msra.mxu0 0
      %1405 = vmatprep.subr.bf16.mxu0 0
      %1406 = vmatpush1.bf16.msra.mxu0 0
      %1407 = vmatprep.subr.bf16.mxu0 0
      %1408 = vmatpush1.bf16.msra.mxu0 0
      %1409 = vmatprep.subr.bf16.mxu0 0
      %1410 = vmatpush1.bf16.msra.mxu0 0
      %1411 = vmatprep.subr.bf16.mxu0 0
      %1412 = vmatpush1.bf16.msra.mxu0 0
      %1413 = vmatprep.subr.bf16.mxu0 0
      %1414 = vmatpush1.bf16.msra.mxu0 0
      %1415 = vmatprep.subr.bf16.mxu0 0
      %1416 = vmatpush1.bf16.msra.mxu0 0
      %1417 = vmatprep.subr.bf16.mxu0 0
      %1418 = vmatpush1.bf16.msra.mxu0 0
      %1419 = vmatprep.mubr.bf16.mxu0 0
      %1420 = vmatmul.mubr.bf16.gmra.mrb[0].mxu0 %v1385
      %v1421 = vpop.f32.mrb[0].mxu0
      %v1422 = vadd.f32 %v1370, %v1421
      %v1423 = vpop.f32.mrb[0].mxu0
      %v1424 = vpop.f32.mrb[0].mxu0
      %v1425 = vpop.f32.mrb[0].mxu0
      %1426 = vdwg.mxu0
      %v1427 = vld [vmem:[%s11] sm:$0xf]
      %v1428 = vld [vmem:[%s11 + $0x4] sm:$0xf]
      %v1429 = vld [vmem:[%s11 + $0x8] sm:$0xf]
      %v1430 = vld [vmem:[%s11 + $0xc] sm:$0xf]
      %v1431 = vld [vmem:[%s12] sm:$0x1]
      %v1433 = vlaneseq
      %v1434 = vshrl.u32 %v1433, 7
      %v1435 = vsub.s32 0, %v1434
      %v1436 = vrot.slane %v1431, %v1435
      %v1442 = vunpack.c.l.b16 %v1427
      %v1443 = vunpack.c.l.b16 %v1428
      %v1444 = vunpack.c.l.b16 %v1429
      %v1445 = vunpack.c.l.b16 %v1430
      %v1446 = vpack.c.b16 %v1443, %v1442
      %v1447 = vpack.c.b16 %v1445, %v1444
      %v1451 = vsel %vm750, %v726, 0
      %1453 = vmatprep.subr.bf16.mxu0 0
      %1454 = vmatpush1.bf16.msra.mxu0 %v1446
      %1455 = vmatprep.subr.bf16.mxu0 0
      %1456 = vmatpush1.bf16.msra.mxu0 %v1447
      %1457 = vmatprep.subr.bf16.mxu0 0
      %1458 = vmatpush1.bf16.msra.mxu0 0
      %1459 = vmatprep.subr.bf16.mxu0 0
      %1460 = vmatpush1.bf16.msra.mxu0 0
      %1461 = vmatprep.subr.bf16.mxu0 0
      %1462 = vmatpush1.bf16.msra.mxu0 0
      %1463 = vmatprep.subr.bf16.mxu0 0
      %1464 = vmatpush1.bf16.msra.mxu0 0
      %1465 = vmatprep.subr.bf16.mxu0 0
      %1466 = vmatpush1.bf16.msra.mxu0 0
      %1467 = vmatprep.subr.bf16.mxu0 0
      %1468 = vmatpush1.bf16.msra.mxu0 0
      %1469 = vmatprep.subr.bf16.mxu0 0
      %1470 = vmatpush1.bf16.msra.mxu0 0
      %1471 = vmatprep.subr.bf16.mxu0 0
      %1472 = vmatpush1.bf16.msra.mxu0 0
      %1473 = vmatprep.subr.bf16.mxu0 0
      %1474 = vmatpush1.bf16.msra.mxu0 0
      %1475 = vmatprep.subr.bf16.mxu0 0
      %1476 = vmatpush1.bf16.msra.mxu0 0
      %1477 = vmatprep.subr.bf16.mxu0 0
      %1478 = vmatpush1.bf16.msra.mxu0 0
      %1479 = vmatprep.subr.bf16.mxu0 0
      %1480 = vmatpush1.bf16.msra.mxu0 0
      %1481 = vmatprep.subr.bf16.mxu0 0
      %1482 = vmatpush1.bf16.msra.mxu0 0
      %1483 = vmatprep.subr.bf16.mxu0 0
      %1484 = vmatpush1.bf16.msra.mxu0 0
      %1485 = vmatprep.mubr.bf16.mxu0 0
      %1486 = vmatmul.mubr.bf16.gmra.mrb[0].mxu0 %v1451
      %v1487 = vpop.f32.mrb[0].mxu0
      %v1488 = vadd.f32 %v1436, %v1487
      %v1489 = vpop.f32.mrb[0].mxu0
      %v1490 = vpop.f32.mrb[0].mxu0
      %v1491 = vpop.f32.mrb[0].mxu0
      %1492 = vdwg.mxu0
      %v1493 = vld [vmem:[%s13] sm:$0xf]
      %v1494 = vld [vmem:[%s13 + $0x4] sm:$0xf]
      %v1495 = vld [vmem:[%s13 + $0x8] sm:$0xf]
      %v1496 = vld [vmem:[%s13 + $0xc] sm:$0xf]
      %v1497 = vpack.c.bf16 %v1422, %v1422
      %v1498 = vpack.c.bf16 %v1488, %v1488
      %v1500 = vsel %vm803, %v1497, 0
      %v1503 = vsel %vm803, %v1498, 0
      %1505 = vmatprep.subr.bf16.mxu0 0
      %1506 = vmatpush1.bf16.xpose.msra.mxu0 %v1503
      %1507 = vmatprep.subr.bf16.mxu0 0
      %1508 = vmatpush1.bf16.xpose.msra.mxu0 0
      %1509 = vmatprep.subr.bf16.mxu0 0
      %1510 = vmatpush1.bf16.xpose.msra.mxu0 0
      %1511 = vmatprep.subr.bf16.mxu0 0
      %1512 = vmatpush1.bf16.xpose.msra.mxu0 0
      %1513 = vmatprep.subr.bf16.mxu0 0
      %1514 = vmatpush1.bf16.xpose.msra.mxu0 0
      %1515 = vmatprep.subr.bf16.mxu0 0
      %1516 = vmatpush1.bf16.xpose.msra.mxu0 0
      %1517 = vmatprep.subr.bf16.mxu0 0
      %1518 = vmatpush1.bf16.xpose.msra.mxu0 0
      %1519 = vmatprep.subr.bf16.mxu0 0
      %1520 = vmatpush1.bf16.xpose.msra.mxu0 0
      %1521 = vmatprep.subr.bf16.mxu0 0
      %1522 = vmatpush1.bf16.xpose.msra.mxu0 0
      %1523 = vmatprep.subr.bf16.mxu0 0
      %1524 = vmatpush1.bf16.xpose.msra.mxu0 0
      %1525 = vmatprep.subr.bf16.mxu0 0
      %1526 = vmatpush1.bf16.xpose.msra.mxu0 0
      %1527 = vmatprep.subr.bf16.mxu0 0
      %1528 = vmatpush1.bf16.xpose.msra.mxu0 0
      %1529 = vmatprep.subr.bf16.mxu0 0
      %1530 = vmatpush1.bf16.xpose.msra.mxu0 0
      %1531 = vmatprep.subr.bf16.mxu0 0
      %1532 = vmatpush1.bf16.xpose.msra.mxu0 0
      %1533 = vmatprep.subr.bf16.mxu0 0
      %1534 = vmatpush1.bf16.xpose.msra.mxu0 0
      %1535 = vmatprep.subr.bf16.mxu0 0
      %1536 = vmatpush1.bf16.xpose.msra.mxu0 0
      %1537 = vmatprep.mubr.bf16.mxu0 0
      %1538 = vmatmul.mubr.bf16.gmra.mrb[0].mxu0 %v1500
      %v1539 = vpop.f32.mrb[0].mxu0
      %v1540 = vadd.f32 0.0, %v1539
      %v1541 = vpop.f32.mrb[0].mxu0
      %v1542 = vpop.f32.mrb[0].mxu0
      %v1543 = vpop.f32.mrb[0].mxu0
      %1544 = vdwg.mxu0
      %v1545 = vmul.f32 %v1540, 0.35355338
      %v1546 = vsel %vm803, %v1545, -inf
      %1547 = vmax.xlane.f32.xlu0 %v1546
      %v1548 = vpop.xlane.xlu0 %1547
      %v1549 = vsub.f32 %v1545, %v1548
      %v1550 = vmul.f32 %v1549, 1.442695
      %v1551 = vpow.pop %v1550
      %v1552 = vsel %vm803, %v1551, 0.0
      %1553 = vadd.xlane.f32.xlu0 %v1552
      %v1554 = vpop.xlane.xlu0 %1553
      %v1555 = vrcp.pop %v1554
      %v1556 = vmul.f32 %v1551, %v1555
      %v1557 = vpack.c.bf16 %v1556, %v1556
      %1559 = vrot.lane.b32.xlu0 %v1498, 96
      %v1560 = vpop.permute.xlu0 %1559
      %v1562 = vsel %vm803, %v1557, 0
      %v1565 = vsel %vm869, %v1560, 0
      %1567 = vmatprep.subr.bf16.mxu0 0
      %1568 = vmatpush1.bf16.msra.mxu0 %v1565
      %1569 = vmatprep.subr.bf16.mxu0 0
      %1570 = vmatpush1.bf16.msra.mxu0 0
      %1571 = vmatprep.subr.bf16.mxu0 0
      %1572 = vmatpush1.bf16.msra.mxu0 0
      %1573 = vmatprep.subr.bf16.mxu0 0
      %1574 = vmatpush1.bf16.msra.mxu0 0
      %1575 = vmatprep.subr.bf16.mxu0 0
      %1576 = vmatpush1.bf16.msra.mxu0 0
      %1577 = vmatprep.subr.bf16.mxu0 0
      %1578 = vmatpush1.bf16.msra.mxu0 0
      %1579 = vmatprep.subr.bf16.mxu0 0
      %1580 = vmatpush1.bf16.msra.mxu0 0
      %1581 = vmatprep.subr.bf16.mxu0 0
      %1582 = vmatpush1.bf16.msra.mxu0 0
      %1583 = vmatprep.subr.bf16.mxu0 0
      %1584 = vmatpush1.bf16.msra.mxu0 0
      %1585 = vmatprep.subr.bf16.mxu0 0
      %1586 = vmatpush1.bf16.msra.mxu0 0
      %1587 = vmatprep.subr.bf16.mxu0 0
      %1588 = vmatpush1.bf16.msra.mxu0 0
      %1589 = vmatprep.subr.bf16.mxu0 0
      %1590 = vmatpush1.bf16.msra.mxu0 0
      %1591 = vmatprep.subr.bf16.mxu0 0
      %1592 = vmatpush1.bf16.msra.mxu0 0
      %1593 = vmatprep.subr.bf16.mxu0 0
      %1594 = vmatpush1.bf16.msra.mxu0 0
      %1595 = vmatprep.subr.bf16.mxu0 0
      %1596 = vmatpush1.bf16.msra.mxu0 0
      %1597 = vmatprep.subr.bf16.mxu0 0
      %1598 = vmatpush1.bf16.msra.mxu0 0
      %1599 = vmatprep.mubr.bf16.mxu0 0
      %1600 = vmatmul.mubr.bf16.gmra.mrb[0].mxu0 %v1562
      %v1601 = vpop.f32.mrb[0].mxu0
      %v1602 = vadd.f32 0.0, %v1601
      %v1603 = vpop.f32.mrb[0].mxu0
      %v1604 = vpop.f32.mrb[0].mxu0
      %v1605 = vpop.f32.mrb[0].mxu0
      %1606 = vdwg.mxu0
      %1608 = vrot.lane.b32.xlu0 %v1497, 120
      %v1609 = vpop.permute.xlu0 %1608
      %1610 = vrot.lane.b32.xlu0 %v1498, 120
      %v1611 = vpop.permute.xlu0 %1610
      %v1613 = vsel %vm803, %v1609, 0
      %v1616 = vsel %vm803, %v1611, 0
      %1618 = vmatprep.subr.bf16.mxu0 0
      %1619 = vmatpush1.bf16.xpose.msra.mxu0 %v1616
      %1620 = vmatprep.subr.bf16.mxu0 0
      %1621 = vmatpush1.bf16.xpose.msra.mxu0 0
      %1622 = vmatprep.subr.bf16.mxu0 0
      %1623 = vmatpush1.bf16.xpose.msra.mxu0 0
      %1624 = vmatprep.subr.bf16.mxu0 0
      %1625 = vmatpush1.bf16.xpose.msra.mxu0 0
      %1626 = vmatprep.subr.bf16.mxu0 0
      %1627 = vmatpush1.bf16.xpose.msra.mxu0 0
      %1628 = vmatprep.subr.bf16.mxu0 0
      %1629 = vmatpush1.bf16.xpose.msra.mxu0 0
      %1630 = vmatprep.subr.bf16.mxu0 0
      %1631 = vmatpush1.bf16.xpose.msra.mxu0 0
      %1632 = vmatprep.subr.bf16.mxu0 0
      %1633 = vmatpush1.bf16.xpose.msra.mxu0 0
      %1634 = vmatprep.subr.bf16.mxu0 0
      %1635 = vmatpush1.bf16.xpose.msra.mxu0 0
      %1636 = vmatprep.subr.bf16.mxu0 0
      %1637 = vmatpush1.bf16.xpose.msra.mxu0 0
      %1638 = vmatprep.subr.bf16.mxu0 0
      %1639 = vmatpush1.bf16.xpose.msra.mxu0 0
      %1640 = vmatprep.subr.bf16.mxu0 0
      %1641 = vmatpush1.bf16.xpose.msra.mxu0 0
      %1642 = vmatprep.subr.bf16.mxu0 0
      %1643 = vmatpush1.bf16.xpose.msra.mxu0 0
      %1644 = vmatprep.subr.bf16.mxu0 0
      %1645 = vmatpush1.bf16.xpose.msra.mxu0 0
      %1646 = vmatprep.subr.bf16.mxu0 0
      %1647 = vmatpush1.bf16.xpose.msra.mxu0 0
      %1648 = vmatprep.subr.bf16.mxu0 0
      %1649 = vmatpush1.bf16.xpose.msra.mxu0 0
      %1650 = vmatprep.mubr.bf16.mxu0 0
      %1651 = vmatmul.mubr.bf16.gmra.mrb[0].mxu0 %v1613
      %v1652 = vpop.f32.mrb[0].mxu0
      %v1653 = vadd.f32 0.0, %v1652
      %v1654 = vpop.f32.mrb[0].mxu0
      %v1655 = vpop.f32.mrb[0].mxu0
      %v1656 = vpop.f32.mrb[0].mxu0
      %1657 = vdwg.mxu0
      %v1658 = vmul.f32 %v1653, 0.35355338
      %v1659 = vsel %vm803, %v1658, -inf
      %1660 = vmax.xlane.f32.xlu0 %v1659
      %v1661 = vpop.xlane.xlu0 %1660
      %v1662 = vsub.f32 %v1658, %v1661
      %v1663 = vmul.f32 %v1662, 1.442695
      %v1664 = vpow.pop %v1663
      %v1665 = vsel %vm803, %v1664, 0.0
      %1666 = vadd.xlane.f32.xlu0 %v1665
      %v1667 = vpop.xlane.xlu0 %1666
      %v1668 = vrcp.pop %v1667
      %v1669 = vmul.f32 %v1664, %v1668
      %v1670 = vpack.c.bf16 %v1669, %v1669
      %1671 = vrot.lane.b32.xlu0 %v1498, 88
      %v1672 = vpop.permute.xlu0 %1671
      %v1674 = vsel %vm803, %v1670, 0
      %v1677 = vsel %vm869, %v1672, 0
      %1679 = vmatprep.subr.bf16.mxu0 0
      %1680 = vmatpush1.bf16.msra.mxu0 %v1677
      %1681 = vmatprep.subr.bf16.mxu0 0
      %1682 = vmatpush1.bf16.msra.mxu0 0
      %1683 = vmatprep.subr.bf16.mxu0 0
      %1684 = vmatpush1.bf16.msra.mxu0 0
      %1685 = vmatprep.subr.bf16.mxu0 0
      %1686 = vmatpush1.bf16.msra.mxu0 0
      %1687 = vmatprep.subr.bf16.mxu0 0
      %1688 = vmatpush1.bf16.msra.mxu0 0
      %1689 = vmatprep.subr.bf16.mxu0 0
      %1690 = vmatpush1.bf16.msra.mxu0 0
      %1691 = vmatprep.subr.bf16.mxu0 0
      %1692 = vmatpush1.bf16.msra.mxu0 0
      %1693 = vmatprep.subr.bf16.mxu0 0
      %1694 = vmatpush1.bf16.msra.mxu0 0
      %1695 = vmatprep.subr.bf16.mxu0 0
      %1696 = vmatpush1.bf16.msra.mxu0 0
      %1697 = vmatprep.subr.bf16.mxu0 0
      %1698 = vmatpush1.bf16.msra.mxu0 0
      %1699 = vmatprep.subr.bf16.mxu0 0
      %1700 = vmatpush1.bf16.msra.mxu0 0
      %1701 = vmatprep.subr.bf16.mxu0 0
      %1702 = vmatpush1.bf16.msra.mxu0 0
      %1703 = vmatprep.subr.bf16.mxu0 0
      %1704 = vmatpush1.bf16.msra.mxu0 0
      %1705 = vmatprep.subr.bf16.mxu0 0
      %1706 = vmatpush1.bf16.msra.mxu0 0
      %1707 = vmatprep.subr.bf16.mxu0 0
      %1708 = vmatpush1.bf16.msra.mxu0 0
      %1709 = vmatprep.subr.bf16.mxu0 0
      %1710 = vmatpush1.bf16.msra.mxu0 0
      %1711 = vmatprep.mubr.bf16.mxu0 0
      %1712 = vmatmul.mubr.bf16.gmra.mrb[0].mxu0 %v1674
      %v1713 = vpop.f32.mrb[0].mxu0
      %v1714 = vadd.f32 0.0, %v1713
      %v1715 = vpop.f32.mrb[0].mxu0
      %v1716 = vpop.f32.mrb[0].mxu0
      %v1717 = vpop.f32.mrb[0].mxu0
      %1718 = vdwg.mxu0
      %1719 = vrot.lane.b32.xlu0 %v1497, 112
      %v1720 = vpop.permute.xlu0 %1719
      %1721 = vrot.lane.b32.xlu0 %v1498, 112
      %v1722 = vpop.permute.xlu0 %1721
      %v1724 = vsel %vm803, %v1720, 0
      %v1727 = vsel %vm803, %v1722, 0
      %1729 = vmatprep.subr.bf16.mxu0 0
      %1730 = vmatpush1.bf16.xpose.msra.mxu0 %v1727
      %1731 = vmatprep.subr.bf16.mxu0 0
      %1732 = vmatpush1.bf16.xpose.msra.mxu0 0
      %1733 = vmatprep.subr.bf16.mxu0 0
      %1734 = vmatpush1.bf16.xpose.msra.mxu0 0
      %1735 = vmatprep.subr.bf16.mxu0 0
      %1736 = vmatpush1.bf16.xpose.msra.mxu0 0
      %1737 = vmatprep.subr.bf16.mxu0 0
      %1738 = vmatpush1.bf16.xpose.msra.mxu0 0
      %1739 = vmatprep.subr.bf16.mxu0 0
      %1740 = vmatpush1.bf16.xpose.msra.mxu0 0
      %1741 = vmatprep.subr.bf16.mxu0 0
      %1742 = vmatpush1.bf16.xpose.msra.mxu0 0
      %1743 = vmatprep.subr.bf16.mxu0 0
      %1744 = vmatpush1.bf16.xpose.msra.mxu0 0
      %1745 = vmatprep.subr.bf16.mxu0 0
      %1746 = vmatpush1.bf16.xpose.msra.mxu0 0
      %1747 = vmatprep.subr.bf16.mxu0 0
      %1748 = vmatpush1.bf16.xpose.msra.mxu0 0
      %1749 = vmatprep.subr.bf16.mxu0 0
      %1750 = vmatpush1.bf16.xpose.msra.mxu0 0
      %1751 = vmatprep.subr.bf16.mxu0 0
      %1752 = vmatpush1.bf16.xpose.msra.mxu0 0
      %1753 = vmatprep.subr.bf16.mxu0 0
      %1754 = vmatpush1.bf16.xpose.msra.mxu0 0
      %1755 = vmatprep.subr.bf16.mxu0 0
      %1756 = vmatpush1.bf16.xpose.msra.mxu0 0
      %1757 = vmatprep.subr.bf16.mxu0 0
      %1758 = vmatpush1.bf16.xpose.msra.mxu0 0
      %1759 = vmatprep.subr.bf16.mxu0 0
      %1760 = vmatpush1.bf16.xpose.msra.mxu0 0
      %1761 = vmatprep.mubr.bf16.mxu0 0
      %1762 = vmatmul.mubr.bf16.gmra.mrb[0].mxu0 %v1724
      %v1763 = vpop.f32.mrb[0].mxu0
      %v1764 = vadd.f32 0.0, %v1763
      %v1765 = vpop.f32.mrb[0].mxu0
      %v1766 = vpop.f32.mrb[0].mxu0
      %v1767 = vpop.f32.mrb[0].mxu0
      %1768 = vdwg.mxu0
      %v1769 = vmul.f32 %v1764, 0.35355338
      %v1770 = vsel %vm803, %v1769, -inf
      %1771 = vmax.xlane.f32.xlu0 %v1770
      %v1772 = vpop.xlane.xlu0 %1771
      %v1773 = vsub.f32 %v1769, %v1772
      %v1774 = vmul.f32 %v1773, 1.442695
      %v1775 = vpow.pop %v1774
      %v1776 = vsel %vm803, %v1775, 0.0
      %1777 = vadd.xlane.f32.xlu0 %v1776
      %v1778 = vpop.xlane.xlu0 %1777
      %v1779 = vrcp.pop %v1778
      %v1780 = vmul.f32 %v1775, %v1779
      %v1781 = vpack.c.bf16 %v1780, %v1780
      %1782 = vrot.lane.b32.xlu0 %v1498, 80
      %v1783 = vpop.permute.xlu0 %1782
      %v1785 = vsel %vm803, %v1781, 0
      %v1788 = vsel %vm869, %v1783, 0
      %1790 = vmatprep.subr.bf16.mxu0 0
      %1791 = vmatpush1.bf16.msra.mxu0 %v1788
      %1792 = vmatprep.subr.bf16.mxu0 0
      %1793 = vmatpush1.bf16.msra.mxu0 0
      %1794 = vmatprep.subr.bf16.mxu0 0
      %1795 = vmatpush1.bf16.msra.mxu0 0
      %1796 = vmatprep.subr.bf16.mxu0 0
      %1797 = vmatpush1.bf16.msra.mxu0 0
      %1798 = vmatprep.subr.bf16.mxu0 0
      %1799 = vmatpush1.bf16.msra.mxu0 0
      %1800 = vmatprep.subr.bf16.mxu0 0
      %1801 = vmatpush1.bf16.msra.mxu0 0
      %1802 = vmatprep.subr.bf16.mxu0 0
      %1803 = vmatpush1.bf16.msra.mxu0 0
      %1804 = vmatprep.subr.bf16.mxu0 0
      %1805 = vmatpush1.bf16.msra.mxu0 0
      %1806 = vmatprep.subr.bf16.mxu0 0
      %1807 = vmatpush1.bf16.msra.mxu0 0
      %1808 = vmatprep.subr.bf16.mxu0 0
      %1809 = vmatpush1.bf16.msra.mxu0 0
      %1810 = vmatprep.subr.bf16.mxu0 0
      %1811 = vmatpush1.bf16.msra.mxu0 0
      %1812 = vmatprep.subr.bf16.mxu0 0
      %1813 = vmatpush1.bf16.msra.mxu0 0
      %1814 = vmatprep.subr.bf16.mxu0 0
      %1815 = vmatpush1.bf16.msra.mxu0 0
      %1816 = vmatprep.subr.bf16.mxu0 0
      %1817 = vmatpush1.bf16.msra.mxu0 0
      %1818 = vmatprep.subr.bf16.mxu0 0
      %1819 = vmatpush1.bf16.msra.mxu0 0
      %1820 = vmatprep.subr.bf16.mxu0 0
      %1821 = vmatpush1.bf16.msra.mxu0 0
      %1822 = vmatprep.mubr.bf16.mxu0 0
      %1823 = vmatmul.mubr.bf16.gmra.mrb[0].mxu0 %v1785
      %v1824 = vpop.f32.mrb[0].mxu0
      %v1825 = vadd.f32 0.0, %v1824
      %v1826 = vpop.f32.mrb[0].mxu0
      %v1827 = vpop.f32.mrb[0].mxu0
      %v1828 = vpop.f32.mrb[0].mxu0
      %1829 = vdwg.mxu0
      %1830 = vrot.lane.b32.xlu0 %v1497, 104
      %v1831 = vpop.permute.xlu0 %1830
      %1832 = vrot.lane.b32.xlu0 %v1498, 104
      %v1833 = vpop.permute.xlu0 %1832
      %v1835 = vsel %vm803, %v1831, 0
      %v1838 = vsel %vm803, %v1833, 0
      %1840 = vmatprep.subr.bf16.mxu0 0
      %1841 = vmatpush1.bf16.xpose.msra.mxu0 %v1838
      %1842 = vmatprep.subr.bf16.mxu0 0
      %1843 = vmatpush1.bf16.xpose.msra.mxu0 0
      %1844 = vmatprep.subr.bf16.mxu0 0
      %1845 = vmatpush1.bf16.xpose.msra.mxu0 0
      %1846 = vmatprep.subr.bf16.mxu0 0
      %1847 = vmatpush1.bf16.xpose.msra.mxu0 0
      %1848 = vmatprep.subr.bf16.mxu0 0
      %1849 = vmatpush1.bf16.xpose.msra.mxu0 0
      %1850 = vmatprep.subr.bf16.mxu0 0
      %1851 = vmatpush1.bf16.xpose.msra.mxu0 0
      %1852 = vmatprep.subr.bf16.mxu0 0
      %1853 = vmatpush1.bf16.xpose.msra.mxu0 0
      %1854 = vmatprep.subr.bf16.mxu0 0
      %1855 = vmatpush1.bf16.xpose.msra.mxu0 0
      %1856 = vmatprep.subr.bf16.mxu0 0
      %1857 = vmatpush1.bf16.xpose.msra.mxu0 0
      %1858 = vmatprep.subr.bf16.mxu0 0
      %1859 = vmatpush1.bf16.xpose.msra.mxu0 0
      %1860 = vmatprep.subr.bf16.mxu0 0
      %1861 = vmatpush1.bf16.xpose.msra.mxu0 0
      %1862 = vmatprep.subr.bf16.mxu0 0
      %1863 = vmatpush1.bf16.xpose.msra.mxu0 0
      %1864 = vmatprep.subr.bf16.mxu0 0
      %1865 = vmatpush1.bf16.xpose.msra.mxu0 0
      %1866 = vmatprep.subr.bf16.mxu0 0
      %1867 = vmatpush1.bf16.xpose.msra.mxu0 0
      %1868 = vmatprep.subr.bf16.mxu0 0
      %1869 = vmatpush1.bf16.xpose.msra.mxu0 0
      %1870 = vmatprep.subr.bf16.mxu0 0
      %1871 = vmatpush1.bf16.xpose.msra.mxu0 0
      %1872 = vmatprep.mubr.bf16.mxu0 0
      %1873 = vmatmul.mubr.bf16.gmra.mrb[0].mxu0 %v1835
      %v1874 = vpop.f32.mrb[0].mxu0
      %v1875 = vadd.f32 0.0, %v1874
      %v1876 = vpop.f32.mrb[0].mxu0
      %v1877 = vpop.f32.mrb[0].mxu0
      %v1878 = vpop.f32.mrb[0].mxu0
      %1879 = vdwg.mxu0
      %v1880 = vmul.f32 %v1875, 0.35355338
      %v1881 = vsel %vm803, %v1880, -inf
      %1882 = vmax.xlane.f32.xlu0 %v1881
      %v1883 = vpop.xlane.xlu0 %1882
      %v1884 = vsub.f32 %v1880, %v1883
      %v1885 = vmul.f32 %v1884, 1.442695
      %v1886 = vpow.pop %v1885
      %v1887 = vsel %vm803, %v1886, 0.0
      %1888 = vadd.xlane.f32.xlu0 %v1887
      %v1889 = vpop.xlane.xlu0 %1888
      %v1890 = vrcp.pop %v1889
      %v1891 = vmul.f32 %v1886, %v1890
      %v1892 = vpack.c.bf16 %v1891, %v1891
      %1893 = vrot.lane.b32.xlu0 %v1498, 72
      %v1894 = vpop.permute.xlu0 %1893
      %v1896 = vsel %vm803, %v1892, 0
      %v1899 = vsel %vm869, %v1894, 0
      %1901 = vmatprep.subr.bf16.mxu0 0
      %1902 = vmatpush1.bf16.msra.mxu0 %v1899
      %1903 = vmatprep.subr.bf16.mxu0 0
      %1904 = vmatpush1.bf16.msra.mxu0 0
      %1905 = vmatprep.subr.bf16.mxu0 0
      %1906 = vmatpush1.bf16.msra.mxu0 0
      %1907 = vmatprep.subr.bf16.mxu0 0
      %1908 = vmatpush1.bf16.msra.mxu0 0
      %1909 = vmatprep.subr.bf16.mxu0 0
      %1910 = vmatpush1.bf16.msra.mxu0 0
      %1911 = vmatprep.subr.bf16.mxu0 0
      %1912 = vmatpush1.bf16.msra.mxu0 0
      %1913 = vmatprep.subr.bf16.mxu0 0
      %1914 = vmatpush1.bf16.msra.mxu0 0
      %1915 = vmatprep.subr.bf16.mxu0 0
      %1916 = vmatpush1.bf16.msra.mxu0 0
      %1917 = vmatprep.subr.bf16.mxu0 0
      %1918 = vmatpush1.bf16.msra.mxu0 0
      %1919 = vmatprep.subr.bf16.mxu0 0
      %1920 = vmatpush1.bf16.msra.mxu0 0
      %1921 = vmatprep.subr.bf16.mxu0 0
      %1922 = vmatpush1.bf16.msra.mxu0 0
      %1923 = vmatprep.subr.bf16.mxu0 0
      %1924 = vmatpush1.bf16.msra.mxu0 0
      %1925 = vmatprep.subr.bf16.mxu0 0
      %1926 = vmatpush1.bf16.msra.mxu0 0
      %1927 = vmatprep.subr.bf16.mxu0 0
      %1928 = vmatpush1.bf16.msra.mxu0 0
      %1929 = vmatprep.subr.bf16.mxu0 0
      %1930 = vmatpush1.bf16.msra.mxu0 0
      %1931 = vmatprep.subr.bf16.mxu0 0
      %1932 = vmatpush1.bf16.msra.mxu0 0
      %1933 = vmatprep.mubr.bf16.mxu0 0
      %1934 = vmatmul.mubr.bf16.gmra.mrb[0].mxu0 %v1896
      %v1935 = vpop.f32.mrb[0].mxu0
      %v1936 = vadd.f32 0.0, %v1935
      %v1937 = vpop.f32.mrb[0].mxu0
      %v1938 = vpop.f32.mrb[0].mxu0
      %v1939 = vpop.f32.mrb[0].mxu0
      %1940 = vdwg.mxu0
      %1942 = vrot.lane.b32.xlu0 %v1714, 8
      %v1943 = vpop.permute.xlu0 %1942
      %1946 = vrot.lane.b32.xlu0 %v1825, 16
      %v1947 = vpop.permute.xlu0 %1946
      %1950 = vrot.lane.b32.xlu0 %v1936, 24
      %v1951 = vpop.permute.xlu0 %1950
      %v1953 = vsel %vm803, %v1602, %v1943
      %v1954 = vsel %vm1262, %v1953, %v1947
      %v1955 = vsel %vm1264, %v1954, %v1951
      %v1956 = vpack.c.bf16 %v1955, %v1955
      %v1957 = vld [vmem:[%s14] sm:$0x1]
      %v1959 = vlaneseq
      %v1960 = vshrl.u32 %v1959, 7
      %v1961 = vsub.s32 0, %v1960
      %v1962 = vrot.slane %v1957, %v1961
      %v1968 = vunpack.c.l.b16 %v1493
      %v1969 = vunpack.c.l.b16 %v1494
      %v1970 = vunpack.c.l.b16 %v1495
      %v1971 = vunpack.c.l.b16 %v1496
      %v1972 = vpack.c.b16 %v1969, %v1968
      %v1973 = vpack.c.b16 %v1971, %v1970
      %v1977 = vsel %vm750, %v1956, 0
      %1979 = vmatprep.subr.bf16.mxu0 0
      %1980 = vmatpush1.bf16.msra.mxu0 %v1972
      %1981 = vmatprep.subr.bf16.mxu0 0
      %1982 = vmatpush1.bf16.msra.mxu0 %v1973
      %1983 = vmatprep.subr.bf16.mxu0 0
      %1984 = vmatpush1.bf16.msra.mxu0 0
      %1985 = vmatprep.subr.bf16.mxu0 0
      %1986 = vmatpush1.bf16.msra.mxu0 0
      %1987 = vmatprep.subr.bf16.mxu0 0
      %1988 = vmatpush1.bf16.msra.mxu0 0
      %1989 = vmatprep.subr.bf16.mxu0 0
      %1990 = vmatpush1.bf16.msra.mxu0 0
      %1991 = vmatprep.subr.bf16.mxu0 0
      %1992 = vmatpush1.bf16.msra.mxu0 0
      %1993 = vmatprep.subr.bf16.mxu0 0
      %1994 = vmatpush1.bf16.msra.mxu0 0
      %1995 = vmatprep.subr.bf16.mxu0 0
      %1996 = vmatpush1.bf16.msra.mxu0 0
      %1997 = vmatprep.subr.bf16.mxu0 0
      %1998 = vmatpush1.bf16.msra.mxu0 0
      %1999 = vmatprep.subr.bf16.mxu0 0
      %2000 = vmatpush1.bf16.msra.mxu0 0
      %2001 = vmatprep.subr.bf16.mxu0 0
      %2002 = vmatpush1.bf16.msra.mxu0 0
      %2003 = vmatprep.subr.bf16.mxu0 0
      %2004 = vmatpush1.bf16.msra.mxu0 0
      %2005 = vmatprep.subr.bf16.mxu0 0
      %2006 = vmatpush1.bf16.msra.mxu0 0
      %2007 = vmatprep.subr.bf16.mxu0 0
      %2008 = vmatpush1.bf16.msra.mxu0 0
      %2009 = vmatprep.subr.bf16.mxu0 0
      %2010 = vmatpush1.bf16.msra.mxu0 0
      %2011 = vmatprep.mubr.bf16.mxu0 0
      %2012 = vmatmul.mubr.bf16.gmra.mrb[0].mxu0 %v1977
      %v2013 = vpop.f32.mrb[0].mxu0
      %v2014 = vadd.f32 %v1962, %v2013
      %v2015 = vpop.f32.mrb[0].mxu0
      %v2016 = vpop.f32.mrb[0].mxu0
      %v2017 = vpop.f32.mrb[0].mxu0
      %2018 = vdwg.mxu0
      %v2019 = vadd.f32 %v1359, %v2014
      %v2020 = vld [vmem:[%s15] sm:$0x1]
      %v2021 = vld [vmem:[%s16] sm:$0x1]
      %v2022 = vsel %vm750, %v2019, 0.0
      %2023 = vadd.xlane.f32.xlu0 %v2022
      %v2024 = vpop.xlane.xlu0 %2023
      %v2025 = vmul.f32 %v2024, %v1335
      %v2026 = vsub.f32 %v2019, %v2025
      %v2027 = vmul.f32 %v2026, %v2026
      %v2028 = vsel %vm750, %v2027, 0.0
      %2029 = vadd.xlane.f32.xlu0 %v2028
      %v2030 = vpop.xlane.xlu0 %2029
      %v2031 = vmul.f32 %v2030, %v1335
      %v2032 = vadd.f32 %v2031, 1e-05
      %v2033 = vrsqrt.pop %v2032
      %v2034 = vmul.f32 %v2026, %v2033
      %v2036 = vlaneseq
      %v2037 = vshrl.u32 %v2036, 7
      %v2038 = vsub.s32 0, %v2037
      %v2039 = vrot.slane %v2020, %v2038
      %v2041 = vmul.f32 %v2034, %v2039
      %v2043 = vlaneseq
      %v2044 = vshrl.u32 %v2043, 7
      %v2045 = vsub.s32 0, %v2044
      %v2046 = vrot.slane %v2021, %v2045
      %v2048 = vadd.f32 %v2041, %v2046
      %v2049 = vld [vmem:[%s17] sm:$0xf]
      %v2050 = vld [vmem:[%s17 + $0x4] sm:$0xf]
      %v2051 = vld [vmem:[%s17 + $0x8] sm:$0xf]
      %v2052 = vld [vmem:[%s17 + $0xc] sm:$0xf]
      %v2053 = vpack.c.bf16 %v2048, %v2048
      %v2054 = vld [vmem:[%s18] sm:$0x1]
      %v2056 = vlaneseq
      %v2057 = vshrl.u32 %v2056, 7
      %v2058 = vsub.s32 0, %v2057
      %v2059 = vrot.slane %v2054, %v2058
      %v2065 = vunpack.c.l.b16 %v2049
      %v2066 = vunpack.c.l.b16 %v2050
      %v2067 = vunpack.c.l.b16 %v2051
      %v2068 = vunpack.c.l.b16 %v2052
      %v2069 = vpack.c.b16 %v2066, %v2065
      %v2070 = vpack.c.b16 %v2068, %v2067
      %v2074 = vsel %vm750, %v2053, 0
      %2076 = vmatprep.subr.bf16.mxu0 0
      %2077 = vmatpush1.bf16.msra.mxu0 %v2069
      %2078 = vmatprep.subr.bf16.mxu0 0
      %2079 = vmatpush1.bf16.msra.mxu0 %v2070
      %2080 = vmatprep.subr.bf16.mxu0 0
      %2081 = vmatpush1.bf16.msra.mxu0 0
      %2082 = vmatprep.subr.bf16.mxu0 0
      %2083 = vmatpush1.bf16.msra.mxu0 0
      %2084 = vmatprep.subr.bf16.mxu0 0
      %2085 = vmatpush1.bf16.msra.mxu0 0
      %2086 = vmatprep.subr.bf16.mxu0 0
      %2087 = vmatpush1.bf16.msra.mxu0 0
      %2088 = vmatprep.subr.bf16.mxu0 0
      %2089 = vmatpush1.bf16.msra.mxu0 0
      %2090 = vmatprep.subr.bf16.mxu0 0
      %2091 = vmatpush1.bf16.msra.mxu0 0
      %2092 = vmatprep.subr.bf16.mxu0 0
      %2093 = vmatpush1.bf16.msra.mxu0 0
      %2094 = vmatprep.subr.bf16.mxu0 0
      %2095 = vmatpush1.bf16.msra.mxu0 0
      %2096 = vmatprep.subr.bf16.mxu0 0
      %2097 = vmatpush1.bf16.msra.mxu0 0
      %2098 = vmatprep.subr.bf16.mxu0 0
      %2099 = vmatpush1.bf16.msra.mxu0 0
      %2100 = vmatprep.subr.bf16.mxu0 0
      %2101 = vmatpush1.bf16.msra.mxu0 0
      %2102 = vmatprep.subr.bf16.mxu0 0
      %2103 = vmatpush1.bf16.msra.mxu0 0
      %2104 = vmatprep.subr.bf16.mxu0 0
      %2105 = vmatpush1.bf16.msra.mxu0 0
      %2106 = vmatprep.subr.bf16.mxu0 0
      %2107 = vmatpush1.bf16.msra.mxu0 0
      %2108 = vmatprep.mubr.bf16.mxu0 0
      %2109 = vmatmul.mubr.bf16.gmra.mrb[0].mxu0 %v2074
      %v2110 = vpop.f32.mrb[0].mxu0
      %v2111 = vadd.f32 %v2059, %v2110
      %v2112 = vpop.f32.mrb[0].mxu0
      %v2113 = vpop.f32.mrb[0].mxu0
      %v2114 = vpop.f32.mrb[0].mxu0
      %2115 = vdwg.mxu0
      %v2116 = vmax.f32 %v2111, 0.0
      %v2117 = vld [vmem:[%s19] sm:$0xf]
      %v2118 = vld [vmem:[%s19 + $0x4] sm:$0xf]
      %v2119 = vld [vmem:[%s19 + $0x8] sm:$0xf]
      %v2120 = vld [vmem:[%s19 + $0xc] sm:$0xf]
      %v2121 = vld [vmem:[%s19 + $0x10] sm:$0xf]
      %v2122 = vld [vmem:[%s19 + $0x14] sm:$0xf]
      %v2123 = vld [vmem:[%s19 + $0x18] sm:$0xf]
      %v2124 = vld [vmem:[%s19 + $0x1c] sm:$0xf]
      %v2125 = vpack.c.bf16 %v2116, %v2116
      %v2126 = vld [vmem:[%s20] sm:$0x1]
      %v2128 = vlaneseq
      %v2129 = vshrl.u32 %v2128, 7
      %v2130 = vsub.s32 0, %v2129
      %v2131 = vrot.slane %v2126, %v2130
      %v2141 = vunpack.c.l.b16 %v2117
      %v2142 = vunpack.c.l.b16 %v2118
      %v2143 = vunpack.c.l.b16 %v2119
      %v2144 = vunpack.c.l.b16 %v2120
      %v2145 = vunpack.c.l.b16 %v2121
      %v2146 = vunpack.c.l.b16 %v2122
      %v2147 = vunpack.c.l.b16 %v2123
      %v2148 = vunpack.c.l.b16 %v2124
      %v2149 = vpack.c.b16 %v2142, %v2141
      %v2150 = vpack.c.b16 %v2144, %v2143
      %v2151 = vpack.c.b16 %v2146, %v2145
      %v2152 = vpack.c.b16 %v2148, %v2147
      %vm2157 = vcmask 523264
      %v2159 = vsel %vm2157, %v2125, 0
      %2161 = vmatprep.subr.bf16.mxu0 0
      %2162 = vmatpush1.bf16.msra.mxu0 %v2149
      %2163 = vmatprep.subr.bf16.mxu0 0
      %2164 = vmatpush1.bf16.msra.mxu0 %v2150
      %2165 = vmatprep.subr.bf16.mxu0 0
      %2166 = vmatpush1.bf16.msra.mxu0 %v2151
      %2167 = vmatprep.subr.bf16.mxu0 0
      %2168 = vmatpush1.bf16.msra.mxu0 %v2152
      %2169 = vmatprep.subr.bf16.mxu0 0
      %2170 = vmatpush1.bf16.msra.mxu0 0
      %2171 = vmatprep.subr.bf16.mxu0 0
      %2172 = vmatpush1.bf16.msra.mxu0 0
      %2173 = vmatprep.subr.bf16.mxu0 0
      %2174 = vmatpush1.bf16.msra.mxu0 0
      %2175 = vmatprep.subr.bf16.mxu0 0
      %2176 = vmatpush1.bf16.msra.mxu0 0
      %2177 = vmatprep.subr.bf16.mxu0 0
      %2178 = vmatpush1.bf16.msra.mxu0 0
      %2179 = vmatprep.subr.bf16.mxu0 0
      %2180 = vmatpush1.bf16.msra.mxu0 0
      %2181 = vmatprep.subr.bf16.mxu0 0
      %2182 = vmatpush1.bf16.msra.mxu0 0
      %2183 = vmatprep.subr.bf16.mxu0 0
      %2184 = vmatpush1.bf16.msra.mxu0 0
      %2185 = vmatprep.subr.bf16.mxu0 0
      %2186 = vmatpush1.bf16.msra.mxu0 0
      %2187 = vmatprep.subr.bf16.mxu0 0
      %2188 = vmatpush1.bf16.msra.mxu0 0
      %2189 = vmatprep.subr.bf16.mxu0 0
      %2190 = vmatpush1.bf16.msra.mxu0 0
      %2191 = vmatprep.subr.bf16.mxu0 0
      %2192 = vmatpush1.bf16.msra.mxu0 0
      %2193 = vmatprep.mubr.bf16.mxu0 0
      %2194 = vmatmul.mubr.bf16.gmra.mrb[0].mxu0 %v2159
      %v2195 = vpop.f32.mrb[0].mxu0
      %v2196 = vadd.f32 %v2131, %v2195
      %v2197 = vpop.f32.mrb[0].mxu0
      %v2198 = vpop.f32.mrb[0].mxu0
      %v2199 = vpop.f32.mrb[0].mxu0
      %2200 = vdwg.mxu0
      %v2201 = vadd.f32 %v2048, %v2196
      %v2202 = vld [vmem:[%s21] sm:$0x1]
      %v2203 = vld [vmem:[%s22] sm:$0x1]
      %v2204 = vsel %vm750, %v2201, 0.0
      %2205 = vadd.xlane.f32.xlu0 %v2204
      %v2206 = vpop.xlane.xlu0 %2205
      %v2207 = vmul.f32 %v2206, %v1335
      %v2208 = vsub.f32 %v2201, %v2207
      %v2209 = vmul.f32 %v2208, %v2208
      %v2210 = vsel %vm750, %v2209, 0.0
      %2211 = vadd.xlane.f32.xlu0 %v2210
      %v2212 = vpop.xlane.xlu0 %2211
      %v2213 = vmul.f32 %v2212, %v1335
      %v2214 = vadd.f32 %v2213, 1e-05
      %v2215 = vrsqrt.pop %v2214
      %v2216 = vmul.f32 %v2208, %v2215
      %v2218 = vlaneseq
      %v2219 = vshrl.u32 %v2218, 7
      %v2220 = vsub.s32 0, %v2219
      %v2221 = vrot.slane %v2202, %v2220
      %v2223 = vmul.f32 %v2216, %v2221
      %v2225 = vlaneseq
      %v2226 = vshrl.u32 %v2225, 7
      %v2227 = vsub.s32 0, %v2226
      %v2228 = vrot.slane %v2203, %v2227
      %v2230 = vadd.f32 %v2223, %v2228
      %v2231 = vpack.c.bf16 %v2230, %v2230
      %vm2232 = vcmask 257024
      %2233 = vst.msk [vmem:[%s722] sm:$0xf] %vm2232, %v2231
      %p2234 = scmp.lt.s32.totalorder %s34, 1
      %s2235 = scalar_select %p2234, %s34, 1
      %s2236 = smul.addr %s2235, 4
      %s2237 = scalar_lea.vmem %s23, %s2236
      // Predicated region
      $region113: #{default_transformer_forward.7} parent=111 // pred_check
        %p2238 = pneg %p545
      $region114: #{default_transformer_forward.7} parent=111 // pred_check_branch
        %2240 = sbr.rel (%p2238) target = $region116
      $region115: #{default_transformer_forward.7} parent=111 // pred_region
        _
      $region116: #{default_transformer_forward.7} parent=111 // pred_fallthru
        _
    $region112: #{default_transformer_forward.7} parent=5 // pred_fallthru
      _
    %p2241 = scmp.le.s32.totalorder 2, %s29
    // Predicated region
    $region117: #{default_transformer_forward.7} parent=5 // pred_check
      %p2242 = pneg %p2241
    $region118: #{default_transformer_forward.7} parent=5 // pred_check_branch
      %2244 = sbr.rel (%p2242) target = $region120
    $region119: #{default_transformer_forward.7} parent=5 // pred_region
      %s2245 = ssub.s32 %s29, 2
      // Predicated region
      $region121: #{default_transformer_forward.7} parent=119 // pred_check
        %p2246 = pneg %p551
      $region122: #{default_transformer_forward.7} parent=119 // pred_check_branch
        %2248 = sbr.rel (%p2246) target = $region124
      $region123: #{default_transformer_forward.7} parent=119 // pred_region
        %p2249 = scmp.lt.s32.totalorder %s35, 1
        %s2250 = scalar_select %p2249, %s35, 1
        %s2251 = smul.addr %s2250, 4
        %s2252 = scalar_lea.vmem %s23, %s2251
      $region124: #{default_transformer_forward.7} parent=119 // pred_fallthru
        _
    $region120: #{default_transformer_forward.7} parent=5 // pred_fallthru
      _
  $region6: #{default_transformer_forward.7} parent=0 // loop_footer
    %s33 = sadd.s32 1, %s29
  $region7: #{default_transformer_forward.7} parent=0 // loop_footer_branch
    %28 = sbr.rel target = $region3
  $region8: #{default_transformer_forward.7} parent=0 // loop_exit
    _

// kernel: default_transformer_forward.9
$region0: #{default_transformer_forward.9}
  #allocation0 [shape = 'u32[]', space=smem, size = 0x4, offset = 0x4, fixed_abs, tag = 'smem constant byte address 0x4 - core index']
  #allocation1 [shape = 'u32[144,128]{1,0:T(1,128)}', space=vmem, size = 0x12000, scoped, tag = 'internal scratch']
  %s0 = inlined_call_operand.vmem [shape: bf16[16,32], index: 0, kind: input, shape index: {}]
  %s1 = inlined_call_operand.vmem [shape: f32[1,32], index: 1, kind: input, shape index: {}]
  %s2 = inlined_call_operand.vmem [shape: f32[1,32], index: 2, kind: input, shape index: {}]
  %s3 = inlined_call_operand.vmem [shape: bf16[32,128], index: 3, kind: input, shape index: {}]
  %s4 = inlined_call_operand.vmem [shape: f32[1,128], index: 4, kind: input, shape index: {}]
  %s5 = inlined_call_operand.vmem [shape: f32[16,128], index: 5, kind: output, shape index: {}]
  %s6 = sld [smem:[#allocation0]]
  $region30: #{default_transformer_forward.9} parent=0
    _
  %s8 = ssub.s32 1, %s6
  %s9 = scalar_select 0, %s8, %s6
  // Predicated region
  $region2: #{default_transformer_forward.9} parent=0 // pred_check
    _
  $region3: #{default_transformer_forward.9} parent=0 // pred_check_branch
    %11 = sbr.rel (0) target = $region5
  $region4: #{default_transformer_forward.9} parent=0 // pred_region
    _
  $region5: #{default_transformer_forward.9} parent=0 // pred_fallthru
    _
  // Predicated region
  $region6: #{default_transformer_forward.9} parent=0 // pred_check
    _
  $region7: #{default_transformer_forward.9} parent=0 // pred_check_branch
    %13 = sbr.rel (0) target = $region9
  $region8: #{default_transformer_forward.9} parent=0 // pred_region
    _
  $region9: #{default_transformer_forward.9} parent=0 // pred_fallthru
    _
  // Predicated region
  $region10: #{default_transformer_forward.9} parent=0 // pred_check
    _
  $region11: #{default_transformer_forward.9} parent=0 // pred_check_branch
    %15 = sbr.rel (0) target = $region13
  $region12: #{default_transformer_forward.9} parent=0 // pred_region
    _
  $region13: #{default_transformer_forward.9} parent=0 // pred_fallthru
    _
  // Predicated region
  $region14: #{default_transformer_forward.9} parent=0 // pred_check
    _
  $region15: #{default_transformer_forward.9} parent=0 // pred_check_branch
    %17 = sbr.rel (0) target = $region17
  $region16: #{default_transformer_forward.9} parent=0 // pred_region
    _
  $region17: #{default_transformer_forward.9} parent=0 // pred_fallthru
    _
  // Predicated region
  $region18: #{default_transformer_forward.9} parent=0 // pred_check
    _
  $region19: #{default_transformer_forward.9} parent=0 // pred_check_branch
    %19 = sbr.rel (0) target = $region21
  $region20: #{default_transformer_forward.9} parent=0 // pred_region
    _
  $region21: #{default_transformer_forward.9} parent=0 // pred_fallthru
    _
  %v21 = vld [vmem:[%s0] sm:$0xf]
  %v22 = vld [vmem:[%s0 + $0x4] sm:$0xf]
  %v23 = vunpack.c.l.bf16 %v21
  %v24 = vunpack.c.l.bf16 %v22
  %v25 = vld [vmem:[%s1] sm:$0x1]
  %v26 = vld [vmem:[%s2] sm:$0x1]
  %vm27 = vcmask 261120
  %v28 = vsel %vm27, %v23, 0.0
  %29 = vadd.xlane.f32.xlu0 %v28
  %v30 = vpop.xlane.xlu0 %29
  %v31 = vsel %vm27, %v24, 0.0
  %32 = vadd.xlane.f32.xlu0 %v31
  %v33 = vpop.xlane.xlu0 %32
  %v34 = vrcp.pop 32.0
  %v35 = vmul.f32 %v30, %v34
  %v36 = vmul.f32 %v33, %v34
  %v37 = vsub.f32 %v23, %v35
  %v38 = vsub.f32 %v24, %v36
  %v39 = vmul.f32 %v37, %v37
  %v40 = vmul.f32 %v38, %v38
  %v41 = vsel %vm27, %v39, 0.0
  %42 = vadd.xlane.f32.xlu0 %v41
  %v43 = vpop.xlane.xlu0 %42
  %v44 = vsel %vm27, %v40, 0.0
  %45 = vadd.xlane.f32.xlu0 %v44
  %v46 = vpop.xlane.xlu0 %45
  %v47 = vmul.f32 %v43, %v34
  %v48 = vmul.f32 %v46, %v34
  %v49 = vadd.f32 %v47, 1e-05
  %v50 = vadd.f32 %v48, 1e-05
  %v51 = vrsqrt.pop %v49
  %v52 = vrsqrt.pop %v50
  %v53 = vmul.f32 %v37, %v51
  %v54 = vmul.f32 %v38, %v52
  %v56 = vlaneseq
  %v57 = vshrl.u32 %v56, 7
  %v58 = vsub.s32 0, %v57
  %v59 = vrot.slane %v25, %v58
  %v61 = vmul.f32 %v53, %v59
  %v62 = vmul.f32 %v54, %v59
  %v64 = vlaneseq
  %v65 = vshrl.u32 %v64, 7
  %v66 = vsub.s32 0, %v65
  %v67 = vrot.slane %v26, %v66
  %v69 = vadd.f32 %v61, %v67
  %v70 = vadd.f32 %v62, %v67
  %v71 = vld [vmem:[%s3] sm:$0xf]
  %v72 = vld [vmem:[%s3 + $0x4] sm:$0xf]
  %v73 = vld [vmem:[%s3 + $0x8] sm:$0xf]
  %v74 = vld [vmem:[%s3 + $0xc] sm:$0xf]
  %v75 = vpack.c.bf16 %v70, %v69
  %v76 = vld [vmem:[%s4] sm:$0x1]
  %v78 = vlaneseq
  %v79 = vshrl.u32 %v78, 7
  %v80 = vsub.s32 0, %v79
  %v81 = vrot.slane %v76, %v80
  %v87 = vunpack.c.l.b16 %v71
  %v88 = vunpack.c.l.b16 %v72
  %v89 = vunpack.c.l.b16 %v73
  %v90 = vunpack.c.l.b16 %v74
  %v91 = vpack.c.b16 %v88, %v87
  %v92 = vpack.c.b16 %v90, %v89
  %v96 = vsel %vm27, %v75, 0
  %98 = vmatprep.subr.bf16.mxu0 0
  %99 = vmatpush1.bf16.msra.mxu0 %v91
  %100 = vmatprep.subr.bf16.mxu0 0
  %101 = vmatpush1.bf16.msra.mxu0 %v92
  %102 = vmatprep.subr.bf16.mxu0 0
  %103 = vmatpush1.bf16.msra.mxu0 0
  %104 = vmatprep.subr.bf16.mxu0 0
  %105 = vmatpush1.bf16.msra.mxu0 0
  %106 = vmatprep.subr.bf16.mxu0 0
  %107 = vmatpush1.bf16.msra.mxu0 0
  %108 = vmatprep.subr.bf16.mxu0 0
  %109 = vmatpush1.bf16.msra.mxu0 0
  %110 = vmatprep.subr.bf16.mxu0 0
  %111 = vmatpush1.bf16.msra.mxu0 0
  %112 = vmatprep.subr.bf16.mxu0 0
  %113 = vmatpush1.bf16.msra.mxu0 0
  %114 = vmatprep.subr.bf16.mxu0 0
  %115 = vmatpush1.bf16.msra.mxu0 0
  %116 = vmatprep.subr.bf16.mxu0 0
  %117 = vmatpush1.bf16.msra.mxu0 0
  %118 = vmatprep.subr.bf16.mxu0 0
  %119 = vmatpush1.bf16.msra.mxu0 0
  %120 = vmatprep.subr.bf16.mxu0 0
  %121 = vmatpush1.bf16.msra.mxu0 0
  %122 = vmatprep.subr.bf16.mxu0 0
  %123 = vmatpush1.bf16.msra.mxu0 0
  %124 = vmatprep.subr.bf16.mxu0 0
  %125 = vmatpush1.bf16.msra.mxu0 0
  %126 = vmatprep.subr.bf16.mxu0 0
  %127 = vmatpush1.bf16.msra.mxu0 0
  %128 = vmatprep.subr.bf16.mxu0 0
  %129 = vmatpush1.bf16.msra.mxu0 0
  %130 = vmatprep.mubr.bf16.mxu0 0
  %131 = vmatmul.mubr.bf16.gmra.mrb[0].mxu0 %v96
  %v132 = vpop.f32.mrb[0].mxu0
  %v133 = vadd.f32 %v81, %v132
  %v134 = vpop.f32.mrb[0].mxu0
  %v135 = vpop.f32.mrb[0].mxu0
  %v136 = vadd.f32 %v81, %v135
  %v137 = vpop.f32.mrb[0].mxu0
  %138 = vdwg.mxu0
  %139 = vst [vmem:[%s5] sm:$0xff] %v133
  %140 = vst [vmem:[%s5 + $0x8] sm:$0xff] %v136
  // Predicated region
  $region22: #{default_transformer_forward.9} parent=0 // pred_check
    _
  $region23: #{default_transformer_forward.9} parent=0 // pred_check_branch
    %142 = sbr.rel (0) target = $region25
  $region24: #{default_transformer_forward.9} parent=0 // pred_region
    _
  $region25: #{default_transformer_forward.9} parent=0 // pred_fallthru
    _
  // Predicated region
  $region26: #{default_transformer_forward.9} parent=0 // pred_check
    _
  $region27: #{default_transformer_forward.9} parent=0 // pred_check_branch
    %144 = sbr.rel (0) target = $region29
  $region28: #{default_transformer_forward.9} parent=0 // pred_region
    _
  $region29: #{default_transformer_forward.9} parent=0 // pred_fallthru
    _

</llo_original>
